<compile_context>
chip_gen: v5e
topology: v5e:2x2
jax: 0.10.0
libtpu: 0.0.40
codegen_flags: <defaults>
</compile_context>

<pallas_src>
import functools

import jax
import jax.numpy as jnp
from jax.experimental import pallas as pl
from jax.experimental.pallas import tpu as pltpu


# ----------------------------- static geometry ------------------------------ #
H_IN = 84                                  # 84x84x1 Atari frame (fc=3136 => 7x7x64)
C1_K, C1_S, C1_CI, C1_CO = 8, 4, 1, 32
C2_K, C2_S, C2_CI, C2_CO = 4, 2, 32, 64
C3_K, C3_S, C3_CI, C3_CO = 3, 1, 64, 64
OH1 = (H_IN - C1_K) // C1_S + 1            # 20
OH2 = (OH1 - C2_K) // C2_S + 1             # 9
OH3 = (OH2 - C3_K) // C3_S + 1             # 7
P1 = OH1 * OH1                             # 400 conv1 output positions / sample
# "wide" row counts for the shifted-matmul formulation (flat grid of width OH1):
#   real y2[a,b]  lives at wide row 2a*OH1 + 2b
#   real y3[u,v]  lives at wide row 2u*OH1 + 2v
L2 = (C2_S * OH1) * (OH2 - 1) + C2_S * (OH2 - 1) + 1     # 337
L3 = (C2_S * OH1) * (OH3 - 1) + C2_S * (OH3 - 1) + 1     # 253
FC_K, FC_N = OH3 * OH3 * C3_CO, 512        # 3136, 512
FC_KP = 3200                               # 25 * 128 (padded fc contraction dim)
NA_P = 128                                 # lane-dense padded action dim

# All in-kernel shifted reads stay inside the scratch buffers:
assert OH1 * (C2_K - 1) + (C2_K - 1) + L2 == P1          # conv2 reads y1[0..399]
assert (C2_S * OH1) * (C3_K - 1) + C2_S * (C3_K - 1) + L3 == L2   # conv3 reads y2[0..336]


# ------------------------------ Pallas kernels ------------------------------ #
def conv_stack_kernel(patches_ref, w1_ref, b1_ref, w2_ref, b2_ref,
                      w3_ref, b3_ref, o_ref, y1_s, y2_s):
    """Fused conv1+conv2+conv3 for one sample; activations stay in VMEM."""
    # conv1: one (400, 64) @ (64, 32) matmul.
    a1 = jnp.dot(patches_ref[...], w1_ref[...],
                 preferred_element_type=jnp.float32)
    y1_s[...] = jnp.maximum(a1 + b1_ref[...], 0.0).astype(y1_s.dtype)

    # conv2 (k=4, stride 2): 16 shifted (337,32)@(32,64) matmuls over the flat
    # y1 grid; the stride is handled by only row 2a*20+2b of the wide output
    # being a real conv2 output.
    acc2 = None
    for dh in range(C2_K):
        for dw in range(C2_K):
            xs = y1_s[pl.ds(OH1 * dh + dw, L2), :]
            t = jnp.dot(xs, w2_ref[dh * C2_K + dw],
                        preferred_element_type=jnp.float32)
            acc2 = t if acc2 is None else acc2 + t
    y2_s[...] = jnp.maximum(acc2 + b2_ref[...], 0.0).astype(y2_s.dtype)

    # conv3 (k=3, stride 1 on y2 == dilation-2 over the wide conv2 grid):
    # 9 shifted (253,64)@(64,64) matmuls; real y3[u,v] is wide row 40u+2v.
    acc3 = None
    for dh in range(C3_K):
        for dw in range(C3_K):
            xs = y2_s[pl.ds((C2_S * OH1) * dh + C2_S * dw, L3), :]
            t = jnp.dot(xs, w3_ref[dh * C3_K + dw],
                        preferred_element_type=jnp.float32)
            acc3 = t if acc3 is None else acc3 + t
    o_ref[...] = jnp.maximum(acc3 + b3_ref[...], 0.0).astype(o_ref.dtype)


def head_kernel(x_ref, wfc_ref, bfc_ref, wout_ref, bout_ref, o_ref, acc_ref):
    """Fused fc(ReLU)+out, K-tiled so the wfc DMA overlaps MXU work."""
    k = pl.program_id(0)

    @pl.when(k == 0)
    def _():
        acc_ref[...] = jnp.zeros_like(acc_ref)

    acc_ref[...] += jnp.dot(x_ref[...], wfc_ref[...],
                            preferred_element_type=jnp.float32)

    @pl.when(k == pl.num_programs(0) - 1)
    def _():
        h = jnp.maximum(acc_ref[...] + bfc_ref[...], 0.0)
        q = jnp.dot(h.astype(jnp.bfloat16), wout_ref[...],
                    preferred_element_type=jnp.float32)
        o_ref[...] = q + bout_ref[...]


# ------------------------------ Pallas wrappers ------------------------------ #
def conv_stack(patches, p):
    """patches: (N, 400, 64) bf16 -> wide conv3 output (N, 253, 64) bf16."""
    n = patches.shape[0]
    flops = 2 * n * (P1 * C1_K * C1_K * C1_CO
                     + L2 * C2_CI * C2_CO * C2_K * C2_K
                     + L3 * C3_CI * C3_CO * C3_K * C3_K)
    bytes_accessed = 2 * (patches.size + p["w1"].size + p["w2"].size
                          + p["w3"].size + n * L3 * C3_CO) + 4 * 4 * (32 + 64 + 64)
    return pl.pallas_call(
        conv_stack_kernel,
        out_shape=jax.ShapeDtypeStruct((n, L3, C3_CO), jnp.bfloat16),
        grid=(n,),
        in_specs=[
            pl.BlockSpec((None, P1, C1_K * C1_K), lambda i: (i, 0, 0)),
            pl.BlockSpec((C1_K * C1_K, C1_CO), lambda i: (0, 0)),
            pl.BlockSpec((1, C1_CO), lambda i: (0, 0)),
            pl.BlockSpec((C2_K * C2_K, C2_CI, C2_CO), lambda i: (0, 0, 0)),
            pl.BlockSpec((1, C2_CO), lambda i: (0, 0)),
            pl.BlockSpec((C3_K * C3_K, C3_CI, C3_CO), lambda i: (0, 0, 0)),
            pl.BlockSpec((1, C3_CO), lambda i: (0, 0)),
        ],
        out_specs=pl.BlockSpec((None, L3, C3_CO), lambda i: (i, 0, 0)),
        scratch_shapes=[
            pltpu.VMEM((P1, C1_CO), jnp.bfloat16),   # y1 (flat 20x20 grid)
            pltpu.VMEM((L2, C2_CO), jnp.bfloat16),   # wide conv2 output
        ],
        compiler_params=pltpu.CompilerParams(
            dimension_semantics=("parallel",)),
        cost_estimate=pl.CostEstimate(flops=flops, transcendentals=0,
                                      bytes_accessed=bytes_accessed),
    )(patches, p["w1"], p["b1"], p["w2"], p["b2"], p["w3"], p["b3"])


def mlp_head(x_fc, p, *, k_tiles=5):
    """x_fc: (N, 3200) bf16 -> (N, 128) f32 padded Q-values."""
    n, kp = x_fc.shape
    tk = kp // k_tiles
    assert tk * k_tiles == kp and tk % 128 == 0
    flops = 2 * n * (kp * FC_N + FC_N * NA_P)
    bytes_accessed = 2 * (x_fc.size + p["wfc"].size + p["wout"].size) \
        + 4 * (FC_N + NA_P + n * NA_P)
    return pl.pallas_call(
        head_kernel,
        out_shape=jax.ShapeDtypeStruct((n, NA_P), jnp.float32),
        grid=(k_tiles,),
        in_specs=[
            pl.BlockSpec((n, tk), lambda k: (0, k)),
            pl.BlockSpec((tk, FC_N), lambda k: (k, 0)),
            pl.BlockSpec((1, FC_N), lambda k: (0, 0)),
            pl.BlockSpec((FC_N, NA_P), lambda k: (0, 0)),
            pl.BlockSpec((1, NA_P), lambda k: (0, 0)),
        ],
        out_specs=pl.BlockSpec((n, NA_P), lambda k: (0, 0)),
        scratch_shapes=[pltpu.VMEM((n, FC_N), jnp.float32)],
        compiler_params=pltpu.CompilerParams(
            dimension_semantics=("arbitrary",)),
        cost_estimate=pl.CostEstimate(flops=flops, transcendentals=0,
                                      bytes_accessed=bytes_accessed),
    )(x_fc, p["wfc"], p["bfc"], p["wout"], p["bout"])


# --------------------------------- params ------------------------------------ #
def init_params(key, env_actions):
    """PyTorch-layout parameters (same shapes as the reference nn.Module)."""
    ks = jax.random.split(key, 10)
    s = 0.05
    return {
        "w1": jax.random.normal(ks[0], (32, 1, 8, 8), jnp.float32) * s,
        "b1": jax.random.normal(ks[1], (32,), jnp.float32) * s,
        "w2": jax.random.normal(ks[2], (64, 32, 4, 4), jnp.float32) * s,
        "b2": jax.random.normal(ks[3], (64,), jnp.float32) * s,
        "w3": jax.random.normal(ks[4], (64, 64, 3, 3), jnp.float32) * s,
        "b3": jax.random.normal(ks[5], (64,), jnp.float32) * s,
        "wfc": jax.random.normal(ks[6], (3136, 512), jnp.float32) * s,
        "bfc": jax.random.normal(ks[7], (512,), jnp.float32) * s,
        "wout": jax.random.normal(ks[8], (512, env_actions), jnp.float32) * s,
        "bout": jax.random.normal(ks[9], (env_actions,), jnp.float32) * s,
    }


def prepare_params(params):
    """One-time packing into kernel layouts (bf16 weights, f32 biases)."""
    bf16 = jnp.bfloat16
    prep = {}
    # conv1: patches feature order is (kh, kw) (Cin=1), matching reshape(32,-1).
    prep["w1"] = params["w1"].reshape(C1_CO, C1_K * C1_K).T.astype(bf16)
    prep["b1"] = params["b1"].reshape(1, C1_CO).astype(jnp.float32)
    # conv2 / conv3: one (Cin, Cout) matrix per kernel offset (dh, dw).
    prep["w2"] = jnp.transpose(params["w2"], (2, 3, 1, 0)).reshape(
        C2_K * C2_K, C2_CI, C2_CO).astype(bf16)
    prep["b2"] = params["b2"].reshape(1, C2_CO).astype(jnp.float32)
    prep["w3"] = jnp.transpose(params["w3"], (2, 3, 1, 0)).reshape(
        C3_K * C3_K, C3_CI, C3_CO).astype(bf16)
    prep["b3"] = params["b3"].reshape(1, C3_CO).astype(jnp.float32)
    # fc expects torch's (C,H,W) flatten of (N,64,7,7); our activations are
    # position-major (H,W,C), so permute the fc rows once, then pad K to 3200.
    wfc_hwc = (params["wfc"].reshape(C3_CO, OH3, OH3, FC_N)
               .transpose(1, 2, 0, 3).reshape(FC_K, FC_N))
    prep["wfc"] = jnp.pad(wfc_hwc, ((0, FC_KP - FC_K), (0, 0))).astype(bf16)
    prep["bfc"] = params["bfc"].reshape(1, FC_N).astype(jnp.float32)
    # out: pad the action dim to a lane-dense 128.
    a = params["wout"].shape[1]
    prep["wout"] = jnp.pad(params["wout"], ((0, 0), (0, NA_P - a))).astype(bf16)
    prep["bout"] = jnp.pad(params["bout"], (0, NA_P - a)).astype(
        jnp.float32).reshape(1, NA_P)
    return prep


# --------------------------------- forward ----------------------------------- #
@functools.partial(jax.jit, static_argnames=("num_actions",))
def cnn_forward(prepared, x, *, num_actions):
    # x: (N, 1, 84, 84) NCHW f32 (PyTorch layout input).
    n = x.shape[0]
    xh = jnp.transpose(x, (0, 2, 3, 1)).astype(jnp.bfloat16)          # NHWC
    # im2col for conv1 only (feature order (Cin=1, kh, kw)); conv2/conv3 patch
    # gathers happen inside the fused kernel.
    patches = jax.lax.conv_general_dilated_patches(
        xh, filter_shape=(C1_K, C1_K), window_strides=(C1_S, C1_S),
        padding="VALID", dimension_numbers=("NHWC", "HWIO", "NHWC"))
    patches = patches.reshape(n, P1, C1_K * C1_K)                      # (N,400,64)

    y3_wide = conv_stack(patches, prepared)                            # (N,253,64)

    # Select the 49 real conv3 positions (wide row 40u+2v) and flatten (H,W,C).
    valid = (C2_S * OH1 * jnp.arange(OH3)[:, None]
             + C2_S * jnp.arange(OH3)[None, :]).reshape(-1)            # (49,)
    x_fc = y3_wide[:, valid, :].reshape(n, FC_K)                       # (N,3136)
    x_fc = jnp.pad(x_fc, ((0, 0), (0, FC_KP - FC_K)))                  # (N,3200)

    q = mlp_head(x_fc, prepared)                                       # (N,128)
    return q[:, :num_actions]


@jax.jit
def reference_forward(params, x):
    """Pure-JAX f32 replica of the PyTorch module (numerical check only)."""
    def conv(z, w, b, stride):
        y = jax.lax.conv_general_dilated(
            z, w, window_strides=(stride, stride), padding="VALID",
            dimension_numbers=("NCHW", "OIHW", "NCHW"))
        return jax.nn.relu(y + b[None, :, None, None])

    z = conv(x, params["w1"], params["b1"], 4)
    z = conv(z, params["w2"], params["b2"], 2)
    z = conv(z, params["w3"], params["b3"], 1)
    z = z.reshape(z.shape[0], -1)                       # (N, C*H*W) torch order
    z = jax.nn.relu(z @ params["wfc"] + params["bfc"])
    return z @ params["wout"] + params["bout"]


if __name__ == "__main__":
    key = jax.random.PRNGKey(0)
    k_param, k_x = jax.random.split(key)
    env_actions = 4
    batch = 2

    params = init_params(k_param, env_actions)
    prepared = prepare_params(params)                   # one-time weight packing
    x = jax.random.normal(k_x, (batch, 1, 84, 84), jnp.float32)

    q = cnn_forward(prepared, x, num_actions=env_actions)
    q = jax.block_until_ready(q)
    assert q.shape == (batch, env_actions)

    # bf16 kernels vs. f32 reference of the original module.
    q_ref = jax.block_until_ready(reference_forward(params, x))
    err = float(jnp.max(jnp.abs(q - q_ref)))
    assert err < 5e-2, f"mismatch vs reference: {err}"

    print("KERNEL_OK")
</pallas_src>

<mosaic_0001>
module attributes {stable_mosaic.version = 11 : i64} {
  func.func @conv_stack_kernel(%arg0: i32, %arg1: memref<1x400x64xbf16, #tpu.memory_space<vmem>>, %arg2: memref<64x32xbf16, #tpu.memory_space<vmem>>, %arg3: memref<1x32xf32, #tpu.memory_space<vmem>>, %arg4: memref<16x32x64xbf16, #tpu.memory_space<vmem>>, %arg5: memref<1x64xf32, #tpu.memory_space<vmem>>, %arg6: memref<9x64x64xbf16, #tpu.memory_space<vmem>>, %arg7: memref<1x64xf32, #tpu.memory_space<vmem>>, %arg8: memref<1x253x64xbf16, #tpu.memory_space<vmem>>, %arg9: memref<400x32xbf16, #tpu.memory_space<vmem>>, %arg10: memref<337x64xbf16, #tpu.memory_space<vmem>>) attributes {dimension_semantics = [#tpu.dimension_semantics<parallel>], iteration_bounds = array<i64: 2>, scalar_prefetch = 0 : i64, scratch_operands = 2 : i64, tpu.core_type = #tpu.core_type<tc>, window_params = [{transform_indices = @transform_0, window_bounds = array<i64: 1, 400, 64>}, {pipeline_mode = #tpu.pipeline_mode<synchronous>, transform_indices = @transform_1, window_bounds = array<i64: 64, 32>}, {pipeline_mode = #tpu.pipeline_mode<synchronous>, transform_indices = @transform_2, window_bounds = array<i64: 1, 32>}, {pipeline_mode = #tpu.pipeline_mode<synchronous>, transform_indices = @transform_3, window_bounds = array<i64: 16, 32, 64>}, {pipeline_mode = #tpu.pipeline_mode<synchronous>, transform_indices = @transform_4, window_bounds = array<i64: 1, 64>}, {pipeline_mode = #tpu.pipeline_mode<synchronous>, transform_indices = @transform_5, window_bounds = array<i64: 9, 64, 64>}, {pipeline_mode = #tpu.pipeline_mode<synchronous>, transform_indices = @transform_6, window_bounds = array<i64: 1, 64>}, {transform_indices = @transform_7, window_bounds = array<i64: 1, 253, 64>}]} {
    %c0 = arith.constant 0 : index
    %c0_0 = arith.constant 0 : index
    %c0_1 = arith.constant 0 : index
    %0 = vector.load %arg1[%c0, %c0_0, %c0_1] : memref<1x400x64xbf16, #tpu.memory_space<vmem>>, vector<1x400x64xbf16>
    %1 = vector.shape_cast %0 : vector<1x400x64xbf16> to vector<400x64xbf16>
    %c0_2 = arith.constant 0 : index
    %c0_3 = arith.constant 0 : index
    %2 = vector.load %arg2[%c0_2, %c0_3] : memref<64x32xbf16, #tpu.memory_space<vmem>>, vector<64x32xbf16>
    %cst = arith.constant dense<0.000000e+00> : vector<400x32xf32>
    %3 = tpu.matmul %1, %2, %cst {dimension_numbers = #tpu.dot_dimension_numbers<[1], [0], [0], [1], [0, 0, 1, 1], [], []>} : vector<400x64xbf16>, vector<64x32xbf16>, vector<400x32xf32> -> vector<400x32xf32>
    %c0_4 = arith.constant 0 : index
    %c0_5 = arith.constant 0 : index
    %4 = vector.load %arg3[%c0_4, %c0_5] : memref<1x32xf32, #tpu.memory_space<vmem>>, vector<1x32xf32>
    %5 = vector.broadcast %4 : vector<1x32xf32> to vector<400x32xf32>
    %6 = arith.addf %3, %5 : vector<400x32xf32>
    %cst_6 = arith.constant 0.000000e+00 : f32
    %7 = vector.broadcast %cst_6 : f32 to vector<400x32xf32>
    %8 = arith.maximumf %6, %7 : vector<400x32xf32>
    %9 = arith.truncf %8 : vector<400x32xf32> to vector<400x32xbf16>
    %c0_7 = arith.constant 0 : index
    %c0_8 = arith.constant 0 : index
    %10 = vector.load %arg9[%c0_7, %c0_8] : memref<400x32xbf16, #tpu.memory_space<vmem>>, vector<400x32xbf16>
    tpu.vector_store %arg9[%c0_7, %c0_8], %9 {strides = array<i32>} : memref<400x32xbf16, #tpu.memory_space<vmem>>, vector<400x32xbf16>,
    %c0_9 = arith.constant 0 : index
    %c0_10 = arith.constant 0 : index
    %11 = vector.load %arg9[%c0_9, %c0_10] : memref<400x32xbf16, #tpu.memory_space<vmem>>, vector<337x32xbf16>
    %c0_11 = arith.constant 0 : index
    %c0_12 = arith.constant 0 : index
    %c0_13 = arith.constant 0 : index
    %12 = vector.load %arg4[%c0_11, %c0_12, %c0_13] : memref<16x32x64xbf16, #tpu.memory_space<vmem>>, vector<1x32x64xbf16>
    %13 = vector.shape_cast %12 : vector<1x32x64xbf16> to vector<32x64xbf16>
    %cst_14 = arith.constant dense<0.000000e+00> : vector<337x64xf32>
    %14 = tpu.matmul %11, %13, %cst_14 {dimension_numbers = #tpu.dot_dimension_numbers<[1], [0], [0], [1], [0, 0, 1, 1], [], []>} : vector<337x32xbf16>, vector<32x64xbf16>, vector<337x64xf32> -> vector<337x64xf32>
    %c1 = arith.constant 1 : index
    %c0_15 = arith.constant 0 : index
    %15 = vector.load %arg9[%c1, %c0_15] : memref<400x32xbf16, #tpu.memory_space<vmem>>, vector<337x32xbf16>
    %c1_16 = arith.constant 1 : index
    %c0_17 = arith.constant 0 : index
    %c0_18 = arith.constant 0 : index
    %16 = vector.load %arg4[%c1_16, %c0_17, %c0_18] : memref<16x32x64xbf16, #tpu.memory_space<vmem>>, vector<1x32x64xbf16>
    %17 = vector.shape_cast %16 : vector<1x32x64xbf16> to vector<32x64xbf16>
    %cst_19 = arith.constant dense<0.000000e+00> : vector<337x64xf32>
    %18 = tpu.matmul %15, %17, %cst_19 {dimension_numbers = #tpu.dot_dimension_numbers<[1], [0], [0], [1], [0, 0, 1, 1], [], []>} : vector<337x32xbf16>, vector<32x64xbf16>, vector<337x64xf32> -> vector<337x64xf32>
    %19 = arith.addf %14, %18 : vector<337x64xf32>
    %c2 = arith.constant 2 : index
    %c0_20 = arith.constant 0 : index
    %20 = vector.load %arg9[%c2, %c0_20] : memref<400x32xbf16, #tpu.memory_space<vmem>>, vector<337x32xbf16>
    %c2_21 = arith.constant 2 : index
    %c0_22 = arith.constant 0 : index
    %c0_23 = arith.constant 0 : index
    %21 = vector.load %arg4[%c2_21, %c0_22, %c0_23] : memref<16x32x64xbf16, #tpu.memory_space<vmem>>, vector<1x32x64xbf16>
    %22 = vector.shape_cast %21 : vector<1x32x64xbf16> to vector<32x64xbf16>
    %cst_24 = arith.constant dense<0.000000e+00> : vector<337x64xf32>
    %23 = tpu.matmul %20, %22, %cst_24 {dimension_numbers = #tpu.dot_dimension_numbers<[1], [0], [0], [1], [0, 0, 1, 1], [], []>} : vector<337x32xbf16>, vector<32x64xbf16>, vector<337x64xf32> -> vector<337x64xf32>
    %24 = arith.addf %19, %23 : vector<337x64xf32>
    %c3 = arith.constant 3 : index
    %c0_25 = arith.constant 0 : index
    %25 = vector.load %arg9[%c3, %c0_25] : memref<400x32xbf16, #tpu.memory_space<vmem>>, vector<337x32xbf16>
    %c3_26 = arith.constant 3 : index
    %c0_27 = arith.constant 0 : index
    %c0_28 = arith.constant 0 : index
    %26 = vector.load %arg4[%c3_26, %c0_27, %c0_28] : memref<16x32x64xbf16, #tpu.memory_space<vmem>>, vector<1x32x64xbf16>
    %27 = vector.shape_cast %26 : vector<1x32x64xbf16> to vector<32x64xbf16>
    %cst_29 = arith.constant dense<0.000000e+00> : vector<337x64xf32>
    %28 = tpu.matmul %25, %27, %cst_29 {dimension_numbers = #tpu.dot_dimension_numbers<[1], [0], [0], [1], [0, 0, 1, 1], [], []>} : vector<337x32xbf16>, vector<32x64xbf16>, vector<337x64xf32> -> vector<337x64xf32>
    %29 = arith.addf %24, %28 : vector<337x64xf32>
    %c20 = arith.constant 20 : index
    %c0_30 = arith.constant 0 : index
    %30 = vector.load %arg9[%c20, %c0_30] : memref<400x32xbf16, #tpu.memory_space<vmem>>, vector<337x32xbf16>
    %c4 = arith.constant 4 : index
    %c0_31 = arith.constant 0 : index
    %c0_32 = arith.constant 0 : index
    %31 = vector.load %arg4[%c4, %c0_31, %c0_32] : memref<16x32x64xbf16, #tpu.memory_space<vmem>>, vector<1x32x64xbf16>
    %32 = vector.shape_cast %31 : vector<1x32x64xbf16> to vector<32x64xbf16>
    %cst_33 = arith.constant dense<0.000000e+00> : vector<337x64xf32>
    %33 = tpu.matmul %30, %32, %cst_33 {dimension_numbers = #tpu.dot_dimension_numbers<[1], [0], [0], [1], [0, 0, 1, 1], [], []>} : vector<337x32xbf16>, vector<32x64xbf16>, vector<337x64xf32> -> vector<337x64xf32>
    %34 = arith.addf %29, %33 : vector<337x64xf32>
    %c21 = arith.constant 21 : index
    %c0_34 = arith.constant 0 : index
    %35 = vector.load %arg9[%c21, %c0_34] : memref<400x32xbf16, #tpu.memory_space<vmem>>, vector<337x32xbf16>
    %c5 = arith.constant 5 : index
    %c0_35 = arith.constant 0 : index
    %c0_36 = arith.constant 0 : index
    %36 = vector.load %arg4[%c5, %c0_35, %c0_36] : memref<16x32x64xbf16, #tpu.memory_space<vmem>>, vector<1x32x64xbf16>
    %37 = vector.shape_cast %36 : vector<1x32x64xbf16> to vector<32x64xbf16>
    %cst_37 = arith.constant dense<0.000000e+00> : vector<337x64xf32>
    %38 = tpu.matmul %35, %37, %cst_37 {dimension_numbers = #tpu.dot_dimension_numbers<[1], [0], [0], [1], [0, 0, 1, 1], [], []>} : vector<337x32xbf16>, vector<32x64xbf16>, vector<337x64xf32> -> vector<337x64xf32>
    %39 = arith.addf %34, %38 : vector<337x64xf32>
    %c22 = arith.constant 22 : index
    %c0_38 = arith.constant 0 : index
    %40 = vector.load %arg9[%c22, %c0_38] : memref<400x32xbf16, #tpu.memory_space<vmem>>, vector<337x32xbf16>
    %c6 = arith.constant 6 : index
    %c0_39 = arith.constant 0 : index
    %c0_40 = arith.constant 0 : index
    %41 = vector.load %arg4[%c6, %c0_39, %c0_40] : memref<16x32x64xbf16, #tpu.memory_space<vmem>>, vector<1x32x64xbf16>
    %42 = vector.shape_cast %41 : vector<1x32x64xbf16> to vector<32x64xbf16>
    %cst_41 = arith.constant dense<0.000000e+00> : vector<337x64xf32>
    %43 = tpu.matmul %40, %42, %cst_41 {dimension_numbers = #tpu.dot_dimension_numbers<[1], [0], [0], [1], [0, 0, 1, 1], [], []>} : vector<337x32xbf16>, vector<32x64xbf16>, vector<337x64xf32> -> vector<337x64xf32>
    %44 = arith.addf %39, %43 : vector<337x64xf32>
    %c23 = arith.constant 23 : index
    %c0_42 = arith.constant 0 : index
    %45 = vector.load %arg9[%c23, %c0_42] : memref<400x32xbf16, #tpu.memory_space<vmem>>, vector<337x32xbf16>
    %c7 = arith.constant 7 : index
    %c0_43 = arith.constant 0 : index
    %c0_44 = arith.constant 0 : index
    %46 = vector.load %arg4[%c7, %c0_43, %c0_44] : memref<16x32x64xbf16, #tpu.memory_space<vmem>>, vector<1x32x64xbf16>
    %47 = vector.shape_cast %46 : vector<1x32x64xbf16> to vector<32x64xbf16>
    %cst_45 = arith.constant dense<0.000000e+00> : vector<337x64xf32>
    %48 = tpu.matmul %45, %47, %cst_45 {dimension_numbers = #tpu.dot_dimension_numbers<[1], [0], [0], [1], [0, 0, 1, 1], [], []>} : vector<337x32xbf16>, vector<32x64xbf16>, vector<337x64xf32> -> vector<337x64xf32>
    %49 = arith.addf %44, %48 : vector<337x64xf32>
    %c40 = arith.constant 40 : index
    %c0_46 = arith.constant 0 : index
    %50 = vector.load %arg9[%c40, %c0_46] : memref<400x32xbf16, #tpu.memory_space<vmem>>, vector<337x32xbf16>
    %c8 = arith.constant 8 : index
    %c0_47 = arith.constant 0 : index
    %c0_48 = arith.constant 0 : index
    %51 = vector.load %arg4[%c8, %c0_47, %c0_48] : memref<16x32x64xbf16, #tpu.memory_space<vmem>>, vector<1x32x64xbf16>
    %52 = vector.shape_cast %51 : vector<1x32x64xbf16> to vector<32x64xbf16>
    %cst_49 = arith.constant dense<0.000000e+00> : vector<337x64xf32>
    %53 = tpu.matmul %50, %52, %cst_49 {dimension_numbers = #tpu.dot_dimension_numbers<[1], [0], [0], [1], [0, 0, 1, 1], [], []>} : vector<337x32xbf16>, vector<32x64xbf16>, vector<337x64xf32> -> vector<337x64xf32>
    %54 = arith.addf %49, %53 : vector<337x64xf32>
    %c41 = arith.constant 41 : index
    %c0_50 = arith.constant 0 : index
    %55 = vector.load %arg9[%c41, %c0_50] : memref<400x32xbf16, #tpu.memory_space<vmem>>, vector<337x32xbf16>
    %c9 = arith.constant 9 : index
    %c0_51 = arith.constant 0 : index
    %c0_52 = arith.constant 0 : index
    %56 = vector.load %arg4[%c9, %c0_51, %c0_52] : memref<16x32x64xbf16, #tpu.memory_space<vmem>>, vector<1x32x64xbf16>
    %57 = vector.shape_cast %56 : vector<1x32x64xbf16> to vector<32x64xbf16>
    %cst_53 = arith.constant dense<0.000000e+00> : vector<337x64xf32>
    %58 = tpu.matmul %55, %57, %cst_53 {dimension_numbers = #tpu.dot_dimension_numbers<[1], [0], [0], [1], [0, 0, 1, 1], [], []>} : vector<337x32xbf16>, vector<32x64xbf16>, vector<337x64xf32> -> vector<337x64xf32>
    %59 = arith.addf %54, %58 : vector<337x64xf32>
    %c42 = arith.constant 42 : index
    %c0_54 = arith.constant 0 : index
    %60 = vector.load %arg9[%c42, %c0_54] : memref<400x32xbf16, #tpu.memory_space<vmem>>, vector<337x32xbf16>
    %c10 = arith.constant 10 : index
    %c0_55 = arith.constant 0 : index
    %c0_56 = arith.constant 0 : index
    %61 = vector.load %arg4[%c10, %c0_55, %c0_56] : memref<16x32x64xbf16, #tpu.memory_space<vmem>>, vector<1x32x64xbf16>
    %62 = vector.shape_cast %61 : vector<1x32x64xbf16> to vector<32x64xbf16>
    %cst_57 = arith.constant dense<0.000000e+00> : vector<337x64xf32>
    %63 = tpu.matmul %60, %62, %cst_57 {dimension_numbers = #tpu.dot_dimension_numbers<[1], [0], [0], [1], [0, 0, 1, 1], [], []>} : vector<337x32xbf16>, vector<32x64xbf16>, vector<337x64xf32> -> vector<337x64xf32>
    %64 = arith.addf %59, %63 : vector<337x64xf32>
    %c43 = arith.constant 43 : index
    %c0_58 = arith.constant 0 : index
    %65 = vector.load %arg9[%c43, %c0_58] : memref<400x32xbf16, #tpu.memory_space<vmem>>, vector<337x32xbf16>
    %c11 = arith.constant 11 : index
    %c0_59 = arith.constant 0 : index
    %c0_60 = arith.constant 0 : index
    %66 = vector.load %arg4[%c11, %c0_59, %c0_60] : memref<16x32x64xbf16, #tpu.memory_space<vmem>>, vector<1x32x64xbf16>
    %67 = vector.shape_cast %66 : vector<1x32x64xbf16> to vector<32x64xbf16>
    %cst_61 = arith.constant dense<0.000000e+00> : vector<337x64xf32>
    %68 = tpu.matmul %65, %67, %cst_61 {dimension_numbers = #tpu.dot_dimension_numbers<[1], [0], [0], [1], [0, 0, 1, 1], [], []>} : vector<337x32xbf16>, vector<32x64xbf16>, vector<337x64xf32> -> vector<337x64xf32>
    %69 = arith.addf %64, %68 : vector<337x64xf32>
    %c60 = arith.constant 60 : index
    %c0_62 = arith.constant 0 : index
    %70 = vector.load %arg9[%c60, %c0_62] : memref<400x32xbf16, #tpu.memory_space<vmem>>, vector<337x32xbf16>
    %c12 = arith.constant 12 : index
    %c0_63 = arith.constant 0 : index
    %c0_64 = arith.constant 0 : index
    %71 = vector.load %arg4[%c12, %c0_63, %c0_64] : memref<16x32x64xbf16, #tpu.memory_space<vmem>>, vector<1x32x64xbf16>
    %72 = vector.shape_cast %71 : vector<1x32x64xbf16> to vector<32x64xbf16>
    %cst_65 = arith.constant dense<0.000000e+00> : vector<337x64xf32>
    %73 = tpu.matmul %70, %72, %cst_65 {dimension_numbers = #tpu.dot_dimension_numbers<[1], [0], [0], [1], [0, 0, 1, 1], [], []>} : vector<337x32xbf16>, vector<32x64xbf16>, vector<337x64xf32> -> vector<337x64xf32>
    %74 = arith.addf %69, %73 : vector<337x64xf32>
    %c61 = arith.constant 61 : index
    %c0_66 = arith.constant 0 : index
    %75 = vector.load %arg9[%c61, %c0_66] : memref<400x32xbf16, #tpu.memory_space<vmem>>, vector<337x32xbf16>
    %c13 = arith.constant 13 : index
    %c0_67 = arith.constant 0 : index
    %c0_68 = arith.constant 0 : index
    %76 = vector.load %arg4[%c13, %c0_67, %c0_68] : memref<16x32x64xbf16, #tpu.memory_space<vmem>>, vector<1x32x64xbf16>
    %77 = vector.shape_cast %76 : vector<1x32x64xbf16> to vector<32x64xbf16>
    %cst_69 = arith.constant dense<0.000000e+00> : vector<337x64xf32>
    %78 = tpu.matmul %75, %77, %cst_69 {dimension_numbers = #tpu.dot_dimension_numbers<[1], [0], [0], [1], [0, 0, 1, 1], [], []>} : vector<337x32xbf16>, vector<32x64xbf16>, vector<337x64xf32> -> vector<337x64xf32>
    %79 = arith.addf %74, %78 : vector<337x64xf32>
    %c62 = arith.constant 62 : index
    %c0_70 = arith.constant 0 : index
    %80 = vector.load %arg9[%c62, %c0_70] : memref<400x32xbf16, #tpu.memory_space<vmem>>, vector<337x32xbf16>
    %c14 = arith.constant 14 : index
    %c0_71 = arith.constant 0 : index
    %c0_72 = arith.constant 0 : index
    %81 = vector.load %arg4[%c14, %c0_71, %c0_72] : memref<16x32x64xbf16, #tpu.memory_space<vmem>>, vector<1x32x64xbf16>
    %82 = vector.shape_cast %81 : vector<1x32x64xbf16> to vector<32x64xbf16>
    %cst_73 = arith.constant dense<0.000000e+00> : vector<337x64xf32>
    %83 = tpu.matmul %80, %82, %cst_73 {dimension_numbers = #tpu.dot_dimension_numbers<[1], [0], [0], [1], [0, 0, 1, 1], [], []>} : vector<337x32xbf16>, vector<32x64xbf16>, vector<337x64xf32> -> vector<337x64xf32>
    %84 = arith.addf %79, %83 : vector<337x64xf32>
    %c63 = arith.constant 63 : index
    %c0_74 = arith.constant 0 : index
    %85 = vector.load %arg9[%c63, %c0_74] : memref<400x32xbf16, #tpu.memory_space<vmem>>, vector<337x32xbf16>
    %c15 = arith.constant 15 : index
    %c0_75 = arith.constant 0 : index
    %c0_76 = arith.constant 0 : index
    %86 = vector.load %arg4[%c15, %c0_75, %c0_76] : memref<16x32x64xbf16, #tpu.memory_space<vmem>>, vector<1x32x64xbf16>
    %87 = vector.shape_cast %86 : vector<1x32x64xbf16> to vector<32x64xbf16>
    %cst_77 = arith.constant dense<0.000000e+00> : vector<337x64xf32>
    %88 = tpu.matmul %85, %87, %cst_77 {dimension_numbers = #tpu.dot_dimension_numbers<[1], [0], [0], [1], [0, 0, 1, 1], [], []>} : vector<337x32xbf16>, vector<32x64xbf16>, vector<337x64xf32> -> vector<337x64xf32>
    %89 = arith.addf %84, %88 : vector<337x64xf32>
    %c0_78 = arith.constant 0 : index
    %c0_79 = arith.constant 0 : index
    %90 = vector.load %arg5[%c0_78, %c0_79] : memref<1x64xf32, #tpu.memory_space<vmem>>, vector<1x64xf32>
    %91 = vector.broadcast %90 : vector<1x64xf32> to vector<337x64xf32>
    %92 = arith.addf %89, %91 : vector<337x64xf32>
    %cst_80 = arith.constant 0.000000e+00 : f32
    %93 = vector.broadcast %cst_80 : f32 to vector<337x64xf32>
    %94 = arith.maximumf %92, %93 : vector<337x64xf32>
    %95 = arith.truncf %94 : vector<337x64xf32> to vector<337x64xbf16>
    %c0_81 = arith.constant 0 : index
    %c0_82 = arith.constant 0 : index
    %96 = vector.load %arg10[%c0_81, %c0_82] : memref<337x64xbf16, #tpu.memory_space<vmem>>, vector<337x64xbf16>
    tpu.vector_store %arg10[%c0_81, %c0_82], %95 {strides = array<i32>} : memref<337x64xbf16, #tpu.memory_space<vmem>>, vector<337x64xbf16>,
    %c0_83 = arith.constant 0 : index
    %c0_84 = arith.constant 0 : index
    %97 = vector.load %arg10[%c0_83, %c0_84] : memref<337x64xbf16, #tpu.memory_space<vmem>>, vector<253x64xbf16>
    %c0_85 = arith.constant 0 : index
    %c0_86 = arith.constant 0 : index
    %c0_87 = arith.constant 0 : index
    %98 = vector.load %arg6[%c0_85, %c0_86, %c0_87] : memref<9x64x64xbf16, #tpu.memory_space<vmem>>, vector<1x64x64xbf16>
    %99 = vector.shape_cast %98 : vector<1x64x64xbf16> to vector<64x64xbf16>
    %cst_88 = arith.constant dense<0.000000e+00> : vector<253x64xf32>
    %100 = tpu.matmul %97, %99, %cst_88 {dimension_numbers = #tpu.dot_dimension_numbers<[1], [0], [0], [1], [0, 0, 1, 1], [], []>} : vector<253x64xbf16>, vector<64x64xbf16>, vector<253x64xf32> -> vector<253x64xf32>
    %c2_89 = arith.constant 2 : index
    %c0_90 = arith.constant 0 : index
    %101 = vector.load %arg10[%c2_89, %c0_90] : memref<337x64xbf16, #tpu.memory_space<vmem>>, vector<253x64xbf16>
    %c1_91 = arith.constant 1 : index
    %c0_92 = arith.constant 0 : index
    %c0_93 = arith.constant 0 : index
    %102 = vector.load %arg6[%c1_91, %c0_92, %c0_93] : memref<9x64x64xbf16, #tpu.memory_space<vmem>>, vector<1x64x64xbf16>
    %103 = vector.shape_cast %102 : vector<1x64x64xbf16> to vector<64x64xbf16>
    %cst_94 = arith.constant dense<0.000000e+00> : vector<253x64xf32>
    %104 = tpu.matmul %101, %103, %cst_94 {dimension_numbers = #tpu.dot_dimension_numbers<[1], [0], [0], [1], [0, 0, 1, 1], [], []>} : vector<253x64xbf16>, vector<64x64xbf16>, vector<253x64xf32> -> vector<253x64xf32>
    %105 = arith.addf %100, %104 : vector<253x64xf32>
    %c4_95 = arith.constant 4 : index
    %c0_96 = arith.constant 0 : index
    %106 = vector.load %arg10[%c4_95, %c0_96] : memref<337x64xbf16, #tpu.memory_space<vmem>>, vector<253x64xbf16>
    %c2_97 = arith.constant 2 : index
    %c0_98 = arith.constant 0 : index
    %c0_99 = arith.constant 0 : index
    %107 = vector.load %arg6[%c2_97, %c0_98, %c0_99] : memref<9x64x64xbf16, #tpu.memory_space<vmem>>, vector<1x64x64xbf16>
    %108 = vector.shape_cast %107 : vector<1x64x64xbf16> to vector<64x64xbf16>
    %cst_100 = arith.constant dense<0.000000e+00> : vector<253x64xf32>
    %109 = tpu.matmul %106, %108, %cst_100 {dimension_numbers = #tpu.dot_dimension_numbers<[1], [0], [0], [1], [0, 0, 1, 1], [], []>} : vector<253x64xbf16>, vector<64x64xbf16>, vector<253x64xf32> -> vector<253x64xf32>
    %110 = arith.addf %105, %109 : vector<253x64xf32>
    %c40_101 = arith.constant 40 : index
    %c0_102 = arith.constant 0 : index
    %111 = vector.load %arg10[%c40_101, %c0_102] : memref<337x64xbf16, #tpu.memory_space<vmem>>, vector<253x64xbf16>
    %c3_103 = arith.constant 3 : index
    %c0_104 = arith.constant 0 : index
    %c0_105 = arith.constant 0 : index
    %112 = vector.load %arg6[%c3_103, %c0_104, %c0_105] : memref<9x64x64xbf16, #tpu.memory_space<vmem>>, vector<1x64x64xbf16>
    %113 = vector.shape_cast %112 : vector<1x64x64xbf16> to vector<64x64xbf16>
    %cst_106 = arith.constant dense<0.000000e+00> : vector<253x64xf32>
    %114 = tpu.matmul %111, %113, %cst_106 {dimension_numbers = #tpu.dot_dimension_numbers<[1], [0], [0], [1], [0, 0, 1, 1], [], []>} : vector<253x64xbf16>, vector<64x64xbf16>, vector<253x64xf32> -> vector<253x64xf32>
    %115 = arith.addf %110, %114 : vector<253x64xf32>
    %c42_107 = arith.constant 42 : index
    %c0_108 = arith.constant 0 : index
    %116 = vector.load %arg10[%c42_107, %c0_108] : memref<337x64xbf16, #tpu.memory_space<vmem>>, vector<253x64xbf16>
    %c4_109 = arith.constant 4 : index
    %c0_110 = arith.constant 0 : index
    %c0_111 = arith.constant 0 : index
    %117 = vector.load %arg6[%c4_109, %c0_110, %c0_111] : memref<9x64x64xbf16, #tpu.memory_space<vmem>>, vector<1x64x64xbf16>
    %118 = vector.shape_cast %117 : vector<1x64x64xbf16> to vector<64x64xbf16>
    %cst_112 = arith.constant dense<0.000000e+00> : vector<253x64xf32>
    %119 = tpu.matmul %116, %118, %cst_112 {dimension_numbers = #tpu.dot_dimension_numbers<[1], [0], [0], [1], [0, 0, 1, 1], [], []>} : vector<253x64xbf16>, vector<64x64xbf16>, vector<253x64xf32> -> vector<253x64xf32>
    %120 = arith.addf %115, %119 : vector<253x64xf32>
    %c44 = arith.constant 44 : index
    %c0_113 = arith.constant 0 : index
    %121 = vector.load %arg10[%c44, %c0_113] : memref<337x64xbf16, #tpu.memory_space<vmem>>, vector<253x64xbf16>
    %c5_114 = arith.constant 5 : index
    %c0_115 = arith.constant 0 : index
    %c0_116 = arith.constant 0 : index
    %122 = vector.load %arg6[%c5_114, %c0_115, %c0_116] : memref<9x64x64xbf16, #tpu.memory_space<vmem>>, vector<1x64x64xbf16>
    %123 = vector.shape_cast %122 : vector<1x64x64xbf16> to vector<64x64xbf16>
    %cst_117 = arith.constant dense<0.000000e+00> : vector<253x64xf32>
    %124 = tpu.matmul %121, %123, %cst_117 {dimension_numbers = #tpu.dot_dimension_numbers<[1], [0], [0], [1], [0, 0, 1, 1], [], []>} : vector<253x64xbf16>, vector<64x64xbf16>, vector<253x64xf32> -> vector<253x64xf32>
    %125 = arith.addf %120, %124 : vector<253x64xf32>
    %c80 = arith.constant 80 : index
    %c0_118 = arith.constant 0 : index
    %126 = vector.load %arg10[%c80, %c0_118] : memref<337x64xbf16, #tpu.memory_space<vmem>>, vector<253x64xbf16>
    %c6_119 = arith.constant 6 : index
    %c0_120 = arith.constant 0 : index
    %c0_121 = arith.constant 0 : index
    %127 = vector.load %arg6[%c6_119, %c0_120, %c0_121] : memref<9x64x64xbf16, #tpu.memory_space<vmem>>, vector<1x64x64xbf16>
    %128 = vector.shape_cast %127 : vector<1x64x64xbf16> to vector<64x64xbf16>
    %cst_122 = arith.constant dense<0.000000e+00> : vector<253x64xf32>
    %129 = tpu.matmul %126, %128, %cst_122 {dimension_numbers = #tpu.dot_dimension_numbers<[1], [0], [0], [1], [0, 0, 1, 1], [], []>} : vector<253x64xbf16>, vector<64x64xbf16>, vector<253x64xf32> -> vector<253x64xf32>
    %130 = arith.addf %125, %129 : vector<253x64xf32>
    %c82 = arith.constant 82 : index
    %c0_123 = arith.constant 0 : index
    %131 = vector.load %arg10[%c82, %c0_123] : memref<337x64xbf16, #tpu.memory_space<vmem>>, vector<253x64xbf16>
    %c7_124 = arith.constant 7 : index
    %c0_125 = arith.constant 0 : index
    %c0_126 = arith.constant 0 : index
    %132 = vector.load %arg6[%c7_124, %c0_125, %c0_126] : memref<9x64x64xbf16, #tpu.memory_space<vmem>>, vector<1x64x64xbf16>
    %133 = vector.shape_cast %132 : vector<1x64x64xbf16> to vector<64x64xbf16>
    %cst_127 = arith.constant dense<0.000000e+00> : vector<253x64xf32>
    %134 = tpu.matmul %131, %133, %cst_127 {dimension_numbers = #tpu.dot_dimension_numbers<[1], [0], [0], [1], [0, 0, 1, 1], [], []>} : vector<253x64xbf16>, vector<64x64xbf16>, vector<253x64xf32> -> vector<253x64xf32>
    %135 = arith.addf %130, %134 : vector<253x64xf32>
    %c84 = arith.constant 84 : index
    %c0_128 = arith.constant 0 : index
    %136 = vector.load %arg10[%c84, %c0_128] : memref<337x64xbf16, #tpu.memory_space<vmem>>, vector<253x64xbf16>
    %c8_129 = arith.constant 8 : index
    %c0_130 = arith.constant 0 : index
    %c0_131 = arith.constant 0 : index
    %137 = vector.load %arg6[%c8_129, %c0_130, %c0_131] : memref<9x64x64xbf16, #tpu.memory_space<vmem>>, vector<1x64x64xbf16>
    %138 = vector.shape_cast %137 : vector<1x64x64xbf16> to vector<64x64xbf16>
    %cst_132 = arith.constant dense<0.000000e+00> : vector<253x64xf32>
    %139 = tpu.matmul %136, %138, %cst_132 {dimension_numbers = #tpu.dot_dimension_numbers<[1], [0], [0], [1], [0, 0, 1, 1], [], []>} : vector<253x64xbf16>, vector<64x64xbf16>, vector<253x64xf32> -> vector<253x64xf32>
    %140 = arith.addf %135, %139 : vector<253x64xf32>
    %c0_133 = arith.constant 0 : index
    %c0_134 = arith.constant 0 : index
    %141 = vector.load %arg7[%c0_133, %c0_134] : memref<1x64xf32, #tpu.memory_space<vmem>>, vector<1x64xf32>
    %142 = vector.broadcast %141 : vector<1x64xf32> to vector<253x64xf32>
    %143 = arith.addf %140, %142 : vector<253x64xf32>
    %cst_135 = arith.constant 0.000000e+00 : f32
    %144 = vector.broadcast %cst_135 : f32 to vector<253x64xf32>
    %145 = arith.maximumf %143, %144 : vector<253x64xf32>
    %146 = arith.truncf %145 : vector<253x64xf32> to vector<253x64xbf16>
    %c0_136 = arith.constant 0 : index
    %c0_137 = arith.constant 0 : index
    %c0_138 = arith.constant 0 : index
    %147 = vector.load %arg8[%c0_136, %c0_137, %c0_138] : memref<1x253x64xbf16, #tpu.memory_space<vmem>>, vector<1x253x64xbf16>
    %148 = vector.shape_cast %147 : vector<1x253x64xbf16> to vector<253x64xbf16>
    %149 = vector.shape_cast %146 : vector<253x64xbf16> to vector<1x253x64xbf16>
    tpu.vector_store %arg8[%c0_136, %c0_137, %c0_138], %149 {strides = array<i32>} : memref<1x253x64xbf16, #tpu.memory_space<vmem>>, vector<1x253x64xbf16>,
    return
  }
  func.func @transform_0(%arg0: i32) -> (i32, i32, i32) {
    %c0_i32 = arith.constant 0 : i32
    %c0_i32_0 = arith.constant 0 : i32
    %c0_i32_1 = arith.constant 0 : i32
    return %arg0, %c0_i32, %c0_i32_0 : i32, i32, i32
  }
  func.func @transform_1(%arg0: i32) -> (i32, i32) {
    %c0_i32 = arith.constant 0 : i32
    %c0_i32_0 = arith.constant 0 : i32
    %c0_i32_1 = arith.constant 0 : i32
    return %c0_i32, %c0_i32_0 : i32, i32
  }
  func.func @transform_2(%arg0: i32) -> (i32, i32) {
    %c0_i32 = arith.constant 0 : i32
    %c0_i32_0 = arith.constant 0 : i32
    %c0_i32_1 = arith.constant 0 : i32
    return %c0_i32, %c0_i32_0 : i32, i32
  }
  func.func @transform_3(%arg0: i32) -> (i32, i32, i32) {
    %c0_i32 = arith.constant 0 : i32
    %c0_i32_0 = arith.constant 0 : i32
    %c0_i32_1 = arith.constant 0 : i32
    %c0_i32_2 = arith.constant 0 : i32
    return %c0_i32, %c0_i32_0, %c0_i32_1 : i32, i32, i32
  }
  func.func @transform_4(%arg0: i32) -> (i32, i32) {
    %c0_i32 = arith.constant 0 : i32
    %c0_i32_0 = arith.constant 0 : i32
    %c0_i32_1 = arith.constant 0 : i32
    return %c0_i32, %c0_i32_0 : i32, i32
  }
  func.func @transform_5(%arg0: i32) -> (i32, i32, i32) {
    %c0_i32 = arith.constant 0 : i32
    %c0_i32_0 = arith.constant 0 : i32
    %c0_i32_1 = arith.constant 0 : i32
    %c0_i32_2 = arith.constant 0 : i32
    return %c0_i32, %c0_i32_0, %c0_i32_1 : i32, i32, i32
  }
  func.func @transform_6(%arg0: i32) -> (i32, i32) {
    %c0_i32 = arith.constant 0 : i32
    %c0_i32_0 = arith.constant 0 : i32
    %c0_i32_1 = arith.constant 0 : i32
    return %c0_i32, %c0_i32_0 : i32, i32
  }
  func.func @transform_7(%arg0: i32) -> (i32, i32, i32) {
    %c0_i32 = arith.constant 0 : i32
    %c0_i32_0 = arith.constant 0 : i32
    %c0_i32_1 = arith.constant 0 : i32
    return %arg0, %c0_i32, %c0_i32_0 : i32, i32, i32
  }
}

module attributes {stable_mosaic.version = 11 : i64} {
  func.func @head_kernel(%arg0: i32, %arg1: memref<2x640xbf16, #tpu.memory_space<vmem>>, %arg2: memref<640x512xbf16, #tpu.memory_space<vmem>>, %arg3: memref<1x512xf32, #tpu.memory_space<vmem>>, %arg4: memref<512x128xbf16, #tpu.memory_space<vmem>>, %arg5: memref<1x128xf32, #tpu.memory_space<vmem>>, %arg6: memref<2x128xf32, #tpu.memory_space<vmem>>, %arg7: memref<2x512xf32, #tpu.memory_space<vmem>>) attributes {dimension_semantics = [#tpu.dimension_semantics<arbitrary>], iteration_bounds = array<i64: 5>, scalar_prefetch = 0 : i64, scratch_operands = 1 : i64, tpu.core_type = #tpu.core_type<tc>, window_params = [{transform_indices = @transform_0, window_bounds = array<i64: 2, 640>}, {transform_indices = @transform_1, window_bounds = array<i64: 640, 512>}, {pipeline_mode = #tpu.pipeline_mode<synchronous>, transform_indices = @transform_2, window_bounds = array<i64: 1, 512>}, {pipeline_mode = #tpu.pipeline_mode<synchronous>, transform_indices = @transform_3, window_bounds = array<i64: 512, 128>}, {pipeline_mode = #tpu.pipeline_mode<synchronous>, transform_indices = @transform_4, window_bounds = array<i64: 1, 128>}, {pipeline_mode = #tpu.pipeline_mode<synchronous>, transform_indices = @transform_5, window_bounds = array<i64: 2, 128>}]} {
    %c0_i32 = arith.constant 0 : i32
    %0 = arith.cmpi eq, %arg0, %c0_i32 : i32
    %1 = arith.extui %0 : i1 to i32
    %c0_i32_0 = arith.constant 0 : i32
    %2 = arith.cmpi ne, %1, %c0_i32_0 : i32
    scf.if %2 {
      %cst_9 = arith.constant 0.000000e+00 : f32
      %12 = vector.broadcast %cst_9 : f32 to vector<2x512xf32>
      %c0_10 = arith.constant 0 : index
      %c0_11 = arith.constant 0 : index
      %13 = vector.load %arg7[%c0_10, %c0_11] : memref<2x512xf32, #tpu.memory_space<vmem>>, vector<2x512xf32>
      tpu.vector_store %arg7[%c0_10, %c0_11], %12 {strides = array<i32>} : memref<2x512xf32, #tpu.memory_space<vmem>>, vector<2x512xf32>,
    } else {
    }
    %c0 = arith.constant 0 : index
    %c0_1 = arith.constant 0 : index
    %3 = vector.load %arg7[%c0, %c0_1] : memref<2x512xf32, #tpu.memory_space<vmem>>, vector<2x512xf32>
    %c0_2 = arith.constant 0 : index
    %c0_3 = arith.constant 0 : index
    %4 = vector.load %arg1[%c0_2, %c0_3] : memref<2x640xbf16, #tpu.memory_space<vmem>>, vector<2x640xbf16>
    %c0_4 = arith.constant 0 : index
    %c0_5 = arith.constant 0 : index
    %5 = vector.load %arg2[%c0_4, %c0_5] : memref<640x512xbf16, #tpu.memory_space<vmem>>, vector<640x512xbf16>
    %cst = arith.constant dense<0.000000e+00> : vector<2x512xf32>
    %6 = tpu.matmul %4, %5, %cst {dimension_numbers = #tpu.dot_dimension_numbers<[1], [0], [0], [1], [0, 0, 1, 1], [], []>} : vector<2x640xbf16>, vector<640x512xbf16>, vector<2x512xf32> -> vector<2x512xf32>
    %7 = arith.addf %3, %6 : vector<2x512xf32>
    %c0_6 = arith.constant 0 : index
    %c0_7 = arith.constant 0 : index
    %8 = vector.load %arg7[%c0_6, %c0_7] : memref<2x512xf32, #tpu.memory_space<vmem>>, vector<2x512xf32>
    tpu.vector_store %arg7[%c0_6, %c0_7], %7 {strides = array<i32>} : memref<2x512xf32, #tpu.memory_space<vmem>>, vector<2x512xf32>,
    %c4_i32 = arith.constant 4 : i32
    %9 = arith.cmpi eq, %arg0, %c4_i32 : i32
    %10 = arith.extui %9 : i1 to i32
    %c0_i32_8 = arith.constant 0 : i32
    %11 = arith.cmpi ne, %10, %c0_i32_8 : i32
    scf.if %11 {
      %c0_9 = arith.constant 0 : index
      %c0_10 = arith.constant 0 : index
      %12 = vector.load %arg7[%c0_9, %c0_10] : memref<2x512xf32, #tpu.memory_space<vmem>>, vector<2x512xf32>
      %c0_11 = arith.constant 0 : index
      %c0_12 = arith.constant 0 : index
      %13 = vector.load %arg3[%c0_11, %c0_12] : memref<1x512xf32, #tpu.memory_space<vmem>>, vector<1x512xf32>
      %14 = vector.broadcast %13 : vector<1x512xf32> to vector<2x512xf32>
      %15 = arith.addf %12, %14 : vector<2x512xf32>
      %cst_13 = arith.constant 0.000000e+00 : f32
      %16 = vector.broadcast %cst_13 : f32 to vector<2x512xf32>
      %17 = arith.maximumf %15, %16 : vector<2x512xf32>
      %18 = arith.truncf %17 : vector<2x512xf32> to vector<2x512xbf16>
      %c0_14 = arith.constant 0 : index
      %c0_15 = arith.constant 0 : index
      %19 = vector.load %arg4[%c0_14, %c0_15] : memref<512x128xbf16, #tpu.memory_space<vmem>>, vector<512x128xbf16>
      %cst_16 = arith.constant dense<0.000000e+00> : vector<2x128xf32>
      %20 = tpu.matmul %18, %19, %cst_16 {dimension_numbers = #tpu.dot_dimension_numbers<[1], [0], [0], [1], [0, 0, 1, 1], [], []>} : vector<2x512xbf16>, vector<512x128xbf16>, vector<2x128xf32> -> vector<2x128xf32>
      %c0_17 = arith.constant 0 : index
      %c0_18 = arith.constant 0 : index
      %21 = vector.load %arg5[%c0_17, %c0_18] : memref<1x128xf32, #tpu.memory_space<vmem>>, vector<1x128xf32>
      %22 = vector.broadcast %21 : vector<1x128xf32> to vector<2x128xf32>
      %23 = arith.addf %20, %22 : vector<2x128xf32>
      %c0_19 = arith.constant 0 : index
      %c0_20 = arith.constant 0 : index
      %24 = vector.load %arg6[%c0_19, %c0_20] : memref<2x128xf32, #tpu.memory_space<vmem>>, vector<2x128xf32>
      tpu.vector_store %arg6[%c0_19, %c0_20], %23 {strides = array<i32>} : memref<2x128xf32, #tpu.memory_space<vmem>>, vector<2x128xf32>,
    } else {
    }
    return
  }
  func.func @transform_0(%arg0: i32) -> (i32, i32) {
    %c0_i32 = arith.constant 0 : i32
    %c0_i32_0 = arith.constant 0 : i32
    return %c0_i32, %arg0 : i32, i32
  }
  func.func @transform_1(%arg0: i32) -> (i32, i32) {
    %c0_i32 = arith.constant 0 : i32
    %c0_i32_0 = arith.constant 0 : i32
    return %arg0, %c0_i32 : i32, i32
  }
  func.func @transform_2(%arg0: i32) -> (i32, i32) {
    %c0_i32 = arith.constant 0 : i32
    %c0_i32_0 = arith.constant 0 : i32
    %c0_i32_1 = arith.constant 0 : i32
    return %c0_i32, %c0_i32_0 : i32, i32
  }
  func.func @transform_3(%arg0: i32) -> (i32, i32) {
    %c0_i32 = arith.constant 0 : i32
    %c0_i32_0 = arith.constant 0 : i32
    %c0_i32_1 = arith.constant 0 : i32
    return %c0_i32, %c0_i32_0 : i32, i32
  }
  func.func @transform_4(%arg0: i32) -> (i32, i32) {
    %c0_i32 = arith.constant 0 : i32
    %c0_i32_0 = arith.constant 0 : i32
    %c0_i32_1 = arith.constant 0 : i32
    return %c0_i32, %c0_i32_0 : i32, i32
  }
  func.func @transform_5(%arg0: i32) -> (i32, i32) {
    %c0_i32 = arith.constant 0 : i32
    %c0_i32_0 = arith.constant 0 : i32
    %c0_i32_1 = arith.constant 0 : i32
    return %c0_i32, %c0_i32_0 : i32, i32
  }
}

</mosaic_0001>

<llo_original>
// kernel: cnn_forward.3
$region0: #{cnn_forward.3}
  #allocation0 [shape = 'u32[]', space=smem, size = 0x4, offset = 0x4, fixed_abs, tag = 'smem constant byte address 0x4 - core index']
  #allocation1 [shape = 'u32[72,128]{1,0:T(1,128)}', space=vmem, size = 0x9000, scoped, tag = 'internal scratch']
  #allocation2 [shape = 'f32[2,512]{1,0:T(2,128)}', space=vmem, size = 0x1000, scoped, tag = 'scratch operand']
  %s0 = inlined_call_operand.vmem [shape: bf16[2,3200], index: 0, kind: input, shape index: {}]
  %s1 = inlined_call_operand.vmem [shape: bf16[3200,512], index: 1, kind: input, shape index: {}]
  %s2 = inlined_call_operand.vmem [shape: f32[1,512], index: 2, kind: input, shape index: {}]
  %s3 = inlined_call_operand.vmem [shape: bf16[512,128], index: 3, kind: input, shape index: {}]
  %s4 = inlined_call_operand.vmem [shape: f32[1,128], index: 4, kind: input, shape index: {}]
  %s5 = inlined_call_operand.hbm [shape: f32[2,128], index: 5, kind: output, shape index: {}]
  %s6 = sld [smem:[#allocation0]]
  $region61: #{cnn_forward.3} parent=0
    _
  %s8 = ssub.s32 1, %s6
  %s9 = scalar_select 0, %s8, %s6
  $region1: #{cnn_forward.3} parent=0
    #allocation3 [shape = 'u8[1024]{0}', space=vmem, size = 0x400, scoped, tag = 'output window, operand 0, single buffered']
    #allocation4 [shape = 's32[2]{0}', space=sflag, size = 0x8, scoped, tag = 'scoped memory for cnn_forward.3']
    %10 = vsyncpa [#allocation4], 0
    loop: start=0, step=1, limit=7
    $region2: #{cnn_forward.3} parent=1 // loop_pre_header
      _
    $region3: #{cnn_forward.3} parent=1 // loop_header
      %s12 = sphi 0, %s16
      %p13 = scmp.ge.s32.totalorder %s12, 7
      %s22 = sphi 0, %s24
      %s25 = sphi 0, %s22
      %s26 = sphi 0, %s25
      %s42 = sphi 0, %s26
      %s48 = sphi 0, %s50
      %s51 = sphi 0, %s48
      %s52 = sphi 0, %s51
      %s68 = sphi 0, %s52
      %s72 = sphi 0, %s72
      %s74 = sphi 0, %s72
      %s75 = sphi 0, %s74
      %s89 = sphi 0, %s75
      %s93 = sphi 0, %s93
      %s95 = sphi 0, %s93
      %s96 = sphi 0, %s95
      %s110 = sphi 0, %s96
      %s114 = sphi 0, %s114
      %s116 = sphi 0, %s114
      %s117 = sphi 0, %s116
      %s131 = sphi 0, %s117
      %s135 = sphi 0, %s135
      %s137 = sphi 0, %s135
      %s138 = sphi 0, %s137
      %s152 = sphi 0, %s138
    $region4: #{cnn_forward.3} parent=1 // loop_header_branch
      %15 = sbr.rel (%p13) target = $region8
    $region5: #{cnn_forward.3} parent=1 // loop_body
      %s17 = ssub.s32 %s12, 1
      %s18 = ssub.s32 %s12, 2
      %s19 = sadd.s32 %s12, 1
      %s20 = ssub.s32 %s12, %s19
      %p21 = scmp.eq.s32.totalorder %s20, 0
      %s23 = sadd.s32 %s22, 1
      %s24 = scalar_select %p21, %s22, %s23
      %p27 = pneg %p21
      %p28 = scmp.eq.s32.totalorder %s12, 4
      %p29 = por %p27, %p28
      %p30 = scmp.ne.s32.totalorder %s22, %s25
      %p31 = scmp.eq.s32.totalorder %s12, 0
      %p32 = por %p30, %p31
      %p33 = scmp.ne.s32.totalorder %s22, %s25
      %p34 = scmp.eq.s32.totalorder %s17, 4
      %p35 = por %p33, %p34
      %p36 = scmp.ne.s32.totalorder %s25, %s26
      %p37 = scmp.eq.s32.totalorder %s17, 0
      %p38 = por %p36, %p37
      %p39 = scmp.ne.s32.totalorder %s25, %s26
      %p40 = scmp.eq.s32.totalorder %s18, 4
      %p41 = por %p39, %p40
      %p43 = scmp.ne.s32.totalorder %s26, %s42
      %p44 = scmp.eq.s32.totalorder %s18, 0
      %p45 = por %p43, %p44
      %s46 = ssub.s32 %s12, %s19
      %p47 = scmp.eq.s32.totalorder %s46, 0
      %s49 = sadd.s32 %s48, 1
      %s50 = scalar_select %p47, %s48, %s49
      %p53 = pneg %p47
      %p54 = scmp.eq.s32.totalorder %s12, 4
      %p55 = por %p53, %p54
      %p56 = scmp.ne.s32.totalorder %s48, %s51
      %p57 = scmp.eq.s32.totalorder %s12, 0
      %p58 = por %p56, %p57
      %p59 = scmp.ne.s32.totalorder %s48, %s51
      %p60 = scmp.eq.s32.totalorder %s17, 4
      %p61 = por %p59, %p60
      %p62 = scmp.ne.s32.totalorder %s51, %s52
      %p63 = scmp.eq.s32.totalorder %s17, 0
      %p64 = por %p62, %p63
      %p65 = scmp.ne.s32.totalorder %s51, %s52
      %p66 = scmp.eq.s32.totalorder %s18, 4
      %p67 = por %p65, %p66
      %p69 = scmp.ne.s32.totalorder %s52, %s68
      %p70 = scmp.eq.s32.totalorder %s18, 0
      %p71 = por %p69, %p70
      %s73 = sadd.s32 %s72, 1
      %p76 = scmp.eq.s32.totalorder %s12, 4
      %p77 = scmp.ne.s32.totalorder %s72, %s74
      %p78 = scmp.eq.s32.totalorder %s12, 0
      %p79 = por %p77, %p78
      %p80 = scmp.ne.s32.totalorder %s72, %s74
      %p81 = scmp.eq.s32.totalorder %s17, 4
      %p82 = por %p80, %p81
      %p83 = scmp.ne.s32.totalorder %s74, %s75
      %p84 = scmp.eq.s32.totalorder %s17, 0
      %p85 = por %p83, %p84
      %p86 = scmp.ne.s32.totalorder %s74, %s75
      %p87 = scmp.eq.s32.totalorder %s18, 4
      %p88 = por %p86, %p87
      %p90 = scmp.ne.s32.totalorder %s75, %s89
      %p91 = scmp.eq.s32.totalorder %s18, 0
      %p92 = por %p90, %p91
      %s94 = sadd.s32 %s93, 1
      %p97 = scmp.eq.s32.totalorder %s12, 4
      %p98 = scmp.ne.s32.totalorder %s93, %s95
      %p99 = scmp.eq.s32.totalorder %s12, 0
      %p100 = por %p98, %p99
      %p101 = scmp.ne.s32.totalorder %s93, %s95
      %p102 = scmp.eq.s32.totalorder %s17, 4
      %p103 = por %p101, %p102
      %p104 = scmp.ne.s32.totalorder %s95, %s96
      %p105 = scmp.eq.s32.totalorder %s17, 0
      %p106 = por %p104, %p105
      %p107 = scmp.ne.s32.totalorder %s95, %s96
      %p108 = scmp.eq.s32.totalorder %s18, 4
      %p109 = por %p107, %p108
      %p111 = scmp.ne.s32.totalorder %s96, %s110
      %p112 = scmp.eq.s32.totalorder %s18, 0
      %p113 = por %p111, %p112
      %s115 = sadd.s32 %s114, 1
      %p118 = scmp.eq.s32.totalorder %s12, 4
      %p119 = scmp.ne.s32.totalorder %s114, %s116
      %p120 = scmp.eq.s32.totalorder %s12, 0
      %p121 = por %p119, %p120
      %p122 = scmp.ne.s32.totalorder %s114, %s116
      %p123 = scmp.eq.s32.totalorder %s17, 4
      %p124 = por %p122, %p123
      %p125 = scmp.ne.s32.totalorder %s116, %s117
      %p126 = scmp.eq.s32.totalorder %s17, 0
      %p127 = por %p125, %p126
      %p128 = scmp.ne.s32.totalorder %s116, %s117
      %p129 = scmp.eq.s32.totalorder %s18, 4
      %p130 = por %p128, %p129
      %p132 = scmp.ne.s32.totalorder %s117, %s131
      %p133 = scmp.eq.s32.totalorder %s18, 0
      %p134 = por %p132, %p133
      %s136 = sadd.s32 %s135, 1
      %p139 = scmp.eq.s32.totalorder %s12, 4
      %p140 = scmp.ne.s32.totalorder %s135, %s137
      %p141 = scmp.eq.s32.totalorder %s12, 0
      %p142 = por %p140, %p141
      %p143 = scmp.ne.s32.totalorder %s135, %s137
      %p144 = scmp.eq.s32.totalorder %s17, 4
      %p145 = por %p143, %p144
      %p146 = scmp.ne.s32.totalorder %s137, %s138
      %p147 = scmp.eq.s32.totalorder %s17, 0
      %p148 = por %p146, %p147
      %p149 = scmp.ne.s32.totalorder %s137, %s138
      %p150 = scmp.eq.s32.totalorder %s18, 4
      %p151 = por %p149, %p150
      %p153 = scmp.ne.s32.totalorder %s138, %s152
      %p154 = scmp.eq.s32.totalorder %s18, 0
      %p155 = por %p153, %p154
      %p156 = scmp.le.s32.totalorder 1, %s12
      %p157 = scmp.lt.s32.totalorder %s12, 6
      %p158 = pnand %p156, %p157
      %p159 = pneg %p158
      // Predicated region
      $region9: #{cnn_forward.3} parent=5 // pred_check
        _
      $region10: #{cnn_forward.3} parent=5 // pred_check_branch
        %161 = sbr.rel (%p158) target = $region12
      $region11: #{cnn_forward.3} parent=5 // pred_region
        %s162 = ssub.s32 %s12, 1
        // Predicated region
        $region13: #{cnn_forward.3} parent=11 // pred_check
          %p163 = pneg %p85
        $region14: #{cnn_forward.3} parent=11 // pred_check_branch
          %165 = sbr.rel (%p163) target = $region16
        $region15: #{cnn_forward.3} parent=11 // pred_region
          _
        $region16: #{cnn_forward.3} parent=11 // pred_fallthru
          _
        // Predicated region
        $region17: #{cnn_forward.3} parent=11 // pred_check
          %p166 = pneg %p106
        $region18: #{cnn_forward.3} parent=11 // pred_check_branch
          %168 = sbr.rel (%p166) target = $region20
        $region19: #{cnn_forward.3} parent=11 // pred_region
          _
        $region20: #{cnn_forward.3} parent=11 // pred_fallthru
          _
        // Predicated region
        $region21: #{cnn_forward.3} parent=11 // pred_check
          %p169 = pneg %p127
        $region22: #{cnn_forward.3} parent=11 // pred_check_branch
          %171 = sbr.rel (%p169) target = $region24
        $region23: #{cnn_forward.3} parent=11 // pred_region
          _
        $region24: #{cnn_forward.3} parent=11 // pred_fallthru
          _
      $region12: #{cnn_forward.3} parent=5 // pred_fallthru
        _
      %p172 = scmp.lt.s32.totalorder %s12, 5
      // Predicated region
      $region25: #{cnn_forward.3} parent=5 // pred_check
        %p173 = pneg %p172
      $region26: #{cnn_forward.3} parent=5 // pred_check_branch
        %175 = sbr.rel (%p173) target = $region28
      $region27: #{cnn_forward.3} parent=5 // pred_region
        // Predicated region
        $region29: #{cnn_forward.3} parent=27 // pred_check
          %p176 = pneg %p32
        $region30: #{cnn_forward.3} parent=27 // pred_check_branch
          %178 = sbr.rel (%p176) target = $region32
        $region31: #{cnn_forward.3} parent=27 // pred_region
          %s179 = smul.u32 5, %s12
          %p180 = scmp.lt.s32.totalorder %s179, 24
          %s181 = scalar_select %p180, %s179, 24
          %s182 = scalar_lea.vmem %s0, %s181
          %s183 = smul.u32 5, %s12
        $region32: #{cnn_forward.3} parent=27 // pred_fallthru
          _
        // Predicated region
        $region33: #{cnn_forward.3} parent=27 // pred_check
          %p184 = pneg %p58
        $region34: #{cnn_forward.3} parent=27 // pred_check_branch
          %186 = sbr.rel (%p184) target = $region36
        $region35: #{cnn_forward.3} parent=27 // pred_region
          %s187 = smul.u32 80, %s12
          %p188 = scmp.lt.s32.totalorder %s187, 399
          %s189 = scalar_select %p188, %s187, 399
          %s190 = smul.addr %s189, 4
          %s191 = smul.addr %s190, 4
          %s192 = scalar_lea.vmem %s1, %s191
          %s193 = smul.u32 80, %s12
        $region36: #{cnn_forward.3} parent=27 // pred_fallthru
          _
      $region28: #{cnn_forward.3} parent=5 // pred_fallthru
        _
      %p194 = scmp.le.s32.totalorder 1, %s12
      %p195 = scmp.lt.s32.totalorder %s12, 6
      %p196 = pnand %p194, %p195
      %p197 = pneg %p196
      // Predicated region
      $region37: #{cnn_forward.3} parent=5 // pred_check
        _
      $region38: #{cnn_forward.3} parent=5 // pred_check_branch
        %199 = sbr.rel (%p196) target = $region40
      $region39: #{cnn_forward.3} parent=5 // pred_region
        %s200 = ssub.s32 %s12, 1
        %s201 = smul.u32 5, %s17
        %p202 = scmp.lt.s32.totalorder %s201, 24
        %s203 = scalar_select %p202, %s201, 24
        %s204 = scalar_lea.vmem %s0, %s203
        %p205 = pneg %p38
        %p206 = pneg %p35
        %s207 = smul.u32 80, %s17
        %p208 = scmp.lt.s32.totalorder %s207, 399
        %s209 = scalar_select %p208, %s207, 399
        %s210 = smul.addr %s209, 4
        %s211 = smul.addr %s210, 4
        %s212 = scalar_lea.vmem %s1, %s211
        %p213 = pneg %p64
        %p214 = pneg %p61
        %p215 = pneg %p85
        %p216 = pneg %p82
        %p217 = pneg %p106
        %p218 = pneg %p103
        %p219 = pneg %p127
        %p220 = pneg %p124
        %p221 = pneg %p148
        %p222 = pneg %p145
        %s223 = smul.u32 5, %s17
        %p224 = scmp.lt.s32.totalorder %s223, 24
        %s225 = scalar_select %p224, %s223, 24
        %s226 = scalar_lea.vmem %s0, %s225
        %s227 = smul.u32 5, %s17
        %s228 = smul.u32 80, %s17
        %p229 = scmp.lt.s32.totalorder %s228, 399
        %s230 = scalar_select %p229, %s228, 399
        %s231 = smul.addr %s230, 4
        %s232 = smul.addr %s231, 4
        %s233 = scalar_lea.vmem %s1, %s232
        %s234 = smul.u32 80, %s17
        %p235 = scmp.eq.s32.totalorder %s17, 0
        // Predicated region
        $region41: #{cnn_forward.3} parent=39 // pred_check
          %p236 = pneg %p235
        $region42: #{cnn_forward.3} parent=39 // pred_check_branch
          %238 = sbr.rel (%p236) target = $region44
        $region43: #{cnn_forward.3} parent=39 // pred_region
          %239 = vst [vmem:[#allocation2] sm:$0xff] 0.0
        $region44: #{cnn_forward.3} parent=39 // pred_fallthru
          _
        %v240 = vld [vmem:[#allocation2] sm:$0xff]
        %v241 = vld [vmem:[%s226] sm:$0x1f]
        %v242 = vld [vmem:[%s233] sm:$0xff]
        %v243 = vld [vmem:[%s233 + $0x8] sm:$0xff]
        %v244 = vld [vmem:[%s233 + $0x10] sm:$0xff]
        %v245 = vld [vmem:[%s233 + $0x18] sm:$0xff]
        %v246 = vld [vmem:[%s233 + $0x20] sm:$0xff]
        %v247 = vld [vmem:[%s233 + $0x28] sm:$0xff]
        %v248 = vld [vmem:[%s233 + $0x30] sm:$0xff]
        %v249 = vld [vmem:[%s233 + $0x38] sm:$0xff]
        %v250 = vld [vmem:[%s233 + $0x40] sm:$0xff]
        %v251 = vld [vmem:[%s233 + $0x48] sm:$0xff]
        %v252 = vld [vmem:[%s233 + $0x50] sm:$0xff]
        %v253 = vld [vmem:[%s233 + $0x58] sm:$0xff]
        %v254 = vld [vmem:[%s233 + $0x60] sm:$0xff]
        %v255 = vld [vmem:[%s233 + $0x68] sm:$0xff]
        %v256 = vld [vmem:[%s233 + $0x70] sm:$0xff]
        %v257 = vld [vmem:[%s233 + $0x78] sm:$0xff]
        %v258 = vld [vmem:[%s233 + $0x80] sm:$0xff]
        %v259 = vld [vmem:[%s233 + $0x88] sm:$0xff]
        %v260 = vld [vmem:[%s233 + $0x90] sm:$0xff]
        %v261 = vld [vmem:[%s233 + $0x98] sm:$0xff]
        %v262 = vld [vmem:[%s233 + $0xa0] sm:$0xff]
        %v263 = vld [vmem:[%s233 + $0xa8] sm:$0xff]
        %v264 = vld [vmem:[%s233 + $0xb0] sm:$0xff]
        %v265 = vld [vmem:[%s233 + $0xb8] sm:$0xff]
        %v266 = vld [vmem:[%s233 + $0xc0] sm:$0xff]
        %v267 = vld [vmem:[%s233 + $0xc8] sm:$0xff]
        %v268 = vld [vmem:[%s233 + $0xd0] sm:$0xff]
        %v269 = vld [vmem:[%s233 + $0xd8] sm:$0xff]
        %v270 = vld [vmem:[%s233 + $0xe0] sm:$0xff]
        %v271 = vld [vmem:[%s233 + $0xe8] sm:$0xff]
        %v272 = vld [vmem:[%s233 + $0xf0] sm:$0xff]
        %v273 = vld [vmem:[%s233 + $0xf8] sm:$0xff]
        %v274 = vld [vmem:[%s233 + $0x100] sm:$0xff]
        %v275 = vld [vmem:[%s233 + $0x108] sm:$0xff]
        %v276 = vld [vmem:[%s233 + $0x110] sm:$0xff]
        %v277 = vld [vmem:[%s233 + $0x118] sm:$0xff]
        %v278 = vld [vmem:[%s233 + $0x120] sm:$0xff]
        %v279 = vld [vmem:[%s233 + $0x128] sm:$0xff]
        %v280 = vld [vmem:[%s233 + $0x130] sm:$0xff]
        %v281 = vld [vmem:[%s233 + $0x138] sm:$0xff]
        %v282 = vld [vmem:[%s233 + $0x140] sm:$0xff]
        %v283 = vld [vmem:[%s233 + $0x148] sm:$0xff]
        %v284 = vld [vmem:[%s233 + $0x150] sm:$0xff]
        %v285 = vld [vmem:[%s233 + $0x158] sm:$0xff]
        %v286 = vld [vmem:[%s233 + $0x160] sm:$0xff]
        %v287 = vld [vmem:[%s233 + $0x168] sm:$0xff]
        %v288 = vld [vmem:[%s233 + $0x170] sm:$0xff]
        %v289 = vld [vmem:[%s233 + $0x178] sm:$0xff]
        %v290 = vld [vmem:[%s233 + $0x180] sm:$0xff]
        %v291 = vld [vmem:[%s233 + $0x188] sm:$0xff]
        %v292 = vld [vmem:[%s233 + $0x190] sm:$0xff]
        %v293 = vld [vmem:[%s233 + $0x198] sm:$0xff]
        %v294 = vld [vmem:[%s233 + $0x1a0] sm:$0xff]
        %v295 = vld [vmem:[%s233 + $0x1a8] sm:$0xff]
        %v296 = vld [vmem:[%s233 + $0x1b0] sm:$0xff]
        %v297 = vld [vmem:[%s233 + $0x1b8] sm:$0xff]
        %v298 = vld [vmem:[%s233 + $0x1c0] sm:$0xff]
        %v299 = vld [vmem:[%s233 + $0x1c8] sm:$0xff]
        %v300 = vld [vmem:[%s233 + $0x1d0] sm:$0xff]
        %v301 = vld [vmem:[%s233 + $0x1d8] sm:$0xff]
        %v302 = vld [vmem:[%s233 + $0x1e0] sm:$0xff]
        %v303 = vld [vmem:[%s233 + $0x1e8] sm:$0xff]
        %v304 = vld [vmem:[%s233 + $0x1f0] sm:$0xff]
        %v305 = vld [vmem:[%s233 + $0x1f8] sm:$0xff]
        %v306 = vld [vmem:[%s233 + $0x200] sm:$0xff]
        %v307 = vld [vmem:[%s233 + $0x208] sm:$0xff]
        %v308 = vld [vmem:[%s233 + $0x210] sm:$0xff]
        %v309 = vld [vmem:[%s233 + $0x218] sm:$0xff]
        %v310 = vld [vmem:[%s233 + $0x220] sm:$0xff]
        %v311 = vld [vmem:[%s233 + $0x228] sm:$0xff]
        %v312 = vld [vmem:[%s233 + $0x230] sm:$0xff]
        %v313 = vld [vmem:[%s233 + $0x238] sm:$0xff]
        %v314 = vld [vmem:[%s233 + $0x240] sm:$0xff]
        %v315 = vld [vmem:[%s233 + $0x248] sm:$0xff]
        %v316 = vld [vmem:[%s233 + $0x250] sm:$0xff]
        %v317 = vld [vmem:[%s233 + $0x258] sm:$0xff]
        %v318 = vld [vmem:[%s233 + $0x260] sm:$0xff]
        %v319 = vld [vmem:[%s233 + $0x268] sm:$0xff]
        %v320 = vld [vmem:[%s233 + $0x270] sm:$0xff]
        %v321 = vld [vmem:[%s233 + $0x278] sm:$0xff]
        %v322 = vld [vmem:[%s233 + $0x280] sm:$0xff]
        %v323 = vld [vmem:[%s233 + $0x288] sm:$0xff]
        %v324 = vld [vmem:[%s233 + $0x290] sm:$0xff]
        %v325 = vld [vmem:[%s233 + $0x298] sm:$0xff]
        %v326 = vld [vmem:[%s233 + $0x2a0] sm:$0xff]
        %v327 = vld [vmem:[%s233 + $0x2a8] sm:$0xff]
        %v328 = vld [vmem:[%s233 + $0x2b0] sm:$0xff]
        %v329 = vld [vmem:[%s233 + $0x2b8] sm:$0xff]
        %v330 = vld [vmem:[%s233 + $0x2c0] sm:$0xff]
        %v331 = vld [vmem:[%s233 + $0x2c8] sm:$0xff]
        %v332 = vld [vmem:[%s233 + $0x2d0] sm:$0xff]
        %v333 = vld [vmem:[%s233 + $0x2d8] sm:$0xff]
        %v334 = vld [vmem:[%s233 + $0x2e0] sm:$0xff]
        %v335 = vld [vmem:[%s233 + $0x2e8] sm:$0xff]
        %v336 = vld [vmem:[%s233 + $0x2f0] sm:$0xff]
        %v337 = vld [vmem:[%s233 + $0x2f8] sm:$0xff]
        %v338 = vld [vmem:[%s233 + $0x300] sm:$0xff]
        %v339 = vld [vmem:[%s233 + $0x308] sm:$0xff]
        %v340 = vld [vmem:[%s233 + $0x310] sm:$0xff]
        %v341 = vld [vmem:[%s233 + $0x318] sm:$0xff]
        %v342 = vld [vmem:[%s233 + $0x320] sm:$0xff]
        %v343 = vld [vmem:[%s233 + $0x328] sm:$0xff]
        %v344 = vld [vmem:[%s233 + $0x330] sm:$0xff]
        %v345 = vld [vmem:[%s233 + $0x338] sm:$0xff]
        %v346 = vld [vmem:[%s233 + $0x340] sm:$0xff]
        %v347 = vld [vmem:[%s233 + $0x348] sm:$0xff]
        %v348 = vld [vmem:[%s233 + $0x350] sm:$0xff]
        %v349 = vld [vmem:[%s233 + $0x358] sm:$0xff]
        %v350 = vld [vmem:[%s233 + $0x360] sm:$0xff]
        %v351 = vld [vmem:[%s233 + $0x368] sm:$0xff]
        %v352 = vld [vmem:[%s233 + $0x370] sm:$0xff]
        %v353 = vld [vmem:[%s233 + $0x378] sm:$0xff]
        %v354 = vld [vmem:[%s233 + $0x380] sm:$0xff]
        %v355 = vld [vmem:[%s233 + $0x388] sm:$0xff]
        %v356 = vld [vmem:[%s233 + $0x390] sm:$0xff]
        %v357 = vld [vmem:[%s233 + $0x398] sm:$0xff]
        %v358 = vld [vmem:[%s233 + $0x3a0] sm:$0xff]
        %v359 = vld [vmem:[%s233 + $0x3a8] sm:$0xff]
        %v360 = vld [vmem:[%s233 + $0x3b0] sm:$0xff]
        %v361 = vld [vmem:[%s233 + $0x3b8] sm:$0xff]
        %v362 = vld [vmem:[%s233 + $0x3c0] sm:$0xff]
        %v363 = vld [vmem:[%s233 + $0x3c8] sm:$0xff]
        %v364 = vld [vmem:[%s233 + $0x3d0] sm:$0xff]
        %v365 = vld [vmem:[%s233 + $0x3d8] sm:$0xff]
        %v366 = vld [vmem:[%s233 + $0x3e0] sm:$0xff]
        %v367 = vld [vmem:[%s233 + $0x3e8] sm:$0xff]
        %v368 = vld [vmem:[%s233 + $0x3f0] sm:$0xff]
        %v369 = vld [vmem:[%s233 + $0x3f8] sm:$0xff]
        %v370 = vld [vmem:[%s233 + $0x400] sm:$0xff]
        %v371 = vld [vmem:[%s233 + $0x408] sm:$0xff]
        %v372 = vld [vmem:[%s233 + $0x410] sm:$0xff]
        %v373 = vld [vmem:[%s233 + $0x418] sm:$0xff]
        %v374 = vld [vmem:[%s233 + $0x420] sm:$0xff]
        %v375 = vld [vmem:[%s233 + $0x428] sm:$0xff]
        %v376 = vld [vmem:[%s233 + $0x430] sm:$0xff]
        %v377 = vld [vmem:[%s233 + $0x438] sm:$0xff]
        %v378 = vld [vmem:[%s233 + $0x440] sm:$0xff]
        %v379 = vld [vmem:[%s233 + $0x448] sm:$0xff]
        %v380 = vld [vmem:[%s233 + $0x450] sm:$0xff]
        %v381 = vld [vmem:[%s233 + $0x458] sm:$0xff]
        %v382 = vld [vmem:[%s233 + $0x460] sm:$0xff]
        %v383 = vld [vmem:[%s233 + $0x468] sm:$0xff]
        %v384 = vld [vmem:[%s233 + $0x470] sm:$0xff]
        %v385 = vld [vmem:[%s233 + $0x478] sm:$0xff]
        %v386 = vld [vmem:[%s233 + $0x480] sm:$0xff]
        %v387 = vld [vmem:[%s233 + $0x488] sm:$0xff]
        %v388 = vld [vmem:[%s233 + $0x490] sm:$0xff]
        %v389 = vld [vmem:[%s233 + $0x498] sm:$0xff]
        %v390 = vld [vmem:[%s233 + $0x4a0] sm:$0xff]
        %v391 = vld [vmem:[%s233 + $0x4a8] sm:$0xff]
        %v392 = vld [vmem:[%s233 + $0x4b0] sm:$0xff]
        %v393 = vld [vmem:[%s233 + $0x4b8] sm:$0xff]
        %v394 = vld [vmem:[%s233 + $0x4c0] sm:$0xff]
        %v395 = vld [vmem:[%s233 + $0x4c8] sm:$0xff]
        %v396 = vld [vmem:[%s233 + $0x4d0] sm:$0xff]
        %v397 = vld [vmem:[%s233 + $0x4d8] sm:$0xff]
        %v398 = vld [vmem:[%s233 + $0x4e0] sm:$0xff]
        %v399 = vld [vmem:[%s233 + $0x4e8] sm:$0xff]
        %v400 = vld [vmem:[%s233 + $0x4f0] sm:$0xff]
        %v401 = vld [vmem:[%s233 + $0x4f8] sm:$0xff]
        %403 = vst [vmem:[#allocation1] ss:$9 sm:$0xff] %v241
        %v404 = vld [vmem:[#allocation1] sm:$0xff]
        %v405 = vld [vmem:[#allocation1 + $0x9] sm:$0xff]
        %v406 = vld [vmem:[#allocation1 + $0x12] sm:$0xff]
        %v407 = vld [vmem:[#allocation1 + $0x1b] sm:$0xff]
        %v408 = vld [vmem:[#allocation1 + $0x24] sm:$0xff]
        %v574 = vunpack.c.l.b16 %v242
        %v575 = vunpack.c.h.b16 %v242
        %v576 = vunpack.c.l.b16 %v243
        %v577 = vunpack.c.h.b16 %v243
        %v578 = vunpack.c.l.b16 %v244
        %v579 = vunpack.c.h.b16 %v244
        %v580 = vunpack.c.l.b16 %v245
        %v581 = vunpack.c.h.b16 %v245
        %v582 = vunpack.c.l.b16 %v246
        %v583 = vunpack.c.h.b16 %v246
        %v584 = vunpack.c.l.b16 %v247
        %v585 = vunpack.c.h.b16 %v247
        %v586 = vunpack.c.l.b16 %v248
        %v587 = vunpack.c.h.b16 %v248
        %v588 = vunpack.c.l.b16 %v249
        %v589 = vunpack.c.h.b16 %v249
        %v590 = vunpack.c.l.b16 %v250
        %v591 = vunpack.c.h.b16 %v250
        %v592 = vunpack.c.l.b16 %v251
        %v593 = vunpack.c.h.b16 %v251
        %v594 = vunpack.c.l.b16 %v252
        %v595 = vunpack.c.h.b16 %v252
        %v596 = vunpack.c.l.b16 %v253
        %v597 = vunpack.c.h.b16 %v253
        %v598 = vunpack.c.l.b16 %v254
        %v599 = vunpack.c.h.b16 %v254
        %v600 = vunpack.c.l.b16 %v255
        %v601 = vunpack.c.h.b16 %v255
        %v602 = vunpack.c.l.b16 %v256
        %v603 = vunpack.c.h.b16 %v256
        %v604 = vunpack.c.l.b16 %v257
        %v605 = vunpack.c.h.b16 %v257
        %v606 = vunpack.c.l.b16 %v258
        %v607 = vunpack.c.h.b16 %v258
        %v608 = vunpack.c.l.b16 %v259
        %v609 = vunpack.c.h.b16 %v259
        %v610 = vunpack.c.l.b16 %v260
        %v611 = vunpack.c.h.b16 %v260
        %v612 = vunpack.c.l.b16 %v261
        %v613 = vunpack.c.h.b16 %v261
        %v614 = vunpack.c.l.b16 %v262
        %v615 = vunpack.c.h.b16 %v262
        %v616 = vunpack.c.l.b16 %v263
        %v617 = vunpack.c.h.b16 %v263
        %v618 = vunpack.c.l.b16 %v264
        %v619 = vunpack.c.h.b16 %v264
        %v620 = vunpack.c.l.b16 %v265
        %v621 = vunpack.c.h.b16 %v265
        %v622 = vunpack.c.l.b16 %v266
        %v623 = vunpack.c.h.b16 %v266
        %v624 = vunpack.c.l.b16 %v267
        %v625 = vunpack.c.h.b16 %v267
        %v626 = vunpack.c.l.b16 %v268
        %v627 = vunpack.c.h.b16 %v268
        %v628 = vunpack.c.l.b16 %v269
        %v629 = vunpack.c.h.b16 %v269
        %v630 = vunpack.c.l.b16 %v270
        %v631 = vunpack.c.h.b16 %v270
        %v632 = vunpack.c.l.b16 %v271
        %v633 = vunpack.c.h.b16 %v271
        %v634 = vunpack.c.l.b16 %v272
        %v635 = vunpack.c.h.b16 %v272
        %v636 = vunpack.c.l.b16 %v273
        %v637 = vunpack.c.h.b16 %v273
        %v638 = vunpack.c.l.b16 %v274
        %v639 = vunpack.c.h.b16 %v274
        %v640 = vunpack.c.l.b16 %v275
        %v641 = vunpack.c.h.b16 %v275
        %v642 = vunpack.c.l.b16 %v276
        %v643 = vunpack.c.h.b16 %v276
        %v644 = vunpack.c.l.b16 %v277
        %v645 = vunpack.c.h.b16 %v277
        %v646 = vunpack.c.l.b16 %v278
        %v647 = vunpack.c.h.b16 %v278
        %v648 = vunpack.c.l.b16 %v279
        %v649 = vunpack.c.h.b16 %v279
        %v650 = vunpack.c.l.b16 %v280
        %v651 = vunpack.c.h.b16 %v280
        %v652 = vunpack.c.l.b16 %v281
        %v653 = vunpack.c.h.b16 %v281
        %v654 = vunpack.c.l.b16 %v282
        %v655 = vunpack.c.h.b16 %v282
        %v656 = vunpack.c.l.b16 %v283
        %v657 = vunpack.c.h.b16 %v283
        %v658 = vunpack.c.l.b16 %v284
        %v659 = vunpack.c.h.b16 %v284
        %v660 = vunpack.c.l.b16 %v285
        %v661 = vunpack.c.h.b16 %v285
        %v662 = vunpack.c.l.b16 %v286
        %v663 = vunpack.c.h.b16 %v286
        %v664 = vunpack.c.l.b16 %v287
        %v665 = vunpack.c.h.b16 %v287
        %v666 = vunpack.c.l.b16 %v288
        %v667 = vunpack.c.h.b16 %v288
        %v668 = vunpack.c.l.b16 %v289
        %v669 = vunpack.c.h.b16 %v289
        %v670 = vunpack.c.l.b16 %v290
        %v671 = vunpack.c.h.b16 %v290
        %v672 = vunpack.c.l.b16 %v291
        %v673 = vunpack.c.h.b16 %v291
        %v674 = vunpack.c.l.b16 %v292
        %v675 = vunpack.c.h.b16 %v292
        %v676 = vunpack.c.l.b16 %v293
        %v677 = vunpack.c.h.b16 %v293
        %v678 = vunpack.c.l.b16 %v294
        %v679 = vunpack.c.h.b16 %v294
        %v680 = vunpack.c.l.b16 %v295
        %v681 = vunpack.c.h.b16 %v295
        %v682 = vunpack.c.l.b16 %v296
        %v683 = vunpack.c.h.b16 %v296
        %v684 = vunpack.c.l.b16 %v297
        %v685 = vunpack.c.h.b16 %v297
        %v686 = vunpack.c.l.b16 %v298
        %v687 = vunpack.c.h.b16 %v298
        %v688 = vunpack.c.l.b16 %v299
        %v689 = vunpack.c.h.b16 %v299
        %v690 = vunpack.c.l.b16 %v300
        %v691 = vunpack.c.h.b16 %v300
        %v692 = vunpack.c.l.b16 %v301
        %v693 = vunpack.c.h.b16 %v301
        %v694 = vunpack.c.l.b16 %v302
        %v695 = vunpack.c.h.b16 %v302
        %v696 = vunpack.c.l.b16 %v303
        %v697 = vunpack.c.h.b16 %v303
        %v698 = vunpack.c.l.b16 %v304
        %v699 = vunpack.c.h.b16 %v304
        %v700 = vunpack.c.l.b16 %v305
        %v701 = vunpack.c.h.b16 %v305
        %v702 = vunpack.c.l.b16 %v306
        %v703 = vunpack.c.h.b16 %v306
        %v704 = vunpack.c.l.b16 %v307
        %v705 = vunpack.c.h.b16 %v307
        %v706 = vunpack.c.l.b16 %v308
        %v707 = vunpack.c.h.b16 %v308
        %v708 = vunpack.c.l.b16 %v309
        %v709 = vunpack.c.h.b16 %v309
        %v710 = vunpack.c.l.b16 %v310
        %v711 = vunpack.c.h.b16 %v310
        %v712 = vunpack.c.l.b16 %v311
        %v713 = vunpack.c.h.b16 %v311
        %v714 = vunpack.c.l.b16 %v312
        %v715 = vunpack.c.h.b16 %v312
        %v716 = vunpack.c.l.b16 %v313
        %v717 = vunpack.c.h.b16 %v313
        %v718 = vunpack.c.l.b16 %v314
        %v719 = vunpack.c.h.b16 %v314
        %v720 = vunpack.c.l.b16 %v315
        %v721 = vunpack.c.h.b16 %v315
        %v722 = vunpack.c.l.b16 %v316
        %v723 = vunpack.c.h.b16 %v316
        %v724 = vunpack.c.l.b16 %v317
        %v725 = vunpack.c.h.b16 %v317
        %v726 = vunpack.c.l.b16 %v318
        %v727 = vunpack.c.h.b16 %v318
        %v728 = vunpack.c.l.b16 %v319
        %v729 = vunpack.c.h.b16 %v319
        %v730 = vunpack.c.l.b16 %v320
        %v731 = vunpack.c.h.b16 %v320
        %v732 = vunpack.c.l.b16 %v321
        %v733 = vunpack.c.h.b16 %v321
        %v734 = vunpack.c.l.b16 %v322
        %v735 = vunpack.c.h.b16 %v322
        %v736 = vunpack.c.l.b16 %v323
        %v737 = vunpack.c.h.b16 %v323
        %v738 = vunpack.c.l.b16 %v324
        %v739 = vunpack.c.h.b16 %v324
        %v740 = vunpack.c.l.b16 %v325
        %v741 = vunpack.c.h.b16 %v325
        %v742 = vunpack.c.l.b16 %v326
        %v743 = vunpack.c.h.b16 %v326
        %v744 = vunpack.c.l.b16 %v327
        %v745 = vunpack.c.h.b16 %v327
        %v746 = vunpack.c.l.b16 %v328
        %v747 = vunpack.c.h.b16 %v328
        %v748 = vunpack.c.l.b16 %v329
        %v749 = vunpack.c.h.b16 %v329
        %v750 = vunpack.c.l.b16 %v330
        %v751 = vunpack.c.h.b16 %v330
        %v752 = vunpack.c.l.b16 %v331
        %v753 = vunpack.c.h.b16 %v331
        %v754 = vunpack.c.l.b16 %v332
        %v755 = vunpack.c.h.b16 %v332
        %v756 = vunpack.c.l.b16 %v333
        %v757 = vunpack.c.h.b16 %v333
        %v758 = vunpack.c.l.b16 %v334
        %v759 = vunpack.c.h.b16 %v334
        %v760 = vunpack.c.l.b16 %v335
        %v761 = vunpack.c.h.b16 %v335
        %v762 = vunpack.c.l.b16 %v336
        %v763 = vunpack.c.h.b16 %v336
        %v764 = vunpack.c.l.b16 %v337
        %v765 = vunpack.c.h.b16 %v337
        %v766 = vunpack.c.l.b16 %v338
        %v767 = vunpack.c.h.b16 %v338
        %v768 = vunpack.c.l.b16 %v339
        %v769 = vunpack.c.h.b16 %v339
        %v770 = vunpack.c.l.b16 %v340
        %v771 = vunpack.c.h.b16 %v340
        %v772 = vunpack.c.l.b16 %v341
        %v773 = vunpack.c.h.b16 %v341
        %v774 = vunpack.c.l.b16 %v342
        %v775 = vunpack.c.h.b16 %v342
        %v776 = vunpack.c.l.b16 %v343
        %v777 = vunpack.c.h.b16 %v343
        %v778 = vunpack.c.l.b16 %v344
        %v779 = vunpack.c.h.b16 %v344
        %v780 = vunpack.c.l.b16 %v345
        %v781 = vunpack.c.h.b16 %v345
        %v782 = vunpack.c.l.b16 %v346
        %v783 = vunpack.c.h.b16 %v346
        %v784 = vunpack.c.l.b16 %v347
        %v785 = vunpack.c.h.b16 %v347
        %v786 = vunpack.c.l.b16 %v348
        %v787 = vunpack.c.h.b16 %v348
        %v788 = vunpack.c.l.b16 %v349
        %v789 = vunpack.c.h.b16 %v349
        %v790 = vunpack.c.l.b16 %v350
        %v791 = vunpack.c.h.b16 %v350
        %v792 = vunpack.c.l.b16 %v351
        %v793 = vunpack.c.h.b16 %v351
        %v794 = vunpack.c.l.b16 %v352
        %v795 = vunpack.c.h.b16 %v352
        %v796 = vunpack.c.l.b16 %v353
        %v797 = vunpack.c.h.b16 %v353
        %v798 = vunpack.c.l.b16 %v354
        %v799 = vunpack.c.h.b16 %v354
        %v800 = vunpack.c.l.b16 %v355
        %v801 = vunpack.c.h.b16 %v355
        %v802 = vunpack.c.l.b16 %v356
        %v803 = vunpack.c.h.b16 %v356
        %v804 = vunpack.c.l.b16 %v357
        %v805 = vunpack.c.h.b16 %v357
        %v806 = vunpack.c.l.b16 %v358
        %v807 = vunpack.c.h.b16 %v358
        %v808 = vunpack.c.l.b16 %v359
        %v809 = vunpack.c.h.b16 %v359
        %v810 = vunpack.c.l.b16 %v360
        %v811 = vunpack.c.h.b16 %v360
        %v812 = vunpack.c.l.b16 %v361
        %v813 = vunpack.c.h.b16 %v361
        %v814 = vunpack.c.l.b16 %v362
        %v815 = vunpack.c.h.b16 %v362
        %v816 = vunpack.c.l.b16 %v363
        %v817 = vunpack.c.h.b16 %v363
        %v818 = vunpack.c.l.b16 %v364
        %v819 = vunpack.c.h.b16 %v364
        %v820 = vunpack.c.l.b16 %v365
        %v821 = vunpack.c.h.b16 %v365
        %v822 = vunpack.c.l.b16 %v366
        %v823 = vunpack.c.h.b16 %v366
        %v824 = vunpack.c.l.b16 %v367
        %v825 = vunpack.c.h.b16 %v367
        %v826 = vunpack.c.l.b16 %v368
        %v827 = vunpack.c.h.b16 %v368
        %v828 = vunpack.c.l.b16 %v369
        %v829 = vunpack.c.h.b16 %v369
        %v830 = vunpack.c.l.b16 %v370
        %v831 = vunpack.c.h.b16 %v370
        %v832 = vunpack.c.l.b16 %v371
        %v833 = vunpack.c.h.b16 %v371
        %v834 = vunpack.c.l.b16 %v372
        %v835 = vunpack.c.h.b16 %v372
        %v836 = vunpack.c.l.b16 %v373
        %v837 = vunpack.c.h.b16 %v373
        %v838 = vunpack.c.l.b16 %v374
        %v839 = vunpack.c.h.b16 %v374
        %v840 = vunpack.c.l.b16 %v375
        %v841 = vunpack.c.h.b16 %v375
        %v842 = vunpack.c.l.b16 %v376
        %v843 = vunpack.c.h.b16 %v376
        %v844 = vunpack.c.l.b16 %v377
        %v845 = vunpack.c.h.b16 %v377
        %v846 = vunpack.c.l.b16 %v378
        %v847 = vunpack.c.h.b16 %v378
        %v848 = vunpack.c.l.b16 %v379
        %v849 = vunpack.c.h.b16 %v379
        %v850 = vunpack.c.l.b16 %v380
        %v851 = vunpack.c.h.b16 %v380
        %v852 = vunpack.c.l.b16 %v381
        %v853 = vunpack.c.h.b16 %v381
        %v854 = vunpack.c.l.b16 %v382
        %v855 = vunpack.c.h.b16 %v382
        %v856 = vunpack.c.l.b16 %v383
        %v857 = vunpack.c.h.b16 %v383
        %v858 = vunpack.c.l.b16 %v384
        %v859 = vunpack.c.h.b16 %v384
        %v860 = vunpack.c.l.b16 %v385
        %v861 = vunpack.c.h.b16 %v385
        %v862 = vunpack.c.l.b16 %v386
        %v863 = vunpack.c.h.b16 %v386
        %v864 = vunpack.c.l.b16 %v387
        %v865 = vunpack.c.h.b16 %v387
        %v866 = vunpack.c.l.b16 %v388
        %v867 = vunpack.c.h.b16 %v388
        %v868 = vunpack.c.l.b16 %v389
        %v869 = vunpack.c.h.b16 %v389
        %v870 = vunpack.c.l.b16 %v390
        %v871 = vunpack.c.h.b16 %v390
        %v872 = vunpack.c.l.b16 %v391
        %v873 = vunpack.c.h.b16 %v391
        %v874 = vunpack.c.l.b16 %v392
        %v875 = vunpack.c.h.b16 %v392
        %v876 = vunpack.c.l.b16 %v393
        %v877 = vunpack.c.h.b16 %v393
        %v878 = vunpack.c.l.b16 %v394
        %v879 = vunpack.c.h.b16 %v394
        %v880 = vunpack.c.l.b16 %v395
        %v881 = vunpack.c.h.b16 %v395
        %v882 = vunpack.c.l.b16 %v396
        %v883 = vunpack.c.h.b16 %v396
        %v884 = vunpack.c.l.b16 %v397
        %v885 = vunpack.c.h.b16 %v397
        %v886 = vunpack.c.l.b16 %v398
        %v887 = vunpack.c.h.b16 %v398
        %v888 = vunpack.c.l.b16 %v399
        %v889 = vunpack.c.h.b16 %v399
        %v890 = vunpack.c.l.b16 %v400
        %v891 = vunpack.c.h.b16 %v400
        %v892 = vunpack.c.l.b16 %v401
        %v893 = vunpack.c.h.b16 %v401
        %v894 = vpack.c.b16 %v578, %v574
        %v895 = vpack.c.b16 %v579, %v575
        %v896 = vpack.c.b16 %v580, %v576
        %v897 = vpack.c.b16 %v581, %v577
        %v898 = vpack.c.b16 %v586, %v582
        %v899 = vpack.c.b16 %v587, %v583
        %v900 = vpack.c.b16 %v588, %v584
        %v901 = vpack.c.b16 %v589, %v585
        %v902 = vpack.c.b16 %v594, %v590
        %v903 = vpack.c.b16 %v595, %v591
        %v904 = vpack.c.b16 %v596, %v592
        %v905 = vpack.c.b16 %v597, %v593
        %v906 = vpack.c.b16 %v602, %v598
        %v907 = vpack.c.b16 %v603, %v599
        %v908 = vpack.c.b16 %v604, %v600
        %v909 = vpack.c.b16 %v605, %v601
        %v910 = vpack.c.b16 %v610, %v606
        %v911 = vpack.c.b16 %v611, %v607
        %v912 = vpack.c.b16 %v612, %v608
        %v913 = vpack.c.b16 %v613, %v609
        %v914 = vpack.c.b16 %v618, %v614
        %v915 = vpack.c.b16 %v619, %v615
        %v916 = vpack.c.b16 %v620, %v616
        %v917 = vpack.c.b16 %v621, %v617
        %v918 = vpack.c.b16 %v626, %v622
        %v919 = vpack.c.b16 %v627, %v623
        %v920 = vpack.c.b16 %v628, %v624
        %v921 = vpack.c.b16 %v629, %v625
        %v922 = vpack.c.b16 %v634, %v630
        %v923 = vpack.c.b16 %v635, %v631
        %v924 = vpack.c.b16 %v636, %v632
        %v925 = vpack.c.b16 %v637, %v633
        %v926 = vpack.c.b16 %v642, %v638
        %v927 = vpack.c.b16 %v643, %v639
        %v928 = vpack.c.b16 %v644, %v640
        %v929 = vpack.c.b16 %v645, %v641
        %v930 = vpack.c.b16 %v650, %v646
        %v931 = vpack.c.b16 %v651, %v647
        %v932 = vpack.c.b16 %v652, %v648
        %v933 = vpack.c.b16 %v653, %v649
        %v934 = vpack.c.b16 %v658, %v654
        %v935 = vpack.c.b16 %v659, %v655
        %v936 = vpack.c.b16 %v660, %v656
        %v937 = vpack.c.b16 %v661, %v657
        %v938 = vpack.c.b16 %v666, %v662
        %v939 = vpack.c.b16 %v667, %v663
        %v940 = vpack.c.b16 %v668, %v664
        %v941 = vpack.c.b16 %v669, %v665
        %v942 = vpack.c.b16 %v674, %v670
        %v943 = vpack.c.b16 %v675, %v671
        %v944 = vpack.c.b16 %v676, %v672
        %v945 = vpack.c.b16 %v677, %v673
        %v946 = vpack.c.b16 %v682, %v678
        %v947 = vpack.c.b16 %v683, %v679
        %v948 = vpack.c.b16 %v684, %v680
        %v949 = vpack.c.b16 %v685, %v681
        %v950 = vpack.c.b16 %v690, %v686
        %v951 = vpack.c.b16 %v691, %v687
        %v952 = vpack.c.b16 %v692, %v688
        %v953 = vpack.c.b16 %v693, %v689
        %v954 = vpack.c.b16 %v698, %v694
        %v955 = vpack.c.b16 %v699, %v695
        %v956 = vpack.c.b16 %v700, %v696
        %v957 = vpack.c.b16 %v701, %v697
        %v958 = vpack.c.b16 %v706, %v702
        %v959 = vpack.c.b16 %v707, %v703
        %v960 = vpack.c.b16 %v708, %v704
        %v961 = vpack.c.b16 %v709, %v705
        %v962 = vpack.c.b16 %v714, %v710
        %v963 = vpack.c.b16 %v715, %v711
        %v964 = vpack.c.b16 %v716, %v712
        %v965 = vpack.c.b16 %v717, %v713
        %v966 = vpack.c.b16 %v722, %v718
        %v967 = vpack.c.b16 %v723, %v719
        %v968 = vpack.c.b16 %v724, %v720
        %v969 = vpack.c.b16 %v725, %v721
        %v970 = vpack.c.b16 %v730, %v726
        %v971 = vpack.c.b16 %v731, %v727
        %v972 = vpack.c.b16 %v732, %v728
        %v973 = vpack.c.b16 %v733, %v729
        %v974 = vpack.c.b16 %v738, %v734
        %v975 = vpack.c.b16 %v739, %v735
        %v976 = vpack.c.b16 %v740, %v736
        %v977 = vpack.c.b16 %v741, %v737
        %v978 = vpack.c.b16 %v746, %v742
        %v979 = vpack.c.b16 %v747, %v743
        %v980 = vpack.c.b16 %v748, %v744
        %v981 = vpack.c.b16 %v749, %v745
        %v982 = vpack.c.b16 %v754, %v750
        %v983 = vpack.c.b16 %v755, %v751
        %v984 = vpack.c.b16 %v756, %v752
        %v985 = vpack.c.b16 %v757, %v753
        %v986 = vpack.c.b16 %v762, %v758
        %v987 = vpack.c.b16 %v763, %v759
        %v988 = vpack.c.b16 %v764, %v760
        %v989 = vpack.c.b16 %v765, %v761
        %v990 = vpack.c.b16 %v770, %v766
        %v991 = vpack.c.b16 %v771, %v767
        %v992 = vpack.c.b16 %v772, %v768
        %v993 = vpack.c.b16 %v773, %v769
        %v994 = vpack.c.b16 %v778, %v774
        %v995 = vpack.c.b16 %v779, %v775
        %v996 = vpack.c.b16 %v780, %v776
        %v997 = vpack.c.b16 %v781, %v777
        %v998 = vpack.c.b16 %v786, %v782
        %v999 = vpack.c.b16 %v787, %v783
        %v1000 = vpack.c.b16 %v788, %v784
        %v1001 = vpack.c.b16 %v789, %v785
        %v1002 = vpack.c.b16 %v794, %v790
        %v1003 = vpack.c.b16 %v795, %v791
        %v1004 = vpack.c.b16 %v796, %v792
        %v1005 = vpack.c.b16 %v797, %v793
        %v1006 = vpack.c.b16 %v802, %v798
        %v1007 = vpack.c.b16 %v803, %v799
        %v1008 = vpack.c.b16 %v804, %v800
        %v1009 = vpack.c.b16 %v805, %v801
        %v1010 = vpack.c.b16 %v810, %v806
        %v1011 = vpack.c.b16 %v811, %v807
        %v1012 = vpack.c.b16 %v812, %v808
        %v1013 = vpack.c.b16 %v813, %v809
        %v1014 = vpack.c.b16 %v818, %v814
        %v1015 = vpack.c.b16 %v819, %v815
        %v1016 = vpack.c.b16 %v820, %v816
        %v1017 = vpack.c.b16 %v821, %v817
        %v1018 = vpack.c.b16 %v826, %v822
        %v1019 = vpack.c.b16 %v827, %v823
        %v1020 = vpack.c.b16 %v828, %v824
        %v1021 = vpack.c.b16 %v829, %v825
        %v1022 = vpack.c.b16 %v834, %v830
        %v1023 = vpack.c.b16 %v835, %v831
        %v1024 = vpack.c.b16 %v836, %v832
        %v1025 = vpack.c.b16 %v837, %v833
        %v1026 = vpack.c.b16 %v842, %v838
        %v1027 = vpack.c.b16 %v843, %v839
        %v1028 = vpack.c.b16 %v844, %v840
        %v1029 = vpack.c.b16 %v845, %v841
        %v1030 = vpack.c.b16 %v850, %v846
        %v1031 = vpack.c.b16 %v851, %v847
        %v1032 = vpack.c.b16 %v852, %v848
        %v1033 = vpack.c.b16 %v853, %v849
        %v1034 = vpack.c.b16 %v858, %v854
        %v1035 = vpack.c.b16 %v859, %v855
        %v1036 = vpack.c.b16 %v860, %v856
        %v1037 = vpack.c.b16 %v861, %v857
        %v1038 = vpack.c.b16 %v866, %v862
        %v1039 = vpack.c.b16 %v867, %v863
        %v1040 = vpack.c.b16 %v868, %v864
        %v1041 = vpack.c.b16 %v869, %v865
        %v1042 = vpack.c.b16 %v874, %v870
        %v1043 = vpack.c.b16 %v875, %v871
        %v1044 = vpack.c.b16 %v876, %v872
        %v1045 = vpack.c.b16 %v877, %v873
        %v1046 = vpack.c.b16 %v882, %v878
        %v1047 = vpack.c.b16 %v883, %v879
        %v1048 = vpack.c.b16 %v884, %v880
        %v1049 = vpack.c.b16 %v885, %v881
        %v1050 = vpack.c.b16 %v890, %v886
        %v1051 = vpack.c.b16 %v891, %v887
        %v1052 = vpack.c.b16 %v892, %v888
        %v1053 = vpack.c.b16 %v893, %v889
        %1214 = vmatpush.bf16.msra.mxu0 %v922
        %1215 = vmatpush.bf16.msra.mxu0 %v918
        %1216 = vmatpush.bf16.msra.mxu0 %v914
        %1217 = vmatpush.bf16.msra.mxu0 %v910
        %1218 = vmatpush.bf16.msra.mxu0 %v906
        %1219 = vmatpush.bf16.msra.mxu0 %v902
        %1220 = vmatpush.bf16.msra.mxu0 %v898
        %1221 = vmatpush.bf16.msra.mxu0 %v894
        %1222 = vmatmul.bf16.gmra.mxu0 %v404
        %v1223 = vpop.f32.mrf.mxu0
        %v1224 = vadd.f32 0.0, %v1223
        %v1225 = vpop.f32.mrf.mxu0
        %1226 = vdwg.mxu0
        %1227 = vmatpush.bf16.msra.mxu0 %v954
        %1228 = vmatpush.bf16.msra.mxu0 %v950
        %1229 = vmatpush.bf16.msra.mxu0 %v946
        %1230 = vmatpush.bf16.msra.mxu0 %v942
        %1231 = vmatpush.bf16.msra.mxu0 %v938
        %1232 = vmatpush.bf16.msra.mxu0 %v934
        %1233 = vmatpush.bf16.msra.mxu0 %v930
        %1234 = vmatpush.bf16.msra.mxu0 %v926
        %1235 = vmatmul.bf16.gmra.mxu0 %v405
        %v1236 = vpop.f32.mrf.mxu0
        %v1237 = vadd.f32 %v1224, %v1236
        %v1238 = vpop.f32.mrf.mxu0
        %1239 = vdwg.mxu0
        %1240 = vmatpush.bf16.msra.mxu0 %v986
        %1241 = vmatpush.bf16.msra.mxu0 %v982
        %1242 = vmatpush.bf16.msra.mxu0 %v978
        %1243 = vmatpush.bf16.msra.mxu0 %v974
        %1244 = vmatpush.bf16.msra.mxu0 %v970
        %1245 = vmatpush.bf16.msra.mxu0 %v966
        %1246 = vmatpush.bf16.msra.mxu0 %v962
        %1247 = vmatpush.bf16.msra.mxu0 %v958
        %1248 = vmatmul.bf16.gmra.mxu0 %v406
        %v1249 = vpop.f32.mrf.mxu0
        %v1250 = vadd.f32 %v1237, %v1249
        %v1251 = vpop.f32.mrf.mxu0
        %1252 = vdwg.mxu0
        %1253 = vmatpush.bf16.msra.mxu0 %v1018
        %1254 = vmatpush.bf16.msra.mxu0 %v1014
        %1255 = vmatpush.bf16.msra.mxu0 %v1010
        %1256 = vmatpush.bf16.msra.mxu0 %v1006
        %1257 = vmatpush.bf16.msra.mxu0 %v1002
        %1258 = vmatpush.bf16.msra.mxu0 %v998
        %1259 = vmatpush.bf16.msra.mxu0 %v994
        %1260 = vmatpush.bf16.msra.mxu0 %v990
        %1261 = vmatmul.bf16.gmra.mxu0 %v407
        %v1262 = vpop.f32.mrf.mxu0
        %v1263 = vadd.f32 %v1250, %v1262
        %v1264 = vpop.f32.mrf.mxu0
        %1265 = vdwg.mxu0
        %1266 = vmatpush.bf16.msra.mxu0 %v1050
        %1267 = vmatpush.bf16.msra.mxu0 %v1046
        %1268 = vmatpush.bf16.msra.mxu0 %v1042
        %1269 = vmatpush.bf16.msra.mxu0 %v1038
        %1270 = vmatpush.bf16.msra.mxu0 %v1034
        %1271 = vmatpush.bf16.msra.mxu0 %v1030
        %1272 = vmatpush.bf16.msra.mxu0 %v1026
        %1273 = vmatpush.bf16.msra.mxu0 %v1022
        %1274 = vmatmul.bf16.gmra.mxu0 %v408
        %v1275 = vpop.f32.mrf.mxu0
        %v1276 = vadd.f32 %v1263, %v1275
        %v1277 = vpop.f32.mrf.mxu0
        %1278 = vdwg.mxu0
        %1279 = vmatpush.bf16.msra.mxu0 %v923
        %1280 = vmatpush.bf16.msra.mxu0 %v919
        %1281 = vmatpush.bf16.msra.mxu0 %v915
        %1282 = vmatpush.bf16.msra.mxu0 %v911
        %1283 = vmatpush.bf16.msra.mxu0 %v907
        %1284 = vmatpush.bf16.msra.mxu0 %v903
        %1285 = vmatpush.bf16.msra.mxu0 %v899
        %1286 = vmatpush.bf16.msra.mxu0 %v895
        %1287 = vmatmul.bf16.gmra.mxu0 %v404
        %v1288 = vpop.f32.mrf.mxu0
        %v1289 = vadd.f32 0.0, %v1288
        %v1290 = vpop.f32.mrf.mxu0
        %1291 = vdwg.mxu0
        %1292 = vmatpush.bf16.msra.mxu0 %v955
        %1293 = vmatpush.bf16.msra.mxu0 %v951
        %1294 = vmatpush.bf16.msra.mxu0 %v947
        %1295 = vmatpush.bf16.msra.mxu0 %v943
        %1296 = vmatpush.bf16.msra.mxu0 %v939
        %1297 = vmatpush.bf16.msra.mxu0 %v935
        %1298 = vmatpush.bf16.msra.mxu0 %v931
        %1299 = vmatpush.bf16.msra.mxu0 %v927
        %1300 = vmatmul.bf16.gmra.mxu0 %v405
        %v1301 = vpop.f32.mrf.mxu0
        %v1302 = vadd.f32 %v1289, %v1301
        %v1303 = vpop.f32.mrf.mxu0
        %1304 = vdwg.mxu0
        %1305 = vmatpush.bf16.msra.mxu0 %v987
        %1306 = vmatpush.bf16.msra.mxu0 %v983
        %1307 = vmatpush.bf16.msra.mxu0 %v979
        %1308 = vmatpush.bf16.msra.mxu0 %v975
        %1309 = vmatpush.bf16.msra.mxu0 %v971
        %1310 = vmatpush.bf16.msra.mxu0 %v967
        %1311 = vmatpush.bf16.msra.mxu0 %v963
        %1312 = vmatpush.bf16.msra.mxu0 %v959
        %1313 = vmatmul.bf16.gmra.mxu0 %v406
        %v1314 = vpop.f32.mrf.mxu0
        %v1315 = vadd.f32 %v1302, %v1314
        %v1316 = vpop.f32.mrf.mxu0
        %1317 = vdwg.mxu0
        %1318 = vmatpush.bf16.msra.mxu0 %v1019
        %1319 = vmatpush.bf16.msra.mxu0 %v1015
        %1320 = vmatpush.bf16.msra.mxu0 %v1011
        %1321 = vmatpush.bf16.msra.mxu0 %v1007
        %1322 = vmatpush.bf16.msra.mxu0 %v1003
        %1323 = vmatpush.bf16.msra.mxu0 %v999
        %1324 = vmatpush.bf16.msra.mxu0 %v995
        %1325 = vmatpush.bf16.msra.mxu0 %v991
        %1326 = vmatmul.bf16.gmra.mxu0 %v407
        %v1327 = vpop.f32.mrf.mxu0
        %v1328 = vadd.f32 %v1315, %v1327
        %v1329 = vpop.f32.mrf.mxu0
        %1330 = vdwg.mxu0
        %1331 = vmatpush.bf16.msra.mxu0 %v1051
        %1332 = vmatpush.bf16.msra.mxu0 %v1047
        %1333 = vmatpush.bf16.msra.mxu0 %v1043
        %1334 = vmatpush.bf16.msra.mxu0 %v1039
        %1335 = vmatpush.bf16.msra.mxu0 %v1035
        %1336 = vmatpush.bf16.msra.mxu0 %v1031
        %1337 = vmatpush.bf16.msra.mxu0 %v1027
        %1338 = vmatpush.bf16.msra.mxu0 %v1023
        %1339 = vmatmul.bf16.gmra.mxu0 %v408
        %v1340 = vpop.f32.mrf.mxu0
        %v1341 = vadd.f32 %v1328, %v1340
        %v1342 = vpop.f32.mrf.mxu0
        %1343 = vdwg.mxu0
        %1344 = vmatpush.bf16.msra.mxu0 %v924
        %1345 = vmatpush.bf16.msra.mxu0 %v920
        %1346 = vmatpush.bf16.msra.mxu0 %v916
        %1347 = vmatpush.bf16.msra.mxu0 %v912
        %1348 = vmatpush.bf16.msra.mxu0 %v908
        %1349 = vmatpush.bf16.msra.mxu0 %v904
        %1350 = vmatpush.bf16.msra.mxu0 %v900
        %1351 = vmatpush.bf16.msra.mxu0 %v896
        %1352 = vmatmul.bf16.gmra.mxu0 %v404
        %v1353 = vpop.f32.mrf.mxu0
        %v1354 = vadd.f32 0.0, %v1353
        %v1355 = vpop.f32.mrf.mxu0
        %1356 = vdwg.mxu0
        %1357 = vmatpush.bf16.msra.mxu0 %v956
        %1358 = vmatpush.bf16.msra.mxu0 %v952
        %1359 = vmatpush.bf16.msra.mxu0 %v948
        %1360 = vmatpush.bf16.msra.mxu0 %v944
        %1361 = vmatpush.bf16.msra.mxu0 %v940
        %1362 = vmatpush.bf16.msra.mxu0 %v936
        %1363 = vmatpush.bf16.msra.mxu0 %v932
        %1364 = vmatpush.bf16.msra.mxu0 %v928
        %1365 = vmatmul.bf16.gmra.mxu0 %v405
        %v1366 = vpop.f32.mrf.mxu0
        %v1367 = vadd.f32 %v1354, %v1366
        %v1368 = vpop.f32.mrf.mxu0
        %1369 = vdwg.mxu0
        %1370 = vmatpush.bf16.msra.mxu0 %v988
        %1371 = vmatpush.bf16.msra.mxu0 %v984
        %1372 = vmatpush.bf16.msra.mxu0 %v980
        %1373 = vmatpush.bf16.msra.mxu0 %v976
        %1374 = vmatpush.bf16.msra.mxu0 %v972
        %1375 = vmatpush.bf16.msra.mxu0 %v968
        %1376 = vmatpush.bf16.msra.mxu0 %v964
        %1377 = vmatpush.bf16.msra.mxu0 %v960
        %1378 = vmatmul.bf16.gmra.mxu0 %v406
        %v1379 = vpop.f32.mrf.mxu0
        %v1380 = vadd.f32 %v1367, %v1379
        %v1381 = vpop.f32.mrf.mxu0
        %1382 = vdwg.mxu0
        %1383 = vmatpush.bf16.msra.mxu0 %v1020
        %1384 = vmatpush.bf16.msra.mxu0 %v1016
        %1385 = vmatpush.bf16.msra.mxu0 %v1012
        %1386 = vmatpush.bf16.msra.mxu0 %v1008
        %1387 = vmatpush.bf16.msra.mxu0 %v1004
        %1388 = vmatpush.bf16.msra.mxu0 %v1000
        %1389 = vmatpush.bf16.msra.mxu0 %v996
        %1390 = vmatpush.bf16.msra.mxu0 %v992
        %1391 = vmatmul.bf16.gmra.mxu0 %v407
        %v1392 = vpop.f32.mrf.mxu0
        %v1393 = vadd.f32 %v1380, %v1392
        %v1394 = vpop.f32.mrf.mxu0
        %1395 = vdwg.mxu0
        %1396 = vmatpush.bf16.msra.mxu0 %v1052
        %1397 = vmatpush.bf16.msra.mxu0 %v1048
        %1398 = vmatpush.bf16.msra.mxu0 %v1044
        %1399 = vmatpush.bf16.msra.mxu0 %v1040
        %1400 = vmatpush.bf16.msra.mxu0 %v1036
        %1401 = vmatpush.bf16.msra.mxu0 %v1032
        %1402 = vmatpush.bf16.msra.mxu0 %v1028
        %1403 = vmatpush.bf16.msra.mxu0 %v1024
        %1404 = vmatmul.bf16.gmra.mxu0 %v408
        %v1405 = vpop.f32.mrf.mxu0
        %v1406 = vadd.f32 %v1393, %v1405
        %v1407 = vpop.f32.mrf.mxu0
        %1408 = vdwg.mxu0
        %1409 = vmatpush.bf16.msra.mxu0 %v925
        %1410 = vmatpush.bf16.msra.mxu0 %v921
        %1411 = vmatpush.bf16.msra.mxu0 %v917
        %1412 = vmatpush.bf16.msra.mxu0 %v913
        %1413 = vmatpush.bf16.msra.mxu0 %v909
        %1414 = vmatpush.bf16.msra.mxu0 %v905
        %1415 = vmatpush.bf16.msra.mxu0 %v901
        %1416 = vmatpush.bf16.msra.mxu0 %v897
        %1417 = vmatmul.bf16.gmra.mxu0 %v404
        %v1418 = vpop.f32.mrf.mxu0
        %v1419 = vadd.f32 0.0, %v1418
        %v1420 = vpop.f32.mrf.mxu0
        %1421 = vdwg.mxu0
        %1422 = vmatpush.bf16.msra.mxu0 %v957
        %1423 = vmatpush.bf16.msra.mxu0 %v953
        %1424 = vmatpush.bf16.msra.mxu0 %v949
        %1425 = vmatpush.bf16.msra.mxu0 %v945
        %1426 = vmatpush.bf16.msra.mxu0 %v941
        %1427 = vmatpush.bf16.msra.mxu0 %v937
        %1428 = vmatpush.bf16.msra.mxu0 %v933
        %1429 = vmatpush.bf16.msra.mxu0 %v929
        %1430 = vmatmul.bf16.gmra.mxu0 %v405
        %v1431 = vpop.f32.mrf.mxu0
        %v1432 = vadd.f32 %v1419, %v1431
        %v1433 = vpop.f32.mrf.mxu0
        %1434 = vdwg.mxu0
        %1435 = vmatpush.bf16.msra.mxu0 %v989
        %1436 = vmatpush.bf16.msra.mxu0 %v985
        %1437 = vmatpush.bf16.msra.mxu0 %v981
        %1438 = vmatpush.bf16.msra.mxu0 %v977
        %1439 = vmatpush.bf16.msra.mxu0 %v973
        %1440 = vmatpush.bf16.msra.mxu0 %v969
        %1441 = vmatpush.bf16.msra.mxu0 %v965
        %1442 = vmatpush.bf16.msra.mxu0 %v961
        %1443 = vmatmul.bf16.gmra.mxu0 %v406
        %v1444 = vpop.f32.mrf.mxu0
        %v1445 = vadd.f32 %v1432, %v1444
        %v1446 = vpop.f32.mrf.mxu0
        %1447 = vdwg.mxu0
        %1448 = vmatpush.bf16.msra.mxu0 %v1021
        %1449 = vmatpush.bf16.msra.mxu0 %v1017
        %1450 = vmatpush.bf16.msra.mxu0 %v1013
        %1451 = vmatpush.bf16.msra.mxu0 %v1009
        %1452 = vmatpush.bf16.msra.mxu0 %v1005
        %1453 = vmatpush.bf16.msra.mxu0 %v1001
        %1454 = vmatpush.bf16.msra.mxu0 %v997
        %1455 = vmatpush.bf16.msra.mxu0 %v993
        %1456 = vmatmul.bf16.gmra.mxu0 %v407
        %v1457 = vpop.f32.mrf.mxu0
        %v1458 = vadd.f32 %v1445, %v1457
        %v1459 = vpop.f32.mrf.mxu0
        %1460 = vdwg.mxu0
        %1461 = vmatpush.bf16.msra.mxu0 %v1053
        %1462 = vmatpush.bf16.msra.mxu0 %v1049
        %1463 = vmatpush.bf16.msra.mxu0 %v1045
        %1464 = vmatpush.bf16.msra.mxu0 %v1041
        %1465 = vmatpush.bf16.msra.mxu0 %v1037
        %1466 = vmatpush.bf16.msra.mxu0 %v1033
        %1467 = vmatpush.bf16.msra.mxu0 %v1029
        %1468 = vmatpush.bf16.msra.mxu0 %v1025
        %1469 = vmatmul.bf16.gmra.mxu0 %v408
        %v1470 = vpop.f32.mrf.mxu0
        %v1471 = vadd.f32 %v1458, %v1470
        %v1472 = vpop.f32.mrf.mxu0
        %1473 = vdwg.mxu0
        %v1478 = vrot.slane %v1341, 6
        %v1479 = vrot.slane %v1406, 4
        %v1480 = vrot.slane %v1471, 2
        %vm1481 = vcmask 1041408
        %v1482 = vsel %vm1481, %v1276, %v1478
        %vm1483 = vcmask 1045508
        %v1484 = vsel %vm1483, %v1479, %v1480
        %vm1485 = vcmask 1043456
        %v1486 = vsel %vm1485, %v1482, %v1484
        %v1488 = vadd.f32 %v240, %v1486
        %1489 = vst [vmem:[#allocation2] sm:$0xff] %v1488
        %p1490 = scmp.eq.s32.totalorder %s17, 4
        // Predicated region
        $region45: #{cnn_forward.3} parent=39 // pred_check
          %p1491 = pneg %p1490
        $region46: #{cnn_forward.3} parent=39 // pred_check_branch
          %1493 = sbr.rel (%p1491) target = $region48
        $region47: #{cnn_forward.3} parent=39 // pred_region
          %v1494 = vld [vmem:[#allocation2] sm:$0xff]
          %v1495 = vld [vmem:[%s2] sm:$0xf]
          %v1497 = vperm.slane %v1495, 0
          %v1498 = vperm.slane %v1495, 1
          %v1499 = vperm.slane %v1495, 2
          %v1500 = vperm.slane %v1495, 3
          %v1501 = vrot.slane %v1498, 6
          %v1502 = vrot.slane %v1499, 4
          %v1503 = vrot.slane %v1500, 2
          %v1504 = vsel %vm1481, %v1497, %v1501
          %v1505 = vsel %vm1483, %v1502, %v1503
          %v1506 = vsel %vm1485, %v1504, %v1505
          %v1508 = vadd.f32 %v1494, %v1506
          %v1509 = vmax.f32 %v1508, 0.0
          %1511 = vst [vmem:[#allocation1] ss:$4 sm:$0xff] %v1509
          %v1512 = vld.sshfl [vmem:[#allocation1] sm:$0xff pattern:$0x73625140]
          %v1513 = vld.sshfl [vmem:[#allocation1 + $0x8] sm:$0xff pattern:$0x73625140]
          %v1514 = vld.sshfl [vmem:[#allocation1 + $0x10] sm:$0xff pattern:$0x73625140]
          %v1515 = vld.sshfl [vmem:[#allocation1 + $0x18] sm:$0xff pattern:$0x73625140]
          %v1520 = vpack.c.bf16 %v1512, %v1512
          %v1521 = vpack.c.bf16 %v1513, %v1513
          %v1522 = vpack.c.bf16 %v1514, %v1514
          %v1523 = vpack.c.bf16 %v1515, %v1515
          %v1524 = vld [vmem:[%s3] sm:$0xf]
          %v1525 = vld [vmem:[%s3 + $0x4] sm:$0xf]
          %v1526 = vld [vmem:[%s3 + $0x8] sm:$0xf]
          %v1527 = vld [vmem:[%s3 + $0xc] sm:$0xf]
          %v1528 = vld [vmem:[%s3 + $0x10] sm:$0xf]
          %v1529 = vld [vmem:[%s3 + $0x14] sm:$0xf]
          %v1530 = vld [vmem:[%s3 + $0x18] sm:$0xf]
          %v1531 = vld [vmem:[%s3 + $0x1c] sm:$0xf]
          %v1532 = vld [vmem:[%s3 + $0x20] sm:$0xf]
          %v1533 = vld [vmem:[%s3 + $0x24] sm:$0xf]
          %v1534 = vld [vmem:[%s3 + $0x28] sm:$0xf]
          %v1535 = vld [vmem:[%s3 + $0x2c] sm:$0xf]
          %v1536 = vld [vmem:[%s3 + $0x30] sm:$0xf]
          %v1537 = vld [vmem:[%s3 + $0x34] sm:$0xf]
          %v1538 = vld [vmem:[%s3 + $0x38] sm:$0xf]
          %v1539 = vld [vmem:[%s3 + $0x3c] sm:$0xf]
          %v1540 = vld [vmem:[%s3 + $0x40] sm:$0xf]
          %v1541 = vld [vmem:[%s3 + $0x44] sm:$0xf]
          %v1542 = vld [vmem:[%s3 + $0x48] sm:$0xf]
          %v1543 = vld [vmem:[%s3 + $0x4c] sm:$0xf]
          %v1544 = vld [vmem:[%s3 + $0x50] sm:$0xf]
          %v1545 = vld [vmem:[%s3 + $0x54] sm:$0xf]
          %v1546 = vld [vmem:[%s3 + $0x58] sm:$0xf]
          %v1547 = vld [vmem:[%s3 + $0x5c] sm:$0xf]
          %v1548 = vld [vmem:[%s3 + $0x60] sm:$0xf]
          %v1549 = vld [vmem:[%s3 + $0x64] sm:$0xf]
          %v1550 = vld [vmem:[%s3 + $0x68] sm:$0xf]
          %v1551 = vld [vmem:[%s3 + $0x6c] sm:$0xf]
          %v1552 = vld [vmem:[%s3 + $0x70] sm:$0xf]
          %v1553 = vld [vmem:[%s3 + $0x74] sm:$0xf]
          %v1554 = vld [vmem:[%s3 + $0x78] sm:$0xf]
          %v1555 = vld [vmem:[%s3 + $0x7c] sm:$0xf]
          %v1556 = vld [vmem:[%s3 + $0x80] sm:$0xf]
          %v1557 = vld [vmem:[%s3 + $0x84] sm:$0xf]
          %v1558 = vld [vmem:[%s3 + $0x88] sm:$0xf]
          %v1559 = vld [vmem:[%s3 + $0x8c] sm:$0xf]
          %v1560 = vld [vmem:[%s3 + $0x90] sm:$0xf]
          %v1561 = vld [vmem:[%s3 + $0x94] sm:$0xf]
          %v1562 = vld [vmem:[%s3 + $0x98] sm:$0xf]
          %v1563 = vld [vmem:[%s3 + $0x9c] sm:$0xf]
          %v1564 = vld [vmem:[%s3 + $0xa0] sm:$0xf]
          %v1565 = vld [vmem:[%s3 + $0xa4] sm:$0xf]
          %v1566 = vld [vmem:[%s3 + $0xa8] sm:$0xf]
          %v1567 = vld [vmem:[%s3 + $0xac] sm:$0xf]
          %v1568 = vld [vmem:[%s3 + $0xb0] sm:$0xf]
          %v1569 = vld [vmem:[%s3 + $0xb4] sm:$0xf]
          %v1570 = vld [vmem:[%s3 + $0xb8] sm:$0xf]
          %v1571 = vld [vmem:[%s3 + $0xbc] sm:$0xf]
          %v1572 = vld [vmem:[%s3 + $0xc0] sm:$0xf]
          %v1573 = vld [vmem:[%s3 + $0xc4] sm:$0xf]
          %v1574 = vld [vmem:[%s3 + $0xc8] sm:$0xf]
          %v1575 = vld [vmem:[%s3 + $0xcc] sm:$0xf]
          %v1576 = vld [vmem:[%s3 + $0xd0] sm:$0xf]
          %v1577 = vld [vmem:[%s3 + $0xd4] sm:$0xf]
          %v1578 = vld [vmem:[%s3 + $0xd8] sm:$0xf]
          %v1579 = vld [vmem:[%s3 + $0xdc] sm:$0xf]
          %v1580 = vld [vmem:[%s3 + $0xe0] sm:$0xf]
          %v1581 = vld [vmem:[%s3 + $0xe4] sm:$0xf]
          %v1582 = vld [vmem:[%s3 + $0xe8] sm:$0xf]
          %v1583 = vld [vmem:[%s3 + $0xec] sm:$0xf]
          %v1584 = vld [vmem:[%s3 + $0xf0] sm:$0xf]
          %v1585 = vld [vmem:[%s3 + $0xf4] sm:$0xf]
          %v1586 = vld [vmem:[%s3 + $0xf8] sm:$0xf]
          %v1587 = vld [vmem:[%s3 + $0xfc] sm:$0xf]
          %v1588 = vld [vmem:[%s4] sm:$0x1]
          %v1590 = vperm.slane %v1588, 0
          %v1656 = vunpack.c.l.b16 %v1524
          %v1657 = vunpack.c.l.b16 %v1525
          %v1658 = vunpack.c.l.b16 %v1526
          %v1659 = vunpack.c.l.b16 %v1527
          %v1660 = vunpack.c.l.b16 %v1528
          %v1661 = vunpack.c.l.b16 %v1529
          %v1662 = vunpack.c.l.b16 %v1530
          %v1663 = vunpack.c.l.b16 %v1531
          %v1664 = vunpack.c.l.b16 %v1532
          %v1665 = vunpack.c.l.b16 %v1533
          %v1666 = vunpack.c.l.b16 %v1534
          %v1667 = vunpack.c.l.b16 %v1535
          %v1668 = vunpack.c.l.b16 %v1536
          %v1669 = vunpack.c.l.b16 %v1537
          %v1670 = vunpack.c.l.b16 %v1538
          %v1671 = vunpack.c.l.b16 %v1539
          %v1672 = vunpack.c.l.b16 %v1540
          %v1673 = vunpack.c.l.b16 %v1541
          %v1674 = vunpack.c.l.b16 %v1542
          %v1675 = vunpack.c.l.b16 %v1543
          %v1676 = vunpack.c.l.b16 %v1544
          %v1677 = vunpack.c.l.b16 %v1545
          %v1678 = vunpack.c.l.b16 %v1546
          %v1679 = vunpack.c.l.b16 %v1547
          %v1680 = vunpack.c.l.b16 %v1548
          %v1681 = vunpack.c.l.b16 %v1549
          %v1682 = vunpack.c.l.b16 %v1550
          %v1683 = vunpack.c.l.b16 %v1551
          %v1684 = vunpack.c.l.b16 %v1552
          %v1685 = vunpack.c.l.b16 %v1553
          %v1686 = vunpack.c.l.b16 %v1554
          %v1687 = vunpack.c.l.b16 %v1555
          %v1688 = vunpack.c.l.b16 %v1556
          %v1689 = vunpack.c.l.b16 %v1557
          %v1690 = vunpack.c.l.b16 %v1558
          %v1691 = vunpack.c.l.b16 %v1559
          %v1692 = vunpack.c.l.b16 %v1560
          %v1693 = vunpack.c.l.b16 %v1561
          %v1694 = vunpack.c.l.b16 %v1562
          %v1695 = vunpack.c.l.b16 %v1563
          %v1696 = vunpack.c.l.b16 %v1564
          %v1697 = vunpack.c.l.b16 %v1565
          %v1698 = vunpack.c.l.b16 %v1566
          %v1699 = vunpack.c.l.b16 %v1567
          %v1700 = vunpack.c.l.b16 %v1568
          %v1701 = vunpack.c.l.b16 %v1569
          %v1702 = vunpack.c.l.b16 %v1570
          %v1703 = vunpack.c.l.b16 %v1571
          %v1704 = vunpack.c.l.b16 %v1572
          %v1705 = vunpack.c.l.b16 %v1573
          %v1706 = vunpack.c.l.b16 %v1574
          %v1707 = vunpack.c.l.b16 %v1575
          %v1708 = vunpack.c.l.b16 %v1576
          %v1709 = vunpack.c.l.b16 %v1577
          %v1710 = vunpack.c.l.b16 %v1578
          %v1711 = vunpack.c.l.b16 %v1579
          %v1712 = vunpack.c.l.b16 %v1580
          %v1713 = vunpack.c.l.b16 %v1581
          %v1714 = vunpack.c.l.b16 %v1582
          %v1715 = vunpack.c.l.b16 %v1583
          %v1716 = vunpack.c.l.b16 %v1584
          %v1717 = vunpack.c.l.b16 %v1585
          %v1718 = vunpack.c.l.b16 %v1586
          %v1719 = vunpack.c.l.b16 %v1587
          %v1720 = vpack.c.b16 %v1657, %v1656
          %v1721 = vpack.c.b16 %v1659, %v1658
          %v1722 = vpack.c.b16 %v1661, %v1660
          %v1723 = vpack.c.b16 %v1663, %v1662
          %v1724 = vpack.c.b16 %v1665, %v1664
          %v1725 = vpack.c.b16 %v1667, %v1666
          %v1726 = vpack.c.b16 %v1669, %v1668
          %v1727 = vpack.c.b16 %v1671, %v1670
          %v1728 = vpack.c.b16 %v1673, %v1672
          %v1729 = vpack.c.b16 %v1675, %v1674
          %v1730 = vpack.c.b16 %v1677, %v1676
          %v1731 = vpack.c.b16 %v1679, %v1678
          %v1732 = vpack.c.b16 %v1681, %v1680
          %v1733 = vpack.c.b16 %v1683, %v1682
          %v1734 = vpack.c.b16 %v1685, %v1684
          %v1735 = vpack.c.b16 %v1687, %v1686
          %v1736 = vpack.c.b16 %v1689, %v1688
          %v1737 = vpack.c.b16 %v1691, %v1690
          %v1738 = vpack.c.b16 %v1693, %v1692
          %v1739 = vpack.c.b16 %v1695, %v1694
          %v1740 = vpack.c.b16 %v1697, %v1696
          %v1741 = vpack.c.b16 %v1699, %v1698
          %v1742 = vpack.c.b16 %v1701, %v1700
          %v1743 = vpack.c.b16 %v1703, %v1702
          %v1744 = vpack.c.b16 %v1705, %v1704
          %v1745 = vpack.c.b16 %v1707, %v1706
          %v1746 = vpack.c.b16 %v1709, %v1708
          %v1747 = vpack.c.b16 %v1711, %v1710
          %v1748 = vpack.c.b16 %v1713, %v1712
          %v1749 = vpack.c.b16 %v1715, %v1714
          %v1750 = vpack.c.b16 %v1717, %v1716
          %v1751 = vpack.c.b16 %v1719, %v1718
          %1784 = vmatpush.bf16.msra.mxu0 %v1727
          %1785 = vmatpush.bf16.msra.mxu0 %v1726
          %1786 = vmatpush.bf16.msra.mxu0 %v1725
          %1787 = vmatpush.bf16.msra.mxu0 %v1724
          %1788 = vmatpush.bf16.msra.mxu0 %v1723
          %1789 = vmatpush.bf16.msra.mxu0 %v1722
          %1790 = vmatpush.bf16.msra.mxu0 %v1721
          %1791 = vmatpush.bf16.msra.mxu0 %v1720
          %1792 = vmatmul.bf16.gmra.mxu0 %v1520
          %v1793 = vpop.f32.mrf.mxu0
          %v1794 = vadd.f32 %v1590, %v1793
          %v1795 = vpop.f32.mrf.mxu0
          %1796 = vdwg.mxu0
          %1797 = vmatpush.bf16.msra.mxu0 %v1735
          %1798 = vmatpush.bf16.msra.mxu0 %v1734
          %1799 = vmatpush.bf16.msra.mxu0 %v1733
          %1800 = vmatpush.bf16.msra.mxu0 %v1732
          %1801 = vmatpush.bf16.msra.mxu0 %v1731
          %1802 = vmatpush.bf16.msra.mxu0 %v1730
          %1803 = vmatpush.bf16.msra.mxu0 %v1729
          %1804 = vmatpush.bf16.msra.mxu0 %v1728
          %1805 = vmatmul.bf16.gmra.mxu0 %v1521
          %v1806 = vpop.f32.mrf.mxu0
          %v1807 = vadd.f32 %v1794, %v1806
          %v1808 = vpop.f32.mrf.mxu0
          %1809 = vdwg.mxu0
          %1810 = vmatpush.bf16.msra.mxu0 %v1743
          %1811 = vmatpush.bf16.msra.mxu0 %v1742
          %1812 = vmatpush.bf16.msra.mxu0 %v1741
          %1813 = vmatpush.bf16.msra.mxu0 %v1740
          %1814 = vmatpush.bf16.msra.mxu0 %v1739
          %1815 = vmatpush.bf16.msra.mxu0 %v1738
          %1816 = vmatpush.bf16.msra.mxu0 %v1737
          %1817 = vmatpush.bf16.msra.mxu0 %v1736
          %1818 = vmatmul.bf16.gmra.mxu0 %v1522
          %v1819 = vpop.f32.mrf.mxu0
          %v1820 = vadd.f32 %v1807, %v1819
          %v1821 = vpop.f32.mrf.mxu0
          %1822 = vdwg.mxu0
          %1823 = vmatpush.bf16.msra.mxu0 %v1751
          %1824 = vmatpush.bf16.msra.mxu0 %v1750
          %1825 = vmatpush.bf16.msra.mxu0 %v1749
          %1826 = vmatpush.bf16.msra.mxu0 %v1748
          %1827 = vmatpush.bf16.msra.mxu0 %v1747
          %1828 = vmatpush.bf16.msra.mxu0 %v1746
          %1829 = vmatpush.bf16.msra.mxu0 %v1745
          %1830 = vmatpush.bf16.msra.mxu0 %v1744
          %1831 = vmatmul.bf16.gmra.mxu0 %v1523
          %v1832 = vpop.f32.mrf.mxu0
          %v1833 = vadd.f32 %v1820, %v1832
          %v1834 = vpop.f32.mrf.mxu0
          %1835 = vdwg.mxu0
          %1836 = vst [vmem:[#allocation3] sm:$0x3] %v1833
        $region48: #{cnn_forward.3} parent=39 // pred_fallthru
          _
        // Predicated region
        $region49: #{cnn_forward.3} parent=39 // pred_check
          %p1837 = pneg %p145
        $region50: #{cnn_forward.3} parent=39 // pred_check_branch
          %1839 = sbr.rel (%p1837) target = $region52
        $region51: #{cnn_forward.3} parent=39 // pred_region
          %1841 = vsyncadd [#allocation4], 0
          %s1843 = sshll.u32 [#allocation3], 4
          %s1844 = int_to_ptr.vmem [resolvable:$true] %s1843
          %s1845 = sshll.u32 %s5, 4
          %s1846 = int_to_ptr.hbm [resolvable:$true] %s1845
          %1848 = dma.vmem_to_hbm [thread:$0]  %s1844, 32, %s1846, [#allocation4]
        $region52: #{cnn_forward.3} parent=39 // pred_fallthru
          _
        // Predicated region
        $region53: #{cnn_forward.3} parent=39 // pred_check
          %p1849 = pneg %p145
        $region54: #{cnn_forward.3} parent=39 // pred_check_branch
          %1851 = sbr.rel (%p1849) target = $region56
        $region55: #{cnn_forward.3} parent=39 // pred_region
          %1853 = dma.done [#allocation4], 32
        $region56: #{cnn_forward.3} parent=39 // pred_fallthru
          _
      $region40: #{cnn_forward.3} parent=5 // pred_fallthru
        _
      %p1854 = scmp.le.s32.totalorder 2, %s12
      // Predicated region
      $region57: #{cnn_forward.3} parent=5 // pred_check
        %p1855 = pneg %p1854
      $region58: #{cnn_forward.3} parent=5 // pred_check_branch
        %1857 = sbr.rel (%p1855) target = $region60
      $region59: #{cnn_forward.3} parent=5 // pred_region
        %s1858 = ssub.s32 %s12, 2
      $region60: #{cnn_forward.3} parent=5 // pred_fallthru
        _
    $region6: #{cnn_forward.3} parent=1 // loop_footer
      %s16 = sadd.s32 1, %s12
    $region7: #{cnn_forward.3} parent=1 // loop_footer_branch
      %11 = sbr.rel target = $region3
    $region8: #{cnn_forward.3} parent=1 // loop_exit
      _
    %1859 = vsyncpa [#allocation4], 1
    %s1860 = scalar_lea.sflag [#allocation4], 1
    %1861 = vsyncpa %s1860, 1

// kernel: cnn_forward.2
$region0: #{cnn_forward.2}
  #allocation0 [shape = 'u32[]', space=smem, size = 0x4, offset = 0x4, fixed_abs, tag = 'smem constant byte address 0x4 - core index']
  #allocation1 [shape = 'u32[72,128]{1,0:T(1,128)}', space=vmem, size = 0x9000, scoped, tag = 'internal scratch']
  #allocation2 [shape = 'bf16[400,32]{1,0:T(8,128)(2,1)}', space=vmem, size = 0x19000, scoped, tag = 'scratch operand']
  #allocation3 [shape = 'bf16[337,64]{1,0:T(8,128)(2,1)}', space=vmem, size = 0x15800, scoped, tag = 'scratch operand']
  %s0 = inlined_call_operand.vmem [shape: bf16[2,400,64], index: 0, kind: input, shape index: {}]
  %s1 = inlined_call_operand.vmem [shape: bf16[64,32], index: 1, kind: input, shape index: {}]
  %s2 = inlined_call_operand.vmem [shape: f32[1,32], index: 2, kind: input, shape index: {}]
  %s3 = inlined_call_operand.vmem [shape: bf16[16,32,64], index: 3, kind: input, shape index: {}]
  %s4 = inlined_call_operand.vmem [shape: f32[1,64], index: 4, kind: input, shape index: {}]
  %s5 = inlined_call_operand.vmem [shape: bf16[9,64,64], index: 5, kind: input, shape index: {}]
  %s6 = inlined_call_operand.vmem [shape: f32[1,64], index: 6, kind: input, shape index: {}]
  %s7 = inlined_call_operand.vmem [shape: bf16[2,253,64], index: 7, kind: output, shape index: {}]
  %s8 = sld [smem:[#allocation0]]
  $region61: #{cnn_forward.2} parent=0
    _
  %s10 = ssub.s32 1, %s8
  %s11 = scalar_select 0, %s10, %s8
  loop: start=0, step=1, limit=4
  $region2: #{cnn_forward.2} parent=0 // loop_pre_header
    _
  $region3: #{cnn_forward.2} parent=0 // loop_header
    %s13 = sphi 0, %s17
    %p14 = scmp.ge.s32.totalorder %s13, 4
    %s23 = sphi 0, %s25
    %s26 = sphi 0, %s23
    %s27 = sphi 0, %s26
    %s43 = sphi 0, %s27
    %s47 = sphi 0, %s47
    %s49 = sphi 0, %s47
    %s50 = sphi 0, %s49
    %s64 = sphi 0, %s50
    %s68 = sphi 0, %s68
    %s70 = sphi 0, %s68
    %s71 = sphi 0, %s70
    %s85 = sphi 0, %s71
    %s89 = sphi 0, %s89
    %s91 = sphi 0, %s89
    %s92 = sphi 0, %s91
    %s106 = sphi 0, %s92
    %s110 = sphi 0, %s110
    %s112 = sphi 0, %s110
    %s113 = sphi 0, %s112
    %s127 = sphi 0, %s113
    %s131 = sphi 0, %s131
    %s133 = sphi 0, %s131
    %s134 = sphi 0, %s133
    %s148 = sphi 0, %s134
    %s152 = sphi 0, %s152
    %s154 = sphi 0, %s152
    %s155 = sphi 0, %s154
    %s169 = sphi 0, %s155
    %s175 = sphi 0, %s177
    %s178 = sphi 0, %s175
    %s179 = sphi 0, %s178
    %s195 = sphi 0, %s179
  $region4: #{cnn_forward.2} parent=0 // loop_header_branch
    %16 = sbr.rel (%p14) target = $region8
  $region5: #{cnn_forward.2} parent=0 // loop_body
    %s18 = ssub.s32 %s13, 1
    %s19 = ssub.s32 %s13, 2
    %s20 = sadd.s32 %s13, 1
    %s21 = ssub.s32 %s13, %s20
    %p22 = scmp.eq.s32.totalorder %s21, 0
    %s24 = sadd.s32 %s23, 1
    %s25 = scalar_select %p22, %s23, %s24
    %p28 = pneg %p22
    %p29 = scmp.eq.s32.totalorder %s13, 1
    %p30 = por %p28, %p29
    %p31 = scmp.ne.s32.totalorder %s23, %s26
    %p32 = scmp.eq.s32.totalorder %s13, 0
    %p33 = por %p31, %p32
    %p34 = scmp.ne.s32.totalorder %s23, %s26
    %p35 = scmp.eq.s32.totalorder %s18, 1
    %p36 = por %p34, %p35
    %p37 = scmp.ne.s32.totalorder %s26, %s27
    %p38 = scmp.eq.s32.totalorder %s18, 0
    %p39 = por %p37, %p38
    %p40 = scmp.ne.s32.totalorder %s26, %s27
    %p41 = scmp.eq.s32.totalorder %s19, 1
    %p42 = por %p40, %p41
    %p44 = scmp.ne.s32.totalorder %s27, %s43
    %p45 = scmp.eq.s32.totalorder %s19, 0
    %p46 = por %p44, %p45
    %s48 = sadd.s32 %s47, 1
    %p51 = scmp.eq.s32.totalorder %s13, 1
    %p52 = scmp.ne.s32.totalorder %s47, %s49
    %p53 = scmp.eq.s32.totalorder %s13, 0
    %p54 = por %p52, %p53
    %p55 = scmp.ne.s32.totalorder %s47, %s49
    %p56 = scmp.eq.s32.totalorder %s18, 1
    %p57 = por %p55, %p56
    %p58 = scmp.ne.s32.totalorder %s49, %s50
    %p59 = scmp.eq.s32.totalorder %s18, 0
    %p60 = por %p58, %p59
    %p61 = scmp.ne.s32.totalorder %s49, %s50
    %p62 = scmp.eq.s32.totalorder %s19, 1
    %p63 = por %p61, %p62
    %p65 = scmp.ne.s32.totalorder %s50, %s64
    %p66 = scmp.eq.s32.totalorder %s19, 0
    %p67 = por %p65, %p66
    %s69 = sadd.s32 %s68, 1
    %p72 = scmp.eq.s32.totalorder %s13, 1
    %p73 = scmp.ne.s32.totalorder %s68, %s70
    %p74 = scmp.eq.s32.totalorder %s13, 0
    %p75 = por %p73, %p74
    %p76 = scmp.ne.s32.totalorder %s68, %s70
    %p77 = scmp.eq.s32.totalorder %s18, 1
    %p78 = por %p76, %p77
    %p79 = scmp.ne.s32.totalorder %s70, %s71
    %p80 = scmp.eq.s32.totalorder %s18, 0
    %p81 = por %p79, %p80
    %p82 = scmp.ne.s32.totalorder %s70, %s71
    %p83 = scmp.eq.s32.totalorder %s19, 1
    %p84 = por %p82, %p83
    %p86 = scmp.ne.s32.totalorder %s71, %s85
    %p87 = scmp.eq.s32.totalorder %s19, 0
    %p88 = por %p86, %p87
    %s90 = sadd.s32 %s89, 1
    %p93 = scmp.eq.s32.totalorder %s13, 1
    %p94 = scmp.ne.s32.totalorder %s89, %s91
    %p95 = scmp.eq.s32.totalorder %s13, 0
    %p96 = por %p94, %p95
    %p97 = scmp.ne.s32.totalorder %s89, %s91
    %p98 = scmp.eq.s32.totalorder %s18, 1
    %p99 = por %p97, %p98
    %p100 = scmp.ne.s32.totalorder %s91, %s92
    %p101 = scmp.eq.s32.totalorder %s18, 0
    %p102 = por %p100, %p101
    %p103 = scmp.ne.s32.totalorder %s91, %s92
    %p104 = scmp.eq.s32.totalorder %s19, 1
    %p105 = por %p103, %p104
    %p107 = scmp.ne.s32.totalorder %s92, %s106
    %p108 = scmp.eq.s32.totalorder %s19, 0
    %p109 = por %p107, %p108
    %s111 = sadd.s32 %s110, 1
    %p114 = scmp.eq.s32.totalorder %s13, 1
    %p115 = scmp.ne.s32.totalorder %s110, %s112
    %p116 = scmp.eq.s32.totalorder %s13, 0
    %p117 = por %p115, %p116
    %p118 = scmp.ne.s32.totalorder %s110, %s112
    %p119 = scmp.eq.s32.totalorder %s18, 1
    %p120 = por %p118, %p119
    %p121 = scmp.ne.s32.totalorder %s112, %s113
    %p122 = scmp.eq.s32.totalorder %s18, 0
    %p123 = por %p121, %p122
    %p124 = scmp.ne.s32.totalorder %s112, %s113
    %p125 = scmp.eq.s32.totalorder %s19, 1
    %p126 = por %p124, %p125
    %p128 = scmp.ne.s32.totalorder %s113, %s127
    %p129 = scmp.eq.s32.totalorder %s19, 0
    %p130 = por %p128, %p129
    %s132 = sadd.s32 %s131, 1
    %p135 = scmp.eq.s32.totalorder %s13, 1
    %p136 = scmp.ne.s32.totalorder %s131, %s133
    %p137 = scmp.eq.s32.totalorder %s13, 0
    %p138 = por %p136, %p137
    %p139 = scmp.ne.s32.totalorder %s131, %s133
    %p140 = scmp.eq.s32.totalorder %s18, 1
    %p141 = por %p139, %p140
    %p142 = scmp.ne.s32.totalorder %s133, %s134
    %p143 = scmp.eq.s32.totalorder %s18, 0
    %p144 = por %p142, %p143
    %p145 = scmp.ne.s32.totalorder %s133, %s134
    %p146 = scmp.eq.s32.totalorder %s19, 1
    %p147 = por %p145, %p146
    %p149 = scmp.ne.s32.totalorder %s134, %s148
    %p150 = scmp.eq.s32.totalorder %s19, 0
    %p151 = por %p149, %p150
    %s153 = sadd.s32 %s152, 1
    %p156 = scmp.eq.s32.totalorder %s13, 1
    %p157 = scmp.ne.s32.totalorder %s152, %s154
    %p158 = scmp.eq.s32.totalorder %s13, 0
    %p159 = por %p157, %p158
    %p160 = scmp.ne.s32.totalorder %s152, %s154
    %p161 = scmp.eq.s32.totalorder %s18, 1
    %p162 = por %p160, %p161
    %p163 = scmp.ne.s32.totalorder %s154, %s155
    %p164 = scmp.eq.s32.totalorder %s18, 0
    %p165 = por %p163, %p164
    %p166 = scmp.ne.s32.totalorder %s154, %s155
    %p167 = scmp.eq.s32.totalorder %s19, 1
    %p168 = por %p166, %p167
    %p170 = scmp.ne.s32.totalorder %s155, %s169
    %p171 = scmp.eq.s32.totalorder %s19, 0
    %p172 = por %p170, %p171
    %s173 = ssub.s32 %s13, %s20
    %p174 = scmp.eq.s32.totalorder %s173, 0
    %s176 = sadd.s32 %s175, 1
    %s177 = scalar_select %p174, %s175, %s176
    %p180 = pneg %p174
    %p181 = scmp.eq.s32.totalorder %s13, 1
    %p182 = por %p180, %p181
    %p183 = scmp.ne.s32.totalorder %s175, %s178
    %p184 = scmp.eq.s32.totalorder %s13, 0
    %p185 = por %p183, %p184
    %p186 = scmp.ne.s32.totalorder %s175, %s178
    %p187 = scmp.eq.s32.totalorder %s18, 1
    %p188 = por %p186, %p187
    %p189 = scmp.ne.s32.totalorder %s178, %s179
    %p190 = scmp.eq.s32.totalorder %s18, 0
    %p191 = por %p189, %p190
    %p192 = scmp.ne.s32.totalorder %s178, %s179
    %p193 = scmp.eq.s32.totalorder %s19, 1
    %p194 = por %p192, %p193
    %p196 = scmp.ne.s32.totalorder %s179, %s195
    %p197 = scmp.eq.s32.totalorder %s19, 0
    %p198 = por %p196, %p197
    %p199 = scmp.le.s32.totalorder 1, %s13
    %p200 = scmp.lt.s32.totalorder %s13, 3
    %p201 = pnand %p199, %p200
    %p202 = pneg %p201
    // Predicated region
    $region9: #{cnn_forward.2} parent=5 // pred_check
      _
    $region10: #{cnn_forward.2} parent=5 // pred_check_branch
      %204 = sbr.rel (%p201) target = $region12
    $region11: #{cnn_forward.2} parent=5 // pred_region
      %s205 = ssub.s32 %s13, 1
      // Predicated region
      $region13: #{cnn_forward.2} parent=11 // pred_check
        %p206 = pneg %p60
      $region14: #{cnn_forward.2} parent=11 // pred_check_branch
        %208 = sbr.rel (%p206) target = $region16
      $region15: #{cnn_forward.2} parent=11 // pred_region
        _
      $region16: #{cnn_forward.2} parent=11 // pred_fallthru
        _
      // Predicated region
      $region17: #{cnn_forward.2} parent=11 // pred_check
        %p209 = pneg %p81
      $region18: #{cnn_forward.2} parent=11 // pred_check_branch
        %211 = sbr.rel (%p209) target = $region20
      $region19: #{cnn_forward.2} parent=11 // pred_region
        _
      $region20: #{cnn_forward.2} parent=11 // pred_fallthru
        _
      // Predicated region
      $region21: #{cnn_forward.2} parent=11 // pred_check
        %p212 = pneg %p102
      $region22: #{cnn_forward.2} parent=11 // pred_check_branch
        %214 = sbr.rel (%p212) target = $region24
      $region23: #{cnn_forward.2} parent=11 // pred_region
        _
      $region24: #{cnn_forward.2} parent=11 // pred_fallthru
        _
      // Predicated region
      $region25: #{cnn_forward.2} parent=11 // pred_check
        %p215 = pneg %p123
      $region26: #{cnn_forward.2} parent=11 // pred_check_branch
        %217 = sbr.rel (%p215) target = $region28
      $region27: #{cnn_forward.2} parent=11 // pred_region
        _
      $region28: #{cnn_forward.2} parent=11 // pred_fallthru
        _
      // Predicated region
      $region29: #{cnn_forward.2} parent=11 // pred_check
        %p218 = pneg %p144
      $region30: #{cnn_forward.2} parent=11 // pred_check_branch
        %220 = sbr.rel (%p218) target = $region32
      $region31: #{cnn_forward.2} parent=11 // pred_region
        _
      $region32: #{cnn_forward.2} parent=11 // pred_fallthru
        _
      // Predicated region
      $region33: #{cnn_forward.2} parent=11 // pred_check
        %p221 = pneg %p165
      $region34: #{cnn_forward.2} parent=11 // pred_check_branch
        %223 = sbr.rel (%p221) target = $region36
      $region35: #{cnn_forward.2} parent=11 // pred_region
        _
      $region36: #{cnn_forward.2} parent=11 // pred_fallthru
        _
    $region12: #{cnn_forward.2} parent=5 // pred_fallthru
      _
    %p224 = scmp.lt.s32.totalorder %s13, 2
    // Predicated region
    $region37: #{cnn_forward.2} parent=5 // pred_check
      %p225 = pneg %p224
    $region38: #{cnn_forward.2} parent=5 // pred_check_branch
      %227 = sbr.rel (%p225) target = $region40
    $region39: #{cnn_forward.2} parent=5 // pred_region
      // Predicated region
      $region41: #{cnn_forward.2} parent=39 // pred_check
        %p228 = pneg %p33
      $region42: #{cnn_forward.2} parent=39 // pred_check_branch
        %230 = sbr.rel (%p228) target = $region44
      $region43: #{cnn_forward.2} parent=39 // pred_region
        %p231 = scmp.lt.s32.totalorder %s13, 1
        %s232 = scalar_select %p231, %s13, 1
        %s233 = smul.addr %s232, 50
        %s234 = smul.addr %s233, 4
        %s235 = scalar_lea.vmem %s0, %s234
      $region44: #{cnn_forward.2} parent=39 // pred_fallthru
        _
    $region40: #{cnn_forward.2} parent=5 // pred_fallthru
      _
    %p236 = scmp.le.s32.totalorder 1, %s13
    %p237 = scmp.lt.s32.totalorder %s13, 3
    %p238 = pnand %p236, %p237
    %p239 = pneg %p238
    // Predicated region
    $region45: #{cnn_forward.2} parent=5 // pred_check
      _
    $region46: #{cnn_forward.2} parent=5 // pred_check_branch
      %241 = sbr.rel (%p238) target = $region48
    $region47: #{cnn_forward.2} parent=5 // pred_region
      %s242 = ssub.s32 %s13, 1
      %p243 = scmp.lt.s32.totalorder %s18, 1
      %s244 = scalar_select %p243, %s18, 1
      %s245 = smul.addr %s244, 50
      %s246 = smul.addr %s245, 4
      %s247 = scalar_lea.vmem %s0, %s246
      %p248 = pneg %p39
      %p249 = pneg %p36
      %p250 = pneg %p60
      %p251 = pneg %p57
      %p252 = pneg %p81
      %p253 = pneg %p78
      %p254 = pneg %p102
      %p255 = pneg %p99
      %p256 = pneg %p123
      %p257 = pneg %p120
      %p258 = pneg %p144
      %p259 = pneg %p141
      %p260 = pneg %p165
      %p261 = pneg %p162
      %p262 = pneg %p191
      %p263 = pneg %p188
      %p264 = scmp.lt.s32.totalorder %s18, 1
      %s265 = scalar_select %p264, %s18, 1
      %s266 = smul.addr %s265, 32
      %s267 = smul.addr %s266, 4
      %s268 = scalar_lea.vmem %s7, %s267
      %p269 = scmp.lt.s32.totalorder %s18, 1
      %s270 = scalar_select %p269, %s18, 1
      %s271 = smul.addr %s270, 50
      %s272 = smul.addr %s271, 4
      %s273 = scalar_lea.vmem %s0, %s272
      %p274 = scmp.lt.s32.totalorder %s18, 1
      %s275 = scalar_select %p274, %s18, 1
      %s276 = smul.addr %s275, 32
      %s277 = smul.addr %s276, 4
      %s278 = scalar_lea.vmem %s7, %s277
      %v280 = vld [vmem:[%s273] sm:$0xf]
      %v281 = vld [vmem:[%s273 + $0x4] sm:$0xf]
      %v282 = vld [vmem:[%s273 + $0x8] sm:$0xf]
      %v283 = vld [vmem:[%s273 + $0xc] sm:$0xf]
      %v284 = vld [vmem:[%s273 + $0x10] sm:$0xf]
      %v285 = vld [vmem:[%s273 + $0x14] sm:$0xf]
      %v286 = vld [vmem:[%s273 + $0x18] sm:$0xf]
      %v287 = vld [vmem:[%s273 + $0x1c] sm:$0xf]
      %v288 = vld [vmem:[%s273 + $0x20] sm:$0xf]
      %v289 = vld [vmem:[%s273 + $0x24] sm:$0xf]
      %v290 = vld [vmem:[%s273 + $0x28] sm:$0xf]
      %v291 = vld [vmem:[%s273 + $0x2c] sm:$0xf]
      %v292 = vld [vmem:[%s273 + $0x30] sm:$0xf]
      %v293 = vld [vmem:[%s273 + $0x34] sm:$0xf]
      %v294 = vld [vmem:[%s273 + $0x38] sm:$0xf]
      %v295 = vld [vmem:[%s273 + $0x3c] sm:$0xf]
      %v296 = vld [vmem:[%s273 + $0x40] sm:$0xf]
      %v297 = vld [vmem:[%s273 + $0x44] sm:$0xf]
      %v298 = vld [vmem:[%s273 + $0x48] sm:$0xf]
      %v299 = vld [vmem:[%s273 + $0x4c] sm:$0xf]
      %v300 = vld [vmem:[%s273 + $0x50] sm:$0xf]
      %v301 = vld [vmem:[%s273 + $0x54] sm:$0xf]
      %v302 = vld [vmem:[%s273 + $0x58] sm:$0xf]
      %v303 = vld [vmem:[%s273 + $0x5c] sm:$0xf]
      %v304 = vld [vmem:[%s273 + $0x60] sm:$0xf]
      %v305 = vld [vmem:[%s273 + $0x64] sm:$0xf]
      %v306 = vld [vmem:[%s273 + $0x68] sm:$0xf]
      %v307 = vld [vmem:[%s273 + $0x6c] sm:$0xf]
      %v308 = vld [vmem:[%s273 + $0x70] sm:$0xf]
      %v309 = vld [vmem:[%s273 + $0x74] sm:$0xf]
      %v310 = vld [vmem:[%s273 + $0x78] sm:$0xf]
      %v311 = vld [vmem:[%s273 + $0x7c] sm:$0xf]
      %v312 = vld [vmem:[%s273 + $0x80] sm:$0xf]
      %v313 = vld [vmem:[%s273 + $0x84] sm:$0xf]
      %v314 = vld [vmem:[%s273 + $0x88] sm:$0xf]
      %v315 = vld [vmem:[%s273 + $0x8c] sm:$0xf]
      %v316 = vld [vmem:[%s273 + $0x90] sm:$0xf]
      %v317 = vld [vmem:[%s273 + $0x94] sm:$0xf]
      %v318 = vld [vmem:[%s273 + $0x98] sm:$0xf]
      %v319 = vld [vmem:[%s273 + $0x9c] sm:$0xf]
      %v320 = vld [vmem:[%s273 + $0xa0] sm:$0xf]
      %v321 = vld [vmem:[%s273 + $0xa4] sm:$0xf]
      %v322 = vld [vmem:[%s273 + $0xa8] sm:$0xf]
      %v323 = vld [vmem:[%s273 + $0xac] sm:$0xf]
      %v324 = vld [vmem:[%s273 + $0xb0] sm:$0xf]
      %v325 = vld [vmem:[%s273 + $0xb4] sm:$0xf]
      %v326 = vld [vmem:[%s273 + $0xb8] sm:$0xf]
      %v327 = vld [vmem:[%s273 + $0xbc] sm:$0xf]
      %v328 = vld [vmem:[%s273 + $0xc0] sm:$0xf]
      %v329 = vld [vmem:[%s273 + $0xc4] sm:$0xf]
      %v330 = vld [vmem:[%s1] sm:$0xf]
      %v331 = vld [vmem:[%s1 + $0x4] sm:$0xf]
      %v332 = vld [vmem:[%s1 + $0x8] sm:$0xf]
      %v333 = vld [vmem:[%s1 + $0xc] sm:$0xf]
      %v334 = vld [vmem:[%s1 + $0x10] sm:$0xf]
      %v335 = vld [vmem:[%s1 + $0x14] sm:$0xf]
      %v336 = vld [vmem:[%s1 + $0x18] sm:$0xf]
      %v337 = vld [vmem:[%s1 + $0x1c] sm:$0xf]
      %v338 = vld [vmem:[%s2] sm:$0x1]
      %v340 = vperm.slane %v338, 0
      %v392 = vunpack.c.l.b16 %v280
      %v393 = vunpack.c.l.b16 %v281
      %v394 = vunpack.c.l.b16 %v282
      %v395 = vunpack.c.l.b16 %v283
      %v396 = vunpack.c.l.b16 %v284
      %v397 = vunpack.c.l.b16 %v285
      %v398 = vunpack.c.l.b16 %v286
      %v399 = vunpack.c.l.b16 %v287
      %v400 = vunpack.c.l.b16 %v288
      %v401 = vunpack.c.l.b16 %v289
      %v402 = vunpack.c.l.b16 %v290
      %v403 = vunpack.c.l.b16 %v291
      %v404 = vunpack.c.l.b16 %v292
      %v405 = vunpack.c.l.b16 %v293
      %v406 = vunpack.c.l.b16 %v294
      %v407 = vunpack.c.l.b16 %v295
      %v408 = vunpack.c.l.b16 %v296
      %v409 = vunpack.c.l.b16 %v297
      %v410 = vunpack.c.l.b16 %v298
      %v411 = vunpack.c.l.b16 %v299
      %v412 = vunpack.c.l.b16 %v300
      %v413 = vunpack.c.l.b16 %v301
      %v414 = vunpack.c.l.b16 %v302
      %v415 = vunpack.c.l.b16 %v303
      %v416 = vunpack.c.l.b16 %v304
      %v417 = vunpack.c.l.b16 %v305
      %v418 = vunpack.c.l.b16 %v306
      %v419 = vunpack.c.l.b16 %v307
      %v420 = vunpack.c.l.b16 %v308
      %v421 = vunpack.c.l.b16 %v309
      %v422 = vunpack.c.l.b16 %v310
      %v423 = vunpack.c.l.b16 %v311
      %v424 = vunpack.c.l.b16 %v312
      %v425 = vunpack.c.l.b16 %v313
      %v426 = vunpack.c.l.b16 %v314
      %v427 = vunpack.c.l.b16 %v315
      %v428 = vunpack.c.l.b16 %v316
      %v429 = vunpack.c.l.b16 %v317
      %v430 = vunpack.c.l.b16 %v318
      %v431 = vunpack.c.l.b16 %v319
      %v432 = vunpack.c.l.b16 %v320
      %v433 = vunpack.c.l.b16 %v321
      %v434 = vunpack.c.l.b16 %v322
      %v435 = vunpack.c.l.b16 %v323
      %v436 = vunpack.c.l.b16 %v324
      %v437 = vunpack.c.l.b16 %v325
      %v438 = vunpack.c.l.b16 %v326
      %v439 = vunpack.c.l.b16 %v327
      %v440 = vunpack.c.l.b16 %v328
      %v441 = vunpack.c.l.b16 %v329
      %v442 = vpack.c.b16 %v393, %v392
      %v443 = vpack.c.b16 %v395, %v394
      %v444 = vpack.c.b16 %v397, %v396
      %v445 = vpack.c.b16 %v399, %v398
      %v446 = vpack.c.b16 %v401, %v400
      %v447 = vpack.c.b16 %v403, %v402
      %v448 = vpack.c.b16 %v405, %v404
      %v449 = vpack.c.b16 %v407, %v406
      %v450 = vpack.c.b16 %v409, %v408
      %v451 = vpack.c.b16 %v411, %v410
      %v452 = vpack.c.b16 %v413, %v412
      %v453 = vpack.c.b16 %v415, %v414
      %v454 = vpack.c.b16 %v417, %v416
      %v455 = vpack.c.b16 %v419, %v418
      %v456 = vpack.c.b16 %v421, %v420
      %v457 = vpack.c.b16 %v423, %v422
      %v458 = vpack.c.b16 %v425, %v424
      %v459 = vpack.c.b16 %v427, %v426
      %v460 = vpack.c.b16 %v429, %v428
      %v461 = vpack.c.b16 %v431, %v430
      %v462 = vpack.c.b16 %v433, %v432
      %v463 = vpack.c.b16 %v435, %v434
      %v464 = vpack.c.b16 %v437, %v436
      %v465 = vpack.c.b16 %v439, %v438
      %v466 = vpack.c.b16 %v441, %v440
      %v475 = vunpack.c.l.b16 %v330
      %v476 = vunpack.c.l.b16 %v331
      %v477 = vunpack.c.l.b16 %v332
      %v478 = vunpack.c.l.b16 %v333
      %v479 = vunpack.c.l.b16 %v334
      %v480 = vunpack.c.l.b16 %v335
      %v481 = vunpack.c.l.b16 %v336
      %v482 = vunpack.c.l.b16 %v337
      %v483 = vpack.c.b16 %v476, %v475
      %v484 = vpack.c.b16 %v478, %v477
      %v485 = vpack.c.b16 %v480, %v479
      %v486 = vpack.c.b16 %v482, %v481
      %vm491 = vcmask 523264
      %v493 = vsel %vm491, %v442, 0
      %v496 = vsel %vm491, %v443, 0
      %v499 = vsel %vm491, %v444, 0
      %v502 = vsel %vm491, %v445, 0
      %v505 = vsel %vm491, %v446, 0
      %v508 = vsel %vm491, %v447, 0
      %v511 = vsel %vm491, %v448, 0
      %v514 = vsel %vm491, %v449, 0
      %v517 = vsel %vm491, %v450, 0
      %v520 = vsel %vm491, %v451, 0
      %v523 = vsel %vm491, %v452, 0
      %v526 = vsel %vm491, %v453, 0
      %v529 = vsel %vm491, %v454, 0
      %v532 = vsel %vm491, %v455, 0
      %v535 = vsel %vm491, %v456, 0
      %v538 = vsel %vm491, %v457, 0
      %v541 = vsel %vm491, %v458, 0
      %v544 = vsel %vm491, %v459, 0
      %v547 = vsel %vm491, %v460, 0
      %v550 = vsel %vm491, %v461, 0
      %v553 = vsel %vm491, %v462, 0
      %v556 = vsel %vm491, %v463, 0
      %v559 = vsel %vm491, %v464, 0
      %v562 = vsel %vm491, %v465, 0
      %v565 = vsel %vm491, %v466, 0
      %567 = vmatpush.bf16.msra.mxu0 0
      %568 = vmatpush.bf16.msra.mxu0 0
      %569 = vmatpush.bf16.msra.mxu0 0
      %570 = vmatpush.bf16.msra.mxu0 0
      %571 = vmatpush.bf16.msra.mxu0 %v486
      %572 = vmatpush.bf16.msra.mxu0 %v485
      %573 = vmatpush.bf16.msra.mxu0 %v484
      %574 = vmatpush.bf16.msra.mxu0 %v483
      %575 = vmatmul.bf16.gmra.mxu0 %v493
      %v576 = vpop.f32.mrf.mxu0
      %v577 = vadd.f32 %v340, %v576
      %v578 = vpop.f32.mrf.mxu0
      %v579 = vadd.f32 %v340, %v578
      %580 = vmatmul.bf16.gmra.mxu0 %v496
      %v581 = vpop.f32.mrf.mxu0
      %v582 = vadd.f32 %v340, %v581
      %v583 = vpop.f32.mrf.mxu0
      %v584 = vadd.f32 %v340, %v583
      %585 = vmatmul.bf16.gmra.mxu0 %v499
      %v586 = vpop.f32.mrf.mxu0
      %v587 = vadd.f32 %v340, %v586
      %v588 = vpop.f32.mrf.mxu0
      %v589 = vadd.f32 %v340, %v588
      %590 = vmatmul.bf16.gmra.mxu0 %v502
      %v591 = vpop.f32.mrf.mxu0
      %v592 = vadd.f32 %v340, %v591
      %v593 = vpop.f32.mrf.mxu0
      %v594 = vadd.f32 %v340, %v593
      %595 = vmatmul.bf16.gmra.mxu0 %v505
      %v596 = vpop.f32.mrf.mxu0
      %v597 = vadd.f32 %v340, %v596
      %v598 = vpop.f32.mrf.mxu0
      %v599 = vadd.f32 %v340, %v598
      %600 = vmatmul.bf16.gmra.mxu0 %v508
      %v601 = vpop.f32.mrf.mxu0
      %v602 = vadd.f32 %v340, %v601
      %v603 = vpop.f32.mrf.mxu0
      %v604 = vadd.f32 %v340, %v603
      %605 = vmatmul.bf16.gmra.mxu0 %v511
      %v606 = vpop.f32.mrf.mxu0
      %v607 = vadd.f32 %v340, %v606
      %v608 = vpop.f32.mrf.mxu0
      %v609 = vadd.f32 %v340, %v608
      %610 = vmatmul.bf16.gmra.mxu0 %v514
      %v611 = vpop.f32.mrf.mxu0
      %v612 = vadd.f32 %v340, %v611
      %v613 = vpop.f32.mrf.mxu0
      %v614 = vadd.f32 %v340, %v613
      %615 = vmatmul.bf16.gmra.mxu0 %v517
      %v616 = vpop.f32.mrf.mxu0
      %v617 = vadd.f32 %v340, %v616
      %v618 = vpop.f32.mrf.mxu0
      %v619 = vadd.f32 %v340, %v618
      %620 = vmatmul.bf16.gmra.mxu0 %v520
      %v621 = vpop.f32.mrf.mxu0
      %v622 = vadd.f32 %v340, %v621
      %v623 = vpop.f32.mrf.mxu0
      %v624 = vadd.f32 %v340, %v623
      %625 = vmatmul.bf16.gmra.mxu0 %v523
      %v626 = vpop.f32.mrf.mxu0
      %v627 = vadd.f32 %v340, %v626
      %v628 = vpop.f32.mrf.mxu0
      %v629 = vadd.f32 %v340, %v628
      %630 = vmatmul.bf16.gmra.mxu0 %v526
      %v631 = vpop.f32.mrf.mxu0
      %v632 = vadd.f32 %v340, %v631
      %v633 = vpop.f32.mrf.mxu0
      %v634 = vadd.f32 %v340, %v633
      %635 = vmatmul.bf16.gmra.mxu0 %v529
      %v636 = vpop.f32.mrf.mxu0
      %v637 = vadd.f32 %v340, %v636
      %v638 = vpop.f32.mrf.mxu0
      %v639 = vadd.f32 %v340, %v638
      %640 = vmatmul.bf16.gmra.mxu0 %v532
      %v641 = vpop.f32.mrf.mxu0
      %v642 = vadd.f32 %v340, %v641
      %v643 = vpop.f32.mrf.mxu0
      %v644 = vadd.f32 %v340, %v643
      %645 = vmatmul.bf16.gmra.mxu0 %v535
      %v646 = vpop.f32.mrf.mxu0
      %v647 = vadd.f32 %v340, %v646
      %v648 = vpop.f32.mrf.mxu0
      %v649 = vadd.f32 %v340, %v648
      %650 = vmatmul.bf16.gmra.mxu0 %v538
      %v651 = vpop.f32.mrf.mxu0
      %v652 = vadd.f32 %v340, %v651
      %v653 = vpop.f32.mrf.mxu0
      %v654 = vadd.f32 %v340, %v653
      %655 = vmatmul.bf16.gmra.mxu0 %v541
      %v656 = vpop.f32.mrf.mxu0
      %v657 = vadd.f32 %v340, %v656
      %v658 = vpop.f32.mrf.mxu0
      %v659 = vadd.f32 %v340, %v658
      %660 = vmatmul.bf16.gmra.mxu0 %v544
      %v661 = vpop.f32.mrf.mxu0
      %v662 = vadd.f32 %v340, %v661
      %v663 = vpop.f32.mrf.mxu0
      %v664 = vadd.f32 %v340, %v663
      %665 = vmatmul.bf16.gmra.mxu0 %v547
      %v666 = vpop.f32.mrf.mxu0
      %v667 = vadd.f32 %v340, %v666
      %v668 = vpop.f32.mrf.mxu0
      %v669 = vadd.f32 %v340, %v668
      %670 = vmatmul.bf16.gmra.mxu0 %v550
      %v671 = vpop.f32.mrf.mxu0
      %v672 = vadd.f32 %v340, %v671
      %v673 = vpop.f32.mrf.mxu0
      %v674 = vadd.f32 %v340, %v673
      %675 = vmatmul.bf16.gmra.mxu0 %v553
      %v676 = vpop.f32.mrf.mxu0
      %v677 = vadd.f32 %v340, %v676
      %v678 = vpop.f32.mrf.mxu0
      %v679 = vadd.f32 %v340, %v678
      %680 = vmatmul.bf16.gmra.mxu0 %v556
      %v681 = vpop.f32.mrf.mxu0
      %v682 = vadd.f32 %v340, %v681
      %v683 = vpop.f32.mrf.mxu0
      %v684 = vadd.f32 %v340, %v683
      %685 = vmatmul.bf16.gmra.mxu0 %v559
      %v686 = vpop.f32.mrf.mxu0
      %v687 = vadd.f32 %v340, %v686
      %v688 = vpop.f32.mrf.mxu0
      %v689 = vadd.f32 %v340, %v688
      %690 = vmatmul.bf16.gmra.mxu0 %v562
      %v691 = vpop.f32.mrf.mxu0
      %v692 = vadd.f32 %v340, %v691
      %v693 = vpop.f32.mrf.mxu0
      %v694 = vadd.f32 %v340, %v693
      %695 = vmatmul.bf16.gmra.mxu0 %v565
      %v696 = vpop.f32.mrf.mxu0
      %v697 = vadd.f32 %v340, %v696
      %v698 = vpop.f32.mrf.mxu0
      %v699 = vadd.f32 %v340, %v698
      %700 = vdwg.mxu0
      %v701 = vmax.f32 %v577, 0.0
      %v702 = vmax.f32 %v579, 0.0
      %v703 = vmax.f32 %v582, 0.0
      %v704 = vmax.f32 %v584, 0.0
      %v705 = vmax.f32 %v587, 0.0
      %v706 = vmax.f32 %v589, 0.0
      %v707 = vmax.f32 %v592, 0.0
      %v708 = vmax.f32 %v594, 0.0
      %v709 = vmax.f32 %v597, 0.0
      %v710 = vmax.f32 %v599, 0.0
      %v711 = vmax.f32 %v602, 0.0
      %v712 = vmax.f32 %v604, 0.0
      %v713 = vmax.f32 %v607, 0.0
      %v714 = vmax.f32 %v609, 0.0
      %v715 = vmax.f32 %v612, 0.0
      %v716 = vmax.f32 %v614, 0.0
      %v717 = vmax.f32 %v617, 0.0
      %v718 = vmax.f32 %v619, 0.0
      %v719 = vmax.f32 %v622, 0.0
      %v720 = vmax.f32 %v624, 0.0
      %v721 = vmax.f32 %v627, 0.0
      %v722 = vmax.f32 %v629, 0.0
      %v723 = vmax.f32 %v632, 0.0
      %v724 = vmax.f32 %v634, 0.0
      %v725 = vmax.f32 %v637, 0.0
      %v726 = vmax.f32 %v639, 0.0
      %v727 = vmax.f32 %v642, 0.0
      %v728 = vmax.f32 %v644, 0.0
      %v729 = vmax.f32 %v647, 0.0
      %v730 = vmax.f32 %v649, 0.0
      %v731 = vmax.f32 %v652, 0.0
      %v732 = vmax.f32 %v654, 0.0
      %v733 = vmax.f32 %v657, 0.0
      %v734 = vmax.f32 %v659, 0.0
      %v735 = vmax.f32 %v662, 0.0
      %v736 = vmax.f32 %v664, 0.0
      %v737 = vmax.f32 %v667, 0.0
      %v738 = vmax.f32 %v669, 0.0
      %v739 = vmax.f32 %v672, 0.0
      %v740 = vmax.f32 %v674, 0.0
      %v741 = vmax.f32 %v677, 0.0
      %v742 = vmax.f32 %v679, 0.0
      %v743 = vmax.f32 %v682, 0.0
      %v744 = vmax.f32 %v684, 0.0
      %v745 = vmax.f32 %v687, 0.0
      %v746 = vmax.f32 %v689, 0.0
      %v747 = vmax.f32 %v692, 0.0
      %v748 = vmax.f32 %v694, 0.0
      %v749 = vmax.f32 %v697, 0.0
      %v750 = vmax.f32 %v699, 0.0
      %v751 = vpack.c.bf16 %v701, %v701
      %v752 = vpack.c.bf16 %v702, %v702
      %v753 = vpack.c.bf16 %v703, %v703
      %v754 = vpack.c.bf16 %v704, %v704
      %v755 = vpack.c.bf16 %v705, %v705
      %v756 = vpack.c.bf16 %v706, %v706
      %v757 = vpack.c.bf16 %v707, %v707
      %v758 = vpack.c.bf16 %v708, %v708
      %v759 = vpack.c.bf16 %v709, %v709
      %v760 = vpack.c.bf16 %v710, %v710
      %v761 = vpack.c.bf16 %v711, %v711
      %v762 = vpack.c.bf16 %v712, %v712
      %v763 = vpack.c.bf16 %v713, %v713
      %v764 = vpack.c.bf16 %v714, %v714
      %v765 = vpack.c.bf16 %v715, %v715
      %v766 = vpack.c.bf16 %v716, %v716
      %v767 = vpack.c.bf16 %v717, %v717
      %v768 = vpack.c.bf16 %v718, %v718
      %v769 = vpack.c.bf16 %v719, %v719
      %v770 = vpack.c.bf16 %v720, %v720
      %v771 = vpack.c.bf16 %v721, %v721
      %v772 = vpack.c.bf16 %v722, %v722
      %v773 = vpack.c.bf16 %v723, %v723
      %v774 = vpack.c.bf16 %v724, %v724
      %v775 = vpack.c.bf16 %v725, %v725
      %v776 = vpack.c.bf16 %v726, %v726
      %v777 = vpack.c.bf16 %v727, %v727
      %v778 = vpack.c.bf16 %v728, %v728
      %v779 = vpack.c.bf16 %v729, %v729
      %v780 = vpack.c.bf16 %v730, %v730
      %v781 = vpack.c.bf16 %v731, %v731
      %v782 = vpack.c.bf16 %v732, %v732
      %v783 = vpack.c.bf16 %v733, %v733
      %v784 = vpack.c.bf16 %v734, %v734
      %v785 = vpack.c.bf16 %v735, %v735
      %v786 = vpack.c.bf16 %v736, %v736
      %v787 = vpack.c.bf16 %v737, %v737
      %v788 = vpack.c.bf16 %v738, %v738
      %v789 = vpack.c.bf16 %v739, %v739
      %v790 = vpack.c.bf16 %v740, %v740
      %v791 = vpack.c.bf16 %v741, %v741
      %v792 = vpack.c.bf16 %v742, %v742
      %v793 = vpack.c.bf16 %v743, %v743
      %v794 = vpack.c.bf16 %v744, %v744
      %v795 = vpack.c.bf16 %v745, %v745
      %v796 = vpack.c.bf16 %v746, %v746
      %v797 = vpack.c.bf16 %v747, %v747
      %v798 = vpack.c.bf16 %v748, %v748
      %v799 = vpack.c.bf16 %v749, %v749
      %v800 = vpack.c.bf16 %v750, %v750
      %vm801 = vcmask 257024
      %802 = vst.msk [vmem:[#allocation2] sm:$0xf] %vm801, %v751
      %803 = vst.msk [vmem:[#allocation2 + $0x4] sm:$0xf] %vm801, %v752
      %804 = vst.msk [vmem:[#allocation2 + $0x8] sm:$0xf] %vm801, %v753
      %805 = vst.msk [vmem:[#allocation2 + $0xc] sm:$0xf] %vm801, %v754
      %806 = vst.msk [vmem:[#allocation2 + $0x10] sm:$0xf] %vm801, %v755
      %807 = vst.msk [vmem:[#allocation2 + $0x14] sm:$0xf] %vm801, %v756
      %808 = vst.msk [vmem:[#allocation2 + $0x18] sm:$0xf] %vm801, %v757
      %809 = vst.msk [vmem:[#allocation2 + $0x1c] sm:$0xf] %vm801, %v758
      %810 = vst.msk [vmem:[#allocation2 + $0x20] sm:$0xf] %vm801, %v759
      %811 = vst.msk [vmem:[#allocation2 + $0x24] sm:$0xf] %vm801, %v760
      %812 = vst.msk [vmem:[#allocation2 + $0x28] sm:$0xf] %vm801, %v761
      %813 = vst.msk [vmem:[#allocation2 + $0x2c] sm:$0xf] %vm801, %v762
      %814 = vst.msk [vmem:[#allocation2 + $0x30] sm:$0xf] %vm801, %v763
      %815 = vst.msk [vmem:[#allocation2 + $0x34] sm:$0xf] %vm801, %v764
      %816 = vst.msk [vmem:[#allocation2 + $0x38] sm:$0xf] %vm801, %v765
      %817 = vst.msk [vmem:[#allocation2 + $0x3c] sm:$0xf] %vm801, %v766
      %818 = vst.msk [vmem:[#allocation2 + $0x40] sm:$0xf] %vm801, %v767
      %819 = vst.msk [vmem:[#allocation2 + $0x44] sm:$0xf] %vm801, %v768
      %820 = vst.msk [vmem:[#allocation2 + $0x48] sm:$0xf] %vm801, %v769
      %821 = vst.msk [vmem:[#allocation2 + $0x4c] sm:$0xf] %vm801, %v770
      %822 = vst.msk [vmem:[#allocation2 + $0x50] sm:$0xf] %vm801, %v771
      %823 = vst.msk [vmem:[#allocation2 + $0x54] sm:$0xf] %vm801, %v772
      %824 = vst.msk [vmem:[#allocation2 + $0x58] sm:$0xf] %vm801, %v773
      %825 = vst.msk [vmem:[#allocation2 + $0x5c] sm:$0xf] %vm801, %v774
      %826 = vst.msk [vmem:[#allocation2 + $0x60] sm:$0xf] %vm801, %v775
      %827 = vst.msk [vmem:[#allocation2 + $0x64] sm:$0xf] %vm801, %v776
      %828 = vst.msk [vmem:[#allocation2 + $0x68] sm:$0xf] %vm801, %v777
      %829 = vst.msk [vmem:[#allocation2 + $0x6c] sm:$0xf] %vm801, %v778
      %830 = vst.msk [vmem:[#allocation2 + $0x70] sm:$0xf] %vm801, %v779
      %831 = vst.msk [vmem:[#allocation2 + $0x74] sm:$0xf] %vm801, %v780
      %832 = vst.msk [vmem:[#allocation2 + $0x78] sm:$0xf] %vm801, %v781
      %833 = vst.msk [vmem:[#allocation2 + $0x7c] sm:$0xf] %vm801, %v782
      %834 = vst.msk [vmem:[#allocation2 + $0x80] sm:$0xf] %vm801, %v783
      %835 = vst.msk [vmem:[#allocation2 + $0x84] sm:$0xf] %vm801, %v784
      %836 = vst.msk [vmem:[#allocation2 + $0x88] sm:$0xf] %vm801, %v785
      %837 = vst.msk [vmem:[#allocation2 + $0x8c] sm:$0xf] %vm801, %v786
      %838 = vst.msk [vmem:[#allocation2 + $0x90] sm:$0xf] %vm801, %v787
      %839 = vst.msk [vmem:[#allocation2 + $0x94] sm:$0xf] %vm801, %v788
      %840 = vst.msk [vmem:[#allocation2 + $0x98] sm:$0xf] %vm801, %v789
      %841 = vst.msk [vmem:[#allocation2 + $0x9c] sm:$0xf] %vm801, %v790
      %842 = vst.msk [vmem:[#allocation2 + $0xa0] sm:$0xf] %vm801, %v791
      %843 = vst.msk [vmem:[#allocation2 + $0xa4] sm:$0xf] %vm801, %v792
      %844 = vst.msk [vmem:[#allocation2 + $0xa8] sm:$0xf] %vm801, %v793
      %845 = vst.msk [vmem:[#allocation2 + $0xac] sm:$0xf] %vm801, %v794
      %846 = vst.msk [vmem:[#allocation2 + $0xb0] sm:$0xf] %vm801, %v795
      %847 = vst.msk [vmem:[#allocation2 + $0xb4] sm:$0xf] %vm801, %v796
      %848 = vst.msk [vmem:[#allocation2 + $0xb8] sm:$0xf] %vm801, %v797
      %849 = vst.msk [vmem:[#allocation2 + $0xbc] sm:$0xf] %vm801, %v798
      %850 = vst.msk [vmem:[#allocation2 + $0xc0] sm:$0xf] %vm801, %v799
      %851 = vst.msk [vmem:[#allocation2 + $0xc4] sm:$0xf] %vm801, %v800
      %v852 = vld [vmem:[#allocation2] sm:$0xf]
      %v853 = vld [vmem:[#allocation2 + $0x4] sm:$0xf]
      %v854 = vld [vmem:[#allocation2 + $0x8] sm:$0xf]
      %v855 = vld [vmem:[#allocation2 + $0xc] sm:$0xf]
      %v856 = vld [vmem:[#allocation2 + $0x10] sm:$0xf]
      %v857 = vld [vmem:[#allocation2 + $0x14] sm:$0xf]
      %v858 = vld [vmem:[#allocation2 + $0x18] sm:$0xf]
      %v859 = vld [vmem:[#allocation2 + $0x1c] sm:$0xf]
      %v860 = vld [vmem:[#allocation2 + $0x20] sm:$0xf]
      %v861 = vld [vmem:[#allocation2 + $0x24] sm:$0xf]
      %v862 = vld [vmem:[#allocation2 + $0x28] sm:$0xf]
      %v863 = vld [vmem:[#allocation2 + $0x2c] sm:$0xf]
      %v864 = vld [vmem:[#allocation2 + $0x30] sm:$0xf]
      %v865 = vld [vmem:[#allocation2 + $0x34] sm:$0xf]
      %v866 = vld [vmem:[#allocation2 + $0x38] sm:$0xf]
      %v867 = vld [vmem:[#allocation2 + $0x3c] sm:$0xf]
      %v868 = vld [vmem:[#allocation2 + $0x40] sm:$0xf]
      %v869 = vld [vmem:[#allocation2 + $0x44] sm:$0xf]
      %v870 = vld [vmem:[#allocation2 + $0x48] sm:$0xf]
      %v871 = vld [vmem:[#allocation2 + $0x4c] sm:$0xf]
      %v872 = vld [vmem:[#allocation2 + $0x50] sm:$0xf]
      %v873 = vld [vmem:[#allocation2 + $0x54] sm:$0xf]
      %v874 = vld [vmem:[#allocation2 + $0x58] sm:$0xf]
      %v875 = vld [vmem:[#allocation2 + $0x5c] sm:$0xf]
      %v876 = vld [vmem:[#allocation2 + $0x60] sm:$0xf]
      %v877 = vld [vmem:[#allocation2 + $0x64] sm:$0xf]
      %v878 = vld [vmem:[#allocation2 + $0x68] sm:$0xf]
      %v879 = vld [vmem:[#allocation2 + $0x6c] sm:$0xf]
      %v880 = vld [vmem:[#allocation2 + $0x70] sm:$0xf]
      %v881 = vld [vmem:[#allocation2 + $0x74] sm:$0xf]
      %v882 = vld [vmem:[#allocation2 + $0x78] sm:$0xf]
      %v883 = vld [vmem:[#allocation2 + $0x7c] sm:$0xf]
      %v884 = vld [vmem:[#allocation2 + $0x80] sm:$0xf]
      %v885 = vld [vmem:[#allocation2 + $0x84] sm:$0xf]
      %v886 = vld [vmem:[#allocation2 + $0x88] sm:$0xf]
      %v887 = vld [vmem:[#allocation2 + $0x8c] sm:$0xf]
      %v888 = vld [vmem:[#allocation2 + $0x90] sm:$0xf]
      %v889 = vld [vmem:[#allocation2 + $0x94] sm:$0xf]
      %v890 = vld [vmem:[#allocation2 + $0x98] sm:$0xf]
      %v891 = vld [vmem:[#allocation2 + $0x9c] sm:$0xf]
      %v892 = vld [vmem:[#allocation2 + $0xa0] sm:$0xf]
      %v893 = vld [vmem:[#allocation2 + $0xa4] sm:$0xf]
      %v894 = vld [vmem:[#allocation2 + $0xa8] sm:$0x1]
      %v895 = vld [vmem:[%s3] sm:$0xf]
      %v896 = vld [vmem:[%s3 + $0x4] sm:$0xf]
      %v897 = vld [vmem:[%s3 + $0x8] sm:$0xf]
      %v898 = vld [vmem:[%s3 + $0xc] sm:$0xf]
      %s899 = scalar_lea.vmem %s3, 16
      %v900 = vld [vmem:[%s899] sm:$0xf]
      %v901 = vld [vmem:[%s899 + $0x4] sm:$0xf]
      %v902 = vld [vmem:[%s899 + $0x8] sm:$0xf]
      %v903 = vld [vmem:[%s899 + $0xc] sm:$0xf]
      %v947 = vunpack.c.l.b16 %v852
      %v948 = vunpack.c.l.b16 %v853
      %v949 = vunpack.c.l.b16 %v854
      %v950 = vunpack.c.l.b16 %v855
      %v951 = vunpack.c.l.b16 %v856
      %v952 = vunpack.c.l.b16 %v857
      %v953 = vunpack.c.l.b16 %v858
      %v954 = vunpack.c.l.b16 %v859
      %v955 = vunpack.c.l.b16 %v860
      %v956 = vunpack.c.l.b16 %v861
      %v957 = vunpack.c.l.b16 %v862
      %v958 = vunpack.c.l.b16 %v863
      %v959 = vunpack.c.l.b16 %v864
      %v960 = vunpack.c.l.b16 %v865
      %v961 = vunpack.c.l.b16 %v866
      %v962 = vunpack.c.l.b16 %v867
      %v963 = vunpack.c.l.b16 %v868
      %v964 = vunpack.c.l.b16 %v869
      %v965 = vunpack.c.l.b16 %v870
      %v966 = vunpack.c.l.b16 %v871
      %v967 = vunpack.c.l.b16 %v872
      %v968 = vunpack.c.l.b16 %v873
      %v969 = vunpack.c.l.b16 %v874
      %v970 = vunpack.c.l.b16 %v875
      %v971 = vunpack.c.l.b16 %v876
      %v972 = vunpack.c.l.b16 %v877
      %v973 = vunpack.c.l.b16 %v878
      %v974 = vunpack.c.l.b16 %v879
      %v975 = vunpack.c.l.b16 %v880
      %v976 = vunpack.c.l.b16 %v881
      %v977 = vunpack.c.l.b16 %v882
      %v978 = vunpack.c.l.b16 %v883
      %v979 = vunpack.c.l.b16 %v884
      %v980 = vunpack.c.l.b16 %v885
      %v981 = vunpack.c.l.b16 %v886
      %v982 = vunpack.c.l.b16 %v887
      %v983 = vunpack.c.l.b16 %v888
      %v984 = vunpack.c.l.b16 %v889
      %v985 = vunpack.c.l.b16 %v890
      %v986 = vunpack.c.l.b16 %v891
      %v987 = vunpack.c.l.b16 %v892
      %v988 = vunpack.c.l.b16 %v893
      %v989 = vunpack.c.l.b16 %v894
      %v990 = vpack.c.b16 %v948, %v947
      %v991 = vpack.c.b16 %v950, %v949
      %v992 = vpack.c.b16 %v952, %v951
      %v993 = vpack.c.b16 %v954, %v953
      %v994 = vpack.c.b16 %v956, %v955
      %v995 = vpack.c.b16 %v958, %v957
      %v996 = vpack.c.b16 %v960, %v959
      %v997 = vpack.c.b16 %v962, %v961
      %v998 = vpack.c.b16 %v964, %v963
      %v999 = vpack.c.b16 %v966, %v965
      %v1000 = vpack.c.b16 %v968, %v967
      %v1001 = vpack.c.b16 %v970, %v969
      %v1002 = vpack.c.b16 %v972, %v971
      %v1003 = vpack.c.b16 %v974, %v973
      %v1004 = vpack.c.b16 %v976, %v975
      %v1005 = vpack.c.b16 %v978, %v977
      %v1006 = vpack.c.b16 %v980, %v979
      %v1007 = vpack.c.b16 %v982, %v981
      %v1008 = vpack.c.b16 %v984, %v983
      %v1009 = vpack.c.b16 %v986, %v985
      %v1010 = vpack.c.b16 %v988, %v987
      %v1011 = vpack.c.b16 %v989, %v989
      %vm1012 = vsmask.f32 7424
      %v1014 = vshrl.u32 %v990, 16
      %v1016 = vshll.u32 %v990, 16
      %v1018 = vrot.slane %v1016, 1
      %v1019 = vor.u32 %v1014, %v1018
      %v1021 = vshll.u32 %v991, 16
      %v1023 = vrot.slane %v1021, 1
      %v1024 = vsel %vm1012, %v1019, %v1023
      %v1025 = vshrl.u32 %v991, 16
      %v1027 = vor.u32 %v1025, %v1023
      %v1029 = vshll.u32 %v992, 16
      %v1031 = vrot.slane %v1029, 1
      %v1032 = vsel %vm1012, %v1027, %v1031
      %v1033 = vshrl.u32 %v992, 16
      %v1035 = vor.u32 %v1033, %v1031
      %v1037 = vshll.u32 %v993, 16
      %v1039 = vrot.slane %v1037, 1
      %v1040 = vsel %vm1012, %v1035, %v1039
      %v1041 = vshrl.u32 %v993, 16
      %v1043 = vor.u32 %v1041, %v1039
      %v1045 = vshll.u32 %v994, 16
      %v1047 = vrot.slane %v1045, 1
      %v1048 = vsel %vm1012, %v1043, %v1047
      %v1049 = vshrl.u32 %v994, 16
      %v1051 = vor.u32 %v1049, %v1047
      %v1053 = vshll.u32 %v995, 16
      %v1055 = vrot.slane %v1053, 1
      %v1056 = vsel %vm1012, %v1051, %v1055
      %v1057 = vshrl.u32 %v995, 16
      %v1059 = vor.u32 %v1057, %v1055
      %v1061 = vshll.u32 %v996, 16
      %v1063 = vrot.slane %v1061, 1
      %v1064 = vsel %vm1012, %v1059, %v1063
      %v1065 = vshrl.u32 %v996, 16
      %v1067 = vor.u32 %v1065, %v1063
      %v1069 = vshll.u32 %v997, 16
      %v1071 = vrot.slane %v1069, 1
      %v1072 = vsel %vm1012, %v1067, %v1071
      %v1073 = vshrl.u32 %v997, 16
      %v1075 = vor.u32 %v1073, %v1071
      %v1077 = vshll.u32 %v998, 16
      %v1079 = vrot.slane %v1077, 1
      %v1080 = vsel %vm1012, %v1075, %v1079
      %v1081 = vshrl.u32 %v998, 16
      %v1083 = vor.u32 %v1081, %v1079
      %v1085 = vshll.u32 %v999, 16
      %v1087 = vrot.slane %v1085, 1
      %v1088 = vsel %vm1012, %v1083, %v1087
      %v1089 = vshrl.u32 %v999, 16
      %v1091 = vor.u32 %v1089, %v1087
      %v1093 = vshll.u32 %v1000, 16
      %v1095 = vrot.slane %v1093, 1
      %v1096 = vsel %vm1012, %v1091, %v1095
      %v1097 = vshrl.u32 %v1000, 16
      %v1099 = vor.u32 %v1097, %v1095
      %v1101 = vshll.u32 %v1001, 16
      %v1103 = vrot.slane %v1101, 1
      %v1104 = vsel %vm1012, %v1099, %v1103
      %v1105 = vshrl.u32 %v1001, 16
      %v1107 = vor.u32 %v1105, %v1103
      %v1109 = vshll.u32 %v1002, 16
      %v1111 = vrot.slane %v1109, 1
      %v1112 = vsel %vm1012, %v1107, %v1111
      %v1113 = vshrl.u32 %v1002, 16
      %v1115 = vor.u32 %v1113, %v1111
      %v1117 = vshll.u32 %v1003, 16
      %v1119 = vrot.slane %v1117, 1
      %v1120 = vsel %vm1012, %v1115, %v1119
      %v1121 = vshrl.u32 %v1003, 16
      %v1123 = vor.u32 %v1121, %v1119
      %v1125 = vshll.u32 %v1004, 16
      %v1127 = vrot.slane %v1125, 1
      %v1128 = vsel %vm1012, %v1123, %v1127
      %v1129 = vshrl.u32 %v1004, 16
      %v1131 = vor.u32 %v1129, %v1127
      %v1133 = vshll.u32 %v1005, 16
      %v1135 = vrot.slane %v1133, 1
      %v1136 = vsel %vm1012, %v1131, %v1135
      %v1137 = vshrl.u32 %v1005, 16
      %v1139 = vor.u32 %v1137, %v1135
      %v1141 = vshll.u32 %v1006, 16
      %v1143 = vrot.slane %v1141, 1
      %v1144 = vsel %vm1012, %v1139, %v1143
      %v1145 = vshrl.u32 %v1006, 16
      %v1147 = vor.u32 %v1145, %v1143
      %v1149 = vshll.u32 %v1007, 16
      %v1151 = vrot.slane %v1149, 1
      %v1152 = vsel %vm1012, %v1147, %v1151
      %v1153 = vshrl.u32 %v1007, 16
      %v1155 = vor.u32 %v1153, %v1151
      %v1157 = vshll.u32 %v1008, 16
      %v1159 = vrot.slane %v1157, 1
      %v1160 = vsel %vm1012, %v1155, %v1159
      %v1161 = vshrl.u32 %v1008, 16
      %v1163 = vor.u32 %v1161, %v1159
      %v1165 = vshll.u32 %v1009, 16
      %v1167 = vrot.slane %v1165, 1
      %v1168 = vsel %vm1012, %v1163, %v1167
      %v1169 = vshrl.u32 %v1009, 16
      %v1171 = vor.u32 %v1169, %v1167
      %v1173 = vshll.u32 %v1010, 16
      %v1175 = vrot.slane %v1173, 1
      %v1176 = vsel %vm1012, %v1171, %v1175
      %v1177 = vshrl.u32 %v1010, 16
      %v1179 = vor.u32 %v1177, %v1175
      %v1181 = vshll.u32 %v1011, 16
      %v1183 = vrot.slane %v1181, 1
      %v1184 = vsel %vm1012, %v1179, %v1183
      %v1185 = vshrl.u32 %v1011, 16
      %v1191 = vunpack.c.l.b16 %v900
      %v1192 = vunpack.c.l.b16 %v901
      %v1193 = vunpack.c.l.b16 %v902
      %v1194 = vunpack.c.l.b16 %v903
      %v1195 = vpack.c.b16 %v1192, %v1191
      %v1196 = vpack.c.b16 %v1194, %v1193
      %vm1199 = vcmask 261120
      %v1201 = vsel %vm1199, %v1024, 0
      %v1204 = vsel %vm1199, %v1032, 0
      %v1207 = vsel %vm1199, %v1040, 0
      %v1210 = vsel %vm1199, %v1048, 0
      %v1213 = vsel %vm1199, %v1056, 0
      %v1216 = vsel %vm1199, %v1064, 0
      %v1219 = vsel %vm1199, %v1072, 0
      %v1222 = vsel %vm1199, %v1080, 0
      %v1225 = vsel %vm1199, %v1088, 0
      %v1228 = vsel %vm1199, %v1096, 0
      %v1231 = vsel %vm1199, %v1104, 0
      %v1234 = vsel %vm1199, %v1112, 0
      %v1237 = vsel %vm1199, %v1120, 0
      %v1240 = vsel %vm1199, %v1128, 0
      %v1243 = vsel %vm1199, %v1136, 0
      %v1246 = vsel %vm1199, %v1144, 0
      %v1249 = vsel %vm1199, %v1152, 0
      %v1252 = vsel %vm1199, %v1160, 0
      %v1255 = vsel %vm1199, %v1168, 0
      %v1258 = vsel %vm1199, %v1176, 0
      %v1261 = vsel %vm1199, %v1184, 0
      %v1264 = vsel %vm1199, %v1185, 0
      %1266 = vmatpush.bf16.msra.mxu0 0
      %1267 = vmatpush.bf16.msra.mxu0 0
      %1268 = vmatpush.bf16.msra.mxu0 0
      %1269 = vmatpush.bf16.msra.mxu0 0
      %1270 = vmatpush.bf16.msra.mxu0 0
      %1271 = vmatpush.bf16.msra.mxu0 0
      %1272 = vmatpush.bf16.msra.mxu0 %v1196
      %1273 = vmatpush.bf16.msra.mxu0 %v1195
      %1274 = vmatmul.bf16.gmra.mxu0 %v1201
      %v1275 = vpop.f32.mrf.mxu0
      %v1276 = vadd.f32 0.0, %v1275
      %v1277 = vpop.f32.mrf.mxu0
      %v1278 = vadd.f32 0.0, %v1277
      %1279 = vmatmul.bf16.gmra.mxu0 %v1204
      %v1280 = vpop.f32.mrf.mxu0
      %v1281 = vadd.f32 0.0, %v1280
      %v1282 = vpop.f32.mrf.mxu0
      %v1283 = vadd.f32 0.0, %v1282
      %1284 = vmatmul.bf16.gmra.mxu0 %v1207
      %v1285 = vpop.f32.mrf.mxu0
      %v1286 = vadd.f32 0.0, %v1285
      %v1287 = vpop.f32.mrf.mxu0
      %v1288 = vadd.f32 0.0, %v1287
      %1289 = vmatmul.bf16.gmra.mxu0 %v1210
      %v1290 = vpop.f32.mrf.mxu0
      %v1291 = vadd.f32 0.0, %v1290
      %v1292 = vpop.f32.mrf.mxu0
      %v1293 = vadd.f32 0.0, %v1292
      %1294 = vmatmul.bf16.gmra.mxu0 %v1213
      %v1295 = vpop.f32.mrf.mxu0
      %v1296 = vadd.f32 0.0, %v1295
      %v1297 = vpop.f32.mrf.mxu0
      %v1298 = vadd.f32 0.0, %v1297
      %1299 = vmatmul.bf16.gmra.mxu0 %v1216
      %v1300 = vpop.f32.mrf.mxu0
      %v1301 = vadd.f32 0.0, %v1300
      %v1302 = vpop.f32.mrf.mxu0
      %v1303 = vadd.f32 0.0, %v1302
      %1304 = vmatmul.bf16.gmra.mxu0 %v1219
      %v1305 = vpop.f32.mrf.mxu0
      %v1306 = vadd.f32 0.0, %v1305
      %v1307 = vpop.f32.mrf.mxu0
      %v1308 = vadd.f32 0.0, %v1307
      %1309 = vmatmul.bf16.gmra.mxu0 %v1222
      %v1310 = vpop.f32.mrf.mxu0
      %v1311 = vadd.f32 0.0, %v1310
      %v1312 = vpop.f32.mrf.mxu0
      %v1313 = vadd.f32 0.0, %v1312
      %1314 = vmatmul.bf16.gmra.mxu0 %v1225
      %v1315 = vpop.f32.mrf.mxu0
      %v1316 = vadd.f32 0.0, %v1315
      %v1317 = vpop.f32.mrf.mxu0
      %v1318 = vadd.f32 0.0, %v1317
      %1319 = vmatmul.bf16.gmra.mxu0 %v1228
      %v1320 = vpop.f32.mrf.mxu0
      %v1321 = vadd.f32 0.0, %v1320
      %v1322 = vpop.f32.mrf.mxu0
      %v1323 = vadd.f32 0.0, %v1322
      %1324 = vmatmul.bf16.gmra.mxu0 %v1231
      %v1325 = vpop.f32.mrf.mxu0
      %v1326 = vadd.f32 0.0, %v1325
      %v1327 = vpop.f32.mrf.mxu0
      %v1328 = vadd.f32 0.0, %v1327
      %1329 = vmatmul.bf16.gmra.mxu0 %v1234
      %v1330 = vpop.f32.mrf.mxu0
      %v1331 = vadd.f32 0.0, %v1330
      %v1332 = vpop.f32.mrf.mxu0
      %v1333 = vadd.f32 0.0, %v1332
      %1334 = vmatmul.bf16.gmra.mxu0 %v1237
      %v1335 = vpop.f32.mrf.mxu0
      %v1336 = vadd.f32 0.0, %v1335
      %v1337 = vpop.f32.mrf.mxu0
      %v1338 = vadd.f32 0.0, %v1337
      %1339 = vmatmul.bf16.gmra.mxu0 %v1240
      %v1340 = vpop.f32.mrf.mxu0
      %v1341 = vadd.f32 0.0, %v1340
      %v1342 = vpop.f32.mrf.mxu0
      %v1343 = vadd.f32 0.0, %v1342
      %1344 = vmatmul.bf16.gmra.mxu0 %v1243
      %v1345 = vpop.f32.mrf.mxu0
      %v1346 = vadd.f32 0.0, %v1345
      %v1347 = vpop.f32.mrf.mxu0
      %v1348 = vadd.f32 0.0, %v1347
      %1349 = vmatmul.bf16.gmra.mxu0 %v1246
      %v1350 = vpop.f32.mrf.mxu0
      %v1351 = vadd.f32 0.0, %v1350
      %v1352 = vpop.f32.mrf.mxu0
      %v1353 = vadd.f32 0.0, %v1352
      %1354 = vmatmul.bf16.gmra.mxu0 %v1249
      %v1355 = vpop.f32.mrf.mxu0
      %v1356 = vadd.f32 0.0, %v1355
      %v1357 = vpop.f32.mrf.mxu0
      %v1358 = vadd.f32 0.0, %v1357
      %1359 = vmatmul.bf16.gmra.mxu0 %v1252
      %v1360 = vpop.f32.mrf.mxu0
      %v1361 = vadd.f32 0.0, %v1360
      %v1362 = vpop.f32.mrf.mxu0
      %v1363 = vadd.f32 0.0, %v1362
      %1364 = vmatmul.bf16.gmra.mxu0 %v1255
      %v1365 = vpop.f32.mrf.mxu0
      %v1366 = vadd.f32 0.0, %v1365
      %v1367 = vpop.f32.mrf.mxu0
      %v1368 = vadd.f32 0.0, %v1367
      %1369 = vmatmul.bf16.gmra.mxu0 %v1258
      %v1370 = vpop.f32.mrf.mxu0
      %v1371 = vadd.f32 0.0, %v1370
      %v1372 = vpop.f32.mrf.mxu0
      %v1373 = vadd.f32 0.0, %v1372
      %1374 = vmatmul.bf16.gmra.mxu0 %v1261
      %v1375 = vpop.f32.mrf.mxu0
      %v1376 = vadd.f32 0.0, %v1375
      %v1377 = vpop.f32.mrf.mxu0
      %v1378 = vadd.f32 0.0, %v1377
      %1379 = vmatmul.bf16.gmra.mxu0 %v1264
      %v1380 = vpop.f32.mrf.mxu0
      %v1381 = vadd.f32 0.0, %v1380
      %v1382 = vpop.f32.mrf.mxu0
      %1383 = vdwg.mxu0
      %v1388 = vunpack.c.l.b16 %v895
      %v1389 = vunpack.c.l.b16 %v896
      %v1390 = vunpack.c.l.b16 %v897
      %v1391 = vunpack.c.l.b16 %v898
      %v1392 = vpack.c.b16 %v1389, %v1388
      %v1393 = vpack.c.b16 %v1391, %v1390
      %v1396 = vsel %vm1199, %v990, 0
      %v1398 = vsel %vm1199, %v991, 0
      %v1400 = vsel %vm1199, %v992, 0
      %v1402 = vsel %vm1199, %v993, 0
      %v1404 = vsel %vm1199, %v994, 0
      %v1406 = vsel %vm1199, %v995, 0
      %v1408 = vsel %vm1199, %v996, 0
      %v1410 = vsel %vm1199, %v997, 0
      %v1412 = vsel %vm1199, %v998, 0
      %v1414 = vsel %vm1199, %v999, 0
      %v1416 = vsel %vm1199, %v1000, 0
      %v1418 = vsel %vm1199, %v1001, 0
      %v1420 = vsel %vm1199, %v1002, 0
      %v1422 = vsel %vm1199, %v1003, 0
      %v1424 = vsel %vm1199, %v1004, 0
      %v1426 = vsel %vm1199, %v1005, 0
      %v1428 = vsel %vm1199, %v1006, 0
      %v1430 = vsel %vm1199, %v1007, 0
      %v1432 = vsel %vm1199, %v1008, 0
      %v1434 = vsel %vm1199, %v1009, 0
      %v1436 = vsel %vm1199, %v1010, 0
      %v1438 = vsel %vm1199, %v1011, 0
      %1440 = vmatpush.bf16.msra.mxu0 0
      %1441 = vmatpush.bf16.msra.mxu0 0
      %1442 = vmatpush.bf16.msra.mxu0 0
      %1443 = vmatpush.bf16.msra.mxu0 0
      %1444 = vmatpush.bf16.msra.mxu0 0
      %1445 = vmatpush.bf16.msra.mxu0 0
      %1446 = vmatpush.bf16.msra.mxu0 %v1393
      %1447 = vmatpush.bf16.msra.mxu0 %v1392
      %1448 = vmatmul.bf16.gmra.mxu0 %v1396
      %v1449 = vpop.f32.mrf.mxu0
      %v1450 = vadd.f32 %v1276, %v1449
      %v1451 = vpop.f32.mrf.mxu0
      %v1452 = vadd.f32 %v1278, %v1451
      %1453 = vmatmul.bf16.gmra.mxu0 %v1398
      %v1454 = vpop.f32.mrf.mxu0
      %v1455 = vadd.f32 %v1281, %v1454
      %v1456 = vpop.f32.mrf.mxu0
      %v1457 = vadd.f32 %v1283, %v1456
      %1458 = vmatmul.bf16.gmra.mxu0 %v1400
      %v1459 = vpop.f32.mrf.mxu0
      %v1460 = vadd.f32 %v1286, %v1459
      %v1461 = vpop.f32.mrf.mxu0
      %v1462 = vadd.f32 %v1288, %v1461
      %1463 = vmatmul.bf16.gmra.mxu0 %v1402
      %v1464 = vpop.f32.mrf.mxu0
      %v1465 = vadd.f32 %v1291, %v1464
      %v1466 = vpop.f32.mrf.mxu0
      %v1467 = vadd.f32 %v1293, %v1466
      %1468 = vmatmul.bf16.gmra.mxu0 %v1404
      %v1469 = vpop.f32.mrf.mxu0
      %v1470 = vadd.f32 %v1296, %v1469
      %v1471 = vpop.f32.mrf.mxu0
      %v1472 = vadd.f32 %v1298, %v1471
      %1473 = vmatmul.bf16.gmra.mxu0 %v1406
      %v1474 = vpop.f32.mrf.mxu0
      %v1475 = vadd.f32 %v1301, %v1474
      %v1476 = vpop.f32.mrf.mxu0
      %v1477 = vadd.f32 %v1303, %v1476
      %1478 = vmatmul.bf16.gmra.mxu0 %v1408
      %v1479 = vpop.f32.mrf.mxu0
      %v1480 = vadd.f32 %v1306, %v1479
      %v1481 = vpop.f32.mrf.mxu0
      %v1482 = vadd.f32 %v1308, %v1481
      %1483 = vmatmul.bf16.gmra.mxu0 %v1410
      %v1484 = vpop.f32.mrf.mxu0
      %v1485 = vadd.f32 %v1311, %v1484
      %v1486 = vpop.f32.mrf.mxu0
      %v1487 = vadd.f32 %v1313, %v1486
      %1488 = vmatmul.bf16.gmra.mxu0 %v1412
      %v1489 = vpop.f32.mrf.mxu0
      %v1490 = vadd.f32 %v1316, %v1489
      %v1491 = vpop.f32.mrf.mxu0
      %v1492 = vadd.f32 %v1318, %v1491
      %1493 = vmatmul.bf16.gmra.mxu0 %v1414
      %v1494 = vpop.f32.mrf.mxu0
      %v1495 = vadd.f32 %v1321, %v1494
      %v1496 = vpop.f32.mrf.mxu0
      %v1497 = vadd.f32 %v1323, %v1496
      %1498 = vmatmul.bf16.gmra.mxu0 %v1416
      %v1499 = vpop.f32.mrf.mxu0
      %v1500 = vadd.f32 %v1326, %v1499
      %v1501 = vpop.f32.mrf.mxu0
      %v1502 = vadd.f32 %v1328, %v1501
      %1503 = vmatmul.bf16.gmra.mxu0 %v1418
      %v1504 = vpop.f32.mrf.mxu0
      %v1505 = vadd.f32 %v1331, %v1504
      %v1506 = vpop.f32.mrf.mxu0
      %v1507 = vadd.f32 %v1333, %v1506
      %1508 = vmatmul.bf16.gmra.mxu0 %v1420
      %v1509 = vpop.f32.mrf.mxu0
      %v1510 = vadd.f32 %v1336, %v1509
      %v1511 = vpop.f32.mrf.mxu0
      %v1512 = vadd.f32 %v1338, %v1511
      %1513 = vmatmul.bf16.gmra.mxu0 %v1422
      %v1514 = vpop.f32.mrf.mxu0
      %v1515 = vadd.f32 %v1341, %v1514
      %v1516 = vpop.f32.mrf.mxu0
      %v1517 = vadd.f32 %v1343, %v1516
      %1518 = vmatmul.bf16.gmra.mxu0 %v1424
      %v1519 = vpop.f32.mrf.mxu0
      %v1520 = vadd.f32 %v1346, %v1519
      %v1521 = vpop.f32.mrf.mxu0
      %v1522 = vadd.f32 %v1348, %v1521
      %1523 = vmatmul.bf16.gmra.mxu0 %v1426
      %v1524 = vpop.f32.mrf.mxu0
      %v1525 = vadd.f32 %v1351, %v1524
      %v1526 = vpop.f32.mrf.mxu0
      %v1527 = vadd.f32 %v1353, %v1526
      %1528 = vmatmul.bf16.gmra.mxu0 %v1428
      %v1529 = vpop.f32.mrf.mxu0
      %v1530 = vadd.f32 %v1356, %v1529
      %v1531 = vpop.f32.mrf.mxu0
      %v1532 = vadd.f32 %v1358, %v1531
      %1533 = vmatmul.bf16.gmra.mxu0 %v1430
      %v1534 = vpop.f32.mrf.mxu0
      %v1535 = vadd.f32 %v1361, %v1534
      %v1536 = vpop.f32.mrf.mxu0
      %v1537 = vadd.f32 %v1363, %v1536
      %1538 = vmatmul.bf16.gmra.mxu0 %v1432
      %v1539 = vpop.f32.mrf.mxu0
      %v1540 = vadd.f32 %v1366, %v1539
      %v1541 = vpop.f32.mrf.mxu0
      %v1542 = vadd.f32 %v1368, %v1541
      %1543 = vmatmul.bf16.gmra.mxu0 %v1434
      %v1544 = vpop.f32.mrf.mxu0
      %v1545 = vadd.f32 %v1371, %v1544
      %v1546 = vpop.f32.mrf.mxu0
      %v1547 = vadd.f32 %v1373, %v1546
      %1548 = vmatmul.bf16.gmra.mxu0 %v1436
      %v1549 = vpop.f32.mrf.mxu0
      %v1550 = vadd.f32 %v1376, %v1549
      %v1551 = vpop.f32.mrf.mxu0
      %v1552 = vadd.f32 %v1378, %v1551
      %1553 = vmatmul.bf16.gmra.mxu0 %v1438
      %v1554 = vpop.f32.mrf.mxu0
      %v1555 = vadd.f32 %v1381, %v1554
      %v1556 = vpop.f32.mrf.mxu0
      %1557 = vdwg.mxu0
      %v1558 = vld [vmem:[#allocation2] sm:$0xe]
      %v1559 = vld [vmem:[#allocation2 + $0xa8] sm:$0x3]
      %s1560 = scalar_lea.vmem %s3, 32
      %v1561 = vld [vmem:[%s1560] sm:$0xf]
      %v1562 = vld [vmem:[%s1560 + $0x4] sm:$0xf]
      %v1563 = vld [vmem:[%s1560 + $0x8] sm:$0xf]
      %v1564 = vld [vmem:[%s1560 + $0xc] sm:$0xf]
      %v1567 = vunpack.c.l.b16 %v1558
      %v1568 = vunpack.c.l.b16 %v1559
      %v1569 = vpack.c.b16 %v948, %v1567
      %v1570 = vpack.c.b16 %v1568, %v1568
      %vm1571 = vcmask 1046528
      %v1572 = vrot.slane %v1569, 1
      %v1573 = vrot.slane %v991, 1
      %v1574 = vsel %vm1571, %v1572, %v1573
      %v1575 = vrot.slane %v992, 1
      %v1576 = vsel %vm1571, %v1573, %v1575
      %v1577 = vrot.slane %v993, 1
      %v1578 = vsel %vm1571, %v1575, %v1577
      %v1579 = vrot.slane %v994, 1
      %v1580 = vsel %vm1571, %v1577, %v1579
      %v1581 = vrot.slane %v995, 1
      %v1582 = vsel %vm1571, %v1579, %v1581
      %v1583 = vrot.slane %v996, 1
      %v1584 = vsel %vm1571, %v1581, %v1583
      %v1585 = vrot.slane %v997, 1
      %v1586 = vsel %vm1571, %v1583, %v1585
      %v1587 = vrot.slane %v998, 1
      %v1588 = vsel %vm1571, %v1585, %v1587
      %v1589 = vrot.slane %v999, 1
      %v1590 = vsel %vm1571, %v1587, %v1589
      %v1591 = vrot.slane %v1000, 1
      %v1592 = vsel %vm1571, %v1589, %v1591
      %v1593 = vrot.slane %v1001, 1
      %v1594 = vsel %vm1571, %v1591, %v1593
      %v1595 = vrot.slane %v1002, 1
      %v1596 = vsel %vm1571, %v1593, %v1595
      %v1597 = vrot.slane %v1003, 1
      %v1598 = vsel %vm1571, %v1595, %v1597
      %v1599 = vrot.slane %v1004, 1
      %v1600 = vsel %vm1571, %v1597, %v1599
      %v1601 = vrot.slane %v1005, 1
      %v1602 = vsel %vm1571, %v1599, %v1601
      %v1603 = vrot.slane %v1006, 1
      %v1604 = vsel %vm1571, %v1601, %v1603
      %v1605 = vrot.slane %v1007, 1
      %v1606 = vsel %vm1571, %v1603, %v1605
      %v1607 = vrot.slane %v1008, 1
      %v1608 = vsel %vm1571, %v1605, %v1607
      %v1609 = vrot.slane %v1009, 1
      %v1610 = vsel %vm1571, %v1607, %v1609
      %v1611 = vrot.slane %v1010, 1
      %v1612 = vsel %vm1571, %v1609, %v1611
      %v1613 = vrot.slane %v1570, 1
      %v1614 = vsel %vm1571, %v1611, %v1613
      %v1619 = vunpack.c.l.b16 %v1561
      %v1620 = vunpack.c.l.b16 %v1562
      %v1621 = vunpack.c.l.b16 %v1563
      %v1622 = vunpack.c.l.b16 %v1564
      %v1623 = vpack.c.b16 %v1620, %v1619
      %v1624 = vpack.c.b16 %v1622, %v1621
      %v1628 = vsel %vm1199, %v1574, 0
      %v1631 = vsel %vm1199, %v1576, 0
      %v1634 = vsel %vm1199, %v1578, 0
      %v1637 = vsel %vm1199, %v1580, 0
      %v1640 = vsel %vm1199, %v1582, 0
      %v1643 = vsel %vm1199, %v1584, 0
      %v1646 = vsel %vm1199, %v1586, 0
      %v1649 = vsel %vm1199, %v1588, 0
      %v1652 = vsel %vm1199, %v1590, 0
      %v1655 = vsel %vm1199, %v1592, 0
      %v1658 = vsel %vm1199, %v1594, 0
      %v1661 = vsel %vm1199, %v1596, 0
      %v1664 = vsel %vm1199, %v1598, 0
      %v1667 = vsel %vm1199, %v1600, 0
      %v1670 = vsel %vm1199, %v1602, 0
      %v1673 = vsel %vm1199, %v1604, 0
      %v1676 = vsel %vm1199, %v1606, 0
      %v1679 = vsel %vm1199, %v1608, 0
      %v1682 = vsel %vm1199, %v1610, 0
      %v1685 = vsel %vm1199, %v1612, 0
      %v1688 = vsel %vm1199, %v1614, 0
      %v1691 = vsel %vm1199, %v1613, 0
      %1693 = vmatpush.bf16.msra.mxu0 0
      %1694 = vmatpush.bf16.msra.mxu0 0
      %1695 = vmatpush.bf16.msra.mxu0 0
      %1696 = vmatpush.bf16.msra.mxu0 0
      %1697 = vmatpush.bf16.msra.mxu0 0
      %1698 = vmatpush.bf16.msra.mxu0 0
      %1699 = vmatpush.bf16.msra.mxu0 %v1624
      %1700 = vmatpush.bf16.msra.mxu0 %v1623
      %1701 = vmatmul.bf16.gmra.mxu0 %v1628
      %v1702 = vpop.f32.mrf.mxu0
      %v1703 = vadd.f32 0.0, %v1702
      %v1704 = vpop.f32.mrf.mxu0
      %v1705 = vadd.f32 0.0, %v1704
      %1706 = vmatmul.bf16.gmra.mxu0 %v1631
      %v1707 = vpop.f32.mrf.mxu0
      %v1708 = vadd.f32 0.0, %v1707
      %v1709 = vpop.f32.mrf.mxu0
      %v1710 = vadd.f32 0.0, %v1709
      %1711 = vmatmul.bf16.gmra.mxu0 %v1634
      %v1712 = vpop.f32.mrf.mxu0
      %v1713 = vadd.f32 0.0, %v1712
      %v1714 = vpop.f32.mrf.mxu0
      %v1715 = vadd.f32 0.0, %v1714
      %1716 = vmatmul.bf16.gmra.mxu0 %v1637
      %v1717 = vpop.f32.mrf.mxu0
      %v1718 = vadd.f32 0.0, %v1717
      %v1719 = vpop.f32.mrf.mxu0
      %v1720 = vadd.f32 0.0, %v1719
      %1721 = vmatmul.bf16.gmra.mxu0 %v1640
      %v1722 = vpop.f32.mrf.mxu0
      %v1723 = vadd.f32 0.0, %v1722
      %v1724 = vpop.f32.mrf.mxu0
      %v1725 = vadd.f32 0.0, %v1724
      %1726 = vmatmul.bf16.gmra.mxu0 %v1643
      %v1727 = vpop.f32.mrf.mxu0
      %v1728 = vadd.f32 0.0, %v1727
      %v1729 = vpop.f32.mrf.mxu0
      %v1730 = vadd.f32 0.0, %v1729
      %1731 = vmatmul.bf16.gmra.mxu0 %v1646
      %v1732 = vpop.f32.mrf.mxu0
      %v1733 = vadd.f32 0.0, %v1732
      %v1734 = vpop.f32.mrf.mxu0
      %v1735 = vadd.f32 0.0, %v1734
      %1736 = vmatmul.bf16.gmra.mxu0 %v1649
      %v1737 = vpop.f32.mrf.mxu0
      %v1738 = vadd.f32 0.0, %v1737
      %v1739 = vpop.f32.mrf.mxu0
      %v1740 = vadd.f32 0.0, %v1739
      %1741 = vmatmul.bf16.gmra.mxu0 %v1652
      %v1742 = vpop.f32.mrf.mxu0
      %v1743 = vadd.f32 0.0, %v1742
      %v1744 = vpop.f32.mrf.mxu0
      %v1745 = vadd.f32 0.0, %v1744
      %1746 = vmatmul.bf16.gmra.mxu0 %v1655
      %v1747 = vpop.f32.mrf.mxu0
      %v1748 = vadd.f32 0.0, %v1747
      %v1749 = vpop.f32.mrf.mxu0
      %v1750 = vadd.f32 0.0, %v1749
      %1751 = vmatmul.bf16.gmra.mxu0 %v1658
      %v1752 = vpop.f32.mrf.mxu0
      %v1753 = vadd.f32 0.0, %v1752
      %v1754 = vpop.f32.mrf.mxu0
      %v1755 = vadd.f32 0.0, %v1754
      %1756 = vmatmul.bf16.gmra.mxu0 %v1661
      %v1757 = vpop.f32.mrf.mxu0
      %v1758 = vadd.f32 0.0, %v1757
      %v1759 = vpop.f32.mrf.mxu0
      %v1760 = vadd.f32 0.0, %v1759
      %1761 = vmatmul.bf16.gmra.mxu0 %v1664
      %v1762 = vpop.f32.mrf.mxu0
      %v1763 = vadd.f32 0.0, %v1762
      %v1764 = vpop.f32.mrf.mxu0
      %v1765 = vadd.f32 0.0, %v1764
      %1766 = vmatmul.bf16.gmra.mxu0 %v1667
      %v1767 = vpop.f32.mrf.mxu0
      %v1768 = vadd.f32 0.0, %v1767
      %v1769 = vpop.f32.mrf.mxu0
      %v1770 = vadd.f32 0.0, %v1769
      %1771 = vmatmul.bf16.gmra.mxu0 %v1670
      %v1772 = vpop.f32.mrf.mxu0
      %v1773 = vadd.f32 0.0, %v1772
      %v1774 = vpop.f32.mrf.mxu0
      %v1775 = vadd.f32 0.0, %v1774
      %1776 = vmatmul.bf16.gmra.mxu0 %v1673
      %v1777 = vpop.f32.mrf.mxu0
      %v1778 = vadd.f32 0.0, %v1777
      %v1779 = vpop.f32.mrf.mxu0
      %v1780 = vadd.f32 0.0, %v1779
      %1781 = vmatmul.bf16.gmra.mxu0 %v1676
      %v1782 = vpop.f32.mrf.mxu0
      %v1783 = vadd.f32 0.0, %v1782
      %v1784 = vpop.f32.mrf.mxu0
      %v1785 = vadd.f32 0.0, %v1784
      %1786 = vmatmul.bf16.gmra.mxu0 %v1679
      %v1787 = vpop.f32.mrf.mxu0
      %v1788 = vadd.f32 0.0, %v1787
      %v1789 = vpop.f32.mrf.mxu0
      %v1790 = vadd.f32 0.0, %v1789
      %1791 = vmatmul.bf16.gmra.mxu0 %v1682
      %v1792 = vpop.f32.mrf.mxu0
      %v1793 = vadd.f32 0.0, %v1792
      %v1794 = vpop.f32.mrf.mxu0
      %v1795 = vadd.f32 0.0, %v1794
      %1796 = vmatmul.bf16.gmra.mxu0 %v1685
      %v1797 = vpop.f32.mrf.mxu0
      %v1798 = vadd.f32 0.0, %v1797
      %v1799 = vpop.f32.mrf.mxu0
      %v1800 = vadd.f32 0.0, %v1799
      %1801 = vmatmul.bf16.gmra.mxu0 %v1688
      %v1802 = vpop.f32.mrf.mxu0
      %v1803 = vadd.f32 0.0, %v1802
      %v1804 = vpop.f32.mrf.mxu0
      %v1805 = vadd.f32 0.0, %v1804
      %1806 = vmatmul.bf16.gmra.mxu0 %v1691
      %v1807 = vpop.f32.mrf.mxu0
      %v1808 = vadd.f32 0.0, %v1807
      %v1809 = vpop.f32.mrf.mxu0
      %1810 = vdwg.mxu0
      %v1811 = vadd.f32 %v1450, %v1703
      %v1812 = vadd.f32 %v1452, %v1705
      %v1813 = vadd.f32 %v1455, %v1708
      %v1814 = vadd.f32 %v1457, %v1710
      %v1815 = vadd.f32 %v1460, %v1713
      %v1816 = vadd.f32 %v1462, %v1715
      %v1817 = vadd.f32 %v1465, %v1718
      %v1818 = vadd.f32 %v1467, %v1720
      %v1819 = vadd.f32 %v1470, %v1723
      %v1820 = vadd.f32 %v1472, %v1725
      %v1821 = vadd.f32 %v1475, %v1728
      %v1822 = vadd.f32 %v1477, %v1730
      %v1823 = vadd.f32 %v1480, %v1733
      %v1824 = vadd.f32 %v1482, %v1735
      %v1825 = vadd.f32 %v1485, %v1738
      %v1826 = vadd.f32 %v1487, %v1740
      %v1827 = vadd.f32 %v1490, %v1743
      %v1828 = vadd.f32 %v1492, %v1745
      %v1829 = vadd.f32 %v1495, %v1748
      %v1830 = vadd.f32 %v1497, %v1750
      %v1831 = vadd.f32 %v1500, %v1753
      %v1832 = vadd.f32 %v1502, %v1755
      %v1833 = vadd.f32 %v1505, %v1758
      %v1834 = vadd.f32 %v1507, %v1760
      %v1835 = vadd.f32 %v1510, %v1763
      %v1836 = vadd.f32 %v1512, %v1765
      %v1837 = vadd.f32 %v1515, %v1768
      %v1838 = vadd.f32 %v1517, %v1770
      %v1839 = vadd.f32 %v1520, %v1773
      %v1840 = vadd.f32 %v1522, %v1775
      %v1841 = vadd.f32 %v1525, %v1778
      %v1842 = vadd.f32 %v1527, %v1780
      %v1843 = vadd.f32 %v1530, %v1783
      %v1844 = vadd.f32 %v1532, %v1785
      %v1845 = vadd.f32 %v1535, %v1788
      %v1846 = vadd.f32 %v1537, %v1790
      %v1847 = vadd.f32 %v1540, %v1793
      %v1848 = vadd.f32 %v1542, %v1795
      %v1849 = vadd.f32 %v1545, %v1798
      %v1850 = vadd.f32 %v1547, %v1800
      %v1851 = vadd.f32 %v1550, %v1803
      %v1852 = vadd.f32 %v1552, %v1805
      %v1853 = vadd.f32 %v1555, %v1808
      %s1854 = scalar_lea.vmem %s3, 48
      %v1855 = vld [vmem:[%s1854] sm:$0xf]
      %v1856 = vld [vmem:[%s1854 + $0x4] sm:$0xf]
      %v1857 = vld [vmem:[%s1854 + $0x8] sm:$0xf]
      %v1858 = vld [vmem:[%s1854 + $0xc] sm:$0xf]
      %vm1859 = vsmask.f32 6400
      %v1861 = vshrl.u32 %v1569, 16
      %v1863 = vrot.slane %v1861, 1
      %v1864 = vshll.u32 %v1569, 16
      %v1866 = vrot.slane %v1864, 2
      %v1867 = vor.u32 %v1863, %v1866
      %v1868 = vrot.slane %v1025, 1
      %v1869 = vrot.slane %v1021, 2
      %v1870 = vor.u32 %v1868, %v1869
      %v1871 = vsel %vm1859, %v1867, %v1870
      %v1872 = vrot.slane %v1033, 1
      %v1873 = vrot.slane %v1029, 2
      %v1874 = vor.u32 %v1872, %v1873
      %v1875 = vsel %vm1859, %v1870, %v1874
      %v1876 = vrot.slane %v1041, 1
      %v1877 = vrot.slane %v1037, 2
      %v1878 = vor.u32 %v1876, %v1877
      %v1879 = vsel %vm1859, %v1874, %v1878
      %v1880 = vrot.slane %v1049, 1
      %v1881 = vrot.slane %v1045, 2
      %v1882 = vor.u32 %v1880, %v1881
      %v1883 = vsel %vm1859, %v1878, %v1882
      %v1884 = vrot.slane %v1057, 1
      %v1885 = vrot.slane %v1053, 2
      %v1886 = vor.u32 %v1884, %v1885
      %v1887 = vsel %vm1859, %v1882, %v1886
      %v1888 = vrot.slane %v1065, 1
      %v1889 = vrot.slane %v1061, 2
      %v1890 = vor.u32 %v1888, %v1889
      %v1891 = vsel %vm1859, %v1886, %v1890
      %v1892 = vrot.slane %v1073, 1
      %v1893 = vrot.slane %v1069, 2
      %v1894 = vor.u32 %v1892, %v1893
      %v1895 = vsel %vm1859, %v1890, %v1894
      %v1896 = vrot.slane %v1081, 1
      %v1897 = vrot.slane %v1077, 2
      %v1898 = vor.u32 %v1896, %v1897
      %v1899 = vsel %vm1859, %v1894, %v1898
      %v1900 = vrot.slane %v1089, 1
      %v1901 = vrot.slane %v1085, 2
      %v1902 = vor.u32 %v1900, %v1901
      %v1903 = vsel %vm1859, %v1898, %v1902
      %v1904 = vrot.slane %v1097, 1
      %v1905 = vrot.slane %v1093, 2
      %v1906 = vor.u32 %v1904, %v1905
      %v1907 = vsel %vm1859, %v1902, %v1906
      %v1908 = vrot.slane %v1105, 1
      %v1909 = vrot.slane %v1101, 2
      %v1910 = vor.u32 %v1908, %v1909
      %v1911 = vsel %vm1859, %v1906, %v1910
      %v1912 = vrot.slane %v1113, 1
      %v1913 = vrot.slane %v1109, 2
      %v1914 = vor.u32 %v1912, %v1913
      %v1915 = vsel %vm1859, %v1910, %v1914
      %v1916 = vrot.slane %v1121, 1
      %v1917 = vrot.slane %v1117, 2
      %v1918 = vor.u32 %v1916, %v1917
      %v1919 = vsel %vm1859, %v1914, %v1918
      %v1920 = vrot.slane %v1129, 1
      %v1921 = vrot.slane %v1125, 2
      %v1922 = vor.u32 %v1920, %v1921
      %v1923 = vsel %vm1859, %v1918, %v1922
      %v1924 = vrot.slane %v1137, 1
      %v1925 = vrot.slane %v1133, 2
      %v1926 = vor.u32 %v1924, %v1925
      %v1927 = vsel %vm1859, %v1922, %v1926
      %v1928 = vrot.slane %v1145, 1
      %v1929 = vrot.slane %v1141, 2
      %v1930 = vor.u32 %v1928, %v1929
      %v1931 = vsel %vm1859, %v1926, %v1930
      %v1932 = vrot.slane %v1153, 1
      %v1933 = vrot.slane %v1149, 2
      %v1934 = vor.u32 %v1932, %v1933
      %v1935 = vsel %vm1859, %v1930, %v1934
      %v1936 = vrot.slane %v1161, 1
      %v1937 = vrot.slane %v1157, 2
      %v1938 = vor.u32 %v1936, %v1937
      %v1939 = vsel %vm1859, %v1934, %v1938
      %v1940 = vrot.slane %v1169, 1
      %v1941 = vrot.slane %v1165, 2
      %v1942 = vor.u32 %v1940, %v1941
      %v1943 = vsel %vm1859, %v1938, %v1942
      %v1944 = vrot.slane %v1177, 1
      %v1945 = vrot.slane %v1173, 2
      %v1946 = vor.u32 %v1944, %v1945
      %v1947 = vsel %vm1859, %v1942, %v1946
      %v1949 = vshrl.u32 %v1570, 16
      %v1951 = vrot.slane %v1949, 1
      %v1952 = vshll.u32 %v1570, 16
      %v1954 = vrot.slane %v1952, 2
      %v1955 = vor.u32 %v1951, %v1954
      %v1956 = vsel %vm1859, %v1946, %v1955
      %v1961 = vunpack.c.l.b16 %v1855
      %v1962 = vunpack.c.l.b16 %v1856
      %v1963 = vunpack.c.l.b16 %v1857
      %v1964 = vunpack.c.l.b16 %v1858
      %v1965 = vpack.c.b16 %v1962, %v1961
      %v1966 = vpack.c.b16 %v1964, %v1963
      %v1970 = vsel %vm1199, %v1871, 0
      %v1973 = vsel %vm1199, %v1875, 0
      %v1976 = vsel %vm1199, %v1879, 0
      %v1979 = vsel %vm1199, %v1883, 0
      %v1982 = vsel %vm1199, %v1887, 0
      %v1985 = vsel %vm1199, %v1891, 0
      %v1988 = vsel %vm1199, %v1895, 0
      %v1991 = vsel %vm1199, %v1899, 0
      %v1994 = vsel %vm1199, %v1903, 0
      %v1997 = vsel %vm1199, %v1907, 0
      %v2000 = vsel %vm1199, %v1911, 0
      %v2003 = vsel %vm1199, %v1915, 0
      %v2006 = vsel %vm1199, %v1919, 0
      %v2009 = vsel %vm1199, %v1923, 0
      %v2012 = vsel %vm1199, %v1927, 0
      %v2015 = vsel %vm1199, %v1931, 0
      %v2018 = vsel %vm1199, %v1935, 0
      %v2021 = vsel %vm1199, %v1939, 0
      %v2024 = vsel %vm1199, %v1943, 0
      %v2027 = vsel %vm1199, %v1947, 0
      %v2030 = vsel %vm1199, %v1956, 0
      %v2033 = vsel %vm1199, %v1951, 0
      %2035 = vmatpush.bf16.msra.mxu0 0
      %2036 = vmatpush.bf16.msra.mxu0 0
      %2037 = vmatpush.bf16.msra.mxu0 0
      %2038 = vmatpush.bf16.msra.mxu0 0
      %2039 = vmatpush.bf16.msra.mxu0 0
      %2040 = vmatpush.bf16.msra.mxu0 0
      %2041 = vmatpush.bf16.msra.mxu0 %v1966
      %2042 = vmatpush.bf16.msra.mxu0 %v1965
      %2043 = vmatmul.bf16.gmra.mxu0 %v1970
      %v2044 = vpop.f32.mrf.mxu0
      %v2045 = vadd.f32 0.0, %v2044
      %v2046 = vpop.f32.mrf.mxu0
      %v2047 = vadd.f32 0.0, %v2046
      %2048 = vmatmul.bf16.gmra.mxu0 %v1973
      %v2049 = vpop.f32.mrf.mxu0
      %v2050 = vadd.f32 0.0, %v2049
      %v2051 = vpop.f32.mrf.mxu0
      %v2052 = vadd.f32 0.0, %v2051
      %2053 = vmatmul.bf16.gmra.mxu0 %v1976
      %v2054 = vpop.f32.mrf.mxu0
      %v2055 = vadd.f32 0.0, %v2054
      %v2056 = vpop.f32.mrf.mxu0
      %v2057 = vadd.f32 0.0, %v2056
      %2058 = vmatmul.bf16.gmra.mxu0 %v1979
      %v2059 = vpop.f32.mrf.mxu0
      %v2060 = vadd.f32 0.0, %v2059
      %v2061 = vpop.f32.mrf.mxu0
      %v2062 = vadd.f32 0.0, %v2061
      %2063 = vmatmul.bf16.gmra.mxu0 %v1982
      %v2064 = vpop.f32.mrf.mxu0
      %v2065 = vadd.f32 0.0, %v2064
      %v2066 = vpop.f32.mrf.mxu0
      %v2067 = vadd.f32 0.0, %v2066
      %2068 = vmatmul.bf16.gmra.mxu0 %v1985
      %v2069 = vpop.f32.mrf.mxu0
      %v2070 = vadd.f32 0.0, %v2069
      %v2071 = vpop.f32.mrf.mxu0
      %v2072 = vadd.f32 0.0, %v2071
      %2073 = vmatmul.bf16.gmra.mxu0 %v1988
      %v2074 = vpop.f32.mrf.mxu0
      %v2075 = vadd.f32 0.0, %v2074
      %v2076 = vpop.f32.mrf.mxu0
      %v2077 = vadd.f32 0.0, %v2076
      %2078 = vmatmul.bf16.gmra.mxu0 %v1991
      %v2079 = vpop.f32.mrf.mxu0
      %v2080 = vadd.f32 0.0, %v2079
      %v2081 = vpop.f32.mrf.mxu0
      %v2082 = vadd.f32 0.0, %v2081
      %2083 = vmatmul.bf16.gmra.mxu0 %v1994
      %v2084 = vpop.f32.mrf.mxu0
      %v2085 = vadd.f32 0.0, %v2084
      %v2086 = vpop.f32.mrf.mxu0
      %v2087 = vadd.f32 0.0, %v2086
      %2088 = vmatmul.bf16.gmra.mxu0 %v1997
      %v2089 = vpop.f32.mrf.mxu0
      %v2090 = vadd.f32 0.0, %v2089
      %v2091 = vpop.f32.mrf.mxu0
      %v2092 = vadd.f32 0.0, %v2091
      %2093 = vmatmul.bf16.gmra.mxu0 %v2000
      %v2094 = vpop.f32.mrf.mxu0
      %v2095 = vadd.f32 0.0, %v2094
      %v2096 = vpop.f32.mrf.mxu0
      %v2097 = vadd.f32 0.0, %v2096
      %2098 = vmatmul.bf16.gmra.mxu0 %v2003
      %v2099 = vpop.f32.mrf.mxu0
      %v2100 = vadd.f32 0.0, %v2099
      %v2101 = vpop.f32.mrf.mxu0
      %v2102 = vadd.f32 0.0, %v2101
      %2103 = vmatmul.bf16.gmra.mxu0 %v2006
      %v2104 = vpop.f32.mrf.mxu0
      %v2105 = vadd.f32 0.0, %v2104
      %v2106 = vpop.f32.mrf.mxu0
      %v2107 = vadd.f32 0.0, %v2106
      %2108 = vmatmul.bf16.gmra.mxu0 %v2009
      %v2109 = vpop.f32.mrf.mxu0
      %v2110 = vadd.f32 0.0, %v2109
      %v2111 = vpop.f32.mrf.mxu0
      %v2112 = vadd.f32 0.0, %v2111
      %2113 = vmatmul.bf16.gmra.mxu0 %v2012
      %v2114 = vpop.f32.mrf.mxu0
      %v2115 = vadd.f32 0.0, %v2114
      %v2116 = vpop.f32.mrf.mxu0
      %v2117 = vadd.f32 0.0, %v2116
      %2118 = vmatmul.bf16.gmra.mxu0 %v2015
      %v2119 = vpop.f32.mrf.mxu0
      %v2120 = vadd.f32 0.0, %v2119
      %v2121 = vpop.f32.mrf.mxu0
      %v2122 = vadd.f32 0.0, %v2121
      %2123 = vmatmul.bf16.gmra.mxu0 %v2018
      %v2124 = vpop.f32.mrf.mxu0
      %v2125 = vadd.f32 0.0, %v2124
      %v2126 = vpop.f32.mrf.mxu0
      %v2127 = vadd.f32 0.0, %v2126
      %2128 = vmatmul.bf16.gmra.mxu0 %v2021
      %v2129 = vpop.f32.mrf.mxu0
      %v2130 = vadd.f32 0.0, %v2129
      %v2131 = vpop.f32.mrf.mxu0
      %v2132 = vadd.f32 0.0, %v2131
      %2133 = vmatmul.bf16.gmra.mxu0 %v2024
      %v2134 = vpop.f32.mrf.mxu0
      %v2135 = vadd.f32 0.0, %v2134
      %v2136 = vpop.f32.mrf.mxu0
      %v2137 = vadd.f32 0.0, %v2136
      %2138 = vmatmul.bf16.gmra.mxu0 %v2027
      %v2139 = vpop.f32.mrf.mxu0
      %v2140 = vadd.f32 0.0, %v2139
      %v2141 = vpop.f32.mrf.mxu0
      %v2142 = vadd.f32 0.0, %v2141
      %2143 = vmatmul.bf16.gmra.mxu0 %v2030
      %v2144 = vpop.f32.mrf.mxu0
      %v2145 = vadd.f32 0.0, %v2144
      %v2146 = vpop.f32.mrf.mxu0
      %v2147 = vadd.f32 0.0, %v2146
      %2148 = vmatmul.bf16.gmra.mxu0 %v2033
      %v2149 = vpop.f32.mrf.mxu0
      %v2150 = vadd.f32 0.0, %v2149
      %v2151 = vpop.f32.mrf.mxu0
      %2152 = vdwg.mxu0
      %v2153 = vadd.f32 %v1811, %v2045
      %v2154 = vadd.f32 %v1812, %v2047
      %v2155 = vadd.f32 %v1813, %v2050
      %v2156 = vadd.f32 %v1814, %v2052
      %v2157 = vadd.f32 %v1815, %v2055
      %v2158 = vadd.f32 %v1816, %v2057
      %v2159 = vadd.f32 %v1817, %v2060
      %v2160 = vadd.f32 %v1818, %v2062
      %v2161 = vadd.f32 %v1819, %v2065
      %v2162 = vadd.f32 %v1820, %v2067
      %v2163 = vadd.f32 %v1821, %v2070
      %v2164 = vadd.f32 %v1822, %v2072
      %v2165 = vadd.f32 %v1823, %v2075
      %v2166 = vadd.f32 %v1824, %v2077
      %v2167 = vadd.f32 %v1825, %v2080
      %v2168 = vadd.f32 %v1826, %v2082
      %v2169 = vadd.f32 %v1827, %v2085
      %v2170 = vadd.f32 %v1828, %v2087
      %v2171 = vadd.f32 %v1829, %v2090
      %v2172 = vadd.f32 %v1830, %v2092
      %v2173 = vadd.f32 %v1831, %v2095
      %v2174 = vadd.f32 %v1832, %v2097
      %v2175 = vadd.f32 %v1833, %v2100
      %v2176 = vadd.f32 %v1834, %v2102
      %v2177 = vadd.f32 %v1835, %v2105
      %v2178 = vadd.f32 %v1836, %v2107
      %v2179 = vadd.f32 %v1837, %v2110
      %v2180 = vadd.f32 %v1838, %v2112
      %v2181 = vadd.f32 %v1839, %v2115
      %v2182 = vadd.f32 %v1840, %v2117
      %v2183 = vadd.f32 %v1841, %v2120
      %v2184 = vadd.f32 %v1842, %v2122
      %v2185 = vadd.f32 %v1843, %v2125
      %v2186 = vadd.f32 %v1844, %v2127
      %v2187 = vadd.f32 %v1845, %v2130
      %v2188 = vadd.f32 %v1846, %v2132
      %v2189 = vadd.f32 %v1847, %v2135
      %v2190 = vadd.f32 %v1848, %v2137
      %v2191 = vadd.f32 %v1849, %v2140
      %v2192 = vadd.f32 %v1850, %v2142
      %v2193 = vadd.f32 %v1851, %v2145
      %v2194 = vadd.f32 %v1852, %v2147
      %v2195 = vadd.f32 %v1853, %v2150
      %v2196 = vld [vmem:[#allocation2 + $0x8] sm:$0xc]
      %v2197 = vld [vmem:[#allocation2 + $0xc] sm:$0xf]
      %v2198 = vld [vmem:[#allocation2 + $0x10] sm:$0xf]
      %v2199 = vld [vmem:[#allocation2 + $0x14] sm:$0xf]
      %v2200 = vld [vmem:[#allocation2 + $0x18] sm:$0xf]
      %v2201 = vld [vmem:[#allocation2 + $0x1c] sm:$0xf]
      %v2202 = vld [vmem:[#allocation2 + $0x20] sm:$0xf]
      %v2203 = vld [vmem:[#allocation2 + $0x24] sm:$0xf]
      %v2204 = vld [vmem:[#allocation2 + $0x28] sm:$0xf]
      %v2205 = vld [vmem:[#allocation2 + $0x2c] sm:$0xf]
      %v2206 = vld [vmem:[#allocation2 + $0x30] sm:$0xf]
      %v2207 = vld [vmem:[#allocation2 + $0x34] sm:$0xf]
      %v2208 = vld [vmem:[#allocation2 + $0x38] sm:$0xf]
      %v2209 = vld [vmem:[#allocation2 + $0x3c] sm:$0xf]
      %v2210 = vld [vmem:[#allocation2 + $0x40] sm:$0xf]
      %v2211 = vld [vmem:[#allocation2 + $0x44] sm:$0xf]
      %v2212 = vld [vmem:[#allocation2 + $0x48] sm:$0xf]
      %v2213 = vld [vmem:[#allocation2 + $0x4c] sm:$0xf]
      %v2214 = vld [vmem:[#allocation2 + $0x50] sm:$0xf]
      %v2215 = vld [vmem:[#allocation2 + $0x54] sm:$0xf]
      %v2216 = vld [vmem:[#allocation2 + $0x58] sm:$0xf]
      %v2217 = vld [vmem:[#allocation2 + $0x5c] sm:$0xf]
      %v2218 = vld [vmem:[#allocation2 + $0x60] sm:$0xf]
      %v2219 = vld [vmem:[#allocation2 + $0x64] sm:$0xf]
      %v2220 = vld [vmem:[#allocation2 + $0x68] sm:$0xf]
      %v2221 = vld [vmem:[#allocation2 + $0x6c] sm:$0xf]
      %v2222 = vld [vmem:[#allocation2 + $0x70] sm:$0xf]
      %v2223 = vld [vmem:[#allocation2 + $0x74] sm:$0xf]
      %v2224 = vld [vmem:[#allocation2 + $0x78] sm:$0xf]
      %v2225 = vld [vmem:[#allocation2 + $0x7c] sm:$0xf]
      %v2226 = vld [vmem:[#allocation2 + $0x80] sm:$0xf]
      %v2227 = vld [vmem:[#allocation2 + $0x84] sm:$0xf]
      %v2228 = vld [vmem:[#allocation2 + $0x88] sm:$0xf]
      %v2229 = vld [vmem:[#allocation2 + $0x8c] sm:$0xf]
      %v2230 = vld [vmem:[#allocation2 + $0x90] sm:$0xf]
      %v2231 = vld [vmem:[#allocation2 + $0x94] sm:$0xf]
      %v2232 = vld [vmem:[#allocation2 + $0x98] sm:$0xf]
      %v2233 = vld [vmem:[#allocation2 + $0x9c] sm:$0xf]
      %v2234 = vld [vmem:[#allocation2 + $0xa0] sm:$0xf]
      %v2235 = vld [vmem:[#allocation2 + $0xa4] sm:$0xf]
      %v2236 = vld [vmem:[#allocation2 + $0xa8] sm:$0xf]
      %v2237 = vld [vmem:[#allocation2 + $0xac] sm:$0xf]
      %v2238 = vld [vmem:[#allocation2 + $0xb0] sm:$0x7]
      %s2239 = scalar_lea.vmem %s3, 64
      %v2240 = vld [vmem:[%s2239] sm:$0xf]
      %v2241 = vld [vmem:[%s2239 + $0x4] sm:$0xf]
      %v2242 = vld [vmem:[%s2239 + $0x8] sm:$0xf]
      %v2243 = vld [vmem:[%s2239 + $0xc] sm:$0xf]
      %v2287 = vunpack.c.l.b16 %v2196
      %v2288 = vunpack.c.l.b16 %v2197
      %v2289 = vunpack.c.l.b16 %v2198
      %v2290 = vunpack.c.l.b16 %v2199
      %v2291 = vunpack.c.l.b16 %v2200
      %v2292 = vunpack.c.l.b16 %v2201
      %v2293 = vunpack.c.l.b16 %v2202
      %v2294 = vunpack.c.l.b16 %v2203
      %v2295 = vunpack.c.l.b16 %v2204
      %v2296 = vunpack.c.l.b16 %v2205
      %v2297 = vunpack.c.l.b16 %v2206
      %v2298 = vunpack.c.l.b16 %v2207
      %v2299 = vunpack.c.l.b16 %v2208
      %v2300 = vunpack.c.l.b16 %v2209
      %v2301 = vunpack.c.l.b16 %v2210
      %v2302 = vunpack.c.l.b16 %v2211
      %v2303 = vunpack.c.l.b16 %v2212
      %v2304 = vunpack.c.l.b16 %v2213
      %v2305 = vunpack.c.l.b16 %v2214
      %v2306 = vunpack.c.l.b16 %v2215
      %v2307 = vunpack.c.l.b16 %v2216
      %v2308 = vunpack.c.l.b16 %v2217
      %v2309 = vunpack.c.l.b16 %v2218
      %v2310 = vunpack.c.l.b16 %v2219
      %v2311 = vunpack.c.l.b16 %v2220
      %v2312 = vunpack.c.l.b16 %v2221
      %v2313 = vunpack.c.l.b16 %v2222
      %v2314 = vunpack.c.l.b16 %v2223
      %v2315 = vunpack.c.l.b16 %v2224
      %v2316 = vunpack.c.l.b16 %v2225
      %v2317 = vunpack.c.l.b16 %v2226
      %v2318 = vunpack.c.l.b16 %v2227
      %v2319 = vunpack.c.l.b16 %v2228
      %v2320 = vunpack.c.l.b16 %v2229
      %v2321 = vunpack.c.l.b16 %v2230
      %v2322 = vunpack.c.l.b16 %v2231
      %v2323 = vunpack.c.l.b16 %v2232
      %v2324 = vunpack.c.l.b16 %v2233
      %v2325 = vunpack.c.l.b16 %v2234
      %v2326 = vunpack.c.l.b16 %v2235
      %v2327 = vunpack.c.l.b16 %v2236
      %v2328 = vunpack.c.l.b16 %v2237
      %v2329 = vunpack.c.l.b16 %v2238
      %v2330 = vpack.c.b16 %v2288, %v2287
      %v2331 = vpack.c.b16 %v2290, %v2289
      %v2332 = vpack.c.b16 %v2292, %v2291
      %v2333 = vpack.c.b16 %v2294, %v2293
      %v2334 = vpack.c.b16 %v2296, %v2295
      %v2335 = vpack.c.b16 %v2298, %v2297
      %v2336 = vpack.c.b16 %v2300, %v2299
      %v2337 = vpack.c.b16 %v2302, %v2301
      %v2338 = vpack.c.b16 %v2304, %v2303
      %v2339 = vpack.c.b16 %v2306, %v2305
      %v2340 = vpack.c.b16 %v2308, %v2307
      %v2341 = vpack.c.b16 %v2310, %v2309
      %v2342 = vpack.c.b16 %v2312, %v2311
      %v2343 = vpack.c.b16 %v2314, %v2313
      %v2344 = vpack.c.b16 %v2316, %v2315
      %v2345 = vpack.c.b16 %v2318, %v2317
      %v2346 = vpack.c.b16 %v2320, %v2319
      %v2347 = vpack.c.b16 %v2322, %v2321
      %v2348 = vpack.c.b16 %v2324, %v2323
      %v2349 = vpack.c.b16 %v2326, %v2325
      %v2350 = vpack.c.b16 %v2328, %v2327
      %v2351 = vpack.c.b16 %v2329, %v2329
      %vm2352 = vcmask 1045504
      %v2353 = vrot.slane %v2330, 2
      %v2354 = vrot.slane %v2331, 2
      %v2355 = vsel %vm2352, %v2353, %v2354
      %v2356 = vrot.slane %v2332, 2
      %v2357 = vsel %vm2352, %v2354, %v2356
      %v2358 = vrot.slane %v2333, 2
      %v2359 = vsel %vm2352, %v2356, %v2358
      %v2360 = vrot.slane %v2334, 2
      %v2361 = vsel %vm2352, %v2358, %v2360
      %v2362 = vrot.slane %v2335, 2
      %v2363 = vsel %vm2352, %v2360, %v2362
      %v2364 = vrot.slane %v2336, 2
      %v2365 = vsel %vm2352, %v2362, %v2364
      %v2366 = vrot.slane %v2337, 2
      %v2367 = vsel %vm2352, %v2364, %v2366
      %v2368 = vrot.slane %v2338, 2
      %v2369 = vsel %vm2352, %v2366, %v2368
      %v2370 = vrot.slane %v2339, 2
      %v2371 = vsel %vm2352, %v2368, %v2370
      %v2372 = vrot.slane %v2340, 2
      %v2373 = vsel %vm2352, %v2370, %v2372
      %v2374 = vrot.slane %v2341, 2
      %v2375 = vsel %vm2352, %v2372, %v2374
      %v2376 = vrot.slane %v2342, 2
      %v2377 = vsel %vm2352, %v2374, %v2376
      %v2378 = vrot.slane %v2343, 2
      %v2379 = vsel %vm2352, %v2376, %v2378
      %v2380 = vrot.slane %v2344, 2
      %v2381 = vsel %vm2352, %v2378, %v2380
      %v2382 = vrot.slane %v2345, 2
      %v2383 = vsel %vm2352, %v2380, %v2382
      %v2384 = vrot.slane %v2346, 2
      %v2385 = vsel %vm2352, %v2382, %v2384
      %v2386 = vrot.slane %v2347, 2
      %v2387 = vsel %vm2352, %v2384, %v2386
      %v2388 = vrot.slane %v2348, 2
      %v2389 = vsel %vm2352, %v2386, %v2388
      %v2390 = vrot.slane %v2349, 2
      %v2391 = vsel %vm2352, %v2388, %v2390
      %v2392 = vrot.slane %v2350, 2
      %v2393 = vsel %vm2352, %v2390, %v2392
      %v2394 = vrot.slane %v2351, 2
      %v2395 = vsel %vm2352, %v2392, %v2394
      %v2400 = vunpack.c.l.b16 %v2240
      %v2401 = vunpack.c.l.b16 %v2241
      %v2402 = vunpack.c.l.b16 %v2242
      %v2403 = vunpack.c.l.b16 %v2243
      %v2404 = vpack.c.b16 %v2401, %v2400
      %v2405 = vpack.c.b16 %v2403, %v2402
      %v2409 = vsel %vm1199, %v2355, 0
      %v2412 = vsel %vm1199, %v2357, 0
      %v2415 = vsel %vm1199, %v2359, 0
      %v2418 = vsel %vm1199, %v2361, 0
      %v2421 = vsel %vm1199, %v2363, 0
      %v2424 = vsel %vm1199, %v2365, 0
      %v2427 = vsel %vm1199, %v2367, 0
      %v2430 = vsel %vm1199, %v2369, 0
      %v2433 = vsel %vm1199, %v2371, 0
      %v2436 = vsel %vm1199, %v2373, 0
      %v2439 = vsel %vm1199, %v2375, 0
      %v2442 = vsel %vm1199, %v2377, 0
      %v2445 = vsel %vm1199, %v2379, 0
      %v2448 = vsel %vm1199, %v2381, 0
      %v2451 = vsel %vm1199, %v2383, 0
      %v2454 = vsel %vm1199, %v2385, 0
      %v2457 = vsel %vm1199, %v2387, 0
      %v2460 = vsel %vm1199, %v2389, 0
      %v2463 = vsel %vm1199, %v2391, 0
      %v2466 = vsel %vm1199, %v2393, 0
      %v2469 = vsel %vm1199, %v2395, 0
      %v2472 = vsel %vm1199, %v2394, 0
      %2474 = vmatpush.bf16.msra.mxu0 0
      %2475 = vmatpush.bf16.msra.mxu0 0
      %2476 = vmatpush.bf16.msra.mxu0 0
      %2477 = vmatpush.bf16.msra.mxu0 0
      %2478 = vmatpush.bf16.msra.mxu0 0
      %2479 = vmatpush.bf16.msra.mxu0 0
      %2480 = vmatpush.bf16.msra.mxu0 %v2405
      %2481 = vmatpush.bf16.msra.mxu0 %v2404
      %2482 = vmatmul.bf16.gmra.mxu0 %v2409
      %v2483 = vpop.f32.mrf.mxu0
      %v2484 = vadd.f32 0.0, %v2483
      %v2485 = vpop.f32.mrf.mxu0
      %v2486 = vadd.f32 0.0, %v2485
      %2487 = vmatmul.bf16.gmra.mxu0 %v2412
      %v2488 = vpop.f32.mrf.mxu0
      %v2489 = vadd.f32 0.0, %v2488
      %v2490 = vpop.f32.mrf.mxu0
      %v2491 = vadd.f32 0.0, %v2490
      %2492 = vmatmul.bf16.gmra.mxu0 %v2415
      %v2493 = vpop.f32.mrf.mxu0
      %v2494 = vadd.f32 0.0, %v2493
      %v2495 = vpop.f32.mrf.mxu0
      %v2496 = vadd.f32 0.0, %v2495
      %2497 = vmatmul.bf16.gmra.mxu0 %v2418
      %v2498 = vpop.f32.mrf.mxu0
      %v2499 = vadd.f32 0.0, %v2498
      %v2500 = vpop.f32.mrf.mxu0
      %v2501 = vadd.f32 0.0, %v2500
      %2502 = vmatmul.bf16.gmra.mxu0 %v2421
      %v2503 = vpop.f32.mrf.mxu0
      %v2504 = vadd.f32 0.0, %v2503
      %v2505 = vpop.f32.mrf.mxu0
      %v2506 = vadd.f32 0.0, %v2505
      %2507 = vmatmul.bf16.gmra.mxu0 %v2424
      %v2508 = vpop.f32.mrf.mxu0
      %v2509 = vadd.f32 0.0, %v2508
      %v2510 = vpop.f32.mrf.mxu0
      %v2511 = vadd.f32 0.0, %v2510
      %2512 = vmatmul.bf16.gmra.mxu0 %v2427
      %v2513 = vpop.f32.mrf.mxu0
      %v2514 = vadd.f32 0.0, %v2513
      %v2515 = vpop.f32.mrf.mxu0
      %v2516 = vadd.f32 0.0, %v2515
      %2517 = vmatmul.bf16.gmra.mxu0 %v2430
      %v2518 = vpop.f32.mrf.mxu0
      %v2519 = vadd.f32 0.0, %v2518
      %v2520 = vpop.f32.mrf.mxu0
      %v2521 = vadd.f32 0.0, %v2520
      %2522 = vmatmul.bf16.gmra.mxu0 %v2433
      %v2523 = vpop.f32.mrf.mxu0
      %v2524 = vadd.f32 0.0, %v2523
      %v2525 = vpop.f32.mrf.mxu0
      %v2526 = vadd.f32 0.0, %v2525
      %2527 = vmatmul.bf16.gmra.mxu0 %v2436
      %v2528 = vpop.f32.mrf.mxu0
      %v2529 = vadd.f32 0.0, %v2528
      %v2530 = vpop.f32.mrf.mxu0
      %v2531 = vadd.f32 0.0, %v2530
      %2532 = vmatmul.bf16.gmra.mxu0 %v2439
      %v2533 = vpop.f32.mrf.mxu0
      %v2534 = vadd.f32 0.0, %v2533
      %v2535 = vpop.f32.mrf.mxu0
      %v2536 = vadd.f32 0.0, %v2535
      %2537 = vmatmul.bf16.gmra.mxu0 %v2442
      %v2538 = vpop.f32.mrf.mxu0
      %v2539 = vadd.f32 0.0, %v2538
      %v2540 = vpop.f32.mrf.mxu0
      %v2541 = vadd.f32 0.0, %v2540
      %2542 = vmatmul.bf16.gmra.mxu0 %v2445
      %v2543 = vpop.f32.mrf.mxu0
      %v2544 = vadd.f32 0.0, %v2543
      %v2545 = vpop.f32.mrf.mxu0
      %v2546 = vadd.f32 0.0, %v2545
      %2547 = vmatmul.bf16.gmra.mxu0 %v2448
      %v2548 = vpop.f32.mrf.mxu0
      %v2549 = vadd.f32 0.0, %v2548
      %v2550 = vpop.f32.mrf.mxu0
      %v2551 = vadd.f32 0.0, %v2550
      %2552 = vmatmul.bf16.gmra.mxu0 %v2451
      %v2553 = vpop.f32.mrf.mxu0
      %v2554 = vadd.f32 0.0, %v2553
      %v2555 = vpop.f32.mrf.mxu0
      %v2556 = vadd.f32 0.0, %v2555
      %2557 = vmatmul.bf16.gmra.mxu0 %v2454
      %v2558 = vpop.f32.mrf.mxu0
      %v2559 = vadd.f32 0.0, %v2558
      %v2560 = vpop.f32.mrf.mxu0
      %v2561 = vadd.f32 0.0, %v2560
      %2562 = vmatmul.bf16.gmra.mxu0 %v2457
      %v2563 = vpop.f32.mrf.mxu0
      %v2564 = vadd.f32 0.0, %v2563
      %v2565 = vpop.f32.mrf.mxu0
      %v2566 = vadd.f32 0.0, %v2565
      %2567 = vmatmul.bf16.gmra.mxu0 %v2460
      %v2568 = vpop.f32.mrf.mxu0
      %v2569 = vadd.f32 0.0, %v2568
      %v2570 = vpop.f32.mrf.mxu0
      %v2571 = vadd.f32 0.0, %v2570
      %2572 = vmatmul.bf16.gmra.mxu0 %v2463
      %v2573 = vpop.f32.mrf.mxu0
      %v2574 = vadd.f32 0.0, %v2573
      %v2575 = vpop.f32.mrf.mxu0
      %v2576 = vadd.f32 0.0, %v2575
      %2577 = vmatmul.bf16.gmra.mxu0 %v2466
      %v2578 = vpop.f32.mrf.mxu0
      %v2579 = vadd.f32 0.0, %v2578
      %v2580 = vpop.f32.mrf.mxu0
      %v2581 = vadd.f32 0.0, %v2580
      %2582 = vmatmul.bf16.gmra.mxu0 %v2469
      %v2583 = vpop.f32.mrf.mxu0
      %v2584 = vadd.f32 0.0, %v2583
      %v2585 = vpop.f32.mrf.mxu0
      %v2586 = vadd.f32 0.0, %v2585
      %2587 = vmatmul.bf16.gmra.mxu0 %v2472
      %v2588 = vpop.f32.mrf.mxu0
      %v2589 = vadd.f32 0.0, %v2588
      %v2590 = vpop.f32.mrf.mxu0
      %2591 = vdwg.mxu0
      %v2592 = vadd.f32 %v2153, %v2484
      %v2593 = vadd.f32 %v2154, %v2486
      %v2594 = vadd.f32 %v2155, %v2489
      %v2595 = vadd.f32 %v2156, %v2491
      %v2596 = vadd.f32 %v2157, %v2494
      %v2597 = vadd.f32 %v2158, %v2496
      %v2598 = vadd.f32 %v2159, %v2499
      %v2599 = vadd.f32 %v2160, %v2501
      %v2600 = vadd.f32 %v2161, %v2504
      %v2601 = vadd.f32 %v2162, %v2506
      %v2602 = vadd.f32 %v2163, %v2509
      %v2603 = vadd.f32 %v2164, %v2511
      %v2604 = vadd.f32 %v2165, %v2514
      %v2605 = vadd.f32 %v2166, %v2516
      %v2606 = vadd.f32 %v2167, %v2519
      %v2607 = vadd.f32 %v2168, %v2521
      %v2608 = vadd.f32 %v2169, %v2524
      %v2609 = vadd.f32 %v2170, %v2526
      %v2610 = vadd.f32 %v2171, %v2529
      %v2611 = vadd.f32 %v2172, %v2531
      %v2612 = vadd.f32 %v2173, %v2534
      %v2613 = vadd.f32 %v2174, %v2536
      %v2614 = vadd.f32 %v2175, %v2539
      %v2615 = vadd.f32 %v2176, %v2541
      %v2616 = vadd.f32 %v2177, %v2544
      %v2617 = vadd.f32 %v2178, %v2546
      %v2618 = vadd.f32 %v2179, %v2549
      %v2619 = vadd.f32 %v2180, %v2551
      %v2620 = vadd.f32 %v2181, %v2554
      %v2621 = vadd.f32 %v2182, %v2556
      %v2622 = vadd.f32 %v2183, %v2559
      %v2623 = vadd.f32 %v2184, %v2561
      %v2624 = vadd.f32 %v2185, %v2564
      %v2625 = vadd.f32 %v2186, %v2566
      %v2626 = vadd.f32 %v2187, %v2569
      %v2627 = vadd.f32 %v2188, %v2571
      %v2628 = vadd.f32 %v2189, %v2574
      %v2629 = vadd.f32 %v2190, %v2576
      %v2630 = vadd.f32 %v2191, %v2579
      %v2631 = vadd.f32 %v2192, %v2581
      %v2632 = vadd.f32 %v2193, %v2584
      %v2633 = vadd.f32 %v2194, %v2586
      %v2634 = vadd.f32 %v2195, %v2589
      %s2635 = scalar_lea.vmem %s3, 80
      %v2636 = vld [vmem:[%s2635] sm:$0xf]
      %v2637 = vld [vmem:[%s2635 + $0x4] sm:$0xf]
      %v2638 = vld [vmem:[%s2635 + $0x8] sm:$0xf]
      %v2639 = vld [vmem:[%s2635 + $0xc] sm:$0xf]
      %vm2640 = vsmask.f32 5376
      %v2642 = vshrl.u32 %v2330, 16
      %v2644 = vrot.slane %v2642, 2
      %v2645 = vshll.u32 %v2330, 16
      %v2647 = vrot.slane %v2645, 3
      %v2648 = vor.u32 %v2644, %v2647
      %v2650 = vshrl.u32 %v2331, 16
      %v2652 = vrot.slane %v2650, 2
      %v2653 = vshll.u32 %v2331, 16
      %v2655 = vrot.slane %v2653, 3
      %v2656 = vor.u32 %v2652, %v2655
      %v2657 = vsel %vm2640, %v2648, %v2656
      %v2659 = vshrl.u32 %v2332, 16
      %v2661 = vrot.slane %v2659, 2
      %v2662 = vshll.u32 %v2332, 16
      %v2664 = vrot.slane %v2662, 3
      %v2665 = vor.u32 %v2661, %v2664
      %v2666 = vsel %vm2640, %v2656, %v2665
      %v2668 = vshrl.u32 %v2333, 16
      %v2670 = vrot.slane %v2668, 2
      %v2671 = vshll.u32 %v2333, 16
      %v2673 = vrot.slane %v2671, 3
      %v2674 = vor.u32 %v2670, %v2673
      %v2675 = vsel %vm2640, %v2665, %v2674
      %v2677 = vshrl.u32 %v2334, 16
      %v2679 = vrot.slane %v2677, 2
      %v2680 = vshll.u32 %v2334, 16
      %v2682 = vrot.slane %v2680, 3
      %v2683 = vor.u32 %v2679, %v2682
      %v2684 = vsel %vm2640, %v2674, %v2683
      %v2686 = vshrl.u32 %v2335, 16
      %v2688 = vrot.slane %v2686, 2
      %v2689 = vshll.u32 %v2335, 16
      %v2691 = vrot.slane %v2689, 3
      %v2692 = vor.u32 %v2688, %v2691
      %v2693 = vsel %vm2640, %v2683, %v2692
      %v2695 = vshrl.u32 %v2336, 16
      %v2697 = vrot.slane %v2695, 2
      %v2698 = vshll.u32 %v2336, 16
      %v2700 = vrot.slane %v2698, 3
      %v2701 = vor.u32 %v2697, %v2700
      %v2702 = vsel %vm2640, %v2692, %v2701
      %v2704 = vshrl.u32 %v2337, 16
      %v2706 = vrot.slane %v2704, 2
      %v2707 = vshll.u32 %v2337, 16
      %v2709 = vrot.slane %v2707, 3
      %v2710 = vor.u32 %v2706, %v2709
      %v2711 = vsel %vm2640, %v2701, %v2710
      %v2713 = vshrl.u32 %v2338, 16
      %v2715 = vrot.slane %v2713, 2
      %v2716 = vshll.u32 %v2338, 16
      %v2718 = vrot.slane %v2716, 3
      %v2719 = vor.u32 %v2715, %v2718
      %v2720 = vsel %vm2640, %v2710, %v2719
      %v2722 = vshrl.u32 %v2339, 16
      %v2724 = vrot.slane %v2722, 2
      %v2725 = vshll.u32 %v2339, 16
      %v2727 = vrot.slane %v2725, 3
      %v2728 = vor.u32 %v2724, %v2727
      %v2729 = vsel %vm2640, %v2719, %v2728
      %v2731 = vshrl.u32 %v2340, 16
      %v2733 = vrot.slane %v2731, 2
      %v2734 = vshll.u32 %v2340, 16
      %v2736 = vrot.slane %v2734, 3
      %v2737 = vor.u32 %v2733, %v2736
      %v2738 = vsel %vm2640, %v2728, %v2737
      %v2740 = vshrl.u32 %v2341, 16
      %v2742 = vrot.slane %v2740, 2
      %v2743 = vshll.u32 %v2341, 16
      %v2745 = vrot.slane %v2743, 3
      %v2746 = vor.u32 %v2742, %v2745
      %v2747 = vsel %vm2640, %v2737, %v2746
      %v2749 = vshrl.u32 %v2342, 16
      %v2751 = vrot.slane %v2749, 2
      %v2752 = vshll.u32 %v2342, 16
      %v2754 = vrot.slane %v2752, 3
      %v2755 = vor.u32 %v2751, %v2754
      %v2756 = vsel %vm2640, %v2746, %v2755
      %v2758 = vshrl.u32 %v2343, 16
      %v2760 = vrot.slane %v2758, 2
      %v2761 = vshll.u32 %v2343, 16
      %v2763 = vrot.slane %v2761, 3
      %v2764 = vor.u32 %v2760, %v2763
      %v2765 = vsel %vm2640, %v2755, %v2764
      %v2767 = vshrl.u32 %v2344, 16
      %v2769 = vrot.slane %v2767, 2
      %v2770 = vshll.u32 %v2344, 16
      %v2772 = vrot.slane %v2770, 3
      %v2773 = vor.u32 %v2769, %v2772
      %v2774 = vsel %vm2640, %v2764, %v2773
      %v2776 = vshrl.u32 %v2345, 16
      %v2778 = vrot.slane %v2776, 2
      %v2779 = vshll.u32 %v2345, 16
      %v2781 = vrot.slane %v2779, 3
      %v2782 = vor.u32 %v2778, %v2781
      %v2783 = vsel %vm2640, %v2773, %v2782
      %v2785 = vshrl.u32 %v2346, 16
      %v2787 = vrot.slane %v2785, 2
      %v2788 = vshll.u32 %v2346, 16
      %v2790 = vrot.slane %v2788, 3
      %v2791 = vor.u32 %v2787, %v2790
      %v2792 = vsel %vm2640, %v2782, %v2791
      %v2794 = vshrl.u32 %v2347, 16
      %v2796 = vrot.slane %v2794, 2
      %v2797 = vshll.u32 %v2347, 16
      %v2799 = vrot.slane %v2797, 3
      %v2800 = vor.u32 %v2796, %v2799
      %v2801 = vsel %vm2640, %v2791, %v2800
      %v2803 = vshrl.u32 %v2348, 16
      %v2805 = vrot.slane %v2803, 2
      %v2806 = vshll.u32 %v2348, 16
      %v2808 = vrot.slane %v2806, 3
      %v2809 = vor.u32 %v2805, %v2808
      %v2810 = vsel %vm2640, %v2800, %v2809
      %v2812 = vshrl.u32 %v2349, 16
      %v2814 = vrot.slane %v2812, 2
      %v2815 = vshll.u32 %v2349, 16
      %v2817 = vrot.slane %v2815, 3
      %v2818 = vor.u32 %v2814, %v2817
      %v2819 = vsel %vm2640, %v2809, %v2818
      %v2821 = vshrl.u32 %v2350, 16
      %v2823 = vrot.slane %v2821, 2
      %v2824 = vshll.u32 %v2350, 16
      %v2826 = vrot.slane %v2824, 3
      %v2827 = vor.u32 %v2823, %v2826
      %v2828 = vsel %vm2640, %v2818, %v2827
      %v2830 = vshrl.u32 %v2351, 16
      %v2832 = vrot.slane %v2830, 2
      %v2833 = vshll.u32 %v2351, 16
      %v2835 = vrot.slane %v2833, 3
      %v2836 = vor.u32 %v2832, %v2835
      %v2837 = vsel %vm2640, %v2827, %v2836
      %v2842 = vunpack.c.l.b16 %v2636
      %v2843 = vunpack.c.l.b16 %v2637
      %v2844 = vunpack.c.l.b16 %v2638
      %v2845 = vunpack.c.l.b16 %v2639
      %v2846 = vpack.c.b16 %v2843, %v2842
      %v2847 = vpack.c.b16 %v2845, %v2844
      %v2851 = vsel %vm1199, %v2657, 0
      %v2854 = vsel %vm1199, %v2666, 0
      %v2857 = vsel %vm1199, %v2675, 0
      %v2860 = vsel %vm1199, %v2684, 0
      %v2863 = vsel %vm1199, %v2693, 0
      %v2866 = vsel %vm1199, %v2702, 0
      %v2869 = vsel %vm1199, %v2711, 0
      %v2872 = vsel %vm1199, %v2720, 0
      %v2875 = vsel %vm1199, %v2729, 0
      %v2878 = vsel %vm1199, %v2738, 0
      %v2881 = vsel %vm1199, %v2747, 0
      %v2884 = vsel %vm1199, %v2756, 0
      %v2887 = vsel %vm1199, %v2765, 0
      %v2890 = vsel %vm1199, %v2774, 0
      %v2893 = vsel %vm1199, %v2783, 0
      %v2896 = vsel %vm1199, %v2792, 0
      %v2899 = vsel %vm1199, %v2801, 0
      %v2902 = vsel %vm1199, %v2810, 0
      %v2905 = vsel %vm1199, %v2819, 0
      %v2908 = vsel %vm1199, %v2828, 0
      %v2911 = vsel %vm1199, %v2837, 0
      %v2914 = vsel %vm1199, %v2832, 0
      %2916 = vmatpush.bf16.msra.mxu0 0
      %2917 = vmatpush.bf16.msra.mxu0 0
      %2918 = vmatpush.bf16.msra.mxu0 0
      %2919 = vmatpush.bf16.msra.mxu0 0
      %2920 = vmatpush.bf16.msra.mxu0 0
      %2921 = vmatpush.bf16.msra.mxu0 0
      %2922 = vmatpush.bf16.msra.mxu0 %v2847
      %2923 = vmatpush.bf16.msra.mxu0 %v2846
      %2924 = vmatmul.bf16.gmra.mxu0 %v2851
      %v2925 = vpop.f32.mrf.mxu0
      %v2926 = vadd.f32 0.0, %v2925
      %v2927 = vpop.f32.mrf.mxu0
      %v2928 = vadd.f32 0.0, %v2927
      %2929 = vmatmul.bf16.gmra.mxu0 %v2854
      %v2930 = vpop.f32.mrf.mxu0
      %v2931 = vadd.f32 0.0, %v2930
      %v2932 = vpop.f32.mrf.mxu0
      %v2933 = vadd.f32 0.0, %v2932
      %2934 = vmatmul.bf16.gmra.mxu0 %v2857
      %v2935 = vpop.f32.mrf.mxu0
      %v2936 = vadd.f32 0.0, %v2935
      %v2937 = vpop.f32.mrf.mxu0
      %v2938 = vadd.f32 0.0, %v2937
      %2939 = vmatmul.bf16.gmra.mxu0 %v2860
      %v2940 = vpop.f32.mrf.mxu0
      %v2941 = vadd.f32 0.0, %v2940
      %v2942 = vpop.f32.mrf.mxu0
      %v2943 = vadd.f32 0.0, %v2942
      %2944 = vmatmul.bf16.gmra.mxu0 %v2863
      %v2945 = vpop.f32.mrf.mxu0
      %v2946 = vadd.f32 0.0, %v2945
      %v2947 = vpop.f32.mrf.mxu0
      %v2948 = vadd.f32 0.0, %v2947
      %2949 = vmatmul.bf16.gmra.mxu0 %v2866
      %v2950 = vpop.f32.mrf.mxu0
      %v2951 = vadd.f32 0.0, %v2950
      %v2952 = vpop.f32.mrf.mxu0
      %v2953 = vadd.f32 0.0, %v2952
      %2954 = vmatmul.bf16.gmra.mxu0 %v2869
      %v2955 = vpop.f32.mrf.mxu0
      %v2956 = vadd.f32 0.0, %v2955
      %v2957 = vpop.f32.mrf.mxu0
      %v2958 = vadd.f32 0.0, %v2957
      %2959 = vmatmul.bf16.gmra.mxu0 %v2872
      %v2960 = vpop.f32.mrf.mxu0
      %v2961 = vadd.f32 0.0, %v2960
      %v2962 = vpop.f32.mrf.mxu0
      %v2963 = vadd.f32 0.0, %v2962
      %2964 = vmatmul.bf16.gmra.mxu0 %v2875
      %v2965 = vpop.f32.mrf.mxu0
      %v2966 = vadd.f32 0.0, %v2965
      %v2967 = vpop.f32.mrf.mxu0
      %v2968 = vadd.f32 0.0, %v2967
      %2969 = vmatmul.bf16.gmra.mxu0 %v2878
      %v2970 = vpop.f32.mrf.mxu0
      %v2971 = vadd.f32 0.0, %v2970
      %v2972 = vpop.f32.mrf.mxu0
      %v2973 = vadd.f32 0.0, %v2972
      %2974 = vmatmul.bf16.gmra.mxu0 %v2881
      %v2975 = vpop.f32.mrf.mxu0
      %v2976 = vadd.f32 0.0, %v2975
      %v2977 = vpop.f32.mrf.mxu0
      %v2978 = vadd.f32 0.0, %v2977
      %2979 = vmatmul.bf16.gmra.mxu0 %v2884
      %v2980 = vpop.f32.mrf.mxu0
      %v2981 = vadd.f32 0.0, %v2980
      %v2982 = vpop.f32.mrf.mxu0
      %v2983 = vadd.f32 0.0, %v2982
      %2984 = vmatmul.bf16.gmra.mxu0 %v2887
      %v2985 = vpop.f32.mrf.mxu0
      %v2986 = vadd.f32 0.0, %v2985
      %v2987 = vpop.f32.mrf.mxu0
      %v2988 = vadd.f32 0.0, %v2987
      %2989 = vmatmul.bf16.gmra.mxu0 %v2890
      %v2990 = vpop.f32.mrf.mxu0
      %v2991 = vadd.f32 0.0, %v2990
      %v2992 = vpop.f32.mrf.mxu0
      %v2993 = vadd.f32 0.0, %v2992
      %2994 = vmatmul.bf16.gmra.mxu0 %v2893
      %v2995 = vpop.f32.mrf.mxu0
      %v2996 = vadd.f32 0.0, %v2995
      %v2997 = vpop.f32.mrf.mxu0
      %v2998 = vadd.f32 0.0, %v2997
      %2999 = vmatmul.bf16.gmra.mxu0 %v2896
      %v3000 = vpop.f32.mrf.mxu0
      %v3001 = vadd.f32 0.0, %v3000
      %v3002 = vpop.f32.mrf.mxu0
      %v3003 = vadd.f32 0.0, %v3002
      %3004 = vmatmul.bf16.gmra.mxu0 %v2899
      %v3005 = vpop.f32.mrf.mxu0
      %v3006 = vadd.f32 0.0, %v3005
      %v3007 = vpop.f32.mrf.mxu0
      %v3008 = vadd.f32 0.0, %v3007
      %3009 = vmatmul.bf16.gmra.mxu0 %v2902
      %v3010 = vpop.f32.mrf.mxu0
      %v3011 = vadd.f32 0.0, %v3010
      %v3012 = vpop.f32.mrf.mxu0
      %v3013 = vadd.f32 0.0, %v3012
      %3014 = vmatmul.bf16.gmra.mxu0 %v2905
      %v3015 = vpop.f32.mrf.mxu0
      %v3016 = vadd.f32 0.0, %v3015
      %v3017 = vpop.f32.mrf.mxu0
      %v3018 = vadd.f32 0.0, %v3017
      %3019 = vmatmul.bf16.gmra.mxu0 %v2908
      %v3020 = vpop.f32.mrf.mxu0
      %v3021 = vadd.f32 0.0, %v3020
      %v3022 = vpop.f32.mrf.mxu0
      %v3023 = vadd.f32 0.0, %v3022
      %3024 = vmatmul.bf16.gmra.mxu0 %v2911
      %v3025 = vpop.f32.mrf.mxu0
      %v3026 = vadd.f32 0.0, %v3025
      %v3027 = vpop.f32.mrf.mxu0
      %v3028 = vadd.f32 0.0, %v3027
      %3029 = vmatmul.bf16.gmra.mxu0 %v2914
      %v3030 = vpop.f32.mrf.mxu0
      %v3031 = vadd.f32 0.0, %v3030
      %v3032 = vpop.f32.mrf.mxu0
      %3033 = vdwg.mxu0
      %v3034 = vadd.f32 %v2592, %v2926
      %v3035 = vadd.f32 %v2593, %v2928
      %v3036 = vadd.f32 %v2594, %v2931
      %v3037 = vadd.f32 %v2595, %v2933
      %v3038 = vadd.f32 %v2596, %v2936
      %v3039 = vadd.f32 %v2597, %v2938
      %v3040 = vadd.f32 %v2598, %v2941
      %v3041 = vadd.f32 %v2599, %v2943
      %v3042 = vadd.f32 %v2600, %v2946
      %v3043 = vadd.f32 %v2601, %v2948
      %v3044 = vadd.f32 %v2602, %v2951
      %v3045 = vadd.f32 %v2603, %v2953
      %v3046 = vadd.f32 %v2604, %v2956
      %v3047 = vadd.f32 %v2605, %v2958
      %v3048 = vadd.f32 %v2606, %v2961
      %v3049 = vadd.f32 %v2607, %v2963
      %v3050 = vadd.f32 %v2608, %v2966
      %v3051 = vadd.f32 %v2609, %v2968
      %v3052 = vadd.f32 %v2610, %v2971
      %v3053 = vadd.f32 %v2611, %v2973
      %v3054 = vadd.f32 %v2612, %v2976
      %v3055 = vadd.f32 %v2613, %v2978
      %v3056 = vadd.f32 %v2614, %v2981
      %v3057 = vadd.f32 %v2615, %v2983
      %v3058 = vadd.f32 %v2616, %v2986
      %v3059 = vadd.f32 %v2617, %v2988
      %v3060 = vadd.f32 %v2618, %v2991
      %v3061 = vadd.f32 %v2619, %v2993
      %v3062 = vadd.f32 %v2620, %v2996
      %v3063 = vadd.f32 %v2621, %v2998
      %v3064 = vadd.f32 %v2622, %v3001
      %v3065 = vadd.f32 %v2623, %v3003
      %v3066 = vadd.f32 %v2624, %v3006
      %v3067 = vadd.f32 %v2625, %v3008
      %v3068 = vadd.f32 %v2626, %v3011
      %v3069 = vadd.f32 %v2627, %v3013
      %v3070 = vadd.f32 %v2628, %v3016
      %v3071 = vadd.f32 %v2629, %v3018
      %v3072 = vadd.f32 %v2630, %v3021
      %v3073 = vadd.f32 %v2631, %v3023
      %v3074 = vadd.f32 %v2632, %v3026
      %v3075 = vadd.f32 %v2633, %v3028
      %v3076 = vadd.f32 %v2634, %v3031
      %v3077 = vld [vmem:[#allocation2 + $0x8] sm:$0x8]
      %v3078 = vld [vmem:[#allocation2 + $0xb0] sm:$0xf]
      %s3079 = scalar_lea.vmem %s3, 96
      %v3080 = vld [vmem:[%s3079] sm:$0xf]
      %v3081 = vld [vmem:[%s3079 + $0x4] sm:$0xf]
      %v3082 = vld [vmem:[%s3079 + $0x8] sm:$0xf]
      %v3083 = vld [vmem:[%s3079 + $0xc] sm:$0xf]
      %v3086 = vunpack.c.l.b16 %v3077
      %v3087 = vunpack.c.l.b16 %v3078
      %v3088 = vpack.c.b16 %v2288, %v3086
      %v3089 = vpack.c.b16 %v3087, %v3087
      %vm3090 = vcmask 1044480
      %v3091 = vrot.slane %v3088, 3
      %v3092 = vrot.slane %v2331, 3
      %v3093 = vsel %vm3090, %v3091, %v3092
      %v3094 = vrot.slane %v2332, 3
      %v3095 = vsel %vm3090, %v3092, %v3094
      %v3096 = vrot.slane %v2333, 3
      %v3097 = vsel %vm3090, %v3094, %v3096
      %v3098 = vrot.slane %v2334, 3
      %v3099 = vsel %vm3090, %v3096, %v3098
      %v3100 = vrot.slane %v2335, 3
      %v3101 = vsel %vm3090, %v3098, %v3100
      %v3102 = vrot.slane %v2336, 3
      %v3103 = vsel %vm3090, %v3100, %v3102
      %v3104 = vrot.slane %v2337, 3
      %v3105 = vsel %vm3090, %v3102, %v3104
      %v3106 = vrot.slane %v2338, 3
      %v3107 = vsel %vm3090, %v3104, %v3106
      %v3108 = vrot.slane %v2339, 3
      %v3109 = vsel %vm3090, %v3106, %v3108
      %v3110 = vrot.slane %v2340, 3
      %v3111 = vsel %vm3090, %v3108, %v3110
      %v3112 = vrot.slane %v2341, 3
      %v3113 = vsel %vm3090, %v3110, %v3112
      %v3114 = vrot.slane %v2342, 3
      %v3115 = vsel %vm3090, %v3112, %v3114
      %v3116 = vrot.slane %v2343, 3
      %v3117 = vsel %vm3090, %v3114, %v3116
      %v3118 = vrot.slane %v2344, 3
      %v3119 = vsel %vm3090, %v3116, %v3118
      %v3120 = vrot.slane %v2345, 3
      %v3121 = vsel %vm3090, %v3118, %v3120
      %v3122 = vrot.slane %v2346, 3
      %v3123 = vsel %vm3090, %v3120, %v3122
      %v3124 = vrot.slane %v2347, 3
      %v3125 = vsel %vm3090, %v3122, %v3124
      %v3126 = vrot.slane %v2348, 3
      %v3127 = vsel %vm3090, %v3124, %v3126
      %v3128 = vrot.slane %v2349, 3
      %v3129 = vsel %vm3090, %v3126, %v3128
      %v3130 = vrot.slane %v2350, 3
      %v3131 = vsel %vm3090, %v3128, %v3130
      %v3132 = vrot.slane %v3089, 3
      %v3133 = vsel %vm3090, %v3130, %v3132
      %v3138 = vunpack.c.l.b16 %v3080
      %v3139 = vunpack.c.l.b16 %v3081
      %v3140 = vunpack.c.l.b16 %v3082
      %v3141 = vunpack.c.l.b16 %v3083
      %v3142 = vpack.c.b16 %v3139, %v3138
      %v3143 = vpack.c.b16 %v3141, %v3140
      %v3147 = vsel %vm1199, %v3093, 0
      %v3150 = vsel %vm1199, %v3095, 0
      %v3153 = vsel %vm1199, %v3097, 0
      %v3156 = vsel %vm1199, %v3099, 0
      %v3159 = vsel %vm1199, %v3101, 0
      %v3162 = vsel %vm1199, %v3103, 0
      %v3165 = vsel %vm1199, %v3105, 0
      %v3168 = vsel %vm1199, %v3107, 0
      %v3171 = vsel %vm1199, %v3109, 0
      %v3174 = vsel %vm1199, %v3111, 0
      %v3177 = vsel %vm1199, %v3113, 0
      %v3180 = vsel %vm1199, %v3115, 0
      %v3183 = vsel %vm1199, %v3117, 0
      %v3186 = vsel %vm1199, %v3119, 0
      %v3189 = vsel %vm1199, %v3121, 0
      %v3192 = vsel %vm1199, %v3123, 0
      %v3195 = vsel %vm1199, %v3125, 0
      %v3198 = vsel %vm1199, %v3127, 0
      %v3201 = vsel %vm1199, %v3129, 0
      %v3204 = vsel %vm1199, %v3131, 0
      %v3207 = vsel %vm1199, %v3133, 0
      %v3210 = vsel %vm1199, %v3132, 0
      %3212 = vmatpush.bf16.msra.mxu0 0
      %3213 = vmatpush.bf16.msra.mxu0 0
      %3214 = vmatpush.bf16.msra.mxu0 0
      %3215 = vmatpush.bf16.msra.mxu0 0
      %3216 = vmatpush.bf16.msra.mxu0 0
      %3217 = vmatpush.bf16.msra.mxu0 0
      %3218 = vmatpush.bf16.msra.mxu0 %v3143
      %3219 = vmatpush.bf16.msra.mxu0 %v3142
      %3220 = vmatmul.bf16.gmra.mxu0 %v3147
      %v3221 = vpop.f32.mrf.mxu0
      %v3222 = vadd.f32 0.0, %v3221
      %v3223 = vpop.f32.mrf.mxu0
      %v3224 = vadd.f32 0.0, %v3223
      %3225 = vmatmul.bf16.gmra.mxu0 %v3150
      %v3226 = vpop.f32.mrf.mxu0
      %v3227 = vadd.f32 0.0, %v3226
      %v3228 = vpop.f32.mrf.mxu0
      %v3229 = vadd.f32 0.0, %v3228
      %3230 = vmatmul.bf16.gmra.mxu0 %v3153
      %v3231 = vpop.f32.mrf.mxu0
      %v3232 = vadd.f32 0.0, %v3231
      %v3233 = vpop.f32.mrf.mxu0
      %v3234 = vadd.f32 0.0, %v3233
      %3235 = vmatmul.bf16.gmra.mxu0 %v3156
      %v3236 = vpop.f32.mrf.mxu0
      %v3237 = vadd.f32 0.0, %v3236
      %v3238 = vpop.f32.mrf.mxu0
      %v3239 = vadd.f32 0.0, %v3238
      %3240 = vmatmul.bf16.gmra.mxu0 %v3159
      %v3241 = vpop.f32.mrf.mxu0
      %v3242 = vadd.f32 0.0, %v3241
      %v3243 = vpop.f32.mrf.mxu0
      %v3244 = vadd.f32 0.0, %v3243
      %3245 = vmatmul.bf16.gmra.mxu0 %v3162
      %v3246 = vpop.f32.mrf.mxu0
      %v3247 = vadd.f32 0.0, %v3246
      %v3248 = vpop.f32.mrf.mxu0
      %v3249 = vadd.f32 0.0, %v3248
      %3250 = vmatmul.bf16.gmra.mxu0 %v3165
      %v3251 = vpop.f32.mrf.mxu0
      %v3252 = vadd.f32 0.0, %v3251
      %v3253 = vpop.f32.mrf.mxu0
      %v3254 = vadd.f32 0.0, %v3253
      %3255 = vmatmul.bf16.gmra.mxu0 %v3168
      %v3256 = vpop.f32.mrf.mxu0
      %v3257 = vadd.f32 0.0, %v3256
      %v3258 = vpop.f32.mrf.mxu0
      %v3259 = vadd.f32 0.0, %v3258
      %3260 = vmatmul.bf16.gmra.mxu0 %v3171
      %v3261 = vpop.f32.mrf.mxu0
      %v3262 = vadd.f32 0.0, %v3261
      %v3263 = vpop.f32.mrf.mxu0
      %v3264 = vadd.f32 0.0, %v3263
      %3265 = vmatmul.bf16.gmra.mxu0 %v3174
      %v3266 = vpop.f32.mrf.mxu0
      %v3267 = vadd.f32 0.0, %v3266
      %v3268 = vpop.f32.mrf.mxu0
      %v3269 = vadd.f32 0.0, %v3268
      %3270 = vmatmul.bf16.gmra.mxu0 %v3177
      %v3271 = vpop.f32.mrf.mxu0
      %v3272 = vadd.f32 0.0, %v3271
      %v3273 = vpop.f32.mrf.mxu0
      %v3274 = vadd.f32 0.0, %v3273
      %3275 = vmatmul.bf16.gmra.mxu0 %v3180
      %v3276 = vpop.f32.mrf.mxu0
      %v3277 = vadd.f32 0.0, %v3276
      %v3278 = vpop.f32.mrf.mxu0
      %v3279 = vadd.f32 0.0, %v3278
      %3280 = vmatmul.bf16.gmra.mxu0 %v3183
      %v3281 = vpop.f32.mrf.mxu0
      %v3282 = vadd.f32 0.0, %v3281
      %v3283 = vpop.f32.mrf.mxu0
      %v3284 = vadd.f32 0.0, %v3283
      %3285 = vmatmul.bf16.gmra.mxu0 %v3186
      %v3286 = vpop.f32.mrf.mxu0
      %v3287 = vadd.f32 0.0, %v3286
      %v3288 = vpop.f32.mrf.mxu0
      %v3289 = vadd.f32 0.0, %v3288
      %3290 = vmatmul.bf16.gmra.mxu0 %v3189
      %v3291 = vpop.f32.mrf.mxu0
      %v3292 = vadd.f32 0.0, %v3291
      %v3293 = vpop.f32.mrf.mxu0
      %v3294 = vadd.f32 0.0, %v3293
      %3295 = vmatmul.bf16.gmra.mxu0 %v3192
      %v3296 = vpop.f32.mrf.mxu0
      %v3297 = vadd.f32 0.0, %v3296
      %v3298 = vpop.f32.mrf.mxu0
      %v3299 = vadd.f32 0.0, %v3298
      %3300 = vmatmul.bf16.gmra.mxu0 %v3195
      %v3301 = vpop.f32.mrf.mxu0
      %v3302 = vadd.f32 0.0, %v3301
      %v3303 = vpop.f32.mrf.mxu0
      %v3304 = vadd.f32 0.0, %v3303
      %3305 = vmatmul.bf16.gmra.mxu0 %v3198
      %v3306 = vpop.f32.mrf.mxu0
      %v3307 = vadd.f32 0.0, %v3306
      %v3308 = vpop.f32.mrf.mxu0
      %v3309 = vadd.f32 0.0, %v3308
      %3310 = vmatmul.bf16.gmra.mxu0 %v3201
      %v3311 = vpop.f32.mrf.mxu0
      %v3312 = vadd.f32 0.0, %v3311
      %v3313 = vpop.f32.mrf.mxu0
      %v3314 = vadd.f32 0.0, %v3313
      %3315 = vmatmul.bf16.gmra.mxu0 %v3204
      %v3316 = vpop.f32.mrf.mxu0
      %v3317 = vadd.f32 0.0, %v3316
      %v3318 = vpop.f32.mrf.mxu0
      %v3319 = vadd.f32 0.0, %v3318
      %3320 = vmatmul.bf16.gmra.mxu0 %v3207
      %v3321 = vpop.f32.mrf.mxu0
      %v3322 = vadd.f32 0.0, %v3321
      %v3323 = vpop.f32.mrf.mxu0
      %v3324 = vadd.f32 0.0, %v3323
      %3325 = vmatmul.bf16.gmra.mxu0 %v3210
      %v3326 = vpop.f32.mrf.mxu0
      %v3327 = vadd.f32 0.0, %v3326
      %v3328 = vpop.f32.mrf.mxu0
      %3329 = vdwg.mxu0
      %v3330 = vadd.f32 %v3034, %v3222
      %v3331 = vadd.f32 %v3035, %v3224
      %v3332 = vadd.f32 %v3036, %v3227
      %v3333 = vadd.f32 %v3037, %v3229
      %v3334 = vadd.f32 %v3038, %v3232
      %v3335 = vadd.f32 %v3039, %v3234
      %v3336 = vadd.f32 %v3040, %v3237
      %v3337 = vadd.f32 %v3041, %v3239
      %v3338 = vadd.f32 %v3042, %v3242
      %v3339 = vadd.f32 %v3043, %v3244
      %v3340 = vadd.f32 %v3044, %v3247
      %v3341 = vadd.f32 %v3045, %v3249
      %v3342 = vadd.f32 %v3046, %v3252
      %v3343 = vadd.f32 %v3047, %v3254
      %v3344 = vadd.f32 %v3048, %v3257
      %v3345 = vadd.f32 %v3049, %v3259
      %v3346 = vadd.f32 %v3050, %v3262
      %v3347 = vadd.f32 %v3051, %v3264
      %v3348 = vadd.f32 %v3052, %v3267
      %v3349 = vadd.f32 %v3053, %v3269
      %v3350 = vadd.f32 %v3054, %v3272
      %v3351 = vadd.f32 %v3055, %v3274
      %v3352 = vadd.f32 %v3056, %v3277
      %v3353 = vadd.f32 %v3057, %v3279
      %v3354 = vadd.f32 %v3058, %v3282
      %v3355 = vadd.f32 %v3059, %v3284
      %v3356 = vadd.f32 %v3060, %v3287
      %v3357 = vadd.f32 %v3061, %v3289
      %v3358 = vadd.f32 %v3062, %v3292
      %v3359 = vadd.f32 %v3063, %v3294
      %v3360 = vadd.f32 %v3064, %v3297
      %v3361 = vadd.f32 %v3065, %v3299
      %v3362 = vadd.f32 %v3066, %v3302
      %v3363 = vadd.f32 %v3067, %v3304
      %v3364 = vadd.f32 %v3068, %v3307
      %v3365 = vadd.f32 %v3069, %v3309
      %v3366 = vadd.f32 %v3070, %v3312
      %v3367 = vadd.f32 %v3071, %v3314
      %v3368 = vadd.f32 %v3072, %v3317
      %v3369 = vadd.f32 %v3073, %v3319
      %v3370 = vadd.f32 %v3074, %v3322
      %v3371 = vadd.f32 %v3075, %v3324
      %v3372 = vadd.f32 %v3076, %v3327
      %s3373 = scalar_lea.vmem %s3, 112
      %v3374 = vld [vmem:[%s3373] sm:$0xf]
      %v3375 = vld [vmem:[%s3373 + $0x4] sm:$0xf]
      %v3376 = vld [vmem:[%s3373 + $0x8] sm:$0xf]
      %v3377 = vld [vmem:[%s3373 + $0xc] sm:$0xf]
      %vm3378 = vsmask.f32 4352
      %v3380 = vshrl.u32 %v3088, 16
      %v3382 = vrot.slane %v3380, 3
      %v3383 = vshll.u32 %v3088, 16
      %v3385 = vrot.slane %v3383, 4
      %v3386 = vor.u32 %v3382, %v3385
      %v3387 = vrot.slane %v2650, 3
      %v3388 = vrot.slane %v2653, 4
      %v3389 = vor.u32 %v3387, %v3388
      %v3390 = vsel %vm3378, %v3386, %v3389
      %v3391 = vrot.slane %v2659, 3
      %v3392 = vrot.slane %v2662, 4
      %v3393 = vor.u32 %v3391, %v3392
      %v3394 = vsel %vm3378, %v3389, %v3393
      %v3395 = vrot.slane %v2668, 3
      %v3396 = vrot.slane %v2671, 4
      %v3397 = vor.u32 %v3395, %v3396
      %v3398 = vsel %vm3378, %v3393, %v3397
      %v3399 = vrot.slane %v2677, 3
      %v3400 = vrot.slane %v2680, 4
      %v3401 = vor.u32 %v3399, %v3400
      %v3402 = vsel %vm3378, %v3397, %v3401
      %v3403 = vrot.slane %v2686, 3
      %v3404 = vrot.slane %v2689, 4
      %v3405 = vor.u32 %v3403, %v3404
      %v3406 = vsel %vm3378, %v3401, %v3405
      %v3407 = vrot.slane %v2695, 3
      %v3408 = vrot.slane %v2698, 4
      %v3409 = vor.u32 %v3407, %v3408
      %v3410 = vsel %vm3378, %v3405, %v3409
      %v3411 = vrot.slane %v2704, 3
      %v3412 = vrot.slane %v2707, 4
      %v3413 = vor.u32 %v3411, %v3412
      %v3414 = vsel %vm3378, %v3409, %v3413
      %v3415 = vrot.slane %v2713, 3
      %v3416 = vrot.slane %v2716, 4
      %v3417 = vor.u32 %v3415, %v3416
      %v3418 = vsel %vm3378, %v3413, %v3417
      %v3419 = vrot.slane %v2722, 3
      %v3420 = vrot.slane %v2725, 4
      %v3421 = vor.u32 %v3419, %v3420
      %v3422 = vsel %vm3378, %v3417, %v3421
      %v3423 = vrot.slane %v2731, 3
      %v3424 = vrot.slane %v2734, 4
      %v3425 = vor.u32 %v3423, %v3424
      %v3426 = vsel %vm3378, %v3421, %v3425
      %v3427 = vrot.slane %v2740, 3
      %v3428 = vrot.slane %v2743, 4
      %v3429 = vor.u32 %v3427, %v3428
      %v3430 = vsel %vm3378, %v3425, %v3429
      %v3431 = vrot.slane %v2749, 3
      %v3432 = vrot.slane %v2752, 4
      %v3433 = vor.u32 %v3431, %v3432
      %v3434 = vsel %vm3378, %v3429, %v3433
      %v3435 = vrot.slane %v2758, 3
      %v3436 = vrot.slane %v2761, 4
      %v3437 = vor.u32 %v3435, %v3436
      %v3438 = vsel %vm3378, %v3433, %v3437
      %v3439 = vrot.slane %v2767, 3
      %v3440 = vrot.slane %v2770, 4
      %v3441 = vor.u32 %v3439, %v3440
      %v3442 = vsel %vm3378, %v3437, %v3441
      %v3443 = vrot.slane %v2776, 3
      %v3444 = vrot.slane %v2779, 4
      %v3445 = vor.u32 %v3443, %v3444
      %v3446 = vsel %vm3378, %v3441, %v3445
      %v3447 = vrot.slane %v2785, 3
      %v3448 = vrot.slane %v2788, 4
      %v3449 = vor.u32 %v3447, %v3448
      %v3450 = vsel %vm3378, %v3445, %v3449
      %v3451 = vrot.slane %v2794, 3
      %v3452 = vrot.slane %v2797, 4
      %v3453 = vor.u32 %v3451, %v3452
      %v3454 = vsel %vm3378, %v3449, %v3453
      %v3455 = vrot.slane %v2803, 3
      %v3456 = vrot.slane %v2806, 4
      %v3457 = vor.u32 %v3455, %v3456
      %v3458 = vsel %vm3378, %v3453, %v3457
      %v3459 = vrot.slane %v2812, 3
      %v3460 = vrot.slane %v2815, 4
      %v3461 = vor.u32 %v3459, %v3460
      %v3462 = vsel %vm3378, %v3457, %v3461
      %v3463 = vrot.slane %v2821, 3
      %v3464 = vrot.slane %v2824, 4
      %v3465 = vor.u32 %v3463, %v3464
      %v3466 = vsel %vm3378, %v3461, %v3465
      %v3468 = vshrl.u32 %v3089, 16
      %v3470 = vrot.slane %v3468, 3
      %v3471 = vshll.u32 %v3089, 16
      %v3473 = vrot.slane %v3471, 4
      %v3474 = vor.u32 %v3470, %v3473
      %v3475 = vsel %vm3378, %v3465, %v3474
      %v3480 = vunpack.c.l.b16 %v3374
      %v3481 = vunpack.c.l.b16 %v3375
      %v3482 = vunpack.c.l.b16 %v3376
      %v3483 = vunpack.c.l.b16 %v3377
      %v3484 = vpack.c.b16 %v3481, %v3480
      %v3485 = vpack.c.b16 %v3483, %v3482
      %v3489 = vsel %vm1199, %v3390, 0
      %v3492 = vsel %vm1199, %v3394, 0
      %v3495 = vsel %vm1199, %v3398, 0
      %v3498 = vsel %vm1199, %v3402, 0
      %v3501 = vsel %vm1199, %v3406, 0
      %v3504 = vsel %vm1199, %v3410, 0
      %v3507 = vsel %vm1199, %v3414, 0
      %v3510 = vsel %vm1199, %v3418, 0
      %v3513 = vsel %vm1199, %v3422, 0
      %v3516 = vsel %vm1199, %v3426, 0
      %v3519 = vsel %vm1199, %v3430, 0
      %v3522 = vsel %vm1199, %v3434, 0
      %v3525 = vsel %vm1199, %v3438, 0
      %v3528 = vsel %vm1199, %v3442, 0
      %v3531 = vsel %vm1199, %v3446, 0
      %v3534 = vsel %vm1199, %v3450, 0
      %v3537 = vsel %vm1199, %v3454, 0
      %v3540 = vsel %vm1199, %v3458, 0
      %v3543 = vsel %vm1199, %v3462, 0
      %v3546 = vsel %vm1199, %v3466, 0
      %v3549 = vsel %vm1199, %v3475, 0
      %v3552 = vsel %vm1199, %v3470, 0
      %3554 = vmatpush.bf16.msra.mxu0 0
      %3555 = vmatpush.bf16.msra.mxu0 0
      %3556 = vmatpush.bf16.msra.mxu0 0
      %3557 = vmatpush.bf16.msra.mxu0 0
      %3558 = vmatpush.bf16.msra.mxu0 0
      %3559 = vmatpush.bf16.msra.mxu0 0
      %3560 = vmatpush.bf16.msra.mxu0 %v3485
      %3561 = vmatpush.bf16.msra.mxu0 %v3484
      %3562 = vmatmul.bf16.gmra.mxu0 %v3489
      %v3563 = vpop.f32.mrf.mxu0
      %v3564 = vadd.f32 0.0, %v3563
      %v3565 = vpop.f32.mrf.mxu0
      %v3566 = vadd.f32 0.0, %v3565
      %3567 = vmatmul.bf16.gmra.mxu0 %v3492
      %v3568 = vpop.f32.mrf.mxu0
      %v3569 = vadd.f32 0.0, %v3568
      %v3570 = vpop.f32.mrf.mxu0
      %v3571 = vadd.f32 0.0, %v3570
      %3572 = vmatmul.bf16.gmra.mxu0 %v3495
      %v3573 = vpop.f32.mrf.mxu0
      %v3574 = vadd.f32 0.0, %v3573
      %v3575 = vpop.f32.mrf.mxu0
      %v3576 = vadd.f32 0.0, %v3575
      %3577 = vmatmul.bf16.gmra.mxu0 %v3498
      %v3578 = vpop.f32.mrf.mxu0
      %v3579 = vadd.f32 0.0, %v3578
      %v3580 = vpop.f32.mrf.mxu0
      %v3581 = vadd.f32 0.0, %v3580
      %3582 = vmatmul.bf16.gmra.mxu0 %v3501
      %v3583 = vpop.f32.mrf.mxu0
      %v3584 = vadd.f32 0.0, %v3583
      %v3585 = vpop.f32.mrf.mxu0
      %v3586 = vadd.f32 0.0, %v3585
      %3587 = vmatmul.bf16.gmra.mxu0 %v3504
      %v3588 = vpop.f32.mrf.mxu0
      %v3589 = vadd.f32 0.0, %v3588
      %v3590 = vpop.f32.mrf.mxu0
      %v3591 = vadd.f32 0.0, %v3590
      %3592 = vmatmul.bf16.gmra.mxu0 %v3507
      %v3593 = vpop.f32.mrf.mxu0
      %v3594 = vadd.f32 0.0, %v3593
      %v3595 = vpop.f32.mrf.mxu0
      %v3596 = vadd.f32 0.0, %v3595
      %3597 = vmatmul.bf16.gmra.mxu0 %v3510
      %v3598 = vpop.f32.mrf.mxu0
      %v3599 = vadd.f32 0.0, %v3598
      %v3600 = vpop.f32.mrf.mxu0
      %v3601 = vadd.f32 0.0, %v3600
      %3602 = vmatmul.bf16.gmra.mxu0 %v3513
      %v3603 = vpop.f32.mrf.mxu0
      %v3604 = vadd.f32 0.0, %v3603
      %v3605 = vpop.f32.mrf.mxu0
      %v3606 = vadd.f32 0.0, %v3605
      %3607 = vmatmul.bf16.gmra.mxu0 %v3516
      %v3608 = vpop.f32.mrf.mxu0
      %v3609 = vadd.f32 0.0, %v3608
      %v3610 = vpop.f32.mrf.mxu0
      %v3611 = vadd.f32 0.0, %v3610
      %3612 = vmatmul.bf16.gmra.mxu0 %v3519
      %v3613 = vpop.f32.mrf.mxu0
      %v3614 = vadd.f32 0.0, %v3613
      %v3615 = vpop.f32.mrf.mxu0
      %v3616 = vadd.f32 0.0, %v3615
      %3617 = vmatmul.bf16.gmra.mxu0 %v3522
      %v3618 = vpop.f32.mrf.mxu0
      %v3619 = vadd.f32 0.0, %v3618
      %v3620 = vpop.f32.mrf.mxu0
      %v3621 = vadd.f32 0.0, %v3620
      %3622 = vmatmul.bf16.gmra.mxu0 %v3525
      %v3623 = vpop.f32.mrf.mxu0
      %v3624 = vadd.f32 0.0, %v3623
      %v3625 = vpop.f32.mrf.mxu0
      %v3626 = vadd.f32 0.0, %v3625
      %3627 = vmatmul.bf16.gmra.mxu0 %v3528
      %v3628 = vpop.f32.mrf.mxu0
      %v3629 = vadd.f32 0.0, %v3628
      %v3630 = vpop.f32.mrf.mxu0
      %v3631 = vadd.f32 0.0, %v3630
      %3632 = vmatmul.bf16.gmra.mxu0 %v3531
      %v3633 = vpop.f32.mrf.mxu0
      %v3634 = vadd.f32 0.0, %v3633
      %v3635 = vpop.f32.mrf.mxu0
      %v3636 = vadd.f32 0.0, %v3635
      %3637 = vmatmul.bf16.gmra.mxu0 %v3534
      %v3638 = vpop.f32.mrf.mxu0
      %v3639 = vadd.f32 0.0, %v3638
      %v3640 = vpop.f32.mrf.mxu0
      %v3641 = vadd.f32 0.0, %v3640
      %3642 = vmatmul.bf16.gmra.mxu0 %v3537
      %v3643 = vpop.f32.mrf.mxu0
      %v3644 = vadd.f32 0.0, %v3643
      %v3645 = vpop.f32.mrf.mxu0
      %v3646 = vadd.f32 0.0, %v3645
      %3647 = vmatmul.bf16.gmra.mxu0 %v3540
      %v3648 = vpop.f32.mrf.mxu0
      %v3649 = vadd.f32 0.0, %v3648
      %v3650 = vpop.f32.mrf.mxu0
      %v3651 = vadd.f32 0.0, %v3650
      %3652 = vmatmul.bf16.gmra.mxu0 %v3543
      %v3653 = vpop.f32.mrf.mxu0
      %v3654 = vadd.f32 0.0, %v3653
      %v3655 = vpop.f32.mrf.mxu0
      %v3656 = vadd.f32 0.0, %v3655
      %3657 = vmatmul.bf16.gmra.mxu0 %v3546
      %v3658 = vpop.f32.mrf.mxu0
      %v3659 = vadd.f32 0.0, %v3658
      %v3660 = vpop.f32.mrf.mxu0
      %v3661 = vadd.f32 0.0, %v3660
      %3662 = vmatmul.bf16.gmra.mxu0 %v3549
      %v3663 = vpop.f32.mrf.mxu0
      %v3664 = vadd.f32 0.0, %v3663
      %v3665 = vpop.f32.mrf.mxu0
      %v3666 = vadd.f32 0.0, %v3665
      %3667 = vmatmul.bf16.gmra.mxu0 %v3552
      %v3668 = vpop.f32.mrf.mxu0
      %v3669 = vadd.f32 0.0, %v3668
      %v3670 = vpop.f32.mrf.mxu0
      %3671 = vdwg.mxu0
      %v3672 = vadd.f32 %v3330, %v3564
      %v3673 = vadd.f32 %v3331, %v3566
      %v3674 = vadd.f32 %v3332, %v3569
      %v3675 = vadd.f32 %v3333, %v3571
      %v3676 = vadd.f32 %v3334, %v3574
      %v3677 = vadd.f32 %v3335, %v3576
      %v3678 = vadd.f32 %v3336, %v3579
      %v3679 = vadd.f32 %v3337, %v3581
      %v3680 = vadd.f32 %v3338, %v3584
      %v3681 = vadd.f32 %v3339, %v3586
      %v3682 = vadd.f32 %v3340, %v3589
      %v3683 = vadd.f32 %v3341, %v3591
      %v3684 = vadd.f32 %v3342, %v3594
      %v3685 = vadd.f32 %v3343, %v3596
      %v3686 = vadd.f32 %v3344, %v3599
      %v3687 = vadd.f32 %v3345, %v3601
      %v3688 = vadd.f32 %v3346, %v3604
      %v3689 = vadd.f32 %v3347, %v3606
      %v3690 = vadd.f32 %v3348, %v3609
      %v3691 = vadd.f32 %v3349, %v3611
      %v3692 = vadd.f32 %v3350, %v3614
      %v3693 = vadd.f32 %v3351, %v3616
      %v3694 = vadd.f32 %v3352, %v3619
      %v3695 = vadd.f32 %v3353, %v3621
      %v3696 = vadd.f32 %v3354, %v3624
      %v3697 = vadd.f32 %v3355, %v3626
      %v3698 = vadd.f32 %v3356, %v3629
      %v3699 = vadd.f32 %v3357, %v3631
      %v3700 = vadd.f32 %v3358, %v3634
      %v3701 = vadd.f32 %v3359, %v3636
      %v3702 = vadd.f32 %v3360, %v3639
      %v3703 = vadd.f32 %v3361, %v3641
      %v3704 = vadd.f32 %v3362, %v3644
      %v3705 = vadd.f32 %v3363, %v3646
      %v3706 = vadd.f32 %v3364, %v3649
      %v3707 = vadd.f32 %v3365, %v3651
      %v3708 = vadd.f32 %v3366, %v3654
      %v3709 = vadd.f32 %v3367, %v3656
      %v3710 = vadd.f32 %v3368, %v3659
      %v3711 = vadd.f32 %v3369, %v3661
      %v3712 = vadd.f32 %v3370, %v3664
      %v3713 = vadd.f32 %v3371, %v3666
      %v3714 = vadd.f32 %v3372, %v3669
      %v3715 = vld [vmem:[#allocation2 + $0x14] sm:$0xf]
      %v3716 = vld [vmem:[#allocation2 + $0x18] sm:$0xf]
      %v3717 = vld [vmem:[#allocation2 + $0x1c] sm:$0xf]
      %v3718 = vld [vmem:[#allocation2 + $0x20] sm:$0xf]
      %v3719 = vld [vmem:[#allocation2 + $0x24] sm:$0xf]
      %v3720 = vld [vmem:[#allocation2 + $0x28] sm:$0xf]
      %v3721 = vld [vmem:[#allocation2 + $0x2c] sm:$0xf]
      %v3722 = vld [vmem:[#allocation2 + $0x30] sm:$0xf]
      %v3723 = vld [vmem:[#allocation2 + $0x34] sm:$0xf]
      %v3724 = vld [vmem:[#allocation2 + $0x38] sm:$0xf]
      %v3725 = vld [vmem:[#allocation2 + $0x3c] sm:$0xf]
      %v3726 = vld [vmem:[#allocation2 + $0x40] sm:$0xf]
      %v3727 = vld [vmem:[#allocation2 + $0x44] sm:$0xf]
      %v3728 = vld [vmem:[#allocation2 + $0x48] sm:$0xf]
      %v3729 = vld [vmem:[#allocation2 + $0x4c] sm:$0xf]
      %v3730 = vld [vmem:[#allocation2 + $0x50] sm:$0xf]
      %v3731 = vld [vmem:[#allocation2 + $0x54] sm:$0xf]
      %v3732 = vld [vmem:[#allocation2 + $0x58] sm:$0xf]
      %v3733 = vld [vmem:[#allocation2 + $0x5c] sm:$0xf]
      %v3734 = vld [vmem:[#allocation2 + $0x60] sm:$0xf]
      %v3735 = vld [vmem:[#allocation2 + $0x64] sm:$0xf]
      %v3736 = vld [vmem:[#allocation2 + $0x68] sm:$0xf]
      %v3737 = vld [vmem:[#allocation2 + $0x6c] sm:$0xf]
      %v3738 = vld [vmem:[#allocation2 + $0x70] sm:$0xf]
      %v3739 = vld [vmem:[#allocation2 + $0x74] sm:$0xf]
      %v3740 = vld [vmem:[#allocation2 + $0x78] sm:$0xf]
      %v3741 = vld [vmem:[#allocation2 + $0x7c] sm:$0xf]
      %v3742 = vld [vmem:[#allocation2 + $0x80] sm:$0xf]
      %v3743 = vld [vmem:[#allocation2 + $0x84] sm:$0xf]
      %v3744 = vld [vmem:[#allocation2 + $0x88] sm:$0xf]
      %v3745 = vld [vmem:[#allocation2 + $0x8c] sm:$0xf]
      %v3746 = vld [vmem:[#allocation2 + $0x90] sm:$0xf]
      %v3747 = vld [vmem:[#allocation2 + $0x94] sm:$0xf]
      %v3748 = vld [vmem:[#allocation2 + $0x98] sm:$0xf]
      %v3749 = vld [vmem:[#allocation2 + $0x9c] sm:$0xf]
      %v3750 = vld [vmem:[#allocation2 + $0xa0] sm:$0xf]
      %v3751 = vld [vmem:[#allocation2 + $0xa4] sm:$0xf]
      %v3752 = vld [vmem:[#allocation2 + $0xa8] sm:$0xf]
      %v3753 = vld [vmem:[#allocation2 + $0xac] sm:$0xf]
      %v3754 = vld [vmem:[#allocation2 + $0xb0] sm:$0xf]
      %v3755 = vld [vmem:[#allocation2 + $0xb4] sm:$0xf]
      %v3756 = vld [vmem:[#allocation2 + $0xb8] sm:$0xf]
      %v3757 = vld [vmem:[#allocation2 + $0xbc] sm:$0x1]
      %s3758 = scalar_lea.vmem %s3, 128
      %v3759 = vld [vmem:[%s3758] sm:$0xf]
      %v3760 = vld [vmem:[%s3758 + $0x4] sm:$0xf]
      %v3761 = vld [vmem:[%s3758 + $0x8] sm:$0xf]
      %v3762 = vld [vmem:[%s3758 + $0xc] sm:$0xf]
      %v3806 = vunpack.c.l.b16 %v3715
      %v3807 = vunpack.c.l.b16 %v3716
      %v3808 = vunpack.c.l.b16 %v3717
      %v3809 = vunpack.c.l.b16 %v3718
      %v3810 = vunpack.c.l.b16 %v3719
      %v3811 = vunpack.c.l.b16 %v3720
      %v3812 = vunpack.c.l.b16 %v3721
      %v3813 = vunpack.c.l.b16 %v3722
      %v3814 = vunpack.c.l.b16 %v3723
      %v3815 = vunpack.c.l.b16 %v3724
      %v3816 = vunpack.c.l.b16 %v3725
      %v3817 = vunpack.c.l.b16 %v3726
      %v3818 = vunpack.c.l.b16 %v3727
      %v3819 = vunpack.c.l.b16 %v3728
      %v3820 = vunpack.c.l.b16 %v3729
      %v3821 = vunpack.c.l.b16 %v3730
      %v3822 = vunpack.c.l.b16 %v3731
      %v3823 = vunpack.c.l.b16 %v3732
      %v3824 = vunpack.c.l.b16 %v3733
      %v3825 = vunpack.c.l.b16 %v3734
      %v3826 = vunpack.c.l.b16 %v3735
      %v3827 = vunpack.c.l.b16 %v3736
      %v3828 = vunpack.c.l.b16 %v3737
      %v3829 = vunpack.c.l.b16 %v3738
      %v3830 = vunpack.c.l.b16 %v3739
      %v3831 = vunpack.c.l.b16 %v3740
      %v3832 = vunpack.c.l.b16 %v3741
      %v3833 = vunpack.c.l.b16 %v3742
      %v3834 = vunpack.c.l.b16 %v3743
      %v3835 = vunpack.c.l.b16 %v3744
      %v3836 = vunpack.c.l.b16 %v3745
      %v3837 = vunpack.c.l.b16 %v3746
      %v3838 = vunpack.c.l.b16 %v3747
      %v3839 = vunpack.c.l.b16 %v3748
      %v3840 = vunpack.c.l.b16 %v3749
      %v3841 = vunpack.c.l.b16 %v3750
      %v3842 = vunpack.c.l.b16 %v3751
      %v3843 = vunpack.c.l.b16 %v3752
      %v3844 = vunpack.c.l.b16 %v3753
      %v3845 = vunpack.c.l.b16 %v3754
      %v3846 = vunpack.c.l.b16 %v3755
      %v3847 = vunpack.c.l.b16 %v3756
      %v3848 = vunpack.c.l.b16 %v3757
      %v3849 = vpack.c.b16 %v3807, %v3806
      %v3850 = vpack.c.b16 %v3809, %v3808
      %v3851 = vpack.c.b16 %v3811, %v3810
      %v3852 = vpack.c.b16 %v3813, %v3812
      %v3853 = vpack.c.b16 %v3815, %v3814
      %v3854 = vpack.c.b16 %v3817, %v3816
      %v3855 = vpack.c.b16 %v3819, %v3818
      %v3856 = vpack.c.b16 %v3821, %v3820
      %v3857 = vpack.c.b16 %v3823, %v3822
      %v3858 = vpack.c.b16 %v3825, %v3824
      %v3859 = vpack.c.b16 %v3827, %v3826
      %v3860 = vpack.c.b16 %v3829, %v3828
      %v3861 = vpack.c.b16 %v3831, %v3830
      %v3862 = vpack.c.b16 %v3833, %v3832
      %v3863 = vpack.c.b16 %v3835, %v3834
      %v3864 = vpack.c.b16 %v3837, %v3836
      %v3865 = vpack.c.b16 %v3839, %v3838
      %v3866 = vpack.c.b16 %v3841, %v3840
      %v3867 = vpack.c.b16 %v3843, %v3842
      %v3868 = vpack.c.b16 %v3845, %v3844
      %v3869 = vpack.c.b16 %v3847, %v3846
      %v3870 = vpack.c.b16 %v3848, %v3848
      %v3875 = vunpack.c.l.b16 %v3759
      %v3876 = vunpack.c.l.b16 %v3760
      %v3877 = vunpack.c.l.b16 %v3761
      %v3878 = vunpack.c.l.b16 %v3762
      %v3879 = vpack.c.b16 %v3876, %v3875
      %v3880 = vpack.c.b16 %v3878, %v3877
      %v3884 = vsel %vm1199, %v3849, 0
      %v3887 = vsel %vm1199, %v3850, 0
      %v3890 = vsel %vm1199, %v3851, 0
      %v3893 = vsel %vm1199, %v3852, 0
      %v3896 = vsel %vm1199, %v3853, 0
      %v3899 = vsel %vm1199, %v3854, 0
      %v3902 = vsel %vm1199, %v3855, 0
      %v3905 = vsel %vm1199, %v3856, 0
      %v3908 = vsel %vm1199, %v3857, 0
      %v3911 = vsel %vm1199, %v3858, 0
      %v3914 = vsel %vm1199, %v3859, 0
      %v3917 = vsel %vm1199, %v3860, 0
      %v3920 = vsel %vm1199, %v3861, 0
      %v3923 = vsel %vm1199, %v3862, 0
      %v3926 = vsel %vm1199, %v3863, 0
      %v3929 = vsel %vm1199, %v3864, 0
      %v3932 = vsel %vm1199, %v3865, 0
      %v3935 = vsel %vm1199, %v3866, 0
      %v3938 = vsel %vm1199, %v3867, 0
      %v3941 = vsel %vm1199, %v3868, 0
      %v3944 = vsel %vm1199, %v3869, 0
      %v3947 = vsel %vm1199, %v3870, 0
      %3949 = vmatpush.bf16.msra.mxu0 0
      %3950 = vmatpush.bf16.msra.mxu0 0
      %3951 = vmatpush.bf16.msra.mxu0 0
      %3952 = vmatpush.bf16.msra.mxu0 0
      %3953 = vmatpush.bf16.msra.mxu0 0
      %3954 = vmatpush.bf16.msra.mxu0 0
      %3955 = vmatpush.bf16.msra.mxu0 %v3880
      %3956 = vmatpush.bf16.msra.mxu0 %v3879
      %3957 = vmatmul.bf16.gmra.mxu0 %v3884
      %v3958 = vpop.f32.mrf.mxu0
      %v3959 = vadd.f32 0.0, %v3958
      %v3960 = vpop.f32.mrf.mxu0
      %v3961 = vadd.f32 0.0, %v3960
      %3962 = vmatmul.bf16.gmra.mxu0 %v3887
      %v3963 = vpop.f32.mrf.mxu0
      %v3964 = vadd.f32 0.0, %v3963
      %v3965 = vpop.f32.mrf.mxu0
      %v3966 = vadd.f32 0.0, %v3965
      %3967 = vmatmul.bf16.gmra.mxu0 %v3890
      %v3968 = vpop.f32.mrf.mxu0
      %v3969 = vadd.f32 0.0, %v3968
      %v3970 = vpop.f32.mrf.mxu0
      %v3971 = vadd.f32 0.0, %v3970
      %3972 = vmatmul.bf16.gmra.mxu0 %v3893
      %v3973 = vpop.f32.mrf.mxu0
      %v3974 = vadd.f32 0.0, %v3973
      %v3975 = vpop.f32.mrf.mxu0
      %v3976 = vadd.f32 0.0, %v3975
      %3977 = vmatmul.bf16.gmra.mxu0 %v3896
      %v3978 = vpop.f32.mrf.mxu0
      %v3979 = vadd.f32 0.0, %v3978
      %v3980 = vpop.f32.mrf.mxu0
      %v3981 = vadd.f32 0.0, %v3980
      %3982 = vmatmul.bf16.gmra.mxu0 %v3899
      %v3983 = vpop.f32.mrf.mxu0
      %v3984 = vadd.f32 0.0, %v3983
      %v3985 = vpop.f32.mrf.mxu0
      %v3986 = vadd.f32 0.0, %v3985
      %3987 = vmatmul.bf16.gmra.mxu0 %v3902
      %v3988 = vpop.f32.mrf.mxu0
      %v3989 = vadd.f32 0.0, %v3988
      %v3990 = vpop.f32.mrf.mxu0
      %v3991 = vadd.f32 0.0, %v3990
      %3992 = vmatmul.bf16.gmra.mxu0 %v3905
      %v3993 = vpop.f32.mrf.mxu0
      %v3994 = vadd.f32 0.0, %v3993
      %v3995 = vpop.f32.mrf.mxu0
      %v3996 = vadd.f32 0.0, %v3995
      %3997 = vmatmul.bf16.gmra.mxu0 %v3908
      %v3998 = vpop.f32.mrf.mxu0
      %v3999 = vadd.f32 0.0, %v3998
      %v4000 = vpop.f32.mrf.mxu0
      %v4001 = vadd.f32 0.0, %v4000
      %4002 = vmatmul.bf16.gmra.mxu0 %v3911
      %v4003 = vpop.f32.mrf.mxu0
      %v4004 = vadd.f32 0.0, %v4003
      %v4005 = vpop.f32.mrf.mxu0
      %v4006 = vadd.f32 0.0, %v4005
      %4007 = vmatmul.bf16.gmra.mxu0 %v3914
      %v4008 = vpop.f32.mrf.mxu0
      %v4009 = vadd.f32 0.0, %v4008
      %v4010 = vpop.f32.mrf.mxu0
      %v4011 = vadd.f32 0.0, %v4010
      %4012 = vmatmul.bf16.gmra.mxu0 %v3917
      %v4013 = vpop.f32.mrf.mxu0
      %v4014 = vadd.f32 0.0, %v4013
      %v4015 = vpop.f32.mrf.mxu0
      %v4016 = vadd.f32 0.0, %v4015
      %4017 = vmatmul.bf16.gmra.mxu0 %v3920
      %v4018 = vpop.f32.mrf.mxu0
      %v4019 = vadd.f32 0.0, %v4018
      %v4020 = vpop.f32.mrf.mxu0
      %v4021 = vadd.f32 0.0, %v4020
      %4022 = vmatmul.bf16.gmra.mxu0 %v3923
      %v4023 = vpop.f32.mrf.mxu0
      %v4024 = vadd.f32 0.0, %v4023
      %v4025 = vpop.f32.mrf.mxu0
      %v4026 = vadd.f32 0.0, %v4025
      %4027 = vmatmul.bf16.gmra.mxu0 %v3926
      %v4028 = vpop.f32.mrf.mxu0
      %v4029 = vadd.f32 0.0, %v4028
      %v4030 = vpop.f32.mrf.mxu0
      %v4031 = vadd.f32 0.0, %v4030
      %4032 = vmatmul.bf16.gmra.mxu0 %v3929
      %v4033 = vpop.f32.mrf.mxu0
      %v4034 = vadd.f32 0.0, %v4033
      %v4035 = vpop.f32.mrf.mxu0
      %v4036 = vadd.f32 0.0, %v4035
      %4037 = vmatmul.bf16.gmra.mxu0 %v3932
      %v4038 = vpop.f32.mrf.mxu0
      %v4039 = vadd.f32 0.0, %v4038
      %v4040 = vpop.f32.mrf.mxu0
      %v4041 = vadd.f32 0.0, %v4040
      %4042 = vmatmul.bf16.gmra.mxu0 %v3935
      %v4043 = vpop.f32.mrf.mxu0
      %v4044 = vadd.f32 0.0, %v4043
      %v4045 = vpop.f32.mrf.mxu0
      %v4046 = vadd.f32 0.0, %v4045
      %4047 = vmatmul.bf16.gmra.mxu0 %v3938
      %v4048 = vpop.f32.mrf.mxu0
      %v4049 = vadd.f32 0.0, %v4048
      %v4050 = vpop.f32.mrf.mxu0
      %v4051 = vadd.f32 0.0, %v4050
      %4052 = vmatmul.bf16.gmra.mxu0 %v3941
      %v4053 = vpop.f32.mrf.mxu0
      %v4054 = vadd.f32 0.0, %v4053
      %v4055 = vpop.f32.mrf.mxu0
      %v4056 = vadd.f32 0.0, %v4055
      %4057 = vmatmul.bf16.gmra.mxu0 %v3944
      %v4058 = vpop.f32.mrf.mxu0
      %v4059 = vadd.f32 0.0, %v4058
      %v4060 = vpop.f32.mrf.mxu0
      %v4061 = vadd.f32 0.0, %v4060
      %4062 = vmatmul.bf16.gmra.mxu0 %v3947
      %v4063 = vpop.f32.mrf.mxu0
      %v4064 = vadd.f32 0.0, %v4063
      %v4065 = vpop.f32.mrf.mxu0
      %4066 = vdwg.mxu0
      %v4067 = vadd.f32 %v3672, %v3959
      %v4068 = vadd.f32 %v3673, %v3961
      %v4069 = vadd.f32 %v3674, %v3964
      %v4070 = vadd.f32 %v3675, %v3966
      %v4071 = vadd.f32 %v3676, %v3969
      %v4072 = vadd.f32 %v3677, %v3971
      %v4073 = vadd.f32 %v3678, %v3974
      %v4074 = vadd.f32 %v3679, %v3976
      %v4075 = vadd.f32 %v3680, %v3979
      %v4076 = vadd.f32 %v3681, %v3981
      %v4077 = vadd.f32 %v3682, %v3984
      %v4078 = vadd.f32 %v3683, %v3986
      %v4079 = vadd.f32 %v3684, %v3989
      %v4080 = vadd.f32 %v3685, %v3991
      %v4081 = vadd.f32 %v3686, %v3994
      %v4082 = vadd.f32 %v3687, %v3996
      %v4083 = vadd.f32 %v3688, %v3999
      %v4084 = vadd.f32 %v3689, %v4001
      %v4085 = vadd.f32 %v3690, %v4004
      %v4086 = vadd.f32 %v3691, %v4006
      %v4087 = vadd.f32 %v3692, %v4009
      %v4088 = vadd.f32 %v3693, %v4011
      %v4089 = vadd.f32 %v3694, %v4014
      %v4090 = vadd.f32 %v3695, %v4016
      %v4091 = vadd.f32 %v3696, %v4019
      %v4092 = vadd.f32 %v3697, %v4021
      %v4093 = vadd.f32 %v3698, %v4024
      %v4094 = vadd.f32 %v3699, %v4026
      %v4095 = vadd.f32 %v3700, %v4029
      %v4096 = vadd.f32 %v3701, %v4031
      %v4097 = vadd.f32 %v3702, %v4034
      %v4098 = vadd.f32 %v3703, %v4036
      %v4099 = vadd.f32 %v3704, %v4039
      %v4100 = vadd.f32 %v3705, %v4041
      %v4101 = vadd.f32 %v3706, %v4044
      %v4102 = vadd.f32 %v3707, %v4046
      %v4103 = vadd.f32 %v3708, %v4049
      %v4104 = vadd.f32 %v3709, %v4051
      %v4105 = vadd.f32 %v3710, %v4054
      %v4106 = vadd.f32 %v3711, %v4056
      %v4107 = vadd.f32 %v3712, %v4059
      %v4108 = vadd.f32 %v3713, %v4061
      %v4109 = vadd.f32 %v3714, %v4064
      %s4110 = scalar_lea.vmem %s3, 144
      %v4111 = vld [vmem:[%s4110] sm:$0xf]
      %v4112 = vld [vmem:[%s4110 + $0x4] sm:$0xf]
      %v4113 = vld [vmem:[%s4110 + $0x8] sm:$0xf]
      %v4114 = vld [vmem:[%s4110 + $0xc] sm:$0xf]
      %v4115 = vshrl.u32 %v3849, 16
      %v4117 = vshll.u32 %v3849, 16
      %v4119 = vrot.slane %v4117, 1
      %v4120 = vor.u32 %v4115, %v4119
      %v4121 = vshll.u32 %v3850, 16
      %v4123 = vrot.slane %v4121, 1
      %v4124 = vsel %vm1012, %v4120, %v4123
      %v4125 = vshrl.u32 %v3850, 16
      %v4127 = vor.u32 %v4125, %v4123
      %v4128 = vshll.u32 %v3851, 16
      %v4130 = vrot.slane %v4128, 1
      %v4131 = vsel %vm1012, %v4127, %v4130
      %v4132 = vshrl.u32 %v3851, 16
      %v4134 = vor.u32 %v4132, %v4130
      %v4135 = vshll.u32 %v3852, 16
      %v4137 = vrot.slane %v4135, 1
      %v4138 = vsel %vm1012, %v4134, %v4137
      %v4139 = vshrl.u32 %v3852, 16
      %v4141 = vor.u32 %v4139, %v4137
      %v4142 = vshll.u32 %v3853, 16
      %v4144 = vrot.slane %v4142, 1
      %v4145 = vsel %vm1012, %v4141, %v4144
      %v4146 = vshrl.u32 %v3853, 16
      %v4148 = vor.u32 %v4146, %v4144
      %v4149 = vshll.u32 %v3854, 16
      %v4151 = vrot.slane %v4149, 1
      %v4152 = vsel %vm1012, %v4148, %v4151
      %v4153 = vshrl.u32 %v3854, 16
      %v4155 = vor.u32 %v4153, %v4151
      %v4156 = vshll.u32 %v3855, 16
      %v4158 = vrot.slane %v4156, 1
      %v4159 = vsel %vm1012, %v4155, %v4158
      %v4160 = vshrl.u32 %v3855, 16
      %v4162 = vor.u32 %v4160, %v4158
      %v4163 = vshll.u32 %v3856, 16
      %v4165 = vrot.slane %v4163, 1
      %v4166 = vsel %vm1012, %v4162, %v4165
      %v4167 = vshrl.u32 %v3856, 16
      %v4169 = vor.u32 %v4167, %v4165
      %v4170 = vshll.u32 %v3857, 16
      %v4172 = vrot.slane %v4170, 1
      %v4173 = vsel %vm1012, %v4169, %v4172
      %v4174 = vshrl.u32 %v3857, 16
      %v4176 = vor.u32 %v4174, %v4172
      %v4177 = vshll.u32 %v3858, 16
      %v4179 = vrot.slane %v4177, 1
      %v4180 = vsel %vm1012, %v4176, %v4179
      %v4181 = vshrl.u32 %v3858, 16
      %v4183 = vor.u32 %v4181, %v4179
      %v4184 = vshll.u32 %v3859, 16
      %v4186 = vrot.slane %v4184, 1
      %v4187 = vsel %vm1012, %v4183, %v4186
      %v4188 = vshrl.u32 %v3859, 16
      %v4190 = vor.u32 %v4188, %v4186
      %v4191 = vshll.u32 %v3860, 16
      %v4193 = vrot.slane %v4191, 1
      %v4194 = vsel %vm1012, %v4190, %v4193
      %v4195 = vshrl.u32 %v3860, 16
      %v4197 = vor.u32 %v4195, %v4193
      %v4198 = vshll.u32 %v3861, 16
      %v4200 = vrot.slane %v4198, 1
      %v4201 = vsel %vm1012, %v4197, %v4200
      %v4202 = vshrl.u32 %v3861, 16
      %v4204 = vor.u32 %v4202, %v4200
      %v4205 = vshll.u32 %v3862, 16
      %v4207 = vrot.slane %v4205, 1
      %v4208 = vsel %vm1012, %v4204, %v4207
      %v4209 = vshrl.u32 %v3862, 16
      %v4211 = vor.u32 %v4209, %v4207
      %v4212 = vshll.u32 %v3863, 16
      %v4214 = vrot.slane %v4212, 1
      %v4215 = vsel %vm1012, %v4211, %v4214
      %v4216 = vshrl.u32 %v3863, 16
      %v4218 = vor.u32 %v4216, %v4214
      %v4219 = vshll.u32 %v3864, 16
      %v4221 = vrot.slane %v4219, 1
      %v4222 = vsel %vm1012, %v4218, %v4221
      %v4223 = vshrl.u32 %v3864, 16
      %v4225 = vor.u32 %v4223, %v4221
      %v4226 = vshll.u32 %v3865, 16
      %v4228 = vrot.slane %v4226, 1
      %v4229 = vsel %vm1012, %v4225, %v4228
      %v4230 = vshrl.u32 %v3865, 16
      %v4232 = vor.u32 %v4230, %v4228
      %v4233 = vshll.u32 %v3866, 16
      %v4235 = vrot.slane %v4233, 1
      %v4236 = vsel %vm1012, %v4232, %v4235
      %v4237 = vshrl.u32 %v3866, 16
      %v4239 = vor.u32 %v4237, %v4235
      %v4240 = vshll.u32 %v3867, 16
      %v4242 = vrot.slane %v4240, 1
      %v4243 = vsel %vm1012, %v4239, %v4242
      %v4244 = vshrl.u32 %v3867, 16
      %v4246 = vor.u32 %v4244, %v4242
      %v4247 = vshll.u32 %v3868, 16
      %v4249 = vrot.slane %v4247, 1
      %v4250 = vsel %vm1012, %v4246, %v4249
      %v4251 = vshrl.u32 %v3868, 16
      %v4253 = vor.u32 %v4251, %v4249
      %v4254 = vshll.u32 %v3869, 16
      %v4256 = vrot.slane %v4254, 1
      %v4257 = vsel %vm1012, %v4253, %v4256
      %v4258 = vshrl.u32 %v3869, 16
      %v4260 = vor.u32 %v4258, %v4256
      %v4261 = vshll.u32 %v3870, 16
      %v4263 = vrot.slane %v4261, 1
      %v4264 = vsel %vm1012, %v4260, %v4263
      %v4265 = vshrl.u32 %v3870, 16
      %v4271 = vunpack.c.l.b16 %v4111
      %v4272 = vunpack.c.l.b16 %v4112
      %v4273 = vunpack.c.l.b16 %v4113
      %v4274 = vunpack.c.l.b16 %v4114
      %v4275 = vpack.c.b16 %v4272, %v4271
      %v4276 = vpack.c.b16 %v4274, %v4273
      %v4280 = vsel %vm1199, %v4124, 0
      %v4283 = vsel %vm1199, %v4131, 0
      %v4286 = vsel %vm1199, %v4138, 0
      %v4289 = vsel %vm1199, %v4145, 0
      %v4292 = vsel %vm1199, %v4152, 0
      %v4295 = vsel %vm1199, %v4159, 0
      %v4298 = vsel %vm1199, %v4166, 0
      %v4301 = vsel %vm1199, %v4173, 0
      %v4304 = vsel %vm1199, %v4180, 0
      %v4307 = vsel %vm1199, %v4187, 0
      %v4310 = vsel %vm1199, %v4194, 0
      %v4313 = vsel %vm1199, %v4201, 0
      %v4316 = vsel %vm1199, %v4208, 0
      %v4319 = vsel %vm1199, %v4215, 0
      %v4322 = vsel %vm1199, %v4222, 0
      %v4325 = vsel %vm1199, %v4229, 0
      %v4328 = vsel %vm1199, %v4236, 0
      %v4331 = vsel %vm1199, %v4243, 0
      %v4334 = vsel %vm1199, %v4250, 0
      %v4337 = vsel %vm1199, %v4257, 0
      %v4340 = vsel %vm1199, %v4264, 0
      %v4343 = vsel %vm1199, %v4265, 0
      %4345 = vmatpush.bf16.msra.mxu0 0
      %4346 = vmatpush.bf16.msra.mxu0 0
      %4347 = vmatpush.bf16.msra.mxu0 0
      %4348 = vmatpush.bf16.msra.mxu0 0
      %4349 = vmatpush.bf16.msra.mxu0 0
      %4350 = vmatpush.bf16.msra.mxu0 0
      %4351 = vmatpush.bf16.msra.mxu0 %v4276
      %4352 = vmatpush.bf16.msra.mxu0 %v4275
      %4353 = vmatmul.bf16.gmra.mxu0 %v4280
      %v4354 = vpop.f32.mrf.mxu0
      %v4355 = vadd.f32 0.0, %v4354
      %v4356 = vpop.f32.mrf.mxu0
      %v4357 = vadd.f32 0.0, %v4356
      %4358 = vmatmul.bf16.gmra.mxu0 %v4283
      %v4359 = vpop.f32.mrf.mxu0
      %v4360 = vadd.f32 0.0, %v4359
      %v4361 = vpop.f32.mrf.mxu0
      %v4362 = vadd.f32 0.0, %v4361
      %4363 = vmatmul.bf16.gmra.mxu0 %v4286
      %v4364 = vpop.f32.mrf.mxu0
      %v4365 = vadd.f32 0.0, %v4364
      %v4366 = vpop.f32.mrf.mxu0
      %v4367 = vadd.f32 0.0, %v4366
      %4368 = vmatmul.bf16.gmra.mxu0 %v4289
      %v4369 = vpop.f32.mrf.mxu0
      %v4370 = vadd.f32 0.0, %v4369
      %v4371 = vpop.f32.mrf.mxu0
      %v4372 = vadd.f32 0.0, %v4371
      %4373 = vmatmul.bf16.gmra.mxu0 %v4292
      %v4374 = vpop.f32.mrf.mxu0
      %v4375 = vadd.f32 0.0, %v4374
      %v4376 = vpop.f32.mrf.mxu0
      %v4377 = vadd.f32 0.0, %v4376
      %4378 = vmatmul.bf16.gmra.mxu0 %v4295
      %v4379 = vpop.f32.mrf.mxu0
      %v4380 = vadd.f32 0.0, %v4379
      %v4381 = vpop.f32.mrf.mxu0
      %v4382 = vadd.f32 0.0, %v4381
      %4383 = vmatmul.bf16.gmra.mxu0 %v4298
      %v4384 = vpop.f32.mrf.mxu0
      %v4385 = vadd.f32 0.0, %v4384
      %v4386 = vpop.f32.mrf.mxu0
      %v4387 = vadd.f32 0.0, %v4386
      %4388 = vmatmul.bf16.gmra.mxu0 %v4301
      %v4389 = vpop.f32.mrf.mxu0
      %v4390 = vadd.f32 0.0, %v4389
      %v4391 = vpop.f32.mrf.mxu0
      %v4392 = vadd.f32 0.0, %v4391
      %4393 = vmatmul.bf16.gmra.mxu0 %v4304
      %v4394 = vpop.f32.mrf.mxu0
      %v4395 = vadd.f32 0.0, %v4394
      %v4396 = vpop.f32.mrf.mxu0
      %v4397 = vadd.f32 0.0, %v4396
      %4398 = vmatmul.bf16.gmra.mxu0 %v4307
      %v4399 = vpop.f32.mrf.mxu0
      %v4400 = vadd.f32 0.0, %v4399
      %v4401 = vpop.f32.mrf.mxu0
      %v4402 = vadd.f32 0.0, %v4401
      %4403 = vmatmul.bf16.gmra.mxu0 %v4310
      %v4404 = vpop.f32.mrf.mxu0
      %v4405 = vadd.f32 0.0, %v4404
      %v4406 = vpop.f32.mrf.mxu0
      %v4407 = vadd.f32 0.0, %v4406
      %4408 = vmatmul.bf16.gmra.mxu0 %v4313
      %v4409 = vpop.f32.mrf.mxu0
      %v4410 = vadd.f32 0.0, %v4409
      %v4411 = vpop.f32.mrf.mxu0
      %v4412 = vadd.f32 0.0, %v4411
      %4413 = vmatmul.bf16.gmra.mxu0 %v4316
      %v4414 = vpop.f32.mrf.mxu0
      %v4415 = vadd.f32 0.0, %v4414
      %v4416 = vpop.f32.mrf.mxu0
      %v4417 = vadd.f32 0.0, %v4416
      %4418 = vmatmul.bf16.gmra.mxu0 %v4319
      %v4419 = vpop.f32.mrf.mxu0
      %v4420 = vadd.f32 0.0, %v4419
      %v4421 = vpop.f32.mrf.mxu0
      %v4422 = vadd.f32 0.0, %v4421
      %4423 = vmatmul.bf16.gmra.mxu0 %v4322
      %v4424 = vpop.f32.mrf.mxu0
      %v4425 = vadd.f32 0.0, %v4424
      %v4426 = vpop.f32.mrf.mxu0
      %v4427 = vadd.f32 0.0, %v4426
      %4428 = vmatmul.bf16.gmra.mxu0 %v4325
      %v4429 = vpop.f32.mrf.mxu0
      %v4430 = vadd.f32 0.0, %v4429
      %v4431 = vpop.f32.mrf.mxu0
      %v4432 = vadd.f32 0.0, %v4431
      %4433 = vmatmul.bf16.gmra.mxu0 %v4328
      %v4434 = vpop.f32.mrf.mxu0
      %v4435 = vadd.f32 0.0, %v4434
      %v4436 = vpop.f32.mrf.mxu0
      %v4437 = vadd.f32 0.0, %v4436
      %4438 = vmatmul.bf16.gmra.mxu0 %v4331
      %v4439 = vpop.f32.mrf.mxu0
      %v4440 = vadd.f32 0.0, %v4439
      %v4441 = vpop.f32.mrf.mxu0
      %v4442 = vadd.f32 0.0, %v4441
      %4443 = vmatmul.bf16.gmra.mxu0 %v4334
      %v4444 = vpop.f32.mrf.mxu0
      %v4445 = vadd.f32 0.0, %v4444
      %v4446 = vpop.f32.mrf.mxu0
      %v4447 = vadd.f32 0.0, %v4446
      %4448 = vmatmul.bf16.gmra.mxu0 %v4337
      %v4449 = vpop.f32.mrf.mxu0
      %v4450 = vadd.f32 0.0, %v4449
      %v4451 = vpop.f32.mrf.mxu0
      %v4452 = vadd.f32 0.0, %v4451
      %4453 = vmatmul.bf16.gmra.mxu0 %v4340
      %v4454 = vpop.f32.mrf.mxu0
      %v4455 = vadd.f32 0.0, %v4454
      %v4456 = vpop.f32.mrf.mxu0
      %v4457 = vadd.f32 0.0, %v4456
      %4458 = vmatmul.bf16.gmra.mxu0 %v4343
      %v4459 = vpop.f32.mrf.mxu0
      %v4460 = vadd.f32 0.0, %v4459
      %v4461 = vpop.f32.mrf.mxu0
      %4462 = vdwg.mxu0
      %v4463 = vadd.f32 %v4067, %v4355
      %v4464 = vadd.f32 %v4068, %v4357
      %v4465 = vadd.f32 %v4069, %v4360
      %v4466 = vadd.f32 %v4070, %v4362
      %v4467 = vadd.f32 %v4071, %v4365
      %v4468 = vadd.f32 %v4072, %v4367
      %v4469 = vadd.f32 %v4073, %v4370
      %v4470 = vadd.f32 %v4074, %v4372
      %v4471 = vadd.f32 %v4075, %v4375
      %v4472 = vadd.f32 %v4076, %v4377
      %v4473 = vadd.f32 %v4077, %v4380
      %v4474 = vadd.f32 %v4078, %v4382
      %v4475 = vadd.f32 %v4079, %v4385
      %v4476 = vadd.f32 %v4080, %v4387
      %v4477 = vadd.f32 %v4081, %v4390
      %v4478 = vadd.f32 %v4082, %v4392
      %v4479 = vadd.f32 %v4083, %v4395
      %v4480 = vadd.f32 %v4084, %v4397
      %v4481 = vadd.f32 %v4085, %v4400
      %v4482 = vadd.f32 %v4086, %v4402
      %v4483 = vadd.f32 %v4087, %v4405
      %v4484 = vadd.f32 %v4088, %v4407
      %v4485 = vadd.f32 %v4089, %v4410
      %v4486 = vadd.f32 %v4090, %v4412
      %v4487 = vadd.f32 %v4091, %v4415
      %v4488 = vadd.f32 %v4092, %v4417
      %v4489 = vadd.f32 %v4093, %v4420
      %v4490 = vadd.f32 %v4094, %v4422
      %v4491 = vadd.f32 %v4095, %v4425
      %v4492 = vadd.f32 %v4096, %v4427
      %v4493 = vadd.f32 %v4097, %v4430
      %v4494 = vadd.f32 %v4098, %v4432
      %v4495 = vadd.f32 %v4099, %v4435
      %v4496 = vadd.f32 %v4100, %v4437
      %v4497 = vadd.f32 %v4101, %v4440
      %v4498 = vadd.f32 %v4102, %v4442
      %v4499 = vadd.f32 %v4103, %v4445
      %v4500 = vadd.f32 %v4104, %v4447
      %v4501 = vadd.f32 %v4105, %v4450
      %v4502 = vadd.f32 %v4106, %v4452
      %v4503 = vadd.f32 %v4107, %v4455
      %v4504 = vadd.f32 %v4108, %v4457
      %v4505 = vadd.f32 %v4109, %v4460
      %v4506 = vld [vmem:[#allocation2 + $0x14] sm:$0xe]
      %v4507 = vld [vmem:[#allocation2 + $0xbc] sm:$0x3]
      %s4508 = scalar_lea.vmem %s3, 160
      %v4509 = vld [vmem:[%s4508] sm:$0xf]
      %v4510 = vld [vmem:[%s4508 + $0x4] sm:$0xf]
      %v4511 = vld [vmem:[%s4508 + $0x8] sm:$0xf]
      %v4512 = vld [vmem:[%s4508 + $0xc] sm:$0xf]
      %v4515 = vunpack.c.l.b16 %v4506
      %v4516 = vunpack.c.l.b16 %v4507
      %v4517 = vpack.c.b16 %v3807, %v4515
      %v4518 = vpack.c.b16 %v4516, %v4516
      %v4519 = vrot.slane %v4517, 1
      %v4520 = vrot.slane %v3850, 1
      %v4521 = vsel %vm1571, %v4519, %v4520
      %v4522 = vrot.slane %v3851, 1
      %v4523 = vsel %vm1571, %v4520, %v4522
      %v4524 = vrot.slane %v3852, 1
      %v4525 = vsel %vm1571, %v4522, %v4524
      %v4526 = vrot.slane %v3853, 1
      %v4527 = vsel %vm1571, %v4524, %v4526
      %v4528 = vrot.slane %v3854, 1
      %v4529 = vsel %vm1571, %v4526, %v4528
      %v4530 = vrot.slane %v3855, 1
      %v4531 = vsel %vm1571, %v4528, %v4530
      %v4532 = vrot.slane %v3856, 1
      %v4533 = vsel %vm1571, %v4530, %v4532
      %v4534 = vrot.slane %v3857, 1
      %v4535 = vsel %vm1571, %v4532, %v4534
      %v4536 = vrot.slane %v3858, 1
      %v4537 = vsel %vm1571, %v4534, %v4536
      %v4538 = vrot.slane %v3859, 1
      %v4539 = vsel %vm1571, %v4536, %v4538
      %v4540 = vrot.slane %v3860, 1
      %v4541 = vsel %vm1571, %v4538, %v4540
      %v4542 = vrot.slane %v3861, 1
      %v4543 = vsel %vm1571, %v4540, %v4542
      %v4544 = vrot.slane %v3862, 1
      %v4545 = vsel %vm1571, %v4542, %v4544
      %v4546 = vrot.slane %v3863, 1
      %v4547 = vsel %vm1571, %v4544, %v4546
      %v4548 = vrot.slane %v3864, 1
      %v4549 = vsel %vm1571, %v4546, %v4548
      %v4550 = vrot.slane %v3865, 1
      %v4551 = vsel %vm1571, %v4548, %v4550
      %v4552 = vrot.slane %v3866, 1
      %v4553 = vsel %vm1571, %v4550, %v4552
      %v4554 = vrot.slane %v3867, 1
      %v4555 = vsel %vm1571, %v4552, %v4554
      %v4556 = vrot.slane %v3868, 1
      %v4557 = vsel %vm1571, %v4554, %v4556
      %v4558 = vrot.slane %v3869, 1
      %v4559 = vsel %vm1571, %v4556, %v4558
      %v4560 = vrot.slane %v4518, 1
      %v4561 = vsel %vm1571, %v4558, %v4560
      %v4566 = vunpack.c.l.b16 %v4509
      %v4567 = vunpack.c.l.b16 %v4510
      %v4568 = vunpack.c.l.b16 %v4511
      %v4569 = vunpack.c.l.b16 %v4512
      %v4570 = vpack.c.b16 %v4567, %v4566
      %v4571 = vpack.c.b16 %v4569, %v4568
      %v4575 = vsel %vm1199, %v4521, 0
      %v4578 = vsel %vm1199, %v4523, 0
      %v4581 = vsel %vm1199, %v4525, 0
      %v4584 = vsel %vm1199, %v4527, 0
      %v4587 = vsel %vm1199, %v4529, 0
      %v4590 = vsel %vm1199, %v4531, 0
      %v4593 = vsel %vm1199, %v4533, 0
      %v4596 = vsel %vm1199, %v4535, 0
      %v4599 = vsel %vm1199, %v4537, 0
      %v4602 = vsel %vm1199, %v4539, 0
      %v4605 = vsel %vm1199, %v4541, 0
      %v4608 = vsel %vm1199, %v4543, 0
      %v4611 = vsel %vm1199, %v4545, 0
      %v4614 = vsel %vm1199, %v4547, 0
      %v4617 = vsel %vm1199, %v4549, 0
      %v4620 = vsel %vm1199, %v4551, 0
      %v4623 = vsel %vm1199, %v4553, 0
      %v4626 = vsel %vm1199, %v4555, 0
      %v4629 = vsel %vm1199, %v4557, 0
      %v4632 = vsel %vm1199, %v4559, 0
      %v4635 = vsel %vm1199, %v4561, 0
      %v4638 = vsel %vm1199, %v4560, 0
      %4640 = vmatpush.bf16.msra.mxu0 0
      %4641 = vmatpush.bf16.msra.mxu0 0
      %4642 = vmatpush.bf16.msra.mxu0 0
      %4643 = vmatpush.bf16.msra.mxu0 0
      %4644 = vmatpush.bf16.msra.mxu0 0
      %4645 = vmatpush.bf16.msra.mxu0 0
      %4646 = vmatpush.bf16.msra.mxu0 %v4571
      %4647 = vmatpush.bf16.msra.mxu0 %v4570
      %4648 = vmatmul.bf16.gmra.mxu0 %v4575
      %v4649 = vpop.f32.mrf.mxu0
      %v4650 = vadd.f32 0.0, %v4649
      %v4651 = vpop.f32.mrf.mxu0
      %v4652 = vadd.f32 0.0, %v4651
      %4653 = vmatmul.bf16.gmra.mxu0 %v4578
      %v4654 = vpop.f32.mrf.mxu0
      %v4655 = vadd.f32 0.0, %v4654
      %v4656 = vpop.f32.mrf.mxu0
      %v4657 = vadd.f32 0.0, %v4656
      %4658 = vmatmul.bf16.gmra.mxu0 %v4581
      %v4659 = vpop.f32.mrf.mxu0
      %v4660 = vadd.f32 0.0, %v4659
      %v4661 = vpop.f32.mrf.mxu0
      %v4662 = vadd.f32 0.0, %v4661
      %4663 = vmatmul.bf16.gmra.mxu0 %v4584
      %v4664 = vpop.f32.mrf.mxu0
      %v4665 = vadd.f32 0.0, %v4664
      %v4666 = vpop.f32.mrf.mxu0
      %v4667 = vadd.f32 0.0, %v4666
      %4668 = vmatmul.bf16.gmra.mxu0 %v4587
      %v4669 = vpop.f32.mrf.mxu0
      %v4670 = vadd.f32 0.0, %v4669
      %v4671 = vpop.f32.mrf.mxu0
      %v4672 = vadd.f32 0.0, %v4671
      %4673 = vmatmul.bf16.gmra.mxu0 %v4590
      %v4674 = vpop.f32.mrf.mxu0
      %v4675 = vadd.f32 0.0, %v4674
      %v4676 = vpop.f32.mrf.mxu0
      %v4677 = vadd.f32 0.0, %v4676
      %4678 = vmatmul.bf16.gmra.mxu0 %v4593
      %v4679 = vpop.f32.mrf.mxu0
      %v4680 = vadd.f32 0.0, %v4679
      %v4681 = vpop.f32.mrf.mxu0
      %v4682 = vadd.f32 0.0, %v4681
      %4683 = vmatmul.bf16.gmra.mxu0 %v4596
      %v4684 = vpop.f32.mrf.mxu0
      %v4685 = vadd.f32 0.0, %v4684
      %v4686 = vpop.f32.mrf.mxu0
      %v4687 = vadd.f32 0.0, %v4686
      %4688 = vmatmul.bf16.gmra.mxu0 %v4599
      %v4689 = vpop.f32.mrf.mxu0
      %v4690 = vadd.f32 0.0, %v4689
      %v4691 = vpop.f32.mrf.mxu0
      %v4692 = vadd.f32 0.0, %v4691
      %4693 = vmatmul.bf16.gmra.mxu0 %v4602
      %v4694 = vpop.f32.mrf.mxu0
      %v4695 = vadd.f32 0.0, %v4694
      %v4696 = vpop.f32.mrf.mxu0
      %v4697 = vadd.f32 0.0, %v4696
      %4698 = vmatmul.bf16.gmra.mxu0 %v4605
      %v4699 = vpop.f32.mrf.mxu0
      %v4700 = vadd.f32 0.0, %v4699
      %v4701 = vpop.f32.mrf.mxu0
      %v4702 = vadd.f32 0.0, %v4701
      %4703 = vmatmul.bf16.gmra.mxu0 %v4608
      %v4704 = vpop.f32.mrf.mxu0
      %v4705 = vadd.f32 0.0, %v4704
      %v4706 = vpop.f32.mrf.mxu0
      %v4707 = vadd.f32 0.0, %v4706
      %4708 = vmatmul.bf16.gmra.mxu0 %v4611
      %v4709 = vpop.f32.mrf.mxu0
      %v4710 = vadd.f32 0.0, %v4709
      %v4711 = vpop.f32.mrf.mxu0
      %v4712 = vadd.f32 0.0, %v4711
      %4713 = vmatmul.bf16.gmra.mxu0 %v4614
      %v4714 = vpop.f32.mrf.mxu0
      %v4715 = vadd.f32 0.0, %v4714
      %v4716 = vpop.f32.mrf.mxu0
      %v4717 = vadd.f32 0.0, %v4716
      %4718 = vmatmul.bf16.gmra.mxu0 %v4617
      %v4719 = vpop.f32.mrf.mxu0
      %v4720 = vadd.f32 0.0, %v4719
      %v4721 = vpop.f32.mrf.mxu0
      %v4722 = vadd.f32 0.0, %v4721
      %4723 = vmatmul.bf16.gmra.mxu0 %v4620
      %v4724 = vpop.f32.mrf.mxu0
      %v4725 = vadd.f32 0.0, %v4724
      %v4726 = vpop.f32.mrf.mxu0
      %v4727 = vadd.f32 0.0, %v4726
      %4728 = vmatmul.bf16.gmra.mxu0 %v4623
      %v4729 = vpop.f32.mrf.mxu0
      %v4730 = vadd.f32 0.0, %v4729
      %v4731 = vpop.f32.mrf.mxu0
      %v4732 = vadd.f32 0.0, %v4731
      %4733 = vmatmul.bf16.gmra.mxu0 %v4626
      %v4734 = vpop.f32.mrf.mxu0
      %v4735 = vadd.f32 0.0, %v4734
      %v4736 = vpop.f32.mrf.mxu0
      %v4737 = vadd.f32 0.0, %v4736
      %4738 = vmatmul.bf16.gmra.mxu0 %v4629
      %v4739 = vpop.f32.mrf.mxu0
      %v4740 = vadd.f32 0.0, %v4739
      %v4741 = vpop.f32.mrf.mxu0
      %v4742 = vadd.f32 0.0, %v4741
      %4743 = vmatmul.bf16.gmra.mxu0 %v4632
      %v4744 = vpop.f32.mrf.mxu0
      %v4745 = vadd.f32 0.0, %v4744
      %v4746 = vpop.f32.mrf.mxu0
      %v4747 = vadd.f32 0.0, %v4746
      %4748 = vmatmul.bf16.gmra.mxu0 %v4635
      %v4749 = vpop.f32.mrf.mxu0
      %v4750 = vadd.f32 0.0, %v4749
      %v4751 = vpop.f32.mrf.mxu0
      %v4752 = vadd.f32 0.0, %v4751
      %4753 = vmatmul.bf16.gmra.mxu0 %v4638
      %v4754 = vpop.f32.mrf.mxu0
      %v4755 = vadd.f32 0.0, %v4754
      %v4756 = vpop.f32.mrf.mxu0
      %4757 = vdwg.mxu0
      %v4758 = vadd.f32 %v4463, %v4650
      %v4759 = vadd.f32 %v4464, %v4652
      %v4760 = vadd.f32 %v4465, %v4655
      %v4761 = vadd.f32 %v4466, %v4657
      %v4762 = vadd.f32 %v4467, %v4660
      %v4763 = vadd.f32 %v4468, %v4662
      %v4764 = vadd.f32 %v4469, %v4665
      %v4765 = vadd.f32 %v4470, %v4667
      %v4766 = vadd.f32 %v4471, %v4670
      %v4767 = vadd.f32 %v4472, %v4672
      %v4768 = vadd.f32 %v4473, %v4675
      %v4769 = vadd.f32 %v4474, %v4677
      %v4770 = vadd.f32 %v4475, %v4680
      %v4771 = vadd.f32 %v4476, %v4682
      %v4772 = vadd.f32 %v4477, %v4685
      %v4773 = vadd.f32 %v4478, %v4687
      %v4774 = vadd.f32 %v4479, %v4690
      %v4775 = vadd.f32 %v4480, %v4692
      %v4776 = vadd.f32 %v4481, %v4695
      %v4777 = vadd.f32 %v4482, %v4697
      %v4778 = vadd.f32 %v4483, %v4700
      %v4779 = vadd.f32 %v4484, %v4702
      %v4780 = vadd.f32 %v4485, %v4705
      %v4781 = vadd.f32 %v4486, %v4707
      %v4782 = vadd.f32 %v4487, %v4710
      %v4783 = vadd.f32 %v4488, %v4712
      %v4784 = vadd.f32 %v4489, %v4715
      %v4785 = vadd.f32 %v4490, %v4717
      %v4786 = vadd.f32 %v4491, %v4720
      %v4787 = vadd.f32 %v4492, %v4722
      %v4788 = vadd.f32 %v4493, %v4725
      %v4789 = vadd.f32 %v4494, %v4727
      %v4790 = vadd.f32 %v4495, %v4730
      %v4791 = vadd.f32 %v4496, %v4732
      %v4792 = vadd.f32 %v4497, %v4735
      %v4793 = vadd.f32 %v4498, %v4737
      %v4794 = vadd.f32 %v4499, %v4740
      %v4795 = vadd.f32 %v4500, %v4742
      %v4796 = vadd.f32 %v4501, %v4745
      %v4797 = vadd.f32 %v4502, %v4747
      %v4798 = vadd.f32 %v4503, %v4750
      %v4799 = vadd.f32 %v4504, %v4752
      %v4800 = vadd.f32 %v4505, %v4755
      %s4801 = scalar_lea.vmem %s3, 176
      %v4802 = vld [vmem:[%s4801] sm:$0xf]
      %v4803 = vld [vmem:[%s4801 + $0x4] sm:$0xf]
      %v4804 = vld [vmem:[%s4801 + $0x8] sm:$0xf]
      %v4805 = vld [vmem:[%s4801 + $0xc] sm:$0xf]
      %v4807 = vshrl.u32 %v4517, 16
      %v4809 = vrot.slane %v4807, 1
      %v4810 = vshll.u32 %v4517, 16
      %v4812 = vrot.slane %v4810, 2
      %v4813 = vor.u32 %v4809, %v4812
      %v4814 = vrot.slane %v4125, 1
      %v4815 = vrot.slane %v4121, 2
      %v4816 = vor.u32 %v4814, %v4815
      %v4817 = vsel %vm1859, %v4813, %v4816
      %v4818 = vrot.slane %v4132, 1
      %v4819 = vrot.slane %v4128, 2
      %v4820 = vor.u32 %v4818, %v4819
      %v4821 = vsel %vm1859, %v4816, %v4820
      %v4822 = vrot.slane %v4139, 1
      %v4823 = vrot.slane %v4135, 2
      %v4824 = vor.u32 %v4822, %v4823
      %v4825 = vsel %vm1859, %v4820, %v4824
      %v4826 = vrot.slane %v4146, 1
      %v4827 = vrot.slane %v4142, 2
      %v4828 = vor.u32 %v4826, %v4827
      %v4829 = vsel %vm1859, %v4824, %v4828
      %v4830 = vrot.slane %v4153, 1
      %v4831 = vrot.slane %v4149, 2
      %v4832 = vor.u32 %v4830, %v4831
      %v4833 = vsel %vm1859, %v4828, %v4832
      %v4834 = vrot.slane %v4160, 1
      %v4835 = vrot.slane %v4156, 2
      %v4836 = vor.u32 %v4834, %v4835
      %v4837 = vsel %vm1859, %v4832, %v4836
      %v4838 = vrot.slane %v4167, 1
      %v4839 = vrot.slane %v4163, 2
      %v4840 = vor.u32 %v4838, %v4839
      %v4841 = vsel %vm1859, %v4836, %v4840
      %v4842 = vrot.slane %v4174, 1
      %v4843 = vrot.slane %v4170, 2
      %v4844 = vor.u32 %v4842, %v4843
      %v4845 = vsel %vm1859, %v4840, %v4844
      %v4846 = vrot.slane %v4181, 1
      %v4847 = vrot.slane %v4177, 2
      %v4848 = vor.u32 %v4846, %v4847
      %v4849 = vsel %vm1859, %v4844, %v4848
      %v4850 = vrot.slane %v4188, 1
      %v4851 = vrot.slane %v4184, 2
      %v4852 = vor.u32 %v4850, %v4851
      %v4853 = vsel %vm1859, %v4848, %v4852
      %v4854 = vrot.slane %v4195, 1
      %v4855 = vrot.slane %v4191, 2
      %v4856 = vor.u32 %v4854, %v4855
      %v4857 = vsel %vm1859, %v4852, %v4856
      %v4858 = vrot.slane %v4202, 1
      %v4859 = vrot.slane %v4198, 2
      %v4860 = vor.u32 %v4858, %v4859
      %v4861 = vsel %vm1859, %v4856, %v4860
      %v4862 = vrot.slane %v4209, 1
      %v4863 = vrot.slane %v4205, 2
      %v4864 = vor.u32 %v4862, %v4863
      %v4865 = vsel %vm1859, %v4860, %v4864
      %v4866 = vrot.slane %v4216, 1
      %v4867 = vrot.slane %v4212, 2
      %v4868 = vor.u32 %v4866, %v4867
      %v4869 = vsel %vm1859, %v4864, %v4868
      %v4870 = vrot.slane %v4223, 1
      %v4871 = vrot.slane %v4219, 2
      %v4872 = vor.u32 %v4870, %v4871
      %v4873 = vsel %vm1859, %v4868, %v4872
      %v4874 = vrot.slane %v4230, 1
      %v4875 = vrot.slane %v4226, 2
      %v4876 = vor.u32 %v4874, %v4875
      %v4877 = vsel %vm1859, %v4872, %v4876
      %v4878 = vrot.slane %v4237, 1
      %v4879 = vrot.slane %v4233, 2
      %v4880 = vor.u32 %v4878, %v4879
      %v4881 = vsel %vm1859, %v4876, %v4880
      %v4882 = vrot.slane %v4244, 1
      %v4883 = vrot.slane %v4240, 2
      %v4884 = vor.u32 %v4882, %v4883
      %v4885 = vsel %vm1859, %v4880, %v4884
      %v4886 = vrot.slane %v4251, 1
      %v4887 = vrot.slane %v4247, 2
      %v4888 = vor.u32 %v4886, %v4887
      %v4889 = vsel %vm1859, %v4884, %v4888
      %v4890 = vrot.slane %v4258, 1
      %v4891 = vrot.slane %v4254, 2
      %v4892 = vor.u32 %v4890, %v4891
      %v4893 = vsel %vm1859, %v4888, %v4892
      %v4895 = vshrl.u32 %v4518, 16
      %v4897 = vrot.slane %v4895, 1
      %v4898 = vshll.u32 %v4518, 16
      %v4900 = vrot.slane %v4898, 2
      %v4901 = vor.u32 %v4897, %v4900
      %v4902 = vsel %vm1859, %v4892, %v4901
      %v4907 = vunpack.c.l.b16 %v4802
      %v4908 = vunpack.c.l.b16 %v4803
      %v4909 = vunpack.c.l.b16 %v4804
      %v4910 = vunpack.c.l.b16 %v4805
      %v4911 = vpack.c.b16 %v4908, %v4907
      %v4912 = vpack.c.b16 %v4910, %v4909
      %v4916 = vsel %vm1199, %v4817, 0
      %v4919 = vsel %vm1199, %v4821, 0
      %v4922 = vsel %vm1199, %v4825, 0
      %v4925 = vsel %vm1199, %v4829, 0
      %v4928 = vsel %vm1199, %v4833, 0
      %v4931 = vsel %vm1199, %v4837, 0
      %v4934 = vsel %vm1199, %v4841, 0
      %v4937 = vsel %vm1199, %v4845, 0
      %v4940 = vsel %vm1199, %v4849, 0
      %v4943 = vsel %vm1199, %v4853, 0
      %v4946 = vsel %vm1199, %v4857, 0
      %v4949 = vsel %vm1199, %v4861, 0
      %v4952 = vsel %vm1199, %v4865, 0
      %v4955 = vsel %vm1199, %v4869, 0
      %v4958 = vsel %vm1199, %v4873, 0
      %v4961 = vsel %vm1199, %v4877, 0
      %v4964 = vsel %vm1199, %v4881, 0
      %v4967 = vsel %vm1199, %v4885, 0
      %v4970 = vsel %vm1199, %v4889, 0
      %v4973 = vsel %vm1199, %v4893, 0
      %v4976 = vsel %vm1199, %v4902, 0
      %v4979 = vsel %vm1199, %v4897, 0
      %4981 = vmatpush.bf16.msra.mxu0 0
      %4982 = vmatpush.bf16.msra.mxu0 0
      %4983 = vmatpush.bf16.msra.mxu0 0
      %4984 = vmatpush.bf16.msra.mxu0 0
      %4985 = vmatpush.bf16.msra.mxu0 0
      %4986 = vmatpush.bf16.msra.mxu0 0
      %4987 = vmatpush.bf16.msra.mxu0 %v4912
      %4988 = vmatpush.bf16.msra.mxu0 %v4911
      %4989 = vmatmul.bf16.gmra.mxu0 %v4916
      %v4990 = vpop.f32.mrf.mxu0
      %v4991 = vadd.f32 0.0, %v4990
      %v4992 = vpop.f32.mrf.mxu0
      %v4993 = vadd.f32 0.0, %v4992
      %4994 = vmatmul.bf16.gmra.mxu0 %v4919
      %v4995 = vpop.f32.mrf.mxu0
      %v4996 = vadd.f32 0.0, %v4995
      %v4997 = vpop.f32.mrf.mxu0
      %v4998 = vadd.f32 0.0, %v4997
      %4999 = vmatmul.bf16.gmra.mxu0 %v4922
      %v5000 = vpop.f32.mrf.mxu0
      %v5001 = vadd.f32 0.0, %v5000
      %v5002 = vpop.f32.mrf.mxu0
      %v5003 = vadd.f32 0.0, %v5002
      %5004 = vmatmul.bf16.gmra.mxu0 %v4925
      %v5005 = vpop.f32.mrf.mxu0
      %v5006 = vadd.f32 0.0, %v5005
      %v5007 = vpop.f32.mrf.mxu0
      %v5008 = vadd.f32 0.0, %v5007
      %5009 = vmatmul.bf16.gmra.mxu0 %v4928
      %v5010 = vpop.f32.mrf.mxu0
      %v5011 = vadd.f32 0.0, %v5010
      %v5012 = vpop.f32.mrf.mxu0
      %v5013 = vadd.f32 0.0, %v5012
      %5014 = vmatmul.bf16.gmra.mxu0 %v4931
      %v5015 = vpop.f32.mrf.mxu0
      %v5016 = vadd.f32 0.0, %v5015
      %v5017 = vpop.f32.mrf.mxu0
      %v5018 = vadd.f32 0.0, %v5017
      %5019 = vmatmul.bf16.gmra.mxu0 %v4934
      %v5020 = vpop.f32.mrf.mxu0
      %v5021 = vadd.f32 0.0, %v5020
      %v5022 = vpop.f32.mrf.mxu0
      %v5023 = vadd.f32 0.0, %v5022
      %5024 = vmatmul.bf16.gmra.mxu0 %v4937
      %v5025 = vpop.f32.mrf.mxu0
      %v5026 = vadd.f32 0.0, %v5025
      %v5027 = vpop.f32.mrf.mxu0
      %v5028 = vadd.f32 0.0, %v5027
      %5029 = vmatmul.bf16.gmra.mxu0 %v4940
      %v5030 = vpop.f32.mrf.mxu0
      %v5031 = vadd.f32 0.0, %v5030
      %v5032 = vpop.f32.mrf.mxu0
      %v5033 = vadd.f32 0.0, %v5032
      %5034 = vmatmul.bf16.gmra.mxu0 %v4943
      %v5035 = vpop.f32.mrf.mxu0
      %v5036 = vadd.f32 0.0, %v5035
      %v5037 = vpop.f32.mrf.mxu0
      %v5038 = vadd.f32 0.0, %v5037
      %5039 = vmatmul.bf16.gmra.mxu0 %v4946
      %v5040 = vpop.f32.mrf.mxu0
      %v5041 = vadd.f32 0.0, %v5040
      %v5042 = vpop.f32.mrf.mxu0
      %v5043 = vadd.f32 0.0, %v5042
      %5044 = vmatmul.bf16.gmra.mxu0 %v4949
      %v5045 = vpop.f32.mrf.mxu0
      %v5046 = vadd.f32 0.0, %v5045
      %v5047 = vpop.f32.mrf.mxu0
      %v5048 = vadd.f32 0.0, %v5047
      %5049 = vmatmul.bf16.gmra.mxu0 %v4952
      %v5050 = vpop.f32.mrf.mxu0
      %v5051 = vadd.f32 0.0, %v5050
      %v5052 = vpop.f32.mrf.mxu0
      %v5053 = vadd.f32 0.0, %v5052
      %5054 = vmatmul.bf16.gmra.mxu0 %v4955
      %v5055 = vpop.f32.mrf.mxu0
      %v5056 = vadd.f32 0.0, %v5055
      %v5057 = vpop.f32.mrf.mxu0
      %v5058 = vadd.f32 0.0, %v5057
      %5059 = vmatmul.bf16.gmra.mxu0 %v4958
      %v5060 = vpop.f32.mrf.mxu0
      %v5061 = vadd.f32 0.0, %v5060
      %v5062 = vpop.f32.mrf.mxu0
      %v5063 = vadd.f32 0.0, %v5062
      %5064 = vmatmul.bf16.gmra.mxu0 %v4961
      %v5065 = vpop.f32.mrf.mxu0
      %v5066 = vadd.f32 0.0, %v5065
      %v5067 = vpop.f32.mrf.mxu0
      %v5068 = vadd.f32 0.0, %v5067
      %5069 = vmatmul.bf16.gmra.mxu0 %v4964
      %v5070 = vpop.f32.mrf.mxu0
      %v5071 = vadd.f32 0.0, %v5070
      %v5072 = vpop.f32.mrf.mxu0
      %v5073 = vadd.f32 0.0, %v5072
      %5074 = vmatmul.bf16.gmra.mxu0 %v4967
      %v5075 = vpop.f32.mrf.mxu0
      %v5076 = vadd.f32 0.0, %v5075
      %v5077 = vpop.f32.mrf.mxu0
      %v5078 = vadd.f32 0.0, %v5077
      %5079 = vmatmul.bf16.gmra.mxu0 %v4970
      %v5080 = vpop.f32.mrf.mxu0
      %v5081 = vadd.f32 0.0, %v5080
      %v5082 = vpop.f32.mrf.mxu0
      %v5083 = vadd.f32 0.0, %v5082
      %5084 = vmatmul.bf16.gmra.mxu0 %v4973
      %v5085 = vpop.f32.mrf.mxu0
      %v5086 = vadd.f32 0.0, %v5085
      %v5087 = vpop.f32.mrf.mxu0
      %v5088 = vadd.f32 0.0, %v5087
      %5089 = vmatmul.bf16.gmra.mxu0 %v4976
      %v5090 = vpop.f32.mrf.mxu0
      %v5091 = vadd.f32 0.0, %v5090
      %v5092 = vpop.f32.mrf.mxu0
      %v5093 = vadd.f32 0.0, %v5092
      %5094 = vmatmul.bf16.gmra.mxu0 %v4979
      %v5095 = vpop.f32.mrf.mxu0
      %v5096 = vadd.f32 0.0, %v5095
      %v5097 = vpop.f32.mrf.mxu0
      %5098 = vdwg.mxu0
      %v5099 = vadd.f32 %v4758, %v4991
      %v5100 = vadd.f32 %v4759, %v4993
      %v5101 = vadd.f32 %v4760, %v4996
      %v5102 = vadd.f32 %v4761, %v4998
      %v5103 = vadd.f32 %v4762, %v5001
      %v5104 = vadd.f32 %v4763, %v5003
      %v5105 = vadd.f32 %v4764, %v5006
      %v5106 = vadd.f32 %v4765, %v5008
      %v5107 = vadd.f32 %v4766, %v5011
      %v5108 = vadd.f32 %v4767, %v5013
      %v5109 = vadd.f32 %v4768, %v5016
      %v5110 = vadd.f32 %v4769, %v5018
      %v5111 = vadd.f32 %v4770, %v5021
      %v5112 = vadd.f32 %v4771, %v5023
      %v5113 = vadd.f32 %v4772, %v5026
      %v5114 = vadd.f32 %v4773, %v5028
      %v5115 = vadd.f32 %v4774, %v5031
      %v5116 = vadd.f32 %v4775, %v5033
      %v5117 = vadd.f32 %v4776, %v5036
      %v5118 = vadd.f32 %v4777, %v5038
      %v5119 = vadd.f32 %v4778, %v5041
      %v5120 = vadd.f32 %v4779, %v5043
      %v5121 = vadd.f32 %v4780, %v5046
      %v5122 = vadd.f32 %v4781, %v5048
      %v5123 = vadd.f32 %v4782, %v5051
      %v5124 = vadd.f32 %v4783, %v5053
      %v5125 = vadd.f32 %v4784, %v5056
      %v5126 = vadd.f32 %v4785, %v5058
      %v5127 = vadd.f32 %v4786, %v5061
      %v5128 = vadd.f32 %v4787, %v5063
      %v5129 = vadd.f32 %v4788, %v5066
      %v5130 = vadd.f32 %v4789, %v5068
      %v5131 = vadd.f32 %v4790, %v5071
      %v5132 = vadd.f32 %v4791, %v5073
      %v5133 = vadd.f32 %v4792, %v5076
      %v5134 = vadd.f32 %v4793, %v5078
      %v5135 = vadd.f32 %v4794, %v5081
      %v5136 = vadd.f32 %v4795, %v5083
      %v5137 = vadd.f32 %v4796, %v5086
      %v5138 = vadd.f32 %v4797, %v5088
      %v5139 = vadd.f32 %v4798, %v5091
      %v5140 = vadd.f32 %v4799, %v5093
      %v5141 = vadd.f32 %v4800, %v5096
      %v5142 = vld [vmem:[#allocation2 + $0x1c] sm:$0xc]
      %v5143 = vld [vmem:[#allocation2 + $0x20] sm:$0xf]
      %v5144 = vld [vmem:[#allocation2 + $0x24] sm:$0xf]
      %v5145 = vld [vmem:[#allocation2 + $0x28] sm:$0xf]
      %v5146 = vld [vmem:[#allocation2 + $0x2c] sm:$0xf]
      %v5147 = vld [vmem:[#allocation2 + $0x30] sm:$0xf]
      %v5148 = vld [vmem:[#allocation2 + $0x34] sm:$0xf]
      %v5149 = vld [vmem:[#allocation2 + $0x38] sm:$0xf]
      %v5150 = vld [vmem:[#allocation2 + $0x3c] sm:$0xf]
      %v5151 = vld [vmem:[#allocation2 + $0x40] sm:$0xf]
      %v5152 = vld [vmem:[#allocation2 + $0x44] sm:$0xf]
      %v5153 = vld [vmem:[#allocation2 + $0x48] sm:$0xf]
      %v5154 = vld [vmem:[#allocation2 + $0x4c] sm:$0xf]
      %v5155 = vld [vmem:[#allocation2 + $0x50] sm:$0xf]
      %v5156 = vld [vmem:[#allocation2 + $0x54] sm:$0xf]
      %v5157 = vld [vmem:[#allocation2 + $0x58] sm:$0xf]
      %v5158 = vld [vmem:[#allocation2 + $0x5c] sm:$0xf]
      %v5159 = vld [vmem:[#allocation2 + $0x60] sm:$0xf]
      %v5160 = vld [vmem:[#allocation2 + $0x64] sm:$0xf]
      %v5161 = vld [vmem:[#allocation2 + $0x68] sm:$0xf]
      %v5162 = vld [vmem:[#allocation2 + $0x6c] sm:$0xf]
      %v5163 = vld [vmem:[#allocation2 + $0x70] sm:$0xf]
      %v5164 = vld [vmem:[#allocation2 + $0x74] sm:$0xf]
      %v5165 = vld [vmem:[#allocation2 + $0x78] sm:$0xf]
      %v5166 = vld [vmem:[#allocation2 + $0x7c] sm:$0xf]
      %v5167 = vld [vmem:[#allocation2 + $0x80] sm:$0xf]
      %v5168 = vld [vmem:[#allocation2 + $0x84] sm:$0xf]
      %v5169 = vld [vmem:[#allocation2 + $0x88] sm:$0xf]
      %v5170 = vld [vmem:[#allocation2 + $0x8c] sm:$0xf]
      %v5171 = vld [vmem:[#allocation2 + $0x90] sm:$0xf]
      %v5172 = vld [vmem:[#allocation2 + $0x94] sm:$0xf]
      %v5173 = vld [vmem:[#allocation2 + $0x98] sm:$0xf]
      %v5174 = vld [vmem:[#allocation2 + $0x9c] sm:$0xf]
      %v5175 = vld [vmem:[#allocation2 + $0xa0] sm:$0xf]
      %v5176 = vld [vmem:[#allocation2 + $0xa4] sm:$0xf]
      %v5177 = vld [vmem:[#allocation2 + $0xa8] sm:$0xf]
      %v5178 = vld [vmem:[#allocation2 + $0xac] sm:$0xf]
      %v5179 = vld [vmem:[#allocation2 + $0xb0] sm:$0xf]
      %v5180 = vld [vmem:[#allocation2 + $0xb4] sm:$0xf]
      %v5181 = vld [vmem:[#allocation2 + $0xb8] sm:$0xf]
      %v5182 = vld [vmem:[#allocation2 + $0xbc] sm:$0xf]
      %v5183 = vld [vmem:[#allocation2 + $0xc0] sm:$0xf]
      %v5184 = vld [vmem:[#allocation2 + $0xc4] sm:$0x7]
      %s5185 = scalar_lea.vmem %s3, 192
      %v5186 = vld [vmem:[%s5185] sm:$0xf]
      %v5187 = vld [vmem:[%s5185 + $0x4] sm:$0xf]
      %v5188 = vld [vmem:[%s5185 + $0x8] sm:$0xf]
      %v5189 = vld [vmem:[%s5185 + $0xc] sm:$0xf]
      %v5233 = vunpack.c.l.b16 %v5142
      %v5234 = vunpack.c.l.b16 %v5143
      %v5235 = vunpack.c.l.b16 %v5144
      %v5236 = vunpack.c.l.b16 %v5145
      %v5237 = vunpack.c.l.b16 %v5146
      %v5238 = vunpack.c.l.b16 %v5147
      %v5239 = vunpack.c.l.b16 %v5148
      %v5240 = vunpack.c.l.b16 %v5149
      %v5241 = vunpack.c.l.b16 %v5150
      %v5242 = vunpack.c.l.b16 %v5151
      %v5243 = vunpack.c.l.b16 %v5152
      %v5244 = vunpack.c.l.b16 %v5153
      %v5245 = vunpack.c.l.b16 %v5154
      %v5246 = vunpack.c.l.b16 %v5155
      %v5247 = vunpack.c.l.b16 %v5156
      %v5248 = vunpack.c.l.b16 %v5157
      %v5249 = vunpack.c.l.b16 %v5158
      %v5250 = vunpack.c.l.b16 %v5159
      %v5251 = vunpack.c.l.b16 %v5160
      %v5252 = vunpack.c.l.b16 %v5161
      %v5253 = vunpack.c.l.b16 %v5162
      %v5254 = vunpack.c.l.b16 %v5163
      %v5255 = vunpack.c.l.b16 %v5164
      %v5256 = vunpack.c.l.b16 %v5165
      %v5257 = vunpack.c.l.b16 %v5166
      %v5258 = vunpack.c.l.b16 %v5167
      %v5259 = vunpack.c.l.b16 %v5168
      %v5260 = vunpack.c.l.b16 %v5169
      %v5261 = vunpack.c.l.b16 %v5170
      %v5262 = vunpack.c.l.b16 %v5171
      %v5263 = vunpack.c.l.b16 %v5172
      %v5264 = vunpack.c.l.b16 %v5173
      %v5265 = vunpack.c.l.b16 %v5174
      %v5266 = vunpack.c.l.b16 %v5175
      %v5267 = vunpack.c.l.b16 %v5176
      %v5268 = vunpack.c.l.b16 %v5177
      %v5269 = vunpack.c.l.b16 %v5178
      %v5270 = vunpack.c.l.b16 %v5179
      %v5271 = vunpack.c.l.b16 %v5180
      %v5272 = vunpack.c.l.b16 %v5181
      %v5273 = vunpack.c.l.b16 %v5182
      %v5274 = vunpack.c.l.b16 %v5183
      %v5275 = vunpack.c.l.b16 %v5184
      %v5276 = vpack.c.b16 %v5234, %v5233
      %v5277 = vpack.c.b16 %v5236, %v5235
      %v5278 = vpack.c.b16 %v5238, %v5237
      %v5279 = vpack.c.b16 %v5240, %v5239
      %v5280 = vpack.c.b16 %v5242, %v5241
      %v5281 = vpack.c.b16 %v5244, %v5243
      %v5282 = vpack.c.b16 %v5246, %v5245
      %v5283 = vpack.c.b16 %v5248, %v5247
      %v5284 = vpack.c.b16 %v5250, %v5249
      %v5285 = vpack.c.b16 %v5252, %v5251
      %v5286 = vpack.c.b16 %v5254, %v5253
      %v5287 = vpack.c.b16 %v5256, %v5255
      %v5288 = vpack.c.b16 %v5258, %v5257
      %v5289 = vpack.c.b16 %v5260, %v5259
      %v5290 = vpack.c.b16 %v5262, %v5261
      %v5291 = vpack.c.b16 %v5264, %v5263
      %v5292 = vpack.c.b16 %v5266, %v5265
      %v5293 = vpack.c.b16 %v5268, %v5267
      %v5294 = vpack.c.b16 %v5270, %v5269
      %v5295 = vpack.c.b16 %v5272, %v5271
      %v5296 = vpack.c.b16 %v5274, %v5273
      %v5297 = vpack.c.b16 %v5275, %v5275
      %v5298 = vrot.slane %v5276, 2
      %v5299 = vrot.slane %v5277, 2
      %v5300 = vsel %vm2352, %v5298, %v5299
      %v5301 = vrot.slane %v5278, 2
      %v5302 = vsel %vm2352, %v5299, %v5301
      %v5303 = vrot.slane %v5279, 2
      %v5304 = vsel %vm2352, %v5301, %v5303
      %v5305 = vrot.slane %v5280, 2
      %v5306 = vsel %vm2352, %v5303, %v5305
      %v5307 = vrot.slane %v5281, 2
      %v5308 = vsel %vm2352, %v5305, %v5307
      %v5309 = vrot.slane %v5282, 2
      %v5310 = vsel %vm2352, %v5307, %v5309
      %v5311 = vrot.slane %v5283, 2
      %v5312 = vsel %vm2352, %v5309, %v5311
      %v5313 = vrot.slane %v5284, 2
      %v5314 = vsel %vm2352, %v5311, %v5313
      %v5315 = vrot.slane %v5285, 2
      %v5316 = vsel %vm2352, %v5313, %v5315
      %v5317 = vrot.slane %v5286, 2
      %v5318 = vsel %vm2352, %v5315, %v5317
      %v5319 = vrot.slane %v5287, 2
      %v5320 = vsel %vm2352, %v5317, %v5319
      %v5321 = vrot.slane %v5288, 2
      %v5322 = vsel %vm2352, %v5319, %v5321
      %v5323 = vrot.slane %v5289, 2
      %v5324 = vsel %vm2352, %v5321, %v5323
      %v5325 = vrot.slane %v5290, 2
      %v5326 = vsel %vm2352, %v5323, %v5325
      %v5327 = vrot.slane %v5291, 2
      %v5328 = vsel %vm2352, %v5325, %v5327
      %v5329 = vrot.slane %v5292, 2
      %v5330 = vsel %vm2352, %v5327, %v5329
      %v5331 = vrot.slane %v5293, 2
      %v5332 = vsel %vm2352, %v5329, %v5331
      %v5333 = vrot.slane %v5294, 2
      %v5334 = vsel %vm2352, %v5331, %v5333
      %v5335 = vrot.slane %v5295, 2
      %v5336 = vsel %vm2352, %v5333, %v5335
      %v5337 = vrot.slane %v5296, 2
      %v5338 = vsel %vm2352, %v5335, %v5337
      %v5339 = vrot.slane %v5297, 2
      %v5340 = vsel %vm2352, %v5337, %v5339
      %v5345 = vunpack.c.l.b16 %v5186
      %v5346 = vunpack.c.l.b16 %v5187
      %v5347 = vunpack.c.l.b16 %v5188
      %v5348 = vunpack.c.l.b16 %v5189
      %v5349 = vpack.c.b16 %v5346, %v5345
      %v5350 = vpack.c.b16 %v5348, %v5347
      %v5354 = vsel %vm1199, %v5300, 0
      %v5357 = vsel %vm1199, %v5302, 0
      %v5360 = vsel %vm1199, %v5304, 0
      %v5363 = vsel %vm1199, %v5306, 0
      %v5366 = vsel %vm1199, %v5308, 0
      %v5369 = vsel %vm1199, %v5310, 0
      %v5372 = vsel %vm1199, %v5312, 0
      %v5375 = vsel %vm1199, %v5314, 0
      %v5378 = vsel %vm1199, %v5316, 0
      %v5381 = vsel %vm1199, %v5318, 0
      %v5384 = vsel %vm1199, %v5320, 0
      %v5387 = vsel %vm1199, %v5322, 0
      %v5390 = vsel %vm1199, %v5324, 0
      %v5393 = vsel %vm1199, %v5326, 0
      %v5396 = vsel %vm1199, %v5328, 0
      %v5399 = vsel %vm1199, %v5330, 0
      %v5402 = vsel %vm1199, %v5332, 0
      %v5405 = vsel %vm1199, %v5334, 0
      %v5408 = vsel %vm1199, %v5336, 0
      %v5411 = vsel %vm1199, %v5338, 0
      %v5414 = vsel %vm1199, %v5340, 0
      %v5417 = vsel %vm1199, %v5339, 0
      %5419 = vmatpush.bf16.msra.mxu0 0
      %5420 = vmatpush.bf16.msra.mxu0 0
      %5421 = vmatpush.bf16.msra.mxu0 0
      %5422 = vmatpush.bf16.msra.mxu0 0
      %5423 = vmatpush.bf16.msra.mxu0 0
      %5424 = vmatpush.bf16.msra.mxu0 0
      %5425 = vmatpush.bf16.msra.mxu0 %v5350
      %5426 = vmatpush.bf16.msra.mxu0 %v5349
      %5427 = vmatmul.bf16.gmra.mxu0 %v5354
      %v5428 = vpop.f32.mrf.mxu0
      %v5429 = vadd.f32 0.0, %v5428
      %v5430 = vpop.f32.mrf.mxu0
      %v5431 = vadd.f32 0.0, %v5430
      %5432 = vmatmul.bf16.gmra.mxu0 %v5357
      %v5433 = vpop.f32.mrf.mxu0
      %v5434 = vadd.f32 0.0, %v5433
      %v5435 = vpop.f32.mrf.mxu0
      %v5436 = vadd.f32 0.0, %v5435
      %5437 = vmatmul.bf16.gmra.mxu0 %v5360
      %v5438 = vpop.f32.mrf.mxu0
      %v5439 = vadd.f32 0.0, %v5438
      %v5440 = vpop.f32.mrf.mxu0
      %v5441 = vadd.f32 0.0, %v5440
      %5442 = vmatmul.bf16.gmra.mxu0 %v5363
      %v5443 = vpop.f32.mrf.mxu0
      %v5444 = vadd.f32 0.0, %v5443
      %v5445 = vpop.f32.mrf.mxu0
      %v5446 = vadd.f32 0.0, %v5445
      %5447 = vmatmul.bf16.gmra.mxu0 %v5366
      %v5448 = vpop.f32.mrf.mxu0
      %v5449 = vadd.f32 0.0, %v5448
      %v5450 = vpop.f32.mrf.mxu0
      %v5451 = vadd.f32 0.0, %v5450
      %5452 = vmatmul.bf16.gmra.mxu0 %v5369
      %v5453 = vpop.f32.mrf.mxu0
      %v5454 = vadd.f32 0.0, %v5453
      %v5455 = vpop.f32.mrf.mxu0
      %v5456 = vadd.f32 0.0, %v5455
      %5457 = vmatmul.bf16.gmra.mxu0 %v5372
      %v5458 = vpop.f32.mrf.mxu0
      %v5459 = vadd.f32 0.0, %v5458
      %v5460 = vpop.f32.mrf.mxu0
      %v5461 = vadd.f32 0.0, %v5460
      %5462 = vmatmul.bf16.gmra.mxu0 %v5375
      %v5463 = vpop.f32.mrf.mxu0
      %v5464 = vadd.f32 0.0, %v5463
      %v5465 = vpop.f32.mrf.mxu0
      %v5466 = vadd.f32 0.0, %v5465
      %5467 = vmatmul.bf16.gmra.mxu0 %v5378
      %v5468 = vpop.f32.mrf.mxu0
      %v5469 = vadd.f32 0.0, %v5468
      %v5470 = vpop.f32.mrf.mxu0
      %v5471 = vadd.f32 0.0, %v5470
      %5472 = vmatmul.bf16.gmra.mxu0 %v5381
      %v5473 = vpop.f32.mrf.mxu0
      %v5474 = vadd.f32 0.0, %v5473
      %v5475 = vpop.f32.mrf.mxu0
      %v5476 = vadd.f32 0.0, %v5475
      %5477 = vmatmul.bf16.gmra.mxu0 %v5384
      %v5478 = vpop.f32.mrf.mxu0
      %v5479 = vadd.f32 0.0, %v5478
      %v5480 = vpop.f32.mrf.mxu0
      %v5481 = vadd.f32 0.0, %v5480
      %5482 = vmatmul.bf16.gmra.mxu0 %v5387
      %v5483 = vpop.f32.mrf.mxu0
      %v5484 = vadd.f32 0.0, %v5483
      %v5485 = vpop.f32.mrf.mxu0
      %v5486 = vadd.f32 0.0, %v5485
      %5487 = vmatmul.bf16.gmra.mxu0 %v5390
      %v5488 = vpop.f32.mrf.mxu0
      %v5489 = vadd.f32 0.0, %v5488
      %v5490 = vpop.f32.mrf.mxu0
      %v5491 = vadd.f32 0.0, %v5490
      %5492 = vmatmul.bf16.gmra.mxu0 %v5393
      %v5493 = vpop.f32.mrf.mxu0
      %v5494 = vadd.f32 0.0, %v5493
      %v5495 = vpop.f32.mrf.mxu0
      %v5496 = vadd.f32 0.0, %v5495
      %5497 = vmatmul.bf16.gmra.mxu0 %v5396
      %v5498 = vpop.f32.mrf.mxu0
      %v5499 = vadd.f32 0.0, %v5498
      %v5500 = vpop.f32.mrf.mxu0
      %v5501 = vadd.f32 0.0, %v5500
      %5502 = vmatmul.bf16.gmra.mxu0 %v5399
      %v5503 = vpop.f32.mrf.mxu0
      %v5504 = vadd.f32 0.0, %v5503
      %v5505 = vpop.f32.mrf.mxu0
      %v5506 = vadd.f32 0.0, %v5505
      %5507 = vmatmul.bf16.gmra.mxu0 %v5402
      %v5508 = vpop.f32.mrf.mxu0
      %v5509 = vadd.f32 0.0, %v5508
      %v5510 = vpop.f32.mrf.mxu0
      %v5511 = vadd.f32 0.0, %v5510
      %5512 = vmatmul.bf16.gmra.mxu0 %v5405
      %v5513 = vpop.f32.mrf.mxu0
      %v5514 = vadd.f32 0.0, %v5513
      %v5515 = vpop.f32.mrf.mxu0
      %v5516 = vadd.f32 0.0, %v5515
      %5517 = vmatmul.bf16.gmra.mxu0 %v5408
      %v5518 = vpop.f32.mrf.mxu0
      %v5519 = vadd.f32 0.0, %v5518
      %v5520 = vpop.f32.mrf.mxu0
      %v5521 = vadd.f32 0.0, %v5520
      %5522 = vmatmul.bf16.gmra.mxu0 %v5411
      %v5523 = vpop.f32.mrf.mxu0
      %v5524 = vadd.f32 0.0, %v5523
      %v5525 = vpop.f32.mrf.mxu0
      %v5526 = vadd.f32 0.0, %v5525
      %5527 = vmatmul.bf16.gmra.mxu0 %v5414
      %v5528 = vpop.f32.mrf.mxu0
      %v5529 = vadd.f32 0.0, %v5528
      %v5530 = vpop.f32.mrf.mxu0
      %v5531 = vadd.f32 0.0, %v5530
      %5532 = vmatmul.bf16.gmra.mxu0 %v5417
      %v5533 = vpop.f32.mrf.mxu0
      %v5534 = vadd.f32 0.0, %v5533
      %v5535 = vpop.f32.mrf.mxu0
      %5536 = vdwg.mxu0
      %v5537 = vadd.f32 %v5099, %v5429
      %v5538 = vadd.f32 %v5100, %v5431
      %v5539 = vadd.f32 %v5101, %v5434
      %v5540 = vadd.f32 %v5102, %v5436
      %v5541 = vadd.f32 %v5103, %v5439
      %v5542 = vadd.f32 %v5104, %v5441
      %v5543 = vadd.f32 %v5105, %v5444
      %v5544 = vadd.f32 %v5106, %v5446
      %v5545 = vadd.f32 %v5107, %v5449
      %v5546 = vadd.f32 %v5108, %v5451
      %v5547 = vadd.f32 %v5109, %v5454
      %v5548 = vadd.f32 %v5110, %v5456
      %v5549 = vadd.f32 %v5111, %v5459
      %v5550 = vadd.f32 %v5112, %v5461
      %v5551 = vadd.f32 %v5113, %v5464
      %v5552 = vadd.f32 %v5114, %v5466
      %v5553 = vadd.f32 %v5115, %v5469
      %v5554 = vadd.f32 %v5116, %v5471
      %v5555 = vadd.f32 %v5117, %v5474
      %v5556 = vadd.f32 %v5118, %v5476
      %v5557 = vadd.f32 %v5119, %v5479
      %v5558 = vadd.f32 %v5120, %v5481
      %v5559 = vadd.f32 %v5121, %v5484
      %v5560 = vadd.f32 %v5122, %v5486
      %v5561 = vadd.f32 %v5123, %v5489
      %v5562 = vadd.f32 %v5124, %v5491
      %v5563 = vadd.f32 %v5125, %v5494
      %v5564 = vadd.f32 %v5126, %v5496
      %v5565 = vadd.f32 %v5127, %v5499
      %v5566 = vadd.f32 %v5128, %v5501
      %v5567 = vadd.f32 %v5129, %v5504
      %v5568 = vadd.f32 %v5130, %v5506
      %v5569 = vadd.f32 %v5131, %v5509
      %v5570 = vadd.f32 %v5132, %v5511
      %v5571 = vadd.f32 %v5133, %v5514
      %v5572 = vadd.f32 %v5134, %v5516
      %v5573 = vadd.f32 %v5135, %v5519
      %v5574 = vadd.f32 %v5136, %v5521
      %v5575 = vadd.f32 %v5137, %v5524
      %v5576 = vadd.f32 %v5138, %v5526
      %v5577 = vadd.f32 %v5139, %v5529
      %v5578 = vadd.f32 %v5140, %v5531
      %v5579 = vadd.f32 %v5141, %v5534
      %s5580 = scalar_lea.vmem %s3, 208
      %v5581 = vld [vmem:[%s5580] sm:$0xf]
      %v5582 = vld [vmem:[%s5580 + $0x4] sm:$0xf]
      %v5583 = vld [vmem:[%s5580 + $0x8] sm:$0xf]
      %v5584 = vld [vmem:[%s5580 + $0xc] sm:$0xf]
      %v5586 = vshrl.u32 %v5276, 16
      %v5588 = vrot.slane %v5586, 2
      %v5589 = vshll.u32 %v5276, 16
      %v5591 = vrot.slane %v5589, 3
      %v5592 = vor.u32 %v5588, %v5591
      %v5594 = vshrl.u32 %v5277, 16
      %v5596 = vrot.slane %v5594, 2
      %v5597 = vshll.u32 %v5277, 16
      %v5599 = vrot.slane %v5597, 3
      %v5600 = vor.u32 %v5596, %v5599
      %v5601 = vsel %vm2640, %v5592, %v5600
      %v5603 = vshrl.u32 %v5278, 16
      %v5605 = vrot.slane %v5603, 2
      %v5606 = vshll.u32 %v5278, 16
      %v5608 = vrot.slane %v5606, 3
      %v5609 = vor.u32 %v5605, %v5608
      %v5610 = vsel %vm2640, %v5600, %v5609
      %v5612 = vshrl.u32 %v5279, 16
      %v5614 = vrot.slane %v5612, 2
      %v5615 = vshll.u32 %v5279, 16
      %v5617 = vrot.slane %v5615, 3
      %v5618 = vor.u32 %v5614, %v5617
      %v5619 = vsel %vm2640, %v5609, %v5618
      %v5621 = vshrl.u32 %v5280, 16
      %v5623 = vrot.slane %v5621, 2
      %v5624 = vshll.u32 %v5280, 16
      %v5626 = vrot.slane %v5624, 3
      %v5627 = vor.u32 %v5623, %v5626
      %v5628 = vsel %vm2640, %v5618, %v5627
      %v5630 = vshrl.u32 %v5281, 16
      %v5632 = vrot.slane %v5630, 2
      %v5633 = vshll.u32 %v5281, 16
      %v5635 = vrot.slane %v5633, 3
      %v5636 = vor.u32 %v5632, %v5635
      %v5637 = vsel %vm2640, %v5627, %v5636
      %v5639 = vshrl.u32 %v5282, 16
      %v5641 = vrot.slane %v5639, 2
      %v5642 = vshll.u32 %v5282, 16
      %v5644 = vrot.slane %v5642, 3
      %v5645 = vor.u32 %v5641, %v5644
      %v5646 = vsel %vm2640, %v5636, %v5645
      %v5648 = vshrl.u32 %v5283, 16
      %v5650 = vrot.slane %v5648, 2
      %v5651 = vshll.u32 %v5283, 16
      %v5653 = vrot.slane %v5651, 3
      %v5654 = vor.u32 %v5650, %v5653
      %v5655 = vsel %vm2640, %v5645, %v5654
      %v5657 = vshrl.u32 %v5284, 16
      %v5659 = vrot.slane %v5657, 2
      %v5660 = vshll.u32 %v5284, 16
      %v5662 = vrot.slane %v5660, 3
      %v5663 = vor.u32 %v5659, %v5662
      %v5664 = vsel %vm2640, %v5654, %v5663
      %v5666 = vshrl.u32 %v5285, 16
      %v5668 = vrot.slane %v5666, 2
      %v5669 = vshll.u32 %v5285, 16
      %v5671 = vrot.slane %v5669, 3
      %v5672 = vor.u32 %v5668, %v5671
      %v5673 = vsel %vm2640, %v5663, %v5672
      %v5675 = vshrl.u32 %v5286, 16
      %v5677 = vrot.slane %v5675, 2
      %v5678 = vshll.u32 %v5286, 16
      %v5680 = vrot.slane %v5678, 3
      %v5681 = vor.u32 %v5677, %v5680
      %v5682 = vsel %vm2640, %v5672, %v5681
      %v5684 = vshrl.u32 %v5287, 16
      %v5686 = vrot.slane %v5684, 2
      %v5687 = vshll.u32 %v5287, 16
      %v5689 = vrot.slane %v5687, 3
      %v5690 = vor.u32 %v5686, %v5689
      %v5691 = vsel %vm2640, %v5681, %v5690
      %v5693 = vshrl.u32 %v5288, 16
      %v5695 = vrot.slane %v5693, 2
      %v5696 = vshll.u32 %v5288, 16
      %v5698 = vrot.slane %v5696, 3
      %v5699 = vor.u32 %v5695, %v5698
      %v5700 = vsel %vm2640, %v5690, %v5699
      %v5702 = vshrl.u32 %v5289, 16
      %v5704 = vrot.slane %v5702, 2
      %v5705 = vshll.u32 %v5289, 16
      %v5707 = vrot.slane %v5705, 3
      %v5708 = vor.u32 %v5704, %v5707
      %v5709 = vsel %vm2640, %v5699, %v5708
      %v5711 = vshrl.u32 %v5290, 16
      %v5713 = vrot.slane %v5711, 2
      %v5714 = vshll.u32 %v5290, 16
      %v5716 = vrot.slane %v5714, 3
      %v5717 = vor.u32 %v5713, %v5716
      %v5718 = vsel %vm2640, %v5708, %v5717
      %v5720 = vshrl.u32 %v5291, 16
      %v5722 = vrot.slane %v5720, 2
      %v5723 = vshll.u32 %v5291, 16
      %v5725 = vrot.slane %v5723, 3
      %v5726 = vor.u32 %v5722, %v5725
      %v5727 = vsel %vm2640, %v5717, %v5726
      %v5729 = vshrl.u32 %v5292, 16
      %v5731 = vrot.slane %v5729, 2
      %v5732 = vshll.u32 %v5292, 16
      %v5734 = vrot.slane %v5732, 3
      %v5735 = vor.u32 %v5731, %v5734
      %v5736 = vsel %vm2640, %v5726, %v5735
      %v5738 = vshrl.u32 %v5293, 16
      %v5740 = vrot.slane %v5738, 2
      %v5741 = vshll.u32 %v5293, 16
      %v5743 = vrot.slane %v5741, 3
      %v5744 = vor.u32 %v5740, %v5743
      %v5745 = vsel %vm2640, %v5735, %v5744
      %v5747 = vshrl.u32 %v5294, 16
      %v5749 = vrot.slane %v5747, 2
      %v5750 = vshll.u32 %v5294, 16
      %v5752 = vrot.slane %v5750, 3
      %v5753 = vor.u32 %v5749, %v5752
      %v5754 = vsel %vm2640, %v5744, %v5753
      %v5756 = vshrl.u32 %v5295, 16
      %v5758 = vrot.slane %v5756, 2
      %v5759 = vshll.u32 %v5295, 16
      %v5761 = vrot.slane %v5759, 3
      %v5762 = vor.u32 %v5758, %v5761
      %v5763 = vsel %vm2640, %v5753, %v5762
      %v5765 = vshrl.u32 %v5296, 16
      %v5767 = vrot.slane %v5765, 2
      %v5768 = vshll.u32 %v5296, 16
      %v5770 = vrot.slane %v5768, 3
      %v5771 = vor.u32 %v5767, %v5770
      %v5772 = vsel %vm2640, %v5762, %v5771
      %v5774 = vshrl.u32 %v5297, 16
      %v5776 = vrot.slane %v5774, 2
      %v5777 = vshll.u32 %v5297, 16
      %v5779 = vrot.slane %v5777, 3
      %v5780 = vor.u32 %v5776, %v5779
      %v5781 = vsel %vm2640, %v5771, %v5780
      %v5786 = vunpack.c.l.b16 %v5581
      %v5787 = vunpack.c.l.b16 %v5582
      %v5788 = vunpack.c.l.b16 %v5583
      %v5789 = vunpack.c.l.b16 %v5584
      %v5790 = vpack.c.b16 %v5787, %v5786
      %v5791 = vpack.c.b16 %v5789, %v5788
      %v5795 = vsel %vm1199, %v5601, 0
      %v5798 = vsel %vm1199, %v5610, 0
      %v5801 = vsel %vm1199, %v5619, 0
      %v5804 = vsel %vm1199, %v5628, 0
      %v5807 = vsel %vm1199, %v5637, 0
      %v5810 = vsel %vm1199, %v5646, 0
      %v5813 = vsel %vm1199, %v5655, 0
      %v5816 = vsel %vm1199, %v5664, 0
      %v5819 = vsel %vm1199, %v5673, 0
      %v5822 = vsel %vm1199, %v5682, 0
      %v5825 = vsel %vm1199, %v5691, 0
      %v5828 = vsel %vm1199, %v5700, 0
      %v5831 = vsel %vm1199, %v5709, 0
      %v5834 = vsel %vm1199, %v5718, 0
      %v5837 = vsel %vm1199, %v5727, 0
      %v5840 = vsel %vm1199, %v5736, 0
      %v5843 = vsel %vm1199, %v5745, 0
      %v5846 = vsel %vm1199, %v5754, 0
      %v5849 = vsel %vm1199, %v5763, 0
      %v5852 = vsel %vm1199, %v5772, 0
      %v5855 = vsel %vm1199, %v5781, 0
      %v5858 = vsel %vm1199, %v5776, 0
      %5860 = vmatpush.bf16.msra.mxu0 0
      %5861 = vmatpush.bf16.msra.mxu0 0
      %5862 = vmatpush.bf16.msra.mxu0 0
      %5863 = vmatpush.bf16.msra.mxu0 0
      %5864 = vmatpush.bf16.msra.mxu0 0
      %5865 = vmatpush.bf16.msra.mxu0 0
      %5866 = vmatpush.bf16.msra.mxu0 %v5791
      %5867 = vmatpush.bf16.msra.mxu0 %v5790
      %5868 = vmatmul.bf16.gmra.mxu0 %v5795
      %v5869 = vpop.f32.mrf.mxu0
      %v5870 = vadd.f32 0.0, %v5869
      %v5871 = vpop.f32.mrf.mxu0
      %v5872 = vadd.f32 0.0, %v5871
      %5873 = vmatmul.bf16.gmra.mxu0 %v5798
      %v5874 = vpop.f32.mrf.mxu0
      %v5875 = vadd.f32 0.0, %v5874
      %v5876 = vpop.f32.mrf.mxu0
      %v5877 = vadd.f32 0.0, %v5876
      %5878 = vmatmul.bf16.gmra.mxu0 %v5801
      %v5879 = vpop.f32.mrf.mxu0
      %v5880 = vadd.f32 0.0, %v5879
      %v5881 = vpop.f32.mrf.mxu0
      %v5882 = vadd.f32 0.0, %v5881
      %5883 = vmatmul.bf16.gmra.mxu0 %v5804
      %v5884 = vpop.f32.mrf.mxu0
      %v5885 = vadd.f32 0.0, %v5884
      %v5886 = vpop.f32.mrf.mxu0
      %v5887 = vadd.f32 0.0, %v5886
      %5888 = vmatmul.bf16.gmra.mxu0 %v5807
      %v5889 = vpop.f32.mrf.mxu0
      %v5890 = vadd.f32 0.0, %v5889
      %v5891 = vpop.f32.mrf.mxu0
      %v5892 = vadd.f32 0.0, %v5891
      %5893 = vmatmul.bf16.gmra.mxu0 %v5810
      %v5894 = vpop.f32.mrf.mxu0
      %v5895 = vadd.f32 0.0, %v5894
      %v5896 = vpop.f32.mrf.mxu0
      %v5897 = vadd.f32 0.0, %v5896
      %5898 = vmatmul.bf16.gmra.mxu0 %v5813
      %v5899 = vpop.f32.mrf.mxu0
      %v5900 = vadd.f32 0.0, %v5899
      %v5901 = vpop.f32.mrf.mxu0
      %v5902 = vadd.f32 0.0, %v5901
      %5903 = vmatmul.bf16.gmra.mxu0 %v5816
      %v5904 = vpop.f32.mrf.mxu0
      %v5905 = vadd.f32 0.0, %v5904
      %v5906 = vpop.f32.mrf.mxu0
      %v5907 = vadd.f32 0.0, %v5906
      %5908 = vmatmul.bf16.gmra.mxu0 %v5819
      %v5909 = vpop.f32.mrf.mxu0
      %v5910 = vadd.f32 0.0, %v5909
      %v5911 = vpop.f32.mrf.mxu0
      %v5912 = vadd.f32 0.0, %v5911
      %5913 = vmatmul.bf16.gmra.mxu0 %v5822
      %v5914 = vpop.f32.mrf.mxu0
      %v5915 = vadd.f32 0.0, %v5914
      %v5916 = vpop.f32.mrf.mxu0
      %v5917 = vadd.f32 0.0, %v5916
      %5918 = vmatmul.bf16.gmra.mxu0 %v5825
      %v5919 = vpop.f32.mrf.mxu0
      %v5920 = vadd.f32 0.0, %v5919
      %v5921 = vpop.f32.mrf.mxu0
      %v5922 = vadd.f32 0.0, %v5921
      %5923 = vmatmul.bf16.gmra.mxu0 %v5828
      %v5924 = vpop.f32.mrf.mxu0
      %v5925 = vadd.f32 0.0, %v5924
      %v5926 = vpop.f32.mrf.mxu0
      %v5927 = vadd.f32 0.0, %v5926
      %5928 = vmatmul.bf16.gmra.mxu0 %v5831
      %v5929 = vpop.f32.mrf.mxu0
      %v5930 = vadd.f32 0.0, %v5929
      %v5931 = vpop.f32.mrf.mxu0
      %v5932 = vadd.f32 0.0, %v5931
      %5933 = vmatmul.bf16.gmra.mxu0 %v5834
      %v5934 = vpop.f32.mrf.mxu0
      %v5935 = vadd.f32 0.0, %v5934
      %v5936 = vpop.f32.mrf.mxu0
      %v5937 = vadd.f32 0.0, %v5936
      %5938 = vmatmul.bf16.gmra.mxu0 %v5837
      %v5939 = vpop.f32.mrf.mxu0
      %v5940 = vadd.f32 0.0, %v5939
      %v5941 = vpop.f32.mrf.mxu0
      %v5942 = vadd.f32 0.0, %v5941
      %5943 = vmatmul.bf16.gmra.mxu0 %v5840
      %v5944 = vpop.f32.mrf.mxu0
      %v5945 = vadd.f32 0.0, %v5944
      %v5946 = vpop.f32.mrf.mxu0
      %v5947 = vadd.f32 0.0, %v5946
      %5948 = vmatmul.bf16.gmra.mxu0 %v5843
      %v5949 = vpop.f32.mrf.mxu0
      %v5950 = vadd.f32 0.0, %v5949
      %v5951 = vpop.f32.mrf.mxu0
      %v5952 = vadd.f32 0.0, %v5951
      %5953 = vmatmul.bf16.gmra.mxu0 %v5846
      %v5954 = vpop.f32.mrf.mxu0
      %v5955 = vadd.f32 0.0, %v5954
      %v5956 = vpop.f32.mrf.mxu0
      %v5957 = vadd.f32 0.0, %v5956
      %5958 = vmatmul.bf16.gmra.mxu0 %v5849
      %v5959 = vpop.f32.mrf.mxu0
      %v5960 = vadd.f32 0.0, %v5959
      %v5961 = vpop.f32.mrf.mxu0
      %v5962 = vadd.f32 0.0, %v5961
      %5963 = vmatmul.bf16.gmra.mxu0 %v5852
      %v5964 = vpop.f32.mrf.mxu0
      %v5965 = vadd.f32 0.0, %v5964
      %v5966 = vpop.f32.mrf.mxu0
      %v5967 = vadd.f32 0.0, %v5966
      %5968 = vmatmul.bf16.gmra.mxu0 %v5855
      %v5969 = vpop.f32.mrf.mxu0
      %v5970 = vadd.f32 0.0, %v5969
      %v5971 = vpop.f32.mrf.mxu0
      %v5972 = vadd.f32 0.0, %v5971
      %5973 = vmatmul.bf16.gmra.mxu0 %v5858
      %v5974 = vpop.f32.mrf.mxu0
      %v5975 = vadd.f32 0.0, %v5974
      %v5976 = vpop.f32.mrf.mxu0
      %5977 = vdwg.mxu0
      %v5978 = vadd.f32 %v5537, %v5870
      %v5979 = vadd.f32 %v5538, %v5872
      %v5980 = vadd.f32 %v5539, %v5875
      %v5981 = vadd.f32 %v5540, %v5877
      %v5982 = vadd.f32 %v5541, %v5880
      %v5983 = vadd.f32 %v5542, %v5882
      %v5984 = vadd.f32 %v5543, %v5885
      %v5985 = vadd.f32 %v5544, %v5887
      %v5986 = vadd.f32 %v5545, %v5890
      %v5987 = vadd.f32 %v5546, %v5892
      %v5988 = vadd.f32 %v5547, %v5895
      %v5989 = vadd.f32 %v5548, %v5897
      %v5990 = vadd.f32 %v5549, %v5900
      %v5991 = vadd.f32 %v5550, %v5902
      %v5992 = vadd.f32 %v5551, %v5905
      %v5993 = vadd.f32 %v5552, %v5907
      %v5994 = vadd.f32 %v5553, %v5910
      %v5995 = vadd.f32 %v5554, %v5912
      %v5996 = vadd.f32 %v5555, %v5915
      %v5997 = vadd.f32 %v5556, %v5917
      %v5998 = vadd.f32 %v5557, %v5920
      %v5999 = vadd.f32 %v5558, %v5922
      %v6000 = vadd.f32 %v5559, %v5925
      %v6001 = vadd.f32 %v5560, %v5927
      %v6002 = vadd.f32 %v5561, %v5930
      %v6003 = vadd.f32 %v5562, %v5932
      %v6004 = vadd.f32 %v5563, %v5935
      %v6005 = vadd.f32 %v5564, %v5937
      %v6006 = vadd.f32 %v5565, %v5940
      %v6007 = vadd.f32 %v5566, %v5942
      %v6008 = vadd.f32 %v5567, %v5945
      %v6009 = vadd.f32 %v5568, %v5947
      %v6010 = vadd.f32 %v5569, %v5950
      %v6011 = vadd.f32 %v5570, %v5952
      %v6012 = vadd.f32 %v5571, %v5955
      %v6013 = vadd.f32 %v5572, %v5957
      %v6014 = vadd.f32 %v5573, %v5960
      %v6015 = vadd.f32 %v5574, %v5962
      %v6016 = vadd.f32 %v5575, %v5965
      %v6017 = vadd.f32 %v5576, %v5967
      %v6018 = vadd.f32 %v5577, %v5970
      %v6019 = vadd.f32 %v5578, %v5972
      %v6020 = vadd.f32 %v5579, %v5975
      %v6021 = vld [vmem:[#allocation2 + $0x1c] sm:$0x8]
      %v6022 = vld [vmem:[#allocation2 + $0xc4] sm:$0xf]
      %s6023 = scalar_lea.vmem %s3, 224
      %v6024 = vld [vmem:[%s6023] sm:$0xf]
      %v6025 = vld [vmem:[%s6023 + $0x4] sm:$0xf]
      %v6026 = vld [vmem:[%s6023 + $0x8] sm:$0xf]
      %v6027 = vld [vmem:[%s6023 + $0xc] sm:$0xf]
      %v6030 = vunpack.c.l.b16 %v6021
      %v6031 = vunpack.c.l.b16 %v6022
      %v6032 = vpack.c.b16 %v5234, %v6030
      %v6033 = vpack.c.b16 %v6031, %v6031
      %v6034 = vrot.slane %v6032, 3
      %v6035 = vrot.slane %v5277, 3
      %v6036 = vsel %vm3090, %v6034, %v6035
      %v6037 = vrot.slane %v5278, 3
      %v6038 = vsel %vm3090, %v6035, %v6037
      %v6039 = vrot.slane %v5279, 3
      %v6040 = vsel %vm3090, %v6037, %v6039
      %v6041 = vrot.slane %v5280, 3
      %v6042 = vsel %vm3090, %v6039, %v6041
      %v6043 = vrot.slane %v5281, 3
      %v6044 = vsel %vm3090, %v6041, %v6043
      %v6045 = vrot.slane %v5282, 3
      %v6046 = vsel %vm3090, %v6043, %v6045
      %v6047 = vrot.slane %v5283, 3
      %v6048 = vsel %vm3090, %v6045, %v6047
      %v6049 = vrot.slane %v5284, 3
      %v6050 = vsel %vm3090, %v6047, %v6049
      %v6051 = vrot.slane %v5285, 3
      %v6052 = vsel %vm3090, %v6049, %v6051
      %v6053 = vrot.slane %v5286, 3
      %v6054 = vsel %vm3090, %v6051, %v6053
      %v6055 = vrot.slane %v5287, 3
      %v6056 = vsel %vm3090, %v6053, %v6055
      %v6057 = vrot.slane %v5288, 3
      %v6058 = vsel %vm3090, %v6055, %v6057
      %v6059 = vrot.slane %v5289, 3
      %v6060 = vsel %vm3090, %v6057, %v6059
      %v6061 = vrot.slane %v5290, 3
      %v6062 = vsel %vm3090, %v6059, %v6061
      %v6063 = vrot.slane %v5291, 3
      %v6064 = vsel %vm3090, %v6061, %v6063
      %v6065 = vrot.slane %v5292, 3
      %v6066 = vsel %vm3090, %v6063, %v6065
      %v6067 = vrot.slane %v5293, 3
      %v6068 = vsel %vm3090, %v6065, %v6067
      %v6069 = vrot.slane %v5294, 3
      %v6070 = vsel %vm3090, %v6067, %v6069
      %v6071 = vrot.slane %v5295, 3
      %v6072 = vsel %vm3090, %v6069, %v6071
      %v6073 = vrot.slane %v5296, 3
      %v6074 = vsel %vm3090, %v6071, %v6073
      %v6075 = vrot.slane %v6033, 3
      %v6076 = vsel %vm3090, %v6073, %v6075
      %v6081 = vunpack.c.l.b16 %v6024
      %v6082 = vunpack.c.l.b16 %v6025
      %v6083 = vunpack.c.l.b16 %v6026
      %v6084 = vunpack.c.l.b16 %v6027
      %v6085 = vpack.c.b16 %v6082, %v6081
      %v6086 = vpack.c.b16 %v6084, %v6083
      %v6090 = vsel %vm1199, %v6036, 0
      %v6093 = vsel %vm1199, %v6038, 0
      %v6096 = vsel %vm1199, %v6040, 0
      %v6099 = vsel %vm1199, %v6042, 0
      %v6102 = vsel %vm1199, %v6044, 0
      %v6105 = vsel %vm1199, %v6046, 0
      %v6108 = vsel %vm1199, %v6048, 0
      %v6111 = vsel %vm1199, %v6050, 0
      %v6114 = vsel %vm1199, %v6052, 0
      %v6117 = vsel %vm1199, %v6054, 0
      %v6120 = vsel %vm1199, %v6056, 0
      %v6123 = vsel %vm1199, %v6058, 0
      %v6126 = vsel %vm1199, %v6060, 0
      %v6129 = vsel %vm1199, %v6062, 0
      %v6132 = vsel %vm1199, %v6064, 0
      %v6135 = vsel %vm1199, %v6066, 0
      %v6138 = vsel %vm1199, %v6068, 0
      %v6141 = vsel %vm1199, %v6070, 0
      %v6144 = vsel %vm1199, %v6072, 0
      %v6147 = vsel %vm1199, %v6074, 0
      %v6150 = vsel %vm1199, %v6076, 0
      %v6153 = vsel %vm1199, %v6075, 0
      %6155 = vmatpush.bf16.msra.mxu0 0
      %6156 = vmatpush.bf16.msra.mxu0 0
      %6157 = vmatpush.bf16.msra.mxu0 0
      %6158 = vmatpush.bf16.msra.mxu0 0
      %6159 = vmatpush.bf16.msra.mxu0 0
      %6160 = vmatpush.bf16.msra.mxu0 0
      %6161 = vmatpush.bf16.msra.mxu0 %v6086
      %6162 = vmatpush.bf16.msra.mxu0 %v6085
      %6163 = vmatmul.bf16.gmra.mxu0 %v6090
      %v6164 = vpop.f32.mrf.mxu0
      %v6165 = vadd.f32 0.0, %v6164
      %v6166 = vpop.f32.mrf.mxu0
      %v6167 = vadd.f32 0.0, %v6166
      %6168 = vmatmul.bf16.gmra.mxu0 %v6093
      %v6169 = vpop.f32.mrf.mxu0
      %v6170 = vadd.f32 0.0, %v6169
      %v6171 = vpop.f32.mrf.mxu0
      %v6172 = vadd.f32 0.0, %v6171
      %6173 = vmatmul.bf16.gmra.mxu0 %v6096
      %v6174 = vpop.f32.mrf.mxu0
      %v6175 = vadd.f32 0.0, %v6174
      %v6176 = vpop.f32.mrf.mxu0
      %v6177 = vadd.f32 0.0, %v6176
      %6178 = vmatmul.bf16.gmra.mxu0 %v6099
      %v6179 = vpop.f32.mrf.mxu0
      %v6180 = vadd.f32 0.0, %v6179
      %v6181 = vpop.f32.mrf.mxu0
      %v6182 = vadd.f32 0.0, %v6181
      %6183 = vmatmul.bf16.gmra.mxu0 %v6102
      %v6184 = vpop.f32.mrf.mxu0
      %v6185 = vadd.f32 0.0, %v6184
      %v6186 = vpop.f32.mrf.mxu0
      %v6187 = vadd.f32 0.0, %v6186
      %6188 = vmatmul.bf16.gmra.mxu0 %v6105
      %v6189 = vpop.f32.mrf.mxu0
      %v6190 = vadd.f32 0.0, %v6189
      %v6191 = vpop.f32.mrf.mxu0
      %v6192 = vadd.f32 0.0, %v6191
      %6193 = vmatmul.bf16.gmra.mxu0 %v6108
      %v6194 = vpop.f32.mrf.mxu0
      %v6195 = vadd.f32 0.0, %v6194
      %v6196 = vpop.f32.mrf.mxu0
      %v6197 = vadd.f32 0.0, %v6196
      %6198 = vmatmul.bf16.gmra.mxu0 %v6111
      %v6199 = vpop.f32.mrf.mxu0
      %v6200 = vadd.f32 0.0, %v6199
      %v6201 = vpop.f32.mrf.mxu0
      %v6202 = vadd.f32 0.0, %v6201
      %6203 = vmatmul.bf16.gmra.mxu0 %v6114
      %v6204 = vpop.f32.mrf.mxu0
      %v6205 = vadd.f32 0.0, %v6204
      %v6206 = vpop.f32.mrf.mxu0
      %v6207 = vadd.f32 0.0, %v6206
      %6208 = vmatmul.bf16.gmra.mxu0 %v6117
      %v6209 = vpop.f32.mrf.mxu0
      %v6210 = vadd.f32 0.0, %v6209
      %v6211 = vpop.f32.mrf.mxu0
      %v6212 = vadd.f32 0.0, %v6211
      %6213 = vmatmul.bf16.gmra.mxu0 %v6120
      %v6214 = vpop.f32.mrf.mxu0
      %v6215 = vadd.f32 0.0, %v6214
      %v6216 = vpop.f32.mrf.mxu0
      %v6217 = vadd.f32 0.0, %v6216
      %6218 = vmatmul.bf16.gmra.mxu0 %v6123
      %v6219 = vpop.f32.mrf.mxu0
      %v6220 = vadd.f32 0.0, %v6219
      %v6221 = vpop.f32.mrf.mxu0
      %v6222 = vadd.f32 0.0, %v6221
      %6223 = vmatmul.bf16.gmra.mxu0 %v6126
      %v6224 = vpop.f32.mrf.mxu0
      %v6225 = vadd.f32 0.0, %v6224
      %v6226 = vpop.f32.mrf.mxu0
      %v6227 = vadd.f32 0.0, %v6226
      %6228 = vmatmul.bf16.gmra.mxu0 %v6129
      %v6229 = vpop.f32.mrf.mxu0
      %v6230 = vadd.f32 0.0, %v6229
      %v6231 = vpop.f32.mrf.mxu0
      %v6232 = vadd.f32 0.0, %v6231
      %6233 = vmatmul.bf16.gmra.mxu0 %v6132
      %v6234 = vpop.f32.mrf.mxu0
      %v6235 = vadd.f32 0.0, %v6234
      %v6236 = vpop.f32.mrf.mxu0
      %v6237 = vadd.f32 0.0, %v6236
      %6238 = vmatmul.bf16.gmra.mxu0 %v6135
      %v6239 = vpop.f32.mrf.mxu0
      %v6240 = vadd.f32 0.0, %v6239
      %v6241 = vpop.f32.mrf.mxu0
      %v6242 = vadd.f32 0.0, %v6241
      %6243 = vmatmul.bf16.gmra.mxu0 %v6138
      %v6244 = vpop.f32.mrf.mxu0
      %v6245 = vadd.f32 0.0, %v6244
      %v6246 = vpop.f32.mrf.mxu0
      %v6247 = vadd.f32 0.0, %v6246
      %6248 = vmatmul.bf16.gmra.mxu0 %v6141
      %v6249 = vpop.f32.mrf.mxu0
      %v6250 = vadd.f32 0.0, %v6249
      %v6251 = vpop.f32.mrf.mxu0
      %v6252 = vadd.f32 0.0, %v6251
      %6253 = vmatmul.bf16.gmra.mxu0 %v6144
      %v6254 = vpop.f32.mrf.mxu0
      %v6255 = vadd.f32 0.0, %v6254
      %v6256 = vpop.f32.mrf.mxu0
      %v6257 = vadd.f32 0.0, %v6256
      %6258 = vmatmul.bf16.gmra.mxu0 %v6147
      %v6259 = vpop.f32.mrf.mxu0
      %v6260 = vadd.f32 0.0, %v6259
      %v6261 = vpop.f32.mrf.mxu0
      %v6262 = vadd.f32 0.0, %v6261
      %6263 = vmatmul.bf16.gmra.mxu0 %v6150
      %v6264 = vpop.f32.mrf.mxu0
      %v6265 = vadd.f32 0.0, %v6264
      %v6266 = vpop.f32.mrf.mxu0
      %v6267 = vadd.f32 0.0, %v6266
      %6268 = vmatmul.bf16.gmra.mxu0 %v6153
      %v6269 = vpop.f32.mrf.mxu0
      %v6270 = vadd.f32 0.0, %v6269
      %v6271 = vpop.f32.mrf.mxu0
      %6272 = vdwg.mxu0
      %v6273 = vadd.f32 %v5978, %v6165
      %v6274 = vadd.f32 %v5979, %v6167
      %v6275 = vadd.f32 %v5980, %v6170
      %v6276 = vadd.f32 %v5981, %v6172
      %v6277 = vadd.f32 %v5982, %v6175
      %v6278 = vadd.f32 %v5983, %v6177
      %v6279 = vadd.f32 %v5984, %v6180
      %v6280 = vadd.f32 %v5985, %v6182
      %v6281 = vadd.f32 %v5986, %v6185
      %v6282 = vadd.f32 %v5987, %v6187
      %v6283 = vadd.f32 %v5988, %v6190
      %v6284 = vadd.f32 %v5989, %v6192
      %v6285 = vadd.f32 %v5990, %v6195
      %v6286 = vadd.f32 %v5991, %v6197
      %v6287 = vadd.f32 %v5992, %v6200
      %v6288 = vadd.f32 %v5993, %v6202
      %v6289 = vadd.f32 %v5994, %v6205
      %v6290 = vadd.f32 %v5995, %v6207
      %v6291 = vadd.f32 %v5996, %v6210
      %v6292 = vadd.f32 %v5997, %v6212
      %v6293 = vadd.f32 %v5998, %v6215
      %v6294 = vadd.f32 %v5999, %v6217
      %v6295 = vadd.f32 %v6000, %v6220
      %v6296 = vadd.f32 %v6001, %v6222
      %v6297 = vadd.f32 %v6002, %v6225
      %v6298 = vadd.f32 %v6003, %v6227
      %v6299 = vadd.f32 %v6004, %v6230
      %v6300 = vadd.f32 %v6005, %v6232
      %v6301 = vadd.f32 %v6006, %v6235
      %v6302 = vadd.f32 %v6007, %v6237
      %v6303 = vadd.f32 %v6008, %v6240
      %v6304 = vadd.f32 %v6009, %v6242
      %v6305 = vadd.f32 %v6010, %v6245
      %v6306 = vadd.f32 %v6011, %v6247
      %v6307 = vadd.f32 %v6012, %v6250
      %v6308 = vadd.f32 %v6013, %v6252
      %v6309 = vadd.f32 %v6014, %v6255
      %v6310 = vadd.f32 %v6015, %v6257
      %v6311 = vadd.f32 %v6016, %v6260
      %v6312 = vadd.f32 %v6017, %v6262
      %v6313 = vadd.f32 %v6018, %v6265
      %v6314 = vadd.f32 %v6019, %v6267
      %v6315 = vadd.f32 %v6020, %v6270
      %s6316 = scalar_lea.vmem %s3, 240
      %v6317 = vld [vmem:[%s6316] sm:$0xf]
      %v6318 = vld [vmem:[%s6316 + $0x4] sm:$0xf]
      %v6319 = vld [vmem:[%s6316 + $0x8] sm:$0xf]
      %v6320 = vld [vmem:[%s6316 + $0xc] sm:$0xf]
      %v6322 = vshrl.u32 %v6032, 16
      %v6324 = vrot.slane %v6322, 3
      %v6325 = vshll.u32 %v6032, 16
      %v6327 = vrot.slane %v6325, 4
      %v6328 = vor.u32 %v6324, %v6327
      %v6329 = vrot.slane %v5594, 3
      %v6330 = vrot.slane %v5597, 4
      %v6331 = vor.u32 %v6329, %v6330
      %v6332 = vsel %vm3378, %v6328, %v6331
      %v6333 = vrot.slane %v5603, 3
      %v6334 = vrot.slane %v5606, 4
      %v6335 = vor.u32 %v6333, %v6334
      %v6336 = vsel %vm3378, %v6331, %v6335
      %v6337 = vrot.slane %v5612, 3
      %v6338 = vrot.slane %v5615, 4
      %v6339 = vor.u32 %v6337, %v6338
      %v6340 = vsel %vm3378, %v6335, %v6339
      %v6341 = vrot.slane %v5621, 3
      %v6342 = vrot.slane %v5624, 4
      %v6343 = vor.u32 %v6341, %v6342
      %v6344 = vsel %vm3378, %v6339, %v6343
      %v6345 = vrot.slane %v5630, 3
      %v6346 = vrot.slane %v5633, 4
      %v6347 = vor.u32 %v6345, %v6346
      %v6348 = vsel %vm3378, %v6343, %v6347
      %v6349 = vrot.slane %v5639, 3
      %v6350 = vrot.slane %v5642, 4
      %v6351 = vor.u32 %v6349, %v6350
      %v6352 = vsel %vm3378, %v6347, %v6351
      %v6353 = vrot.slane %v5648, 3
      %v6354 = vrot.slane %v5651, 4
      %v6355 = vor.u32 %v6353, %v6354
      %v6356 = vsel %vm3378, %v6351, %v6355
      %v6357 = vrot.slane %v5657, 3
      %v6358 = vrot.slane %v5660, 4
      %v6359 = vor.u32 %v6357, %v6358
      %v6360 = vsel %vm3378, %v6355, %v6359
      %v6361 = vrot.slane %v5666, 3
      %v6362 = vrot.slane %v5669, 4
      %v6363 = vor.u32 %v6361, %v6362
      %v6364 = vsel %vm3378, %v6359, %v6363
      %v6365 = vrot.slane %v5675, 3
      %v6366 = vrot.slane %v5678, 4
      %v6367 = vor.u32 %v6365, %v6366
      %v6368 = vsel %vm3378, %v6363, %v6367
      %v6369 = vrot.slane %v5684, 3
      %v6370 = vrot.slane %v5687, 4
      %v6371 = vor.u32 %v6369, %v6370
      %v6372 = vsel %vm3378, %v6367, %v6371
      %v6373 = vrot.slane %v5693, 3
      %v6374 = vrot.slane %v5696, 4
      %v6375 = vor.u32 %v6373, %v6374
      %v6376 = vsel %vm3378, %v6371, %v6375
      %v6377 = vrot.slane %v5702, 3
      %v6378 = vrot.slane %v5705, 4
      %v6379 = vor.u32 %v6377, %v6378
      %v6380 = vsel %vm3378, %v6375, %v6379
      %v6381 = vrot.slane %v5711, 3
      %v6382 = vrot.slane %v5714, 4
      %v6383 = vor.u32 %v6381, %v6382
      %v6384 = vsel %vm3378, %v6379, %v6383
      %v6385 = vrot.slane %v5720, 3
      %v6386 = vrot.slane %v5723, 4
      %v6387 = vor.u32 %v6385, %v6386
      %v6388 = vsel %vm3378, %v6383, %v6387
      %v6389 = vrot.slane %v5729, 3
      %v6390 = vrot.slane %v5732, 4
      %v6391 = vor.u32 %v6389, %v6390
      %v6392 = vsel %vm3378, %v6387, %v6391
      %v6393 = vrot.slane %v5738, 3
      %v6394 = vrot.slane %v5741, 4
      %v6395 = vor.u32 %v6393, %v6394
      %v6396 = vsel %vm3378, %v6391, %v6395
      %v6397 = vrot.slane %v5747, 3
      %v6398 = vrot.slane %v5750, 4
      %v6399 = vor.u32 %v6397, %v6398
      %v6400 = vsel %vm3378, %v6395, %v6399
      %v6401 = vrot.slane %v5756, 3
      %v6402 = vrot.slane %v5759, 4
      %v6403 = vor.u32 %v6401, %v6402
      %v6404 = vsel %vm3378, %v6399, %v6403
      %v6405 = vrot.slane %v5765, 3
      %v6406 = vrot.slane %v5768, 4
      %v6407 = vor.u32 %v6405, %v6406
      %v6408 = vsel %vm3378, %v6403, %v6407
      %v6410 = vshrl.u32 %v6033, 16
      %v6412 = vrot.slane %v6410, 3
      %v6413 = vshll.u32 %v6033, 16
      %v6415 = vrot.slane %v6413, 4
      %v6416 = vor.u32 %v6412, %v6415
      %v6417 = vsel %vm3378, %v6407, %v6416
      %v6422 = vunpack.c.l.b16 %v6317
      %v6423 = vunpack.c.l.b16 %v6318
      %v6424 = vunpack.c.l.b16 %v6319
      %v6425 = vunpack.c.l.b16 %v6320
      %v6426 = vpack.c.b16 %v6423, %v6422
      %v6427 = vpack.c.b16 %v6425, %v6424
      %v6431 = vsel %vm1199, %v6332, 0
      %v6434 = vsel %vm1199, %v6336, 0
      %v6437 = vsel %vm1199, %v6340, 0
      %v6440 = vsel %vm1199, %v6344, 0
      %v6443 = vsel %vm1199, %v6348, 0
      %v6446 = vsel %vm1199, %v6352, 0
      %v6449 = vsel %vm1199, %v6356, 0
      %v6452 = vsel %vm1199, %v6360, 0
      %v6455 = vsel %vm1199, %v6364, 0
      %v6458 = vsel %vm1199, %v6368, 0
      %v6461 = vsel %vm1199, %v6372, 0
      %v6464 = vsel %vm1199, %v6376, 0
      %v6467 = vsel %vm1199, %v6380, 0
      %v6470 = vsel %vm1199, %v6384, 0
      %v6473 = vsel %vm1199, %v6388, 0
      %v6476 = vsel %vm1199, %v6392, 0
      %v6479 = vsel %vm1199, %v6396, 0
      %v6482 = vsel %vm1199, %v6400, 0
      %v6485 = vsel %vm1199, %v6404, 0
      %v6488 = vsel %vm1199, %v6408, 0
      %v6491 = vsel %vm1199, %v6417, 0
      %v6494 = vsel %vm1199, %v6412, 0
      %6496 = vmatpush.bf16.msra.mxu0 0
      %6497 = vmatpush.bf16.msra.mxu0 0
      %6498 = vmatpush.bf16.msra.mxu0 0
      %6499 = vmatpush.bf16.msra.mxu0 0
      %6500 = vmatpush.bf16.msra.mxu0 0
      %6501 = vmatpush.bf16.msra.mxu0 0
      %6502 = vmatpush.bf16.msra.mxu0 %v6427
      %6503 = vmatpush.bf16.msra.mxu0 %v6426
      %6504 = vmatmul.bf16.gmra.mxu0 %v6431
      %v6505 = vpop.f32.mrf.mxu0
      %v6506 = vadd.f32 0.0, %v6505
      %v6507 = vpop.f32.mrf.mxu0
      %v6508 = vadd.f32 0.0, %v6507
      %6509 = vmatmul.bf16.gmra.mxu0 %v6434
      %v6510 = vpop.f32.mrf.mxu0
      %v6511 = vadd.f32 0.0, %v6510
      %v6512 = vpop.f32.mrf.mxu0
      %v6513 = vadd.f32 0.0, %v6512
      %6514 = vmatmul.bf16.gmra.mxu0 %v6437
      %v6515 = vpop.f32.mrf.mxu0
      %v6516 = vadd.f32 0.0, %v6515
      %v6517 = vpop.f32.mrf.mxu0
      %v6518 = vadd.f32 0.0, %v6517
      %6519 = vmatmul.bf16.gmra.mxu0 %v6440
      %v6520 = vpop.f32.mrf.mxu0
      %v6521 = vadd.f32 0.0, %v6520
      %v6522 = vpop.f32.mrf.mxu0
      %v6523 = vadd.f32 0.0, %v6522
      %6524 = vmatmul.bf16.gmra.mxu0 %v6443
      %v6525 = vpop.f32.mrf.mxu0
      %v6526 = vadd.f32 0.0, %v6525
      %v6527 = vpop.f32.mrf.mxu0
      %v6528 = vadd.f32 0.0, %v6527
      %6529 = vmatmul.bf16.gmra.mxu0 %v6446
      %v6530 = vpop.f32.mrf.mxu0
      %v6531 = vadd.f32 0.0, %v6530
      %v6532 = vpop.f32.mrf.mxu0
      %v6533 = vadd.f32 0.0, %v6532
      %6534 = vmatmul.bf16.gmra.mxu0 %v6449
      %v6535 = vpop.f32.mrf.mxu0
      %v6536 = vadd.f32 0.0, %v6535
      %v6537 = vpop.f32.mrf.mxu0
      %v6538 = vadd.f32 0.0, %v6537
      %6539 = vmatmul.bf16.gmra.mxu0 %v6452
      %v6540 = vpop.f32.mrf.mxu0
      %v6541 = vadd.f32 0.0, %v6540
      %v6542 = vpop.f32.mrf.mxu0
      %v6543 = vadd.f32 0.0, %v6542
      %6544 = vmatmul.bf16.gmra.mxu0 %v6455
      %v6545 = vpop.f32.mrf.mxu0
      %v6546 = vadd.f32 0.0, %v6545
      %v6547 = vpop.f32.mrf.mxu0
      %v6548 = vadd.f32 0.0, %v6547
      %6549 = vmatmul.bf16.gmra.mxu0 %v6458
      %v6550 = vpop.f32.mrf.mxu0
      %v6551 = vadd.f32 0.0, %v6550
      %v6552 = vpop.f32.mrf.mxu0
      %v6553 = vadd.f32 0.0, %v6552
      %6554 = vmatmul.bf16.gmra.mxu0 %v6461
      %v6555 = vpop.f32.mrf.mxu0
      %v6556 = vadd.f32 0.0, %v6555
      %v6557 = vpop.f32.mrf.mxu0
      %v6558 = vadd.f32 0.0, %v6557
      %6559 = vmatmul.bf16.gmra.mxu0 %v6464
      %v6560 = vpop.f32.mrf.mxu0
      %v6561 = vadd.f32 0.0, %v6560
      %v6562 = vpop.f32.mrf.mxu0
      %v6563 = vadd.f32 0.0, %v6562
      %6564 = vmatmul.bf16.gmra.mxu0 %v6467
      %v6565 = vpop.f32.mrf.mxu0
      %v6566 = vadd.f32 0.0, %v6565
      %v6567 = vpop.f32.mrf.mxu0
      %v6568 = vadd.f32 0.0, %v6567
      %6569 = vmatmul.bf16.gmra.mxu0 %v6470
      %v6570 = vpop.f32.mrf.mxu0
      %v6571 = vadd.f32 0.0, %v6570
      %v6572 = vpop.f32.mrf.mxu0
      %v6573 = vadd.f32 0.0, %v6572
      %6574 = vmatmul.bf16.gmra.mxu0 %v6473
      %v6575 = vpop.f32.mrf.mxu0
      %v6576 = vadd.f32 0.0, %v6575
      %v6577 = vpop.f32.mrf.mxu0
      %v6578 = vadd.f32 0.0, %v6577
      %6579 = vmatmul.bf16.gmra.mxu0 %v6476
      %v6580 = vpop.f32.mrf.mxu0
      %v6581 = vadd.f32 0.0, %v6580
      %v6582 = vpop.f32.mrf.mxu0
      %v6583 = vadd.f32 0.0, %v6582
      %6584 = vmatmul.bf16.gmra.mxu0 %v6479
      %v6585 = vpop.f32.mrf.mxu0
      %v6586 = vadd.f32 0.0, %v6585
      %v6587 = vpop.f32.mrf.mxu0
      %v6588 = vadd.f32 0.0, %v6587
      %6589 = vmatmul.bf16.gmra.mxu0 %v6482
      %v6590 = vpop.f32.mrf.mxu0
      %v6591 = vadd.f32 0.0, %v6590
      %v6592 = vpop.f32.mrf.mxu0
      %v6593 = vadd.f32 0.0, %v6592
      %6594 = vmatmul.bf16.gmra.mxu0 %v6485
      %v6595 = vpop.f32.mrf.mxu0
      %v6596 = vadd.f32 0.0, %v6595
      %v6597 = vpop.f32.mrf.mxu0
      %v6598 = vadd.f32 0.0, %v6597
      %6599 = vmatmul.bf16.gmra.mxu0 %v6488
      %v6600 = vpop.f32.mrf.mxu0
      %v6601 = vadd.f32 0.0, %v6600
      %v6602 = vpop.f32.mrf.mxu0
      %v6603 = vadd.f32 0.0, %v6602
      %6604 = vmatmul.bf16.gmra.mxu0 %v6491
      %v6605 = vpop.f32.mrf.mxu0
      %v6606 = vadd.f32 0.0, %v6605
      %v6607 = vpop.f32.mrf.mxu0
      %v6608 = vadd.f32 0.0, %v6607
      %6609 = vmatmul.bf16.gmra.mxu0 %v6494
      %v6610 = vpop.f32.mrf.mxu0
      %v6611 = vadd.f32 0.0, %v6610
      %v6612 = vpop.f32.mrf.mxu0
      %6613 = vdwg.mxu0
      %v6614 = vadd.f32 %v6273, %v6506
      %v6615 = vadd.f32 %v6274, %v6508
      %v6616 = vadd.f32 %v6275, %v6511
      %v6617 = vadd.f32 %v6276, %v6513
      %v6618 = vadd.f32 %v6277, %v6516
      %v6619 = vadd.f32 %v6278, %v6518
      %v6620 = vadd.f32 %v6279, %v6521
      %v6621 = vadd.f32 %v6280, %v6523
      %v6622 = vadd.f32 %v6281, %v6526
      %v6623 = vadd.f32 %v6282, %v6528
      %v6624 = vadd.f32 %v6283, %v6531
      %v6625 = vadd.f32 %v6284, %v6533
      %v6626 = vadd.f32 %v6285, %v6536
      %v6627 = vadd.f32 %v6286, %v6538
      %v6628 = vadd.f32 %v6287, %v6541
      %v6629 = vadd.f32 %v6288, %v6543
      %v6630 = vadd.f32 %v6289, %v6546
      %v6631 = vadd.f32 %v6290, %v6548
      %v6632 = vadd.f32 %v6291, %v6551
      %v6633 = vadd.f32 %v6292, %v6553
      %v6634 = vadd.f32 %v6293, %v6556
      %v6635 = vadd.f32 %v6294, %v6558
      %v6636 = vadd.f32 %v6295, %v6561
      %v6637 = vadd.f32 %v6296, %v6563
      %v6638 = vadd.f32 %v6297, %v6566
      %v6639 = vadd.f32 %v6298, %v6568
      %v6640 = vadd.f32 %v6299, %v6571
      %v6641 = vadd.f32 %v6300, %v6573
      %v6642 = vadd.f32 %v6301, %v6576
      %v6643 = vadd.f32 %v6302, %v6578
      %v6644 = vadd.f32 %v6303, %v6581
      %v6645 = vadd.f32 %v6304, %v6583
      %v6646 = vadd.f32 %v6305, %v6586
      %v6647 = vadd.f32 %v6306, %v6588
      %v6648 = vadd.f32 %v6307, %v6591
      %v6649 = vadd.f32 %v6308, %v6593
      %v6650 = vadd.f32 %v6309, %v6596
      %v6651 = vadd.f32 %v6310, %v6598
      %v6652 = vadd.f32 %v6311, %v6601
      %v6653 = vadd.f32 %v6312, %v6603
      %v6654 = vadd.f32 %v6313, %v6606
      %v6655 = vadd.f32 %v6314, %v6608
      %v6656 = vadd.f32 %v6315, %v6611
      %v6657 = vld [vmem:[%s4] sm:$0x1]
      %v6659 = vperm.slane %v6657, 0
      %v6661 = vadd.f32 %v6614, %v6659
      %v6662 = vadd.f32 %v6615, %v6659
      %v6663 = vadd.f32 %v6616, %v6659
      %v6664 = vadd.f32 %v6617, %v6659
      %v6665 = vadd.f32 %v6618, %v6659
      %v6666 = vadd.f32 %v6619, %v6659
      %v6667 = vadd.f32 %v6620, %v6659
      %v6668 = vadd.f32 %v6621, %v6659
      %v6669 = vadd.f32 %v6622, %v6659
      %v6670 = vadd.f32 %v6623, %v6659
      %v6671 = vadd.f32 %v6624, %v6659
      %v6672 = vadd.f32 %v6625, %v6659
      %v6673 = vadd.f32 %v6626, %v6659
      %v6674 = vadd.f32 %v6627, %v6659
      %v6675 = vadd.f32 %v6628, %v6659
      %v6676 = vadd.f32 %v6629, %v6659
      %v6677 = vadd.f32 %v6630, %v6659
      %v6678 = vadd.f32 %v6631, %v6659
      %v6679 = vadd.f32 %v6632, %v6659
      %v6680 = vadd.f32 %v6633, %v6659
      %v6681 = vadd.f32 %v6634, %v6659
      %v6682 = vadd.f32 %v6635, %v6659
      %v6683 = vadd.f32 %v6636, %v6659
      %v6684 = vadd.f32 %v6637, %v6659
      %v6685 = vadd.f32 %v6638, %v6659
      %v6686 = vadd.f32 %v6639, %v6659
      %v6687 = vadd.f32 %v6640, %v6659
      %v6688 = vadd.f32 %v6641, %v6659
      %v6689 = vadd.f32 %v6642, %v6659
      %v6690 = vadd.f32 %v6643, %v6659
      %v6691 = vadd.f32 %v6644, %v6659
      %v6692 = vadd.f32 %v6645, %v6659
      %v6693 = vadd.f32 %v6646, %v6659
      %v6694 = vadd.f32 %v6647, %v6659
      %v6695 = vadd.f32 %v6648, %v6659
      %v6696 = vadd.f32 %v6649, %v6659
      %v6697 = vadd.f32 %v6650, %v6659
      %v6698 = vadd.f32 %v6651, %v6659
      %v6699 = vadd.f32 %v6652, %v6659
      %v6700 = vadd.f32 %v6653, %v6659
      %v6701 = vadd.f32 %v6654, %v6659
      %v6702 = vadd.f32 %v6655, %v6659
      %v6703 = vadd.f32 %v6656, %v6659
      %v6704 = vmax.f32 %v6661, 0.0
      %v6705 = vmax.f32 %v6662, 0.0
      %v6706 = vmax.f32 %v6663, 0.0
      %v6707 = vmax.f32 %v6664, 0.0
      %v6708 = vmax.f32 %v6665, 0.0
      %v6709 = vmax.f32 %v6666, 0.0
      %v6710 = vmax.f32 %v6667, 0.0
      %v6711 = vmax.f32 %v6668, 0.0
      %v6712 = vmax.f32 %v6669, 0.0
      %v6713 = vmax.f32 %v6670, 0.0
      %v6714 = vmax.f32 %v6671, 0.0
      %v6715 = vmax.f32 %v6672, 0.0
      %v6716 = vmax.f32 %v6673, 0.0
      %v6717 = vmax.f32 %v6674, 0.0
      %v6718 = vmax.f32 %v6675, 0.0
      %v6719 = vmax.f32 %v6676, 0.0
      %v6720 = vmax.f32 %v6677, 0.0
      %v6721 = vmax.f32 %v6678, 0.0
      %v6722 = vmax.f32 %v6679, 0.0
      %v6723 = vmax.f32 %v6680, 0.0
      %v6724 = vmax.f32 %v6681, 0.0
      %v6725 = vmax.f32 %v6682, 0.0
      %v6726 = vmax.f32 %v6683, 0.0
      %v6727 = vmax.f32 %v6684, 0.0
      %v6728 = vmax.f32 %v6685, 0.0
      %v6729 = vmax.f32 %v6686, 0.0
      %v6730 = vmax.f32 %v6687, 0.0
      %v6731 = vmax.f32 %v6688, 0.0
      %v6732 = vmax.f32 %v6689, 0.0
      %v6733 = vmax.f32 %v6690, 0.0
      %v6734 = vmax.f32 %v6691, 0.0
      %v6735 = vmax.f32 %v6692, 0.0
      %v6736 = vmax.f32 %v6693, 0.0
      %v6737 = vmax.f32 %v6694, 0.0
      %v6738 = vmax.f32 %v6695, 0.0
      %v6739 = vmax.f32 %v6696, 0.0
      %v6740 = vmax.f32 %v6697, 0.0
      %v6741 = vmax.f32 %v6698, 0.0
      %v6742 = vmax.f32 %v6699, 0.0
      %v6743 = vmax.f32 %v6700, 0.0
      %v6744 = vmax.f32 %v6701, 0.0
      %v6745 = vmax.f32 %v6702, 0.0
      %v6746 = vmax.f32 %v6703, 0.0
      %v6747 = vpack.c.bf16 %v6704, %v6704
      %v6748 = vpack.c.bf16 %v6705, %v6705
      %v6749 = vpack.c.bf16 %v6706, %v6706
      %v6750 = vpack.c.bf16 %v6707, %v6707
      %v6751 = vpack.c.bf16 %v6708, %v6708
      %v6752 = vpack.c.bf16 %v6709, %v6709
      %v6753 = vpack.c.bf16 %v6710, %v6710
      %v6754 = vpack.c.bf16 %v6711, %v6711
      %v6755 = vpack.c.bf16 %v6712, %v6712
      %v6756 = vpack.c.bf16 %v6713, %v6713
      %v6757 = vpack.c.bf16 %v6714, %v6714
      %v6758 = vpack.c.bf16 %v6715, %v6715
      %v6759 = vpack.c.bf16 %v6716, %v6716
      %v6760 = vpack.c.bf16 %v6717, %v6717
      %v6761 = vpack.c.bf16 %v6718, %v6718
      %v6762 = vpack.c.bf16 %v6719, %v6719
      %v6763 = vpack.c.bf16 %v6720, %v6720
      %v6764 = vpack.c.bf16 %v6721, %v6721
      %v6765 = vpack.c.bf16 %v6722, %v6722
      %v6766 = vpack.c.bf16 %v6723, %v6723
      %v6767 = vpack.c.bf16 %v6724, %v6724
      %v6768 = vpack.c.bf16 %v6725, %v6725
      %v6769 = vpack.c.bf16 %v6726, %v6726
      %v6770 = vpack.c.bf16 %v6727, %v6727
      %v6771 = vpack.c.bf16 %v6728, %v6728
      %v6772 = vpack.c.bf16 %v6729, %v6729
      %v6773 = vpack.c.bf16 %v6730, %v6730
      %v6774 = vpack.c.bf16 %v6731, %v6731
      %v6775 = vpack.c.bf16 %v6732, %v6732
      %v6776 = vpack.c.bf16 %v6733, %v6733
      %v6777 = vpack.c.bf16 %v6734, %v6734
      %v6778 = vpack.c.bf16 %v6735, %v6735
      %v6779 = vpack.c.bf16 %v6736, %v6736
      %v6780 = vpack.c.bf16 %v6737, %v6737
      %v6781 = vpack.c.bf16 %v6738, %v6738
      %v6782 = vpack.c.bf16 %v6739, %v6739
      %v6783 = vpack.c.bf16 %v6740, %v6740
      %v6784 = vpack.c.bf16 %v6741, %v6741
      %v6785 = vpack.c.bf16 %v6742, %v6742
      %v6786 = vpack.c.bf16 %v6743, %v6743
      %v6787 = vpack.c.bf16 %v6744, %v6744
      %v6788 = vpack.c.bf16 %v6745, %v6745
      %v6789 = vpack.c.bf16 %v6746, %v6746
      %vm6790 = vcmask 519168
      %6791 = vst.msk [vmem:[#allocation3] sm:$0xf] %vm6790, %v6747
      %6792 = vst.msk [vmem:[#allocation3 + $0x4] sm:$0xf] %vm6790, %v6748
      %6793 = vst.msk [vmem:[#allocation3 + $0x8] sm:$0xf] %vm6790, %v6749
      %6794 = vst.msk [vmem:[#allocation3 + $0xc] sm:$0xf] %vm6790, %v6750
      %6795 = vst.msk [vmem:[#allocation3 + $0x10] sm:$0xf] %vm6790, %v6751
      %6796 = vst.msk [vmem:[#allocation3 + $0x14] sm:$0xf] %vm6790, %v6752
      %6797 = vst.msk [vmem:[#allocation3 + $0x18] sm:$0xf] %vm6790, %v6753
      %6798 = vst.msk [vmem:[#allocation3 + $0x1c] sm:$0xf] %vm6790, %v6754
      %6799 = vst.msk [vmem:[#allocation3 + $0x20] sm:$0xf] %vm6790, %v6755
      %6800 = vst.msk [vmem:[#allocation3 + $0x24] sm:$0xf] %vm6790, %v6756
      %6801 = vst.msk [vmem:[#allocation3 + $0x28] sm:$0xf] %vm6790, %v6757
      %6802 = vst.msk [vmem:[#allocation3 + $0x2c] sm:$0xf] %vm6790, %v6758
      %6803 = vst.msk [vmem:[#allocation3 + $0x30] sm:$0xf] %vm6790, %v6759
      %6804 = vst.msk [vmem:[#allocation3 + $0x34] sm:$0xf] %vm6790, %v6760
      %6805 = vst.msk [vmem:[#allocation3 + $0x38] sm:$0xf] %vm6790, %v6761
      %6806 = vst.msk [vmem:[#allocation3 + $0x3c] sm:$0xf] %vm6790, %v6762
      %6807 = vst.msk [vmem:[#allocation3 + $0x40] sm:$0xf] %vm6790, %v6763
      %6808 = vst.msk [vmem:[#allocation3 + $0x44] sm:$0xf] %vm6790, %v6764
      %6809 = vst.msk [vmem:[#allocation3 + $0x48] sm:$0xf] %vm6790, %v6765
      %6810 = vst.msk [vmem:[#allocation3 + $0x4c] sm:$0xf] %vm6790, %v6766
      %6811 = vst.msk [vmem:[#allocation3 + $0x50] sm:$0xf] %vm6790, %v6767
      %6812 = vst.msk [vmem:[#allocation3 + $0x54] sm:$0xf] %vm6790, %v6768
      %6813 = vst.msk [vmem:[#allocation3 + $0x58] sm:$0xf] %vm6790, %v6769
      %6814 = vst.msk [vmem:[#allocation3 + $0x5c] sm:$0xf] %vm6790, %v6770
      %6815 = vst.msk [vmem:[#allocation3 + $0x60] sm:$0xf] %vm6790, %v6771
      %6816 = vst.msk [vmem:[#allocation3 + $0x64] sm:$0xf] %vm6790, %v6772
      %6817 = vst.msk [vmem:[#allocation3 + $0x68] sm:$0xf] %vm6790, %v6773
      %6818 = vst.msk [vmem:[#allocation3 + $0x6c] sm:$0xf] %vm6790, %v6774
      %6819 = vst.msk [vmem:[#allocation3 + $0x70] sm:$0xf] %vm6790, %v6775
      %6820 = vst.msk [vmem:[#allocation3 + $0x74] sm:$0xf] %vm6790, %v6776
      %6821 = vst.msk [vmem:[#allocation3 + $0x78] sm:$0xf] %vm6790, %v6777
      %6822 = vst.msk [vmem:[#allocation3 + $0x7c] sm:$0xf] %vm6790, %v6778
      %6823 = vst.msk [vmem:[#allocation3 + $0x80] sm:$0xf] %vm6790, %v6779
      %6824 = vst.msk [vmem:[#allocation3 + $0x84] sm:$0xf] %vm6790, %v6780
      %6825 = vst.msk [vmem:[#allocation3 + $0x88] sm:$0xf] %vm6790, %v6781
      %6826 = vst.msk [vmem:[#allocation3 + $0x8c] sm:$0xf] %vm6790, %v6782
      %6827 = vst.msk [vmem:[#allocation3 + $0x90] sm:$0xf] %vm6790, %v6783
      %6828 = vst.msk [vmem:[#allocation3 + $0x94] sm:$0xf] %vm6790, %v6784
      %6829 = vst.msk [vmem:[#allocation3 + $0x98] sm:$0xf] %vm6790, %v6785
      %6830 = vst.msk [vmem:[#allocation3 + $0x9c] sm:$0xf] %vm6790, %v6786
      %6831 = vst.msk [vmem:[#allocation3 + $0xa0] sm:$0xf] %vm6790, %v6787
      %6832 = vst.msk [vmem:[#allocation3 + $0xa4] sm:$0xf] %vm6790, %v6788
      %vm6833 = vcmask 516096
      %vm6834 = vsmask.f32 256
      %vm6835 = vmand %vm6833, %vm6834
      %v6836 = vld [vmem:[#allocation3 + $0xa8] sm:$0x1]
      %v6837 = vsel %vm6835, %v6789, %v6836
      %6838 = vst [vmem:[#allocation3 + $0xa8] sm:$0x1] %v6837
      %v6839 = vld [vmem:[#allocation3] sm:$0xf]
      %v6840 = vld [vmem:[#allocation3 + $0x4] sm:$0xf]
      %v6841 = vld [vmem:[#allocation3 + $0x8] sm:$0xf]
      %v6842 = vld [vmem:[#allocation3 + $0xc] sm:$0xf]
      %v6843 = vld [vmem:[#allocation3 + $0x10] sm:$0xf]
      %v6844 = vld [vmem:[#allocation3 + $0x14] sm:$0xf]
      %v6845 = vld [vmem:[#allocation3 + $0x18] sm:$0xf]
      %v6846 = vld [vmem:[#allocation3 + $0x1c] sm:$0xf]
      %v6847 = vld [vmem:[#allocation3 + $0x20] sm:$0xf]
      %v6848 = vld [vmem:[#allocation3 + $0x24] sm:$0xf]
      %v6849 = vld [vmem:[#allocation3 + $0x28] sm:$0xf]
      %v6850 = vld [vmem:[#allocation3 + $0x2c] sm:$0xf]
      %v6851 = vld [vmem:[#allocation3 + $0x30] sm:$0xf]
      %v6852 = vld [vmem:[#allocation3 + $0x34] sm:$0xf]
      %v6853 = vld [vmem:[#allocation3 + $0x38] sm:$0xf]
      %v6854 = vld [vmem:[#allocation3 + $0x3c] sm:$0xf]
      %v6855 = vld [vmem:[#allocation3 + $0x40] sm:$0xf]
      %v6856 = vld [vmem:[#allocation3 + $0x44] sm:$0xf]
      %v6857 = vld [vmem:[#allocation3 + $0x48] sm:$0xf]
      %v6858 = vld [vmem:[#allocation3 + $0x4c] sm:$0xf]
      %v6859 = vld [vmem:[#allocation3 + $0x50] sm:$0xf]
      %v6860 = vld [vmem:[#allocation3 + $0x54] sm:$0xf]
      %v6861 = vld [vmem:[#allocation3 + $0x58] sm:$0xf]
      %v6862 = vld [vmem:[#allocation3 + $0x5c] sm:$0xf]
      %v6863 = vld [vmem:[#allocation3 + $0x60] sm:$0xf]
      %v6864 = vld [vmem:[#allocation3 + $0x64] sm:$0xf]
      %v6865 = vld [vmem:[#allocation3 + $0x68] sm:$0xf]
      %v6866 = vld [vmem:[#allocation3 + $0x6c] sm:$0xf]
      %v6867 = vld [vmem:[#allocation3 + $0x70] sm:$0xf]
      %v6868 = vld [vmem:[#allocation3 + $0x74] sm:$0xf]
      %v6869 = vld [vmem:[#allocation3 + $0x78] sm:$0xf]
      %v6870 = vld [vmem:[#allocation3 + $0x7c] sm:$0x7]
      %v6871 = vld [vmem:[%s5] sm:$0xf]
      %v6872 = vld [vmem:[%s5 + $0x4] sm:$0xf]
      %v6873 = vld [vmem:[%s5 + $0x8] sm:$0xf]
      %v6874 = vld [vmem:[%s5 + $0xc] sm:$0xf]
      %v6875 = vld [vmem:[%s5 + $0x10] sm:$0xf]
      %v6876 = vld [vmem:[%s5 + $0x14] sm:$0xf]
      %v6877 = vld [vmem:[%s5 + $0x18] sm:$0xf]
      %v6878 = vld [vmem:[%s5 + $0x1c] sm:$0xf]
      %v6879 = vld [vmem:[#allocation3] sm:$0xe]
      %v6880 = vld [vmem:[#allocation3 + $0x7c] sm:$0xf]
      %s6881 = scalar_lea.vmem %s5, 32
      %v6882 = vld [vmem:[%s6881] sm:$0xf]
      %v6883 = vld [vmem:[%s6881 + $0x4] sm:$0xf]
      %v6884 = vld [vmem:[%s6881 + $0x8] sm:$0xf]
      %v6885 = vld [vmem:[%s6881 + $0xc] sm:$0xf]
      %v6886 = vld [vmem:[%s6881 + $0x10] sm:$0xf]
      %v6887 = vld [vmem:[%s6881 + $0x14] sm:$0xf]
      %v6888 = vld [vmem:[%s6881 + $0x18] sm:$0xf]
      %v6889 = vld [vmem:[%s6881 + $0x1c] sm:$0xf]
      %v6922 = vunpack.c.l.b16 %v6879
      %v6923 = vunpack.c.l.b16 %v6840
      %v6924 = vunpack.c.l.b16 %v6841
      %v6925 = vunpack.c.l.b16 %v6842
      %v6926 = vunpack.c.l.b16 %v6843
      %v6927 = vunpack.c.l.b16 %v6844
      %v6928 = vunpack.c.l.b16 %v6845
      %v6929 = vunpack.c.l.b16 %v6846
      %v6930 = vunpack.c.l.b16 %v6847
      %v6931 = vunpack.c.l.b16 %v6848
      %v6932 = vunpack.c.l.b16 %v6849
      %v6933 = vunpack.c.l.b16 %v6850
      %v6934 = vunpack.c.l.b16 %v6851
      %v6935 = vunpack.c.l.b16 %v6852
      %v6936 = vunpack.c.l.b16 %v6853
      %v6937 = vunpack.c.l.b16 %v6854
      %v6938 = vunpack.c.l.b16 %v6855
      %v6939 = vunpack.c.l.b16 %v6856
      %v6940 = vunpack.c.l.b16 %v6857
      %v6941 = vunpack.c.l.b16 %v6858
      %v6942 = vunpack.c.l.b16 %v6859
      %v6943 = vunpack.c.l.b16 %v6860
      %v6944 = vunpack.c.l.b16 %v6861
      %v6945 = vunpack.c.l.b16 %v6862
      %v6946 = vunpack.c.l.b16 %v6863
      %v6947 = vunpack.c.l.b16 %v6864
      %v6948 = vunpack.c.l.b16 %v6865
      %v6949 = vunpack.c.l.b16 %v6866
      %v6950 = vunpack.c.l.b16 %v6867
      %v6951 = vunpack.c.l.b16 %v6868
      %v6952 = vunpack.c.l.b16 %v6869
      %v6953 = vunpack.c.l.b16 %v6880
      %v6954 = vpack.c.b16 %v6923, %v6922
      %v6955 = vpack.c.b16 %v6925, %v6924
      %v6956 = vpack.c.b16 %v6927, %v6926
      %v6957 = vpack.c.b16 %v6929, %v6928
      %v6958 = vpack.c.b16 %v6931, %v6930
      %v6959 = vpack.c.b16 %v6933, %v6932
      %v6960 = vpack.c.b16 %v6935, %v6934
      %v6961 = vpack.c.b16 %v6937, %v6936
      %v6962 = vpack.c.b16 %v6939, %v6938
      %v6963 = vpack.c.b16 %v6941, %v6940
      %v6964 = vpack.c.b16 %v6943, %v6942
      %v6965 = vpack.c.b16 %v6945, %v6944
      %v6966 = vpack.c.b16 %v6947, %v6946
      %v6967 = vpack.c.b16 %v6949, %v6948
      %v6968 = vpack.c.b16 %v6951, %v6950
      %v6969 = vpack.c.b16 %v6953, %v6952
      %v6970 = vrot.slane %v6954, 1
      %v6971 = vrot.slane %v6955, 1
      %v6972 = vsel %vm1571, %v6970, %v6971
      %v6973 = vrot.slane %v6956, 1
      %v6974 = vsel %vm1571, %v6971, %v6973
      %v6975 = vrot.slane %v6957, 1
      %v6976 = vsel %vm1571, %v6973, %v6975
      %v6977 = vrot.slane %v6958, 1
      %v6978 = vsel %vm1571, %v6975, %v6977
      %v6979 = vrot.slane %v6959, 1
      %v6980 = vsel %vm1571, %v6977, %v6979
      %v6981 = vrot.slane %v6960, 1
      %v6982 = vsel %vm1571, %v6979, %v6981
      %v6983 = vrot.slane %v6961, 1
      %v6984 = vsel %vm1571, %v6981, %v6983
      %v6985 = vrot.slane %v6962, 1
      %v6986 = vsel %vm1571, %v6983, %v6985
      %v6987 = vrot.slane %v6963, 1
      %v6988 = vsel %vm1571, %v6985, %v6987
      %v6989 = vrot.slane %v6964, 1
      %v6990 = vsel %vm1571, %v6987, %v6989
      %v6991 = vrot.slane %v6965, 1
      %v6992 = vsel %vm1571, %v6989, %v6991
      %v6993 = vrot.slane %v6966, 1
      %v6994 = vsel %vm1571, %v6991, %v6993
      %v6995 = vrot.slane %v6967, 1
      %v6996 = vsel %vm1571, %v6993, %v6995
      %v6997 = vrot.slane %v6968, 1
      %v6998 = vsel %vm1571, %v6995, %v6997
      %v6999 = vrot.slane %v6969, 1
      %v7000 = vsel %vm1571, %v6997, %v6999
      %v7009 = vunpack.c.l.b16 %v6882
      %v7010 = vunpack.c.l.b16 %v6883
      %v7011 = vunpack.c.l.b16 %v6884
      %v7012 = vunpack.c.l.b16 %v6885
      %v7013 = vunpack.c.l.b16 %v6886
      %v7014 = vunpack.c.l.b16 %v6887
      %v7015 = vunpack.c.l.b16 %v6888
      %v7016 = vunpack.c.l.b16 %v6889
      %v7017 = vpack.c.b16 %v7010, %v7009
      %v7018 = vpack.c.b16 %v7012, %v7011
      %v7019 = vpack.c.b16 %v7014, %v7013
      %v7020 = vpack.c.b16 %v7016, %v7015
      %v7026 = vsel %vm491, %v6972, 0
      %v7029 = vsel %vm491, %v6974, 0
      %v7032 = vsel %vm491, %v6976, 0
      %v7035 = vsel %vm491, %v6978, 0
      %v7038 = vsel %vm491, %v6980, 0
      %v7041 = vsel %vm491, %v6982, 0
      %v7044 = vsel %vm491, %v6984, 0
      %v7047 = vsel %vm491, %v6986, 0
      %v7050 = vsel %vm491, %v6988, 0
      %v7053 = vsel %vm491, %v6990, 0
      %v7056 = vsel %vm491, %v6992, 0
      %v7059 = vsel %vm491, %v6994, 0
      %v7062 = vsel %vm491, %v6996, 0
      %v7065 = vsel %vm491, %v6998, 0
      %v7068 = vsel %vm491, %v7000, 0
      %v7071 = vsel %vm491, %v6999, 0
      %7073 = vmatpush.bf16.msra.mxu0 0
      %7074 = vmatpush.bf16.msra.mxu0 0
      %7075 = vmatpush.bf16.msra.mxu0 0
      %7076 = vmatpush.bf16.msra.mxu0 0
      %7077 = vmatpush.bf16.msra.mxu0 %v7020
      %7078 = vmatpush.bf16.msra.mxu0 %v7019
      %7079 = vmatpush.bf16.msra.mxu0 %v7018
      %7080 = vmatpush.bf16.msra.mxu0 %v7017
      %7081 = vmatmul.bf16.gmra.mxu0 %v7026
      %v7082 = vpop.f32.mrf.mxu0
      %v7083 = vadd.f32 0.0, %v7082
      %v7084 = vpop.f32.mrf.mxu0
      %v7085 = vadd.f32 0.0, %v7084
      %7086 = vmatmul.bf16.gmra.mxu0 %v7029
      %v7087 = vpop.f32.mrf.mxu0
      %v7088 = vadd.f32 0.0, %v7087
      %v7089 = vpop.f32.mrf.mxu0
      %v7090 = vadd.f32 0.0, %v7089
      %7091 = vmatmul.bf16.gmra.mxu0 %v7032
      %v7092 = vpop.f32.mrf.mxu0
      %v7093 = vadd.f32 0.0, %v7092
      %v7094 = vpop.f32.mrf.mxu0
      %v7095 = vadd.f32 0.0, %v7094
      %7096 = vmatmul.bf16.gmra.mxu0 %v7035
      %v7097 = vpop.f32.mrf.mxu0
      %v7098 = vadd.f32 0.0, %v7097
      %v7099 = vpop.f32.mrf.mxu0
      %v7100 = vadd.f32 0.0, %v7099
      %7101 = vmatmul.bf16.gmra.mxu0 %v7038
      %v7102 = vpop.f32.mrf.mxu0
      %v7103 = vadd.f32 0.0, %v7102
      %v7104 = vpop.f32.mrf.mxu0
      %v7105 = vadd.f32 0.0, %v7104
      %7106 = vmatmul.bf16.gmra.mxu0 %v7041
      %v7107 = vpop.f32.mrf.mxu0
      %v7108 = vadd.f32 0.0, %v7107
      %v7109 = vpop.f32.mrf.mxu0
      %v7110 = vadd.f32 0.0, %v7109
      %7111 = vmatmul.bf16.gmra.mxu0 %v7044
      %v7112 = vpop.f32.mrf.mxu0
      %v7113 = vadd.f32 0.0, %v7112
      %v7114 = vpop.f32.mrf.mxu0
      %v7115 = vadd.f32 0.0, %v7114
      %7116 = vmatmul.bf16.gmra.mxu0 %v7047
      %v7117 = vpop.f32.mrf.mxu0
      %v7118 = vadd.f32 0.0, %v7117
      %v7119 = vpop.f32.mrf.mxu0
      %v7120 = vadd.f32 0.0, %v7119
      %7121 = vmatmul.bf16.gmra.mxu0 %v7050
      %v7122 = vpop.f32.mrf.mxu0
      %v7123 = vadd.f32 0.0, %v7122
      %v7124 = vpop.f32.mrf.mxu0
      %v7125 = vadd.f32 0.0, %v7124
      %7126 = vmatmul.bf16.gmra.mxu0 %v7053
      %v7127 = vpop.f32.mrf.mxu0
      %v7128 = vadd.f32 0.0, %v7127
      %v7129 = vpop.f32.mrf.mxu0
      %v7130 = vadd.f32 0.0, %v7129
      %7131 = vmatmul.bf16.gmra.mxu0 %v7056
      %v7132 = vpop.f32.mrf.mxu0
      %v7133 = vadd.f32 0.0, %v7132
      %v7134 = vpop.f32.mrf.mxu0
      %v7135 = vadd.f32 0.0, %v7134
      %7136 = vmatmul.bf16.gmra.mxu0 %v7059
      %v7137 = vpop.f32.mrf.mxu0
      %v7138 = vadd.f32 0.0, %v7137
      %v7139 = vpop.f32.mrf.mxu0
      %v7140 = vadd.f32 0.0, %v7139
      %7141 = vmatmul.bf16.gmra.mxu0 %v7062
      %v7142 = vpop.f32.mrf.mxu0
      %v7143 = vadd.f32 0.0, %v7142
      %v7144 = vpop.f32.mrf.mxu0
      %v7145 = vadd.f32 0.0, %v7144
      %7146 = vmatmul.bf16.gmra.mxu0 %v7065
      %v7147 = vpop.f32.mrf.mxu0
      %v7148 = vadd.f32 0.0, %v7147
      %v7149 = vpop.f32.mrf.mxu0
      %v7150 = vadd.f32 0.0, %v7149
      %7151 = vmatmul.bf16.gmra.mxu0 %v7068
      %v7152 = vpop.f32.mrf.mxu0
      %v7153 = vadd.f32 0.0, %v7152
      %v7154 = vpop.f32.mrf.mxu0
      %v7155 = vadd.f32 0.0, %v7154
      %7156 = vmatmul.bf16.gmra.mxu0 %v7071
      %v7157 = vpop.f32.mrf.mxu0
      %v7158 = vadd.f32 0.0, %v7157
      %v7159 = vpop.f32.mrf.mxu0
      %v7160 = vadd.f32 0.0, %v7159
      %7161 = vdwg.mxu0
      %v7164 = vunpack.c.l.b16 %v6839
      %v7165 = vunpack.c.l.b16 %v6870
      %v7166 = vpack.c.b16 %v6923, %v7164
      %v7167 = vpack.c.b16 %v7165, %v6952
      %v7176 = vunpack.c.l.b16 %v6871
      %v7177 = vunpack.c.l.b16 %v6872
      %v7178 = vunpack.c.l.b16 %v6873
      %v7179 = vunpack.c.l.b16 %v6874
      %v7180 = vunpack.c.l.b16 %v6875
      %v7181 = vunpack.c.l.b16 %v6876
      %v7182 = vunpack.c.l.b16 %v6877
      %v7183 = vunpack.c.l.b16 %v6878
      %v7184 = vpack.c.b16 %v7177, %v7176
      %v7185 = vpack.c.b16 %v7179, %v7178
      %v7186 = vpack.c.b16 %v7181, %v7180
      %v7187 = vpack.c.b16 %v7183, %v7182
      %v7193 = vsel %vm491, %v7166, 0
      %v7196 = vsel %vm491, %v6955, 0
      %v7199 = vsel %vm491, %v6956, 0
      %v7202 = vsel %vm491, %v6957, 0
      %v7205 = vsel %vm491, %v6958, 0
      %v7208 = vsel %vm491, %v6959, 0
      %v7211 = vsel %vm491, %v6960, 0
      %v7214 = vsel %vm491, %v6961, 0
      %v7217 = vsel %vm491, %v6962, 0
      %v7220 = vsel %vm491, %v6963, 0
      %v7223 = vsel %vm491, %v6964, 0
      %v7226 = vsel %vm491, %v6965, 0
      %v7229 = vsel %vm491, %v6966, 0
      %v7232 = vsel %vm491, %v6967, 0
      %v7235 = vsel %vm491, %v6968, 0
      %v7238 = vsel %vm491, %v7167, 0
      %7240 = vmatpush.bf16.msra.mxu0 0
      %7241 = vmatpush.bf16.msra.mxu0 0
      %7242 = vmatpush.bf16.msra.mxu0 0
      %7243 = vmatpush.bf16.msra.mxu0 0
      %7244 = vmatpush.bf16.msra.mxu0 %v7187
      %7245 = vmatpush.bf16.msra.mxu0 %v7186
      %7246 = vmatpush.bf16.msra.mxu0 %v7185
      %7247 = vmatpush.bf16.msra.mxu0 %v7184
      %7248 = vmatmul.bf16.gmra.mxu0 %v7193
      %v7249 = vpop.f32.mrf.mxu0
      %v7250 = vadd.f32 %v7083, %v7249
      %v7251 = vpop.f32.mrf.mxu0
      %v7252 = vadd.f32 %v7085, %v7251
      %7253 = vmatmul.bf16.gmra.mxu0 %v7196
      %v7254 = vpop.f32.mrf.mxu0
      %v7255 = vadd.f32 %v7088, %v7254
      %v7256 = vpop.f32.mrf.mxu0
      %v7257 = vadd.f32 %v7090, %v7256
      %7258 = vmatmul.bf16.gmra.mxu0 %v7199
      %v7259 = vpop.f32.mrf.mxu0
      %v7260 = vadd.f32 %v7093, %v7259
      %v7261 = vpop.f32.mrf.mxu0
      %v7262 = vadd.f32 %v7095, %v7261
      %7263 = vmatmul.bf16.gmra.mxu0 %v7202
      %v7264 = vpop.f32.mrf.mxu0
      %v7265 = vadd.f32 %v7098, %v7264
      %v7266 = vpop.f32.mrf.mxu0
      %v7267 = vadd.f32 %v7100, %v7266
      %7268 = vmatmul.bf16.gmra.mxu0 %v7205
      %v7269 = vpop.f32.mrf.mxu0
      %v7270 = vadd.f32 %v7103, %v7269
      %v7271 = vpop.f32.mrf.mxu0
      %v7272 = vadd.f32 %v7105, %v7271
      %7273 = vmatmul.bf16.gmra.mxu0 %v7208
      %v7274 = vpop.f32.mrf.mxu0
      %v7275 = vadd.f32 %v7108, %v7274
      %v7276 = vpop.f32.mrf.mxu0
      %v7277 = vadd.f32 %v7110, %v7276
      %7278 = vmatmul.bf16.gmra.mxu0 %v7211
      %v7279 = vpop.f32.mrf.mxu0
      %v7280 = vadd.f32 %v7113, %v7279
      %v7281 = vpop.f32.mrf.mxu0
      %v7282 = vadd.f32 %v7115, %v7281
      %7283 = vmatmul.bf16.gmra.mxu0 %v7214
      %v7284 = vpop.f32.mrf.mxu0
      %v7285 = vadd.f32 %v7118, %v7284
      %v7286 = vpop.f32.mrf.mxu0
      %v7287 = vadd.f32 %v7120, %v7286
      %7288 = vmatmul.bf16.gmra.mxu0 %v7217
      %v7289 = vpop.f32.mrf.mxu0
      %v7290 = vadd.f32 %v7123, %v7289
      %v7291 = vpop.f32.mrf.mxu0
      %v7292 = vadd.f32 %v7125, %v7291
      %7293 = vmatmul.bf16.gmra.mxu0 %v7220
      %v7294 = vpop.f32.mrf.mxu0
      %v7295 = vadd.f32 %v7128, %v7294
      %v7296 = vpop.f32.mrf.mxu0
      %v7297 = vadd.f32 %v7130, %v7296
      %7298 = vmatmul.bf16.gmra.mxu0 %v7223
      %v7299 = vpop.f32.mrf.mxu0
      %v7300 = vadd.f32 %v7133, %v7299
      %v7301 = vpop.f32.mrf.mxu0
      %v7302 = vadd.f32 %v7135, %v7301
      %7303 = vmatmul.bf16.gmra.mxu0 %v7226
      %v7304 = vpop.f32.mrf.mxu0
      %v7305 = vadd.f32 %v7138, %v7304
      %v7306 = vpop.f32.mrf.mxu0
      %v7307 = vadd.f32 %v7140, %v7306
      %7308 = vmatmul.bf16.gmra.mxu0 %v7229
      %v7309 = vpop.f32.mrf.mxu0
      %v7310 = vadd.f32 %v7143, %v7309
      %v7311 = vpop.f32.mrf.mxu0
      %v7312 = vadd.f32 %v7145, %v7311
      %7313 = vmatmul.bf16.gmra.mxu0 %v7232
      %v7314 = vpop.f32.mrf.mxu0
      %v7315 = vadd.f32 %v7148, %v7314
      %v7316 = vpop.f32.mrf.mxu0
      %v7317 = vadd.f32 %v7150, %v7316
      %7318 = vmatmul.bf16.gmra.mxu0 %v7235
      %v7319 = vpop.f32.mrf.mxu0
      %v7320 = vadd.f32 %v7153, %v7319
      %v7321 = vpop.f32.mrf.mxu0
      %v7322 = vadd.f32 %v7155, %v7321
      %7323 = vmatmul.bf16.gmra.mxu0 %v7238
      %v7324 = vpop.f32.mrf.mxu0
      %v7325 = vadd.f32 %v7158, %v7324
      %v7326 = vpop.f32.mrf.mxu0
      %v7327 = vadd.f32 %v7160, %v7326
      %7328 = vdwg.mxu0
      %v7329 = vld [vmem:[#allocation3] sm:$0xc]
      %v7330 = vld [vmem:[#allocation3 + $0x4] sm:$0xf]
      %v7331 = vld [vmem:[#allocation3 + $0x8] sm:$0xf]
      %v7332 = vld [vmem:[#allocation3 + $0xc] sm:$0xf]
      %v7333 = vld [vmem:[#allocation3 + $0x10] sm:$0xf]
      %v7334 = vld [vmem:[#allocation3 + $0x14] sm:$0xf]
      %v7335 = vld [vmem:[#allocation3 + $0x18] sm:$0xf]
      %v7336 = vld [vmem:[#allocation3 + $0x1c] sm:$0xf]
      %v7337 = vld [vmem:[#allocation3 + $0x20] sm:$0xf]
      %v7338 = vld [vmem:[#allocation3 + $0x24] sm:$0xf]
      %v7339 = vld [vmem:[#allocation3 + $0x28] sm:$0xf]
      %v7340 = vld [vmem:[#allocation3 + $0x2c] sm:$0xf]
      %v7341 = vld [vmem:[#allocation3 + $0x30] sm:$0xf]
      %v7342 = vld [vmem:[#allocation3 + $0x34] sm:$0xf]
      %v7343 = vld [vmem:[#allocation3 + $0x38] sm:$0xf]
      %v7344 = vld [vmem:[#allocation3 + $0x3c] sm:$0xf]
      %v7345 = vld [vmem:[#allocation3 + $0x40] sm:$0xf]
      %v7346 = vld [vmem:[#allocation3 + $0x44] sm:$0xf]
      %v7347 = vld [vmem:[#allocation3 + $0x48] sm:$0xf]
      %v7348 = vld [vmem:[#allocation3 + $0x4c] sm:$0xf]
      %v7349 = vld [vmem:[#allocation3 + $0x50] sm:$0xf]
      %v7350 = vld [vmem:[#allocation3 + $0x54] sm:$0xf]
      %v7351 = vld [vmem:[#allocation3 + $0x58] sm:$0xf]
      %v7352 = vld [vmem:[#allocation3 + $0x5c] sm:$0xf]
      %v7353 = vld [vmem:[#allocation3 + $0x60] sm:$0xf]
      %v7354 = vld [vmem:[#allocation3 + $0x64] sm:$0xf]
      %v7355 = vld [vmem:[#allocation3 + $0x68] sm:$0xf]
      %v7356 = vld [vmem:[#allocation3 + $0x6c] sm:$0xf]
      %v7357 = vld [vmem:[#allocation3 + $0x70] sm:$0xf]
      %v7358 = vld [vmem:[#allocation3 + $0x74] sm:$0xf]
      %v7359 = vld [vmem:[#allocation3 + $0x78] sm:$0xf]
      %v7360 = vld [vmem:[#allocation3 + $0x7c] sm:$0xf]
      %v7361 = vld [vmem:[#allocation3 + $0x80] sm:$0x1]
      %s7362 = scalar_lea.vmem %s5, 64
      %v7363 = vld [vmem:[%s7362] sm:$0xf]
      %v7364 = vld [vmem:[%s7362 + $0x4] sm:$0xf]
      %v7365 = vld [vmem:[%s7362 + $0x8] sm:$0xf]
      %v7366 = vld [vmem:[%s7362 + $0xc] sm:$0xf]
      %v7367 = vld [vmem:[%s7362 + $0x10] sm:$0xf]
      %v7368 = vld [vmem:[%s7362 + $0x14] sm:$0xf]
      %v7369 = vld [vmem:[%s7362 + $0x18] sm:$0xf]
      %v7370 = vld [vmem:[%s7362 + $0x1c] sm:$0xf]
      %v7404 = vunpack.c.l.b16 %v7329
      %v7405 = vunpack.c.l.b16 %v7330
      %v7406 = vunpack.c.l.b16 %v7331
      %v7407 = vunpack.c.l.b16 %v7332
      %v7408 = vunpack.c.l.b16 %v7333
      %v7409 = vunpack.c.l.b16 %v7334
      %v7410 = vunpack.c.l.b16 %v7335
      %v7411 = vunpack.c.l.b16 %v7336
      %v7412 = vunpack.c.l.b16 %v7337
      %v7413 = vunpack.c.l.b16 %v7338
      %v7414 = vunpack.c.l.b16 %v7339
      %v7415 = vunpack.c.l.b16 %v7340
      %v7416 = vunpack.c.l.b16 %v7341
      %v7417 = vunpack.c.l.b16 %v7342
      %v7418 = vunpack.c.l.b16 %v7343
      %v7419 = vunpack.c.l.b16 %v7344
      %v7420 = vunpack.c.l.b16 %v7345
      %v7421 = vunpack.c.l.b16 %v7346
      %v7422 = vunpack.c.l.b16 %v7347
      %v7423 = vunpack.c.l.b16 %v7348
      %v7424 = vunpack.c.l.b16 %v7349
      %v7425 = vunpack.c.l.b16 %v7350
      %v7426 = vunpack.c.l.b16 %v7351
      %v7427 = vunpack.c.l.b16 %v7352
      %v7428 = vunpack.c.l.b16 %v7353
      %v7429 = vunpack.c.l.b16 %v7354
      %v7430 = vunpack.c.l.b16 %v7355
      %v7431 = vunpack.c.l.b16 %v7356
      %v7432 = vunpack.c.l.b16 %v7357
      %v7433 = vunpack.c.l.b16 %v7358
      %v7434 = vunpack.c.l.b16 %v7359
      %v7435 = vunpack.c.l.b16 %v7360
      %v7436 = vunpack.c.l.b16 %v7361
      %v7437 = vpack.c.b16 %v7405, %v7404
      %v7438 = vpack.c.b16 %v7407, %v7406
      %v7439 = vpack.c.b16 %v7409, %v7408
      %v7440 = vpack.c.b16 %v7411, %v7410
      %v7441 = vpack.c.b16 %v7413, %v7412
      %v7442 = vpack.c.b16 %v7415, %v7414
      %v7443 = vpack.c.b16 %v7417, %v7416
      %v7444 = vpack.c.b16 %v7419, %v7418
      %v7445 = vpack.c.b16 %v7421, %v7420
      %v7446 = vpack.c.b16 %v7423, %v7422
      %v7447 = vpack.c.b16 %v7425, %v7424
      %v7448 = vpack.c.b16 %v7427, %v7426
      %v7449 = vpack.c.b16 %v7429, %v7428
      %v7450 = vpack.c.b16 %v7431, %v7430
      %v7451 = vpack.c.b16 %v7433, %v7432
      %v7452 = vpack.c.b16 %v7435, %v7434
      %v7453 = vpack.c.b16 %v7436, %v7436
      %v7454 = vrot.slane %v7437, 2
      %v7455 = vrot.slane %v7438, 2
      %v7456 = vsel %vm2352, %v7454, %v7455
      %v7457 = vrot.slane %v7439, 2
      %v7458 = vsel %vm2352, %v7455, %v7457
      %v7459 = vrot.slane %v7440, 2
      %v7460 = vsel %vm2352, %v7457, %v7459
      %v7461 = vrot.slane %v7441, 2
      %v7462 = vsel %vm2352, %v7459, %v7461
      %v7463 = vrot.slane %v7442, 2
      %v7464 = vsel %vm2352, %v7461, %v7463
      %v7465 = vrot.slane %v7443, 2
      %v7466 = vsel %vm2352, %v7463, %v7465
      %v7467 = vrot.slane %v7444, 2
      %v7468 = vsel %vm2352, %v7465, %v7467
      %v7469 = vrot.slane %v7445, 2
      %v7470 = vsel %vm2352, %v7467, %v7469
      %v7471 = vrot.slane %v7446, 2
      %v7472 = vsel %vm2352, %v7469, %v7471
      %v7473 = vrot.slane %v7447, 2
      %v7474 = vsel %vm2352, %v7471, %v7473
      %v7475 = vrot.slane %v7448, 2
      %v7476 = vsel %vm2352, %v7473, %v7475
      %v7477 = vrot.slane %v7449, 2
      %v7478 = vsel %vm2352, %v7475, %v7477
      %v7479 = vrot.slane %v7450, 2
      %v7480 = vsel %vm2352, %v7477, %v7479
      %v7481 = vrot.slane %v7451, 2
      %v7482 = vsel %vm2352, %v7479, %v7481
      %v7483 = vrot.slane %v7452, 2
      %v7484 = vsel %vm2352, %v7481, %v7483
      %v7485 = vrot.slane %v7453, 2
      %v7486 = vsel %vm2352, %v7483, %v7485
      %v7495 = vunpack.c.l.b16 %v7363
      %v7496 = vunpack.c.l.b16 %v7364
      %v7497 = vunpack.c.l.b16 %v7365
      %v7498 = vunpack.c.l.b16 %v7366
      %v7499 = vunpack.c.l.b16 %v7367
      %v7500 = vunpack.c.l.b16 %v7368
      %v7501 = vunpack.c.l.b16 %v7369
      %v7502 = vunpack.c.l.b16 %v7370
      %v7503 = vpack.c.b16 %v7496, %v7495
      %v7504 = vpack.c.b16 %v7498, %v7497
      %v7505 = vpack.c.b16 %v7500, %v7499
      %v7506 = vpack.c.b16 %v7502, %v7501
      %v7512 = vsel %vm491, %v7456, 0
      %v7515 = vsel %vm491, %v7458, 0
      %v7518 = vsel %vm491, %v7460, 0
      %v7521 = vsel %vm491, %v7462, 0
      %v7524 = vsel %vm491, %v7464, 0
      %v7527 = vsel %vm491, %v7466, 0
      %v7530 = vsel %vm491, %v7468, 0
      %v7533 = vsel %vm491, %v7470, 0
      %v7536 = vsel %vm491, %v7472, 0
      %v7539 = vsel %vm491, %v7474, 0
      %v7542 = vsel %vm491, %v7476, 0
      %v7545 = vsel %vm491, %v7478, 0
      %v7548 = vsel %vm491, %v7480, 0
      %v7551 = vsel %vm491, %v7482, 0
      %v7554 = vsel %vm491, %v7484, 0
      %v7557 = vsel %vm491, %v7486, 0
      %7559 = vmatpush.bf16.msra.mxu0 0
      %7560 = vmatpush.bf16.msra.mxu0 0
      %7561 = vmatpush.bf16.msra.mxu0 0
      %7562 = vmatpush.bf16.msra.mxu0 0
      %7563 = vmatpush.bf16.msra.mxu0 %v7506
      %7564 = vmatpush.bf16.msra.mxu0 %v7505
      %7565 = vmatpush.bf16.msra.mxu0 %v7504
      %7566 = vmatpush.bf16.msra.mxu0 %v7503
      %7567 = vmatmul.bf16.gmra.mxu0 %v7512
      %v7568 = vpop.f32.mrf.mxu0
      %v7569 = vadd.f32 0.0, %v7568
      %v7570 = vpop.f32.mrf.mxu0
      %v7571 = vadd.f32 0.0, %v7570
      %7572 = vmatmul.bf16.gmra.mxu0 %v7515
      %v7573 = vpop.f32.mrf.mxu0
      %v7574 = vadd.f32 0.0, %v7573
      %v7575 = vpop.f32.mrf.mxu0
      %v7576 = vadd.f32 0.0, %v7575
      %7577 = vmatmul.bf16.gmra.mxu0 %v7518
      %v7578 = vpop.f32.mrf.mxu0
      %v7579 = vadd.f32 0.0, %v7578
      %v7580 = vpop.f32.mrf.mxu0
      %v7581 = vadd.f32 0.0, %v7580
      %7582 = vmatmul.bf16.gmra.mxu0 %v7521
      %v7583 = vpop.f32.mrf.mxu0
      %v7584 = vadd.f32 0.0, %v7583
      %v7585 = vpop.f32.mrf.mxu0
      %v7586 = vadd.f32 0.0, %v7585
      %7587 = vmatmul.bf16.gmra.mxu0 %v7524
      %v7588 = vpop.f32.mrf.mxu0
      %v7589 = vadd.f32 0.0, %v7588
      %v7590 = vpop.f32.mrf.mxu0
      %v7591 = vadd.f32 0.0, %v7590
      %7592 = vmatmul.bf16.gmra.mxu0 %v7527
      %v7593 = vpop.f32.mrf.mxu0
      %v7594 = vadd.f32 0.0, %v7593
      %v7595 = vpop.f32.mrf.mxu0
      %v7596 = vadd.f32 0.0, %v7595
      %7597 = vmatmul.bf16.gmra.mxu0 %v7530
      %v7598 = vpop.f32.mrf.mxu0
      %v7599 = vadd.f32 0.0, %v7598
      %v7600 = vpop.f32.mrf.mxu0
      %v7601 = vadd.f32 0.0, %v7600
      %7602 = vmatmul.bf16.gmra.mxu0 %v7533
      %v7603 = vpop.f32.mrf.mxu0
      %v7604 = vadd.f32 0.0, %v7603
      %v7605 = vpop.f32.mrf.mxu0
      %v7606 = vadd.f32 0.0, %v7605
      %7607 = vmatmul.bf16.gmra.mxu0 %v7536
      %v7608 = vpop.f32.mrf.mxu0
      %v7609 = vadd.f32 0.0, %v7608
      %v7610 = vpop.f32.mrf.mxu0
      %v7611 = vadd.f32 0.0, %v7610
      %7612 = vmatmul.bf16.gmra.mxu0 %v7539
      %v7613 = vpop.f32.mrf.mxu0
      %v7614 = vadd.f32 0.0, %v7613
      %v7615 = vpop.f32.mrf.mxu0
      %v7616 = vadd.f32 0.0, %v7615
      %7617 = vmatmul.bf16.gmra.mxu0 %v7542
      %v7618 = vpop.f32.mrf.mxu0
      %v7619 = vadd.f32 0.0, %v7618
      %v7620 = vpop.f32.mrf.mxu0
      %v7621 = vadd.f32 0.0, %v7620
      %7622 = vmatmul.bf16.gmra.mxu0 %v7545
      %v7623 = vpop.f32.mrf.mxu0
      %v7624 = vadd.f32 0.0, %v7623
      %v7625 = vpop.f32.mrf.mxu0
      %v7626 = vadd.f32 0.0, %v7625
      %7627 = vmatmul.bf16.gmra.mxu0 %v7548
      %v7628 = vpop.f32.mrf.mxu0
      %v7629 = vadd.f32 0.0, %v7628
      %v7630 = vpop.f32.mrf.mxu0
      %v7631 = vadd.f32 0.0, %v7630
      %7632 = vmatmul.bf16.gmra.mxu0 %v7551
      %v7633 = vpop.f32.mrf.mxu0
      %v7634 = vadd.f32 0.0, %v7633
      %v7635 = vpop.f32.mrf.mxu0
      %v7636 = vadd.f32 0.0, %v7635
      %7637 = vmatmul.bf16.gmra.mxu0 %v7554
      %v7638 = vpop.f32.mrf.mxu0
      %v7639 = vadd.f32 0.0, %v7638
      %v7640 = vpop.f32.mrf.mxu0
      %v7641 = vadd.f32 0.0, %v7640
      %7642 = vmatmul.bf16.gmra.mxu0 %v7557
      %v7643 = vpop.f32.mrf.mxu0
      %v7644 = vadd.f32 0.0, %v7643
      %v7645 = vpop.f32.mrf.mxu0
      %v7646 = vadd.f32 0.0, %v7645
      %7647 = vdwg.mxu0
      %v7648 = vadd.f32 %v7250, %v7569
      %v7649 = vadd.f32 %v7252, %v7571
      %v7650 = vadd.f32 %v7255, %v7574
      %v7651 = vadd.f32 %v7257, %v7576
      %v7652 = vadd.f32 %v7260, %v7579
      %v7653 = vadd.f32 %v7262, %v7581
      %v7654 = vadd.f32 %v7265, %v7584
      %v7655 = vadd.f32 %v7267, %v7586
      %v7656 = vadd.f32 %v7270, %v7589
      %v7657 = vadd.f32 %v7272, %v7591
      %v7658 = vadd.f32 %v7275, %v7594
      %v7659 = vadd.f32 %v7277, %v7596
      %v7660 = vadd.f32 %v7280, %v7599
      %v7661 = vadd.f32 %v7282, %v7601
      %v7662 = vadd.f32 %v7285, %v7604
      %v7663 = vadd.f32 %v7287, %v7606
      %v7664 = vadd.f32 %v7290, %v7609
      %v7665 = vadd.f32 %v7292, %v7611
      %v7666 = vadd.f32 %v7295, %v7614
      %v7667 = vadd.f32 %v7297, %v7616
      %v7668 = vadd.f32 %v7300, %v7619
      %v7669 = vadd.f32 %v7302, %v7621
      %v7670 = vadd.f32 %v7305, %v7624
      %v7671 = vadd.f32 %v7307, %v7626
      %v7672 = vadd.f32 %v7310, %v7629
      %v7673 = vadd.f32 %v7312, %v7631
      %v7674 = vadd.f32 %v7315, %v7634
      %v7675 = vadd.f32 %v7317, %v7636
      %v7676 = vadd.f32 %v7320, %v7639
      %v7677 = vadd.f32 %v7322, %v7641
      %v7678 = vadd.f32 %v7325, %v7644
      %v7679 = vadd.f32 %v7327, %v7646
      %v7680 = vld [vmem:[#allocation3 + $0x14] sm:$0xf]
      %v7681 = vld [vmem:[#allocation3 + $0x18] sm:$0xf]
      %v7682 = vld [vmem:[#allocation3 + $0x1c] sm:$0xf]
      %v7683 = vld [vmem:[#allocation3 + $0x20] sm:$0xf]
      %v7684 = vld [vmem:[#allocation3 + $0x24] sm:$0xf]
      %v7685 = vld [vmem:[#allocation3 + $0x28] sm:$0xf]
      %v7686 = vld [vmem:[#allocation3 + $0x2c] sm:$0xf]
      %v7687 = vld [vmem:[#allocation3 + $0x30] sm:$0xf]
      %v7688 = vld [vmem:[#allocation3 + $0x34] sm:$0xf]
      %v7689 = vld [vmem:[#allocation3 + $0x38] sm:$0xf]
      %v7690 = vld [vmem:[#allocation3 + $0x3c] sm:$0xf]
      %v7691 = vld [vmem:[#allocation3 + $0x40] sm:$0xf]
      %v7692 = vld [vmem:[#allocation3 + $0x44] sm:$0xf]
      %v7693 = vld [vmem:[#allocation3 + $0x48] sm:$0xf]
      %v7694 = vld [vmem:[#allocation3 + $0x4c] sm:$0xf]
      %v7695 = vld [vmem:[#allocation3 + $0x50] sm:$0xf]
      %v7696 = vld [vmem:[#allocation3 + $0x54] sm:$0xf]
      %v7697 = vld [vmem:[#allocation3 + $0x58] sm:$0xf]
      %v7698 = vld [vmem:[#allocation3 + $0x5c] sm:$0xf]
      %v7699 = vld [vmem:[#allocation3 + $0x60] sm:$0xf]
      %v7700 = vld [vmem:[#allocation3 + $0x64] sm:$0xf]
      %v7701 = vld [vmem:[#allocation3 + $0x68] sm:$0xf]
      %v7702 = vld [vmem:[#allocation3 + $0x6c] sm:$0xf]
      %v7703 = vld [vmem:[#allocation3 + $0x70] sm:$0xf]
      %v7704 = vld [vmem:[#allocation3 + $0x74] sm:$0xf]
      %v7705 = vld [vmem:[#allocation3 + $0x78] sm:$0xf]
      %v7706 = vld [vmem:[#allocation3 + $0x7c] sm:$0xf]
      %v7707 = vld [vmem:[#allocation3 + $0x80] sm:$0xf]
      %v7708 = vld [vmem:[#allocation3 + $0x84] sm:$0xf]
      %v7709 = vld [vmem:[#allocation3 + $0x88] sm:$0xf]
      %v7710 = vld [vmem:[#allocation3 + $0x8c] sm:$0xf]
      %v7711 = vld [vmem:[#allocation3 + $0x90] sm:$0x7]
      %s7712 = scalar_lea.vmem %s5, 96
      %v7713 = vld [vmem:[%s7712] sm:$0xf]
      %v7714 = vld [vmem:[%s7712 + $0x4] sm:$0xf]
      %v7715 = vld [vmem:[%s7712 + $0x8] sm:$0xf]
      %v7716 = vld [vmem:[%s7712 + $0xc] sm:$0xf]
      %v7717 = vld [vmem:[%s7712 + $0x10] sm:$0xf]
      %v7718 = vld [vmem:[%s7712 + $0x14] sm:$0xf]
      %v7719 = vld [vmem:[%s7712 + $0x18] sm:$0xf]
      %v7720 = vld [vmem:[%s7712 + $0x1c] sm:$0xf]
      %v7753 = vunpack.c.l.b16 %v7680
      %v7754 = vunpack.c.l.b16 %v7681
      %v7755 = vunpack.c.l.b16 %v7682
      %v7756 = vunpack.c.l.b16 %v7683
      %v7757 = vunpack.c.l.b16 %v7684
      %v7758 = vunpack.c.l.b16 %v7685
      %v7759 = vunpack.c.l.b16 %v7686
      %v7760 = vunpack.c.l.b16 %v7687
      %v7761 = vunpack.c.l.b16 %v7688
      %v7762 = vunpack.c.l.b16 %v7689
      %v7763 = vunpack.c.l.b16 %v7690
      %v7764 = vunpack.c.l.b16 %v7691
      %v7765 = vunpack.c.l.b16 %v7692
      %v7766 = vunpack.c.l.b16 %v7693
      %v7767 = vunpack.c.l.b16 %v7694
      %v7768 = vunpack.c.l.b16 %v7695
      %v7769 = vunpack.c.l.b16 %v7696
      %v7770 = vunpack.c.l.b16 %v7697
      %v7771 = vunpack.c.l.b16 %v7698
      %v7772 = vunpack.c.l.b16 %v7699
      %v7773 = vunpack.c.l.b16 %v7700
      %v7774 = vunpack.c.l.b16 %v7701
      %v7775 = vunpack.c.l.b16 %v7702
      %v7776 = vunpack.c.l.b16 %v7703
      %v7777 = vunpack.c.l.b16 %v7704
      %v7778 = vunpack.c.l.b16 %v7705
      %v7779 = vunpack.c.l.b16 %v7706
      %v7780 = vunpack.c.l.b16 %v7707
      %v7781 = vunpack.c.l.b16 %v7708
      %v7782 = vunpack.c.l.b16 %v7709
      %v7783 = vunpack.c.l.b16 %v7710
      %v7784 = vunpack.c.l.b16 %v7711
      %v7785 = vpack.c.b16 %v7754, %v7753
      %v7786 = vpack.c.b16 %v7756, %v7755
      %v7787 = vpack.c.b16 %v7758, %v7757
      %v7788 = vpack.c.b16 %v7760, %v7759
      %v7789 = vpack.c.b16 %v7762, %v7761
      %v7790 = vpack.c.b16 %v7764, %v7763
      %v7791 = vpack.c.b16 %v7766, %v7765
      %v7792 = vpack.c.b16 %v7768, %v7767
      %v7793 = vpack.c.b16 %v7770, %v7769
      %v7794 = vpack.c.b16 %v7772, %v7771
      %v7795 = vpack.c.b16 %v7774, %v7773
      %v7796 = vpack.c.b16 %v7776, %v7775
      %v7797 = vpack.c.b16 %v7778, %v7777
      %v7798 = vpack.c.b16 %v7780, %v7779
      %v7799 = vpack.c.b16 %v7782, %v7781
      %v7800 = vpack.c.b16 %v7784, %v7783
      %v7809 = vunpack.c.l.b16 %v7713
      %v7810 = vunpack.c.l.b16 %v7714
      %v7811 = vunpack.c.l.b16 %v7715
      %v7812 = vunpack.c.l.b16 %v7716
      %v7813 = vunpack.c.l.b16 %v7717
      %v7814 = vunpack.c.l.b16 %v7718
      %v7815 = vunpack.c.l.b16 %v7719
      %v7816 = vunpack.c.l.b16 %v7720
      %v7817 = vpack.c.b16 %v7810, %v7809
      %v7818 = vpack.c.b16 %v7812, %v7811
      %v7819 = vpack.c.b16 %v7814, %v7813
      %v7820 = vpack.c.b16 %v7816, %v7815
      %v7826 = vsel %vm491, %v7785, 0
      %v7829 = vsel %vm491, %v7786, 0
      %v7832 = vsel %vm491, %v7787, 0
      %v7835 = vsel %vm491, %v7788, 0
      %v7838 = vsel %vm491, %v7789, 0
      %v7841 = vsel %vm491, %v7790, 0
      %v7844 = vsel %vm491, %v7791, 0
      %v7847 = vsel %vm491, %v7792, 0
      %v7850 = vsel %vm491, %v7793, 0
      %v7853 = vsel %vm491, %v7794, 0
      %v7856 = vsel %vm491, %v7795, 0
      %v7859 = vsel %vm491, %v7796, 0
      %v7862 = vsel %vm491, %v7797, 0
      %v7865 = vsel %vm491, %v7798, 0
      %v7868 = vsel %vm491, %v7799, 0
      %v7871 = vsel %vm491, %v7800, 0
      %7873 = vmatpush.bf16.msra.mxu0 0
      %7874 = vmatpush.bf16.msra.mxu0 0
      %7875 = vmatpush.bf16.msra.mxu0 0
      %7876 = vmatpush.bf16.msra.mxu0 0
      %7877 = vmatpush.bf16.msra.mxu0 %v7820
      %7878 = vmatpush.bf16.msra.mxu0 %v7819
      %7879 = vmatpush.bf16.msra.mxu0 %v7818
      %7880 = vmatpush.bf16.msra.mxu0 %v7817
      %7881 = vmatmul.bf16.gmra.mxu0 %v7826
      %v7882 = vpop.f32.mrf.mxu0
      %v7883 = vadd.f32 0.0, %v7882
      %v7884 = vpop.f32.mrf.mxu0
      %v7885 = vadd.f32 0.0, %v7884
      %7886 = vmatmul.bf16.gmra.mxu0 %v7829
      %v7887 = vpop.f32.mrf.mxu0
      %v7888 = vadd.f32 0.0, %v7887
      %v7889 = vpop.f32.mrf.mxu0
      %v7890 = vadd.f32 0.0, %v7889
      %7891 = vmatmul.bf16.gmra.mxu0 %v7832
      %v7892 = vpop.f32.mrf.mxu0
      %v7893 = vadd.f32 0.0, %v7892
      %v7894 = vpop.f32.mrf.mxu0
      %v7895 = vadd.f32 0.0, %v7894
      %7896 = vmatmul.bf16.gmra.mxu0 %v7835
      %v7897 = vpop.f32.mrf.mxu0
      %v7898 = vadd.f32 0.0, %v7897
      %v7899 = vpop.f32.mrf.mxu0
      %v7900 = vadd.f32 0.0, %v7899
      %7901 = vmatmul.bf16.gmra.mxu0 %v7838
      %v7902 = vpop.f32.mrf.mxu0
      %v7903 = vadd.f32 0.0, %v7902
      %v7904 = vpop.f32.mrf.mxu0
      %v7905 = vadd.f32 0.0, %v7904
      %7906 = vmatmul.bf16.gmra.mxu0 %v7841
      %v7907 = vpop.f32.mrf.mxu0
      %v7908 = vadd.f32 0.0, %v7907
      %v7909 = vpop.f32.mrf.mxu0
      %v7910 = vadd.f32 0.0, %v7909
      %7911 = vmatmul.bf16.gmra.mxu0 %v7844
      %v7912 = vpop.f32.mrf.mxu0
      %v7913 = vadd.f32 0.0, %v7912
      %v7914 = vpop.f32.mrf.mxu0
      %v7915 = vadd.f32 0.0, %v7914
      %7916 = vmatmul.bf16.gmra.mxu0 %v7847
      %v7917 = vpop.f32.mrf.mxu0
      %v7918 = vadd.f32 0.0, %v7917
      %v7919 = vpop.f32.mrf.mxu0
      %v7920 = vadd.f32 0.0, %v7919
      %7921 = vmatmul.bf16.gmra.mxu0 %v7850
      %v7922 = vpop.f32.mrf.mxu0
      %v7923 = vadd.f32 0.0, %v7922
      %v7924 = vpop.f32.mrf.mxu0
      %v7925 = vadd.f32 0.0, %v7924
      %7926 = vmatmul.bf16.gmra.mxu0 %v7853
      %v7927 = vpop.f32.mrf.mxu0
      %v7928 = vadd.f32 0.0, %v7927
      %v7929 = vpop.f32.mrf.mxu0
      %v7930 = vadd.f32 0.0, %v7929
      %7931 = vmatmul.bf16.gmra.mxu0 %v7856
      %v7932 = vpop.f32.mrf.mxu0
      %v7933 = vadd.f32 0.0, %v7932
      %v7934 = vpop.f32.mrf.mxu0
      %v7935 = vadd.f32 0.0, %v7934
      %7936 = vmatmul.bf16.gmra.mxu0 %v7859
      %v7937 = vpop.f32.mrf.mxu0
      %v7938 = vadd.f32 0.0, %v7937
      %v7939 = vpop.f32.mrf.mxu0
      %v7940 = vadd.f32 0.0, %v7939
      %7941 = vmatmul.bf16.gmra.mxu0 %v7862
      %v7942 = vpop.f32.mrf.mxu0
      %v7943 = vadd.f32 0.0, %v7942
      %v7944 = vpop.f32.mrf.mxu0
      %v7945 = vadd.f32 0.0, %v7944
      %7946 = vmatmul.bf16.gmra.mxu0 %v7865
      %v7947 = vpop.f32.mrf.mxu0
      %v7948 = vadd.f32 0.0, %v7947
      %v7949 = vpop.f32.mrf.mxu0
      %v7950 = vadd.f32 0.0, %v7949
      %7951 = vmatmul.bf16.gmra.mxu0 %v7868
      %v7952 = vpop.f32.mrf.mxu0
      %v7953 = vadd.f32 0.0, %v7952
      %v7954 = vpop.f32.mrf.mxu0
      %v7955 = vadd.f32 0.0, %v7954
      %7956 = vmatmul.bf16.gmra.mxu0 %v7871
      %v7957 = vpop.f32.mrf.mxu0
      %v7958 = vadd.f32 0.0, %v7957
      %v7959 = vpop.f32.mrf.mxu0
      %v7960 = vadd.f32 0.0, %v7959
      %7961 = vdwg.mxu0
      %v7962 = vadd.f32 %v7648, %v7883
      %v7963 = vadd.f32 %v7649, %v7885
      %v7964 = vadd.f32 %v7650, %v7888
      %v7965 = vadd.f32 %v7651, %v7890
      %v7966 = vadd.f32 %v7652, %v7893
      %v7967 = vadd.f32 %v7653, %v7895
      %v7968 = vadd.f32 %v7654, %v7898
      %v7969 = vadd.f32 %v7655, %v7900
      %v7970 = vadd.f32 %v7656, %v7903
      %v7971 = vadd.f32 %v7657, %v7905
      %v7972 = vadd.f32 %v7658, %v7908
      %v7973 = vadd.f32 %v7659, %v7910
      %v7974 = vadd.f32 %v7660, %v7913
      %v7975 = vadd.f32 %v7661, %v7915
      %v7976 = vadd.f32 %v7662, %v7918
      %v7977 = vadd.f32 %v7663, %v7920
      %v7978 = vadd.f32 %v7664, %v7923
      %v7979 = vadd.f32 %v7665, %v7925
      %v7980 = vadd.f32 %v7666, %v7928
      %v7981 = vadd.f32 %v7667, %v7930
      %v7982 = vadd.f32 %v7668, %v7933
      %v7983 = vadd.f32 %v7669, %v7935
      %v7984 = vadd.f32 %v7670, %v7938
      %v7985 = vadd.f32 %v7671, %v7940
      %v7986 = vadd.f32 %v7672, %v7943
      %v7987 = vadd.f32 %v7673, %v7945
      %v7988 = vadd.f32 %v7674, %v7948
      %v7989 = vadd.f32 %v7675, %v7950
      %v7990 = vadd.f32 %v7676, %v7953
      %v7991 = vadd.f32 %v7677, %v7955
      %v7992 = vadd.f32 %v7678, %v7958
      %v7993 = vadd.f32 %v7679, %v7960
      %v7994 = vld [vmem:[#allocation3 + $0x14] sm:$0xe]
      %v7995 = vld [vmem:[#allocation3 + $0x90] sm:$0xf]
      %s7996 = scalar_lea.vmem %s5, 128
      %v7997 = vld [vmem:[%s7996] sm:$0xf]
      %v7998 = vld [vmem:[%s7996 + $0x4] sm:$0xf]
      %v7999 = vld [vmem:[%s7996 + $0x8] sm:$0xf]
      %v8000 = vld [vmem:[%s7996 + $0xc] sm:$0xf]
      %v8001 = vld [vmem:[%s7996 + $0x10] sm:$0xf]
      %v8002 = vld [vmem:[%s7996 + $0x14] sm:$0xf]
      %v8003 = vld [vmem:[%s7996 + $0x18] sm:$0xf]
      %v8004 = vld [vmem:[%s7996 + $0x1c] sm:$0xf]
      %v8007 = vunpack.c.l.b16 %v7994
      %v8008 = vunpack.c.l.b16 %v7995
      %v8009 = vpack.c.b16 %v7754, %v8007
      %v8010 = vpack.c.b16 %v8008, %v7783
      %v8011 = vrot.slane %v8009, 1
      %v8012 = vrot.slane %v7786, 1
      %v8013 = vsel %vm1571, %v8011, %v8012
      %v8014 = vrot.slane %v7787, 1
      %v8015 = vsel %vm1571, %v8012, %v8014
      %v8016 = vrot.slane %v7788, 1
      %v8017 = vsel %vm1571, %v8014, %v8016
      %v8018 = vrot.slane %v7789, 1
      %v8019 = vsel %vm1571, %v8016, %v8018
      %v8020 = vrot.slane %v7790, 1
      %v8021 = vsel %vm1571, %v8018, %v8020
      %v8022 = vrot.slane %v7791, 1
      %v8023 = vsel %vm1571, %v8020, %v8022
      %v8024 = vrot.slane %v7792, 1
      %v8025 = vsel %vm1571, %v8022, %v8024
      %v8026 = vrot.slane %v7793, 1
      %v8027 = vsel %vm1571, %v8024, %v8026
      %v8028 = vrot.slane %v7794, 1
      %v8029 = vsel %vm1571, %v8026, %v8028
      %v8030 = vrot.slane %v7795, 1
      %v8031 = vsel %vm1571, %v8028, %v8030
      %v8032 = vrot.slane %v7796, 1
      %v8033 = vsel %vm1571, %v8030, %v8032
      %v8034 = vrot.slane %v7797, 1
      %v8035 = vsel %vm1571, %v8032, %v8034
      %v8036 = vrot.slane %v7798, 1
      %v8037 = vsel %vm1571, %v8034, %v8036
      %v8038 = vrot.slane %v7799, 1
      %v8039 = vsel %vm1571, %v8036, %v8038
      %v8040 = vrot.slane %v8010, 1
      %v8041 = vsel %vm1571, %v8038, %v8040
      %v8050 = vunpack.c.l.b16 %v7997
      %v8051 = vunpack.c.l.b16 %v7998
      %v8052 = vunpack.c.l.b16 %v7999
      %v8053 = vunpack.c.l.b16 %v8000
      %v8054 = vunpack.c.l.b16 %v8001
      %v8055 = vunpack.c.l.b16 %v8002
      %v8056 = vunpack.c.l.b16 %v8003
      %v8057 = vunpack.c.l.b16 %v8004
      %v8058 = vpack.c.b16 %v8051, %v8050
      %v8059 = vpack.c.b16 %v8053, %v8052
      %v8060 = vpack.c.b16 %v8055, %v8054
      %v8061 = vpack.c.b16 %v8057, %v8056
      %v8067 = vsel %vm491, %v8013, 0
      %v8070 = vsel %vm491, %v8015, 0
      %v8073 = vsel %vm491, %v8017, 0
      %v8076 = vsel %vm491, %v8019, 0
      %v8079 = vsel %vm491, %v8021, 0
      %v8082 = vsel %vm491, %v8023, 0
      %v8085 = vsel %vm491, %v8025, 0
      %v8088 = vsel %vm491, %v8027, 0
      %v8091 = vsel %vm491, %v8029, 0
      %v8094 = vsel %vm491, %v8031, 0
      %v8097 = vsel %vm491, %v8033, 0
      %v8100 = vsel %vm491, %v8035, 0
      %v8103 = vsel %vm491, %v8037, 0
      %v8106 = vsel %vm491, %v8039, 0
      %v8109 = vsel %vm491, %v8041, 0
      %v8112 = vsel %vm491, %v8040, 0
      %8114 = vmatpush.bf16.msra.mxu0 0
      %8115 = vmatpush.bf16.msra.mxu0 0
      %8116 = vmatpush.bf16.msra.mxu0 0
      %8117 = vmatpush.bf16.msra.mxu0 0
      %8118 = vmatpush.bf16.msra.mxu0 %v8061
      %8119 = vmatpush.bf16.msra.mxu0 %v8060
      %8120 = vmatpush.bf16.msra.mxu0 %v8059
      %8121 = vmatpush.bf16.msra.mxu0 %v8058
      %8122 = vmatmul.bf16.gmra.mxu0 %v8067
      %v8123 = vpop.f32.mrf.mxu0
      %v8124 = vadd.f32 0.0, %v8123
      %v8125 = vpop.f32.mrf.mxu0
      %v8126 = vadd.f32 0.0, %v8125
      %8127 = vmatmul.bf16.gmra.mxu0 %v8070
      %v8128 = vpop.f32.mrf.mxu0
      %v8129 = vadd.f32 0.0, %v8128
      %v8130 = vpop.f32.mrf.mxu0
      %v8131 = vadd.f32 0.0, %v8130
      %8132 = vmatmul.bf16.gmra.mxu0 %v8073
      %v8133 = vpop.f32.mrf.mxu0
      %v8134 = vadd.f32 0.0, %v8133
      %v8135 = vpop.f32.mrf.mxu0
      %v8136 = vadd.f32 0.0, %v8135
      %8137 = vmatmul.bf16.gmra.mxu0 %v8076
      %v8138 = vpop.f32.mrf.mxu0
      %v8139 = vadd.f32 0.0, %v8138
      %v8140 = vpop.f32.mrf.mxu0
      %v8141 = vadd.f32 0.0, %v8140
      %8142 = vmatmul.bf16.gmra.mxu0 %v8079
      %v8143 = vpop.f32.mrf.mxu0
      %v8144 = vadd.f32 0.0, %v8143
      %v8145 = vpop.f32.mrf.mxu0
      %v8146 = vadd.f32 0.0, %v8145
      %8147 = vmatmul.bf16.gmra.mxu0 %v8082
      %v8148 = vpop.f32.mrf.mxu0
      %v8149 = vadd.f32 0.0, %v8148
      %v8150 = vpop.f32.mrf.mxu0
      %v8151 = vadd.f32 0.0, %v8150
      %8152 = vmatmul.bf16.gmra.mxu0 %v8085
      %v8153 = vpop.f32.mrf.mxu0
      %v8154 = vadd.f32 0.0, %v8153
      %v8155 = vpop.f32.mrf.mxu0
      %v8156 = vadd.f32 0.0, %v8155
      %8157 = vmatmul.bf16.gmra.mxu0 %v8088
      %v8158 = vpop.f32.mrf.mxu0
      %v8159 = vadd.f32 0.0, %v8158
      %v8160 = vpop.f32.mrf.mxu0
      %v8161 = vadd.f32 0.0, %v8160
      %8162 = vmatmul.bf16.gmra.mxu0 %v8091
      %v8163 = vpop.f32.mrf.mxu0
      %v8164 = vadd.f32 0.0, %v8163
      %v8165 = vpop.f32.mrf.mxu0
      %v8166 = vadd.f32 0.0, %v8165
      %8167 = vmatmul.bf16.gmra.mxu0 %v8094
      %v8168 = vpop.f32.mrf.mxu0
      %v8169 = vadd.f32 0.0, %v8168
      %v8170 = vpop.f32.mrf.mxu0
      %v8171 = vadd.f32 0.0, %v8170
      %8172 = vmatmul.bf16.gmra.mxu0 %v8097
      %v8173 = vpop.f32.mrf.mxu0
      %v8174 = vadd.f32 0.0, %v8173
      %v8175 = vpop.f32.mrf.mxu0
      %v8176 = vadd.f32 0.0, %v8175
      %8177 = vmatmul.bf16.gmra.mxu0 %v8100
      %v8178 = vpop.f32.mrf.mxu0
      %v8179 = vadd.f32 0.0, %v8178
      %v8180 = vpop.f32.mrf.mxu0
      %v8181 = vadd.f32 0.0, %v8180
      %8182 = vmatmul.bf16.gmra.mxu0 %v8103
      %v8183 = vpop.f32.mrf.mxu0
      %v8184 = vadd.f32 0.0, %v8183
      %v8185 = vpop.f32.mrf.mxu0
      %v8186 = vadd.f32 0.0, %v8185
      %8187 = vmatmul.bf16.gmra.mxu0 %v8106
      %v8188 = vpop.f32.mrf.mxu0
      %v8189 = vadd.f32 0.0, %v8188
      %v8190 = vpop.f32.mrf.mxu0
      %v8191 = vadd.f32 0.0, %v8190
      %8192 = vmatmul.bf16.gmra.mxu0 %v8109
      %v8193 = vpop.f32.mrf.mxu0
      %v8194 = vadd.f32 0.0, %v8193
      %v8195 = vpop.f32.mrf.mxu0
      %v8196 = vadd.f32 0.0, %v8195
      %8197 = vmatmul.bf16.gmra.mxu0 %v8112
      %v8198 = vpop.f32.mrf.mxu0
      %v8199 = vadd.f32 0.0, %v8198
      %v8200 = vpop.f32.mrf.mxu0
      %v8201 = vadd.f32 0.0, %v8200
      %8202 = vdwg.mxu0
      %v8203 = vadd.f32 %v7962, %v8124
      %v8204 = vadd.f32 %v7963, %v8126
      %v8205 = vadd.f32 %v7964, %v8129
      %v8206 = vadd.f32 %v7965, %v8131
      %v8207 = vadd.f32 %v7966, %v8134
      %v8208 = vadd.f32 %v7967, %v8136
      %v8209 = vadd.f32 %v7968, %v8139
      %v8210 = vadd.f32 %v7969, %v8141
      %v8211 = vadd.f32 %v7970, %v8144
      %v8212 = vadd.f32 %v7971, %v8146
      %v8213 = vadd.f32 %v7972, %v8149
      %v8214 = vadd.f32 %v7973, %v8151
      %v8215 = vadd.f32 %v7974, %v8154
      %v8216 = vadd.f32 %v7975, %v8156
      %v8217 = vadd.f32 %v7976, %v8159
      %v8218 = vadd.f32 %v7977, %v8161
      %v8219 = vadd.f32 %v7978, %v8164
      %v8220 = vadd.f32 %v7979, %v8166
      %v8221 = vadd.f32 %v7980, %v8169
      %v8222 = vadd.f32 %v7981, %v8171
      %v8223 = vadd.f32 %v7982, %v8174
      %v8224 = vadd.f32 %v7983, %v8176
      %v8225 = vadd.f32 %v7984, %v8179
      %v8226 = vadd.f32 %v7985, %v8181
      %v8227 = vadd.f32 %v7986, %v8184
      %v8228 = vadd.f32 %v7987, %v8186
      %v8229 = vadd.f32 %v7988, %v8189
      %v8230 = vadd.f32 %v7989, %v8191
      %v8231 = vadd.f32 %v7990, %v8194
      %v8232 = vadd.f32 %v7991, %v8196
      %v8233 = vadd.f32 %v7992, %v8199
      %v8234 = vadd.f32 %v7993, %v8201
      %v8235 = vld [vmem:[#allocation3 + $0x14] sm:$0xc]
      %v8236 = vld [vmem:[#allocation3 + $0x18] sm:$0xf]
      %v8237 = vld [vmem:[#allocation3 + $0x1c] sm:$0xf]
      %v8238 = vld [vmem:[#allocation3 + $0x20] sm:$0xf]
      %v8239 = vld [vmem:[#allocation3 + $0x24] sm:$0xf]
      %v8240 = vld [vmem:[#allocation3 + $0x28] sm:$0xf]
      %v8241 = vld [vmem:[#allocation3 + $0x2c] sm:$0xf]
      %v8242 = vld [vmem:[#allocation3 + $0x30] sm:$0xf]
      %v8243 = vld [vmem:[#allocation3 + $0x34] sm:$0xf]
      %v8244 = vld [vmem:[#allocation3 + $0x38] sm:$0xf]
      %v8245 = vld [vmem:[#allocation3 + $0x3c] sm:$0xf]
      %v8246 = vld [vmem:[#allocation3 + $0x40] sm:$0xf]
      %v8247 = vld [vmem:[#allocation3 + $0x44] sm:$0xf]
      %v8248 = vld [vmem:[#allocation3 + $0x48] sm:$0xf]
      %v8249 = vld [vmem:[#allocation3 + $0x4c] sm:$0xf]
      %v8250 = vld [vmem:[#allocation3 + $0x50] sm:$0xf]
      %v8251 = vld [vmem:[#allocation3 + $0x54] sm:$0xf]
      %v8252 = vld [vmem:[#allocation3 + $0x58] sm:$0xf]
      %v8253 = vld [vmem:[#allocation3 + $0x5c] sm:$0xf]
      %v8254 = vld [vmem:[#allocation3 + $0x60] sm:$0xf]
      %v8255 = vld [vmem:[#allocation3 + $0x64] sm:$0xf]
      %v8256 = vld [vmem:[#allocation3 + $0x68] sm:$0xf]
      %v8257 = vld [vmem:[#allocation3 + $0x6c] sm:$0xf]
      %v8258 = vld [vmem:[#allocation3 + $0x70] sm:$0xf]
      %v8259 = vld [vmem:[#allocation3 + $0x74] sm:$0xf]
      %v8260 = vld [vmem:[#allocation3 + $0x78] sm:$0xf]
      %v8261 = vld [vmem:[#allocation3 + $0x7c] sm:$0xf]
      %v8262 = vld [vmem:[#allocation3 + $0x80] sm:$0xf]
      %v8263 = vld [vmem:[#allocation3 + $0x84] sm:$0xf]
      %v8264 = vld [vmem:[#allocation3 + $0x88] sm:$0xf]
      %v8265 = vld [vmem:[#allocation3 + $0x8c] sm:$0xf]
      %v8266 = vld [vmem:[#allocation3 + $0x90] sm:$0xf]
      %v8267 = vld [vmem:[#allocation3 + $0x94] sm:$0x1]
      %s8268 = scalar_lea.vmem %s5, 160
      %v8269 = vld [vmem:[%s8268] sm:$0xf]
      %v8270 = vld [vmem:[%s8268 + $0x4] sm:$0xf]
      %v8271 = vld [vmem:[%s8268 + $0x8] sm:$0xf]
      %v8272 = vld [vmem:[%s8268 + $0xc] sm:$0xf]
      %v8273 = vld [vmem:[%s8268 + $0x10] sm:$0xf]
      %v8274 = vld [vmem:[%s8268 + $0x14] sm:$0xf]
      %v8275 = vld [vmem:[%s8268 + $0x18] sm:$0xf]
      %v8276 = vld [vmem:[%s8268 + $0x1c] sm:$0xf]
      %v8310 = vunpack.c.l.b16 %v8235
      %v8311 = vunpack.c.l.b16 %v8236
      %v8312 = vunpack.c.l.b16 %v8237
      %v8313 = vunpack.c.l.b16 %v8238
      %v8314 = vunpack.c.l.b16 %v8239
      %v8315 = vunpack.c.l.b16 %v8240
      %v8316 = vunpack.c.l.b16 %v8241
      %v8317 = vunpack.c.l.b16 %v8242
      %v8318 = vunpack.c.l.b16 %v8243
      %v8319 = vunpack.c.l.b16 %v8244
      %v8320 = vunpack.c.l.b16 %v8245
      %v8321 = vunpack.c.l.b16 %v8246
      %v8322 = vunpack.c.l.b16 %v8247
      %v8323 = vunpack.c.l.b16 %v8248
      %v8324 = vunpack.c.l.b16 %v8249
      %v8325 = vunpack.c.l.b16 %v8250
      %v8326 = vunpack.c.l.b16 %v8251
      %v8327 = vunpack.c.l.b16 %v8252
      %v8328 = vunpack.c.l.b16 %v8253
      %v8329 = vunpack.c.l.b16 %v8254
      %v8330 = vunpack.c.l.b16 %v8255
      %v8331 = vunpack.c.l.b16 %v8256
      %v8332 = vunpack.c.l.b16 %v8257
      %v8333 = vunpack.c.l.b16 %v8258
      %v8334 = vunpack.c.l.b16 %v8259
      %v8335 = vunpack.c.l.b16 %v8260
      %v8336 = vunpack.c.l.b16 %v8261
      %v8337 = vunpack.c.l.b16 %v8262
      %v8338 = vunpack.c.l.b16 %v8263
      %v8339 = vunpack.c.l.b16 %v8264
      %v8340 = vunpack.c.l.b16 %v8265
      %v8341 = vunpack.c.l.b16 %v8266
      %v8342 = vunpack.c.l.b16 %v8267
      %v8343 = vpack.c.b16 %v8311, %v8310
      %v8344 = vpack.c.b16 %v8313, %v8312
      %v8345 = vpack.c.b16 %v8315, %v8314
      %v8346 = vpack.c.b16 %v8317, %v8316
      %v8347 = vpack.c.b16 %v8319, %v8318
      %v8348 = vpack.c.b16 %v8321, %v8320
      %v8349 = vpack.c.b16 %v8323, %v8322
      %v8350 = vpack.c.b16 %v8325, %v8324
      %v8351 = vpack.c.b16 %v8327, %v8326
      %v8352 = vpack.c.b16 %v8329, %v8328
      %v8353 = vpack.c.b16 %v8331, %v8330
      %v8354 = vpack.c.b16 %v8333, %v8332
      %v8355 = vpack.c.b16 %v8335, %v8334
      %v8356 = vpack.c.b16 %v8337, %v8336
      %v8357 = vpack.c.b16 %v8339, %v8338
      %v8358 = vpack.c.b16 %v8341, %v8340
      %v8359 = vpack.c.b16 %v8342, %v8342
      %v8360 = vrot.slane %v8343, 2
      %v8361 = vrot.slane %v8344, 2
      %v8362 = vsel %vm2352, %v8360, %v8361
      %v8363 = vrot.slane %v8345, 2
      %v8364 = vsel %vm2352, %v8361, %v8363
      %v8365 = vrot.slane %v8346, 2
      %v8366 = vsel %vm2352, %v8363, %v8365
      %v8367 = vrot.slane %v8347, 2
      %v8368 = vsel %vm2352, %v8365, %v8367
      %v8369 = vrot.slane %v8348, 2
      %v8370 = vsel %vm2352, %v8367, %v8369
      %v8371 = vrot.slane %v8349, 2
      %v8372 = vsel %vm2352, %v8369, %v8371
      %v8373 = vrot.slane %v8350, 2
      %v8374 = vsel %vm2352, %v8371, %v8373
      %v8375 = vrot.slane %v8351, 2
      %v8376 = vsel %vm2352, %v8373, %v8375
      %v8377 = vrot.slane %v8352, 2
      %v8378 = vsel %vm2352, %v8375, %v8377
      %v8379 = vrot.slane %v8353, 2
      %v8380 = vsel %vm2352, %v8377, %v8379
      %v8381 = vrot.slane %v8354, 2
      %v8382 = vsel %vm2352, %v8379, %v8381
      %v8383 = vrot.slane %v8355, 2
      %v8384 = vsel %vm2352, %v8381, %v8383
      %v8385 = vrot.slane %v8356, 2
      %v8386 = vsel %vm2352, %v8383, %v8385
      %v8387 = vrot.slane %v8357, 2
      %v8388 = vsel %vm2352, %v8385, %v8387
      %v8389 = vrot.slane %v8358, 2
      %v8390 = vsel %vm2352, %v8387, %v8389
      %v8391 = vrot.slane %v8359, 2
      %v8392 = vsel %vm2352, %v8389, %v8391
      %v8401 = vunpack.c.l.b16 %v8269
      %v8402 = vunpack.c.l.b16 %v8270
      %v8403 = vunpack.c.l.b16 %v8271
      %v8404 = vunpack.c.l.b16 %v8272
      %v8405 = vunpack.c.l.b16 %v8273
      %v8406 = vunpack.c.l.b16 %v8274
      %v8407 = vunpack.c.l.b16 %v8275
      %v8408 = vunpack.c.l.b16 %v8276
      %v8409 = vpack.c.b16 %v8402, %v8401
      %v8410 = vpack.c.b16 %v8404, %v8403
      %v8411 = vpack.c.b16 %v8406, %v8405
      %v8412 = vpack.c.b16 %v8408, %v8407
      %v8418 = vsel %vm491, %v8362, 0
      %v8421 = vsel %vm491, %v8364, 0
      %v8424 = vsel %vm491, %v8366, 0
      %v8427 = vsel %vm491, %v8368, 0
      %v8430 = vsel %vm491, %v8370, 0
      %v8433 = vsel %vm491, %v8372, 0
      %v8436 = vsel %vm491, %v8374, 0
      %v8439 = vsel %vm491, %v8376, 0
      %v8442 = vsel %vm491, %v8378, 0
      %v8445 = vsel %vm491, %v8380, 0
      %v8448 = vsel %vm491, %v8382, 0
      %v8451 = vsel %vm491, %v8384, 0
      %v8454 = vsel %vm491, %v8386, 0
      %v8457 = vsel %vm491, %v8388, 0
      %v8460 = vsel %vm491, %v8390, 0
      %v8463 = vsel %vm491, %v8392, 0
      %8465 = vmatpush.bf16.msra.mxu0 0
      %8466 = vmatpush.bf16.msra.mxu0 0
      %8467 = vmatpush.bf16.msra.mxu0 0
      %8468 = vmatpush.bf16.msra.mxu0 0
      %8469 = vmatpush.bf16.msra.mxu0 %v8412
      %8470 = vmatpush.bf16.msra.mxu0 %v8411
      %8471 = vmatpush.bf16.msra.mxu0 %v8410
      %8472 = vmatpush.bf16.msra.mxu0 %v8409
      %8473 = vmatmul.bf16.gmra.mxu0 %v8418
      %v8474 = vpop.f32.mrf.mxu0
      %v8475 = vadd.f32 0.0, %v8474
      %v8476 = vpop.f32.mrf.mxu0
      %v8477 = vadd.f32 0.0, %v8476
      %8478 = vmatmul.bf16.gmra.mxu0 %v8421
      %v8479 = vpop.f32.mrf.mxu0
      %v8480 = vadd.f32 0.0, %v8479
      %v8481 = vpop.f32.mrf.mxu0
      %v8482 = vadd.f32 0.0, %v8481
      %8483 = vmatmul.bf16.gmra.mxu0 %v8424
      %v8484 = vpop.f32.mrf.mxu0
      %v8485 = vadd.f32 0.0, %v8484
      %v8486 = vpop.f32.mrf.mxu0
      %v8487 = vadd.f32 0.0, %v8486
      %8488 = vmatmul.bf16.gmra.mxu0 %v8427
      %v8489 = vpop.f32.mrf.mxu0
      %v8490 = vadd.f32 0.0, %v8489
      %v8491 = vpop.f32.mrf.mxu0
      %v8492 = vadd.f32 0.0, %v8491
      %8493 = vmatmul.bf16.gmra.mxu0 %v8430
      %v8494 = vpop.f32.mrf.mxu0
      %v8495 = vadd.f32 0.0, %v8494
      %v8496 = vpop.f32.mrf.mxu0
      %v8497 = vadd.f32 0.0, %v8496
      %8498 = vmatmul.bf16.gmra.mxu0 %v8433
      %v8499 = vpop.f32.mrf.mxu0
      %v8500 = vadd.f32 0.0, %v8499
      %v8501 = vpop.f32.mrf.mxu0
      %v8502 = vadd.f32 0.0, %v8501
      %8503 = vmatmul.bf16.gmra.mxu0 %v8436
      %v8504 = vpop.f32.mrf.mxu0
      %v8505 = vadd.f32 0.0, %v8504
      %v8506 = vpop.f32.mrf.mxu0
      %v8507 = vadd.f32 0.0, %v8506
      %8508 = vmatmul.bf16.gmra.mxu0 %v8439
      %v8509 = vpop.f32.mrf.mxu0
      %v8510 = vadd.f32 0.0, %v8509
      %v8511 = vpop.f32.mrf.mxu0
      %v8512 = vadd.f32 0.0, %v8511
      %8513 = vmatmul.bf16.gmra.mxu0 %v8442
      %v8514 = vpop.f32.mrf.mxu0
      %v8515 = vadd.f32 0.0, %v8514
      %v8516 = vpop.f32.mrf.mxu0
      %v8517 = vadd.f32 0.0, %v8516
      %8518 = vmatmul.bf16.gmra.mxu0 %v8445
      %v8519 = vpop.f32.mrf.mxu0
      %v8520 = vadd.f32 0.0, %v8519
      %v8521 = vpop.f32.mrf.mxu0
      %v8522 = vadd.f32 0.0, %v8521
      %8523 = vmatmul.bf16.gmra.mxu0 %v8448
      %v8524 = vpop.f32.mrf.mxu0
      %v8525 = vadd.f32 0.0, %v8524
      %v8526 = vpop.f32.mrf.mxu0
      %v8527 = vadd.f32 0.0, %v8526
      %8528 = vmatmul.bf16.gmra.mxu0 %v8451
      %v8529 = vpop.f32.mrf.mxu0
      %v8530 = vadd.f32 0.0, %v8529
      %v8531 = vpop.f32.mrf.mxu0
      %v8532 = vadd.f32 0.0, %v8531
      %8533 = vmatmul.bf16.gmra.mxu0 %v8454
      %v8534 = vpop.f32.mrf.mxu0
      %v8535 = vadd.f32 0.0, %v8534
      %v8536 = vpop.f32.mrf.mxu0
      %v8537 = vadd.f32 0.0, %v8536
      %8538 = vmatmul.bf16.gmra.mxu0 %v8457
      %v8539 = vpop.f32.mrf.mxu0
      %v8540 = vadd.f32 0.0, %v8539
      %v8541 = vpop.f32.mrf.mxu0
      %v8542 = vadd.f32 0.0, %v8541
      %8543 = vmatmul.bf16.gmra.mxu0 %v8460
      %v8544 = vpop.f32.mrf.mxu0
      %v8545 = vadd.f32 0.0, %v8544
      %v8546 = vpop.f32.mrf.mxu0
      %v8547 = vadd.f32 0.0, %v8546
      %8548 = vmatmul.bf16.gmra.mxu0 %v8463
      %v8549 = vpop.f32.mrf.mxu0
      %v8550 = vadd.f32 0.0, %v8549
      %v8551 = vpop.f32.mrf.mxu0
      %v8552 = vadd.f32 0.0, %v8551
      %8553 = vdwg.mxu0
      %v8554 = vadd.f32 %v8203, %v8475
      %v8555 = vadd.f32 %v8204, %v8477
      %v8556 = vadd.f32 %v8205, %v8480
      %v8557 = vadd.f32 %v8206, %v8482
      %v8558 = vadd.f32 %v8207, %v8485
      %v8559 = vadd.f32 %v8208, %v8487
      %v8560 = vadd.f32 %v8209, %v8490
      %v8561 = vadd.f32 %v8210, %v8492
      %v8562 = vadd.f32 %v8211, %v8495
      %v8563 = vadd.f32 %v8212, %v8497
      %v8564 = vadd.f32 %v8213, %v8500
      %v8565 = vadd.f32 %v8214, %v8502
      %v8566 = vadd.f32 %v8215, %v8505
      %v8567 = vadd.f32 %v8216, %v8507
      %v8568 = vadd.f32 %v8217, %v8510
      %v8569 = vadd.f32 %v8218, %v8512
      %v8570 = vadd.f32 %v8219, %v8515
      %v8571 = vadd.f32 %v8220, %v8517
      %v8572 = vadd.f32 %v8221, %v8520
      %v8573 = vadd.f32 %v8222, %v8522
      %v8574 = vadd.f32 %v8223, %v8525
      %v8575 = vadd.f32 %v8224, %v8527
      %v8576 = vadd.f32 %v8225, %v8530
      %v8577 = vadd.f32 %v8226, %v8532
      %v8578 = vadd.f32 %v8227, %v8535
      %v8579 = vadd.f32 %v8228, %v8537
      %v8580 = vadd.f32 %v8229, %v8540
      %v8581 = vadd.f32 %v8230, %v8542
      %v8582 = vadd.f32 %v8231, %v8545
      %v8583 = vadd.f32 %v8232, %v8547
      %v8584 = vadd.f32 %v8233, %v8550
      %v8585 = vadd.f32 %v8234, %v8552
      %v8586 = vld [vmem:[#allocation3 + $0x28] sm:$0xf]
      %v8587 = vld [vmem:[#allocation3 + $0x2c] sm:$0xf]
      %v8588 = vld [vmem:[#allocation3 + $0x30] sm:$0xf]
      %v8589 = vld [vmem:[#allocation3 + $0x34] sm:$0xf]
      %v8590 = vld [vmem:[#allocation3 + $0x38] sm:$0xf]
      %v8591 = vld [vmem:[#allocation3 + $0x3c] sm:$0xf]
      %v8592 = vld [vmem:[#allocation3 + $0x40] sm:$0xf]
      %v8593 = vld [vmem:[#allocation3 + $0x44] sm:$0xf]
      %v8594 = vld [vmem:[#allocation3 + $0x48] sm:$0xf]
      %v8595 = vld [vmem:[#allocation3 + $0x4c] sm:$0xf]
      %v8596 = vld [vmem:[#allocation3 + $0x50] sm:$0xf]
      %v8597 = vld [vmem:[#allocation3 + $0x54] sm:$0xf]
      %v8598 = vld [vmem:[#allocation3 + $0x58] sm:$0xf]
      %v8599 = vld [vmem:[#allocation3 + $0x5c] sm:$0xf]
      %v8600 = vld [vmem:[#allocation3 + $0x60] sm:$0xf]
      %v8601 = vld [vmem:[#allocation3 + $0x64] sm:$0xf]
      %v8602 = vld [vmem:[#allocation3 + $0x68] sm:$0xf]
      %v8603 = vld [vmem:[#allocation3 + $0x6c] sm:$0xf]
      %v8604 = vld [vmem:[#allocation3 + $0x70] sm:$0xf]
      %v8605 = vld [vmem:[#allocation3 + $0x74] sm:$0xf]
      %v8606 = vld [vmem:[#allocation3 + $0x78] sm:$0xf]
      %v8607 = vld [vmem:[#allocation3 + $0x7c] sm:$0xf]
      %v8608 = vld [vmem:[#allocation3 + $0x80] sm:$0xf]
      %v8609 = vld [vmem:[#allocation3 + $0x84] sm:$0xf]
      %v8610 = vld [vmem:[#allocation3 + $0x88] sm:$0xf]
      %v8611 = vld [vmem:[#allocation3 + $0x8c] sm:$0xf]
      %v8612 = vld [vmem:[#allocation3 + $0x90] sm:$0xf]
      %v8613 = vld [vmem:[#allocation3 + $0x94] sm:$0xf]
      %v8614 = vld [vmem:[#allocation3 + $0x98] sm:$0xf]
      %v8615 = vld [vmem:[#allocation3 + $0x9c] sm:$0xf]
      %v8616 = vld [vmem:[#allocation3 + $0xa0] sm:$0xf]
      %v8617 = vld [vmem:[#allocation3 + $0xa4] sm:$0x7]
      %s8618 = scalar_lea.vmem %s5, 192
      %v8619 = vld [vmem:[%s8618] sm:$0xf]
      %v8620 = vld [vmem:[%s8618 + $0x4] sm:$0xf]
      %v8621 = vld [vmem:[%s8618 + $0x8] sm:$0xf]
      %v8622 = vld [vmem:[%s8618 + $0xc] sm:$0xf]
      %v8623 = vld [vmem:[%s8618 + $0x10] sm:$0xf]
      %v8624 = vld [vmem:[%s8618 + $0x14] sm:$0xf]
      %v8625 = vld [vmem:[%s8618 + $0x18] sm:$0xf]
      %v8626 = vld [vmem:[%s8618 + $0x1c] sm:$0xf]
      %v8659 = vunpack.c.l.b16 %v8586
      %v8660 = vunpack.c.l.b16 %v8587
      %v8661 = vunpack.c.l.b16 %v8588
      %v8662 = vunpack.c.l.b16 %v8589
      %v8663 = vunpack.c.l.b16 %v8590
      %v8664 = vunpack.c.l.b16 %v8591
      %v8665 = vunpack.c.l.b16 %v8592
      %v8666 = vunpack.c.l.b16 %v8593
      %v8667 = vunpack.c.l.b16 %v8594
      %v8668 = vunpack.c.l.b16 %v8595
      %v8669 = vunpack.c.l.b16 %v8596
      %v8670 = vunpack.c.l.b16 %v8597
      %v8671 = vunpack.c.l.b16 %v8598
      %v8672 = vunpack.c.l.b16 %v8599
      %v8673 = vunpack.c.l.b16 %v8600
      %v8674 = vunpack.c.l.b16 %v8601
      %v8675 = vunpack.c.l.b16 %v8602
      %v8676 = vunpack.c.l.b16 %v8603
      %v8677 = vunpack.c.l.b16 %v8604
      %v8678 = vunpack.c.l.b16 %v8605
      %v8679 = vunpack.c.l.b16 %v8606
      %v8680 = vunpack.c.l.b16 %v8607
      %v8681 = vunpack.c.l.b16 %v8608
      %v8682 = vunpack.c.l.b16 %v8609
      %v8683 = vunpack.c.l.b16 %v8610
      %v8684 = vunpack.c.l.b16 %v8611
      %v8685 = vunpack.c.l.b16 %v8612
      %v8686 = vunpack.c.l.b16 %v8613
      %v8687 = vunpack.c.l.b16 %v8614
      %v8688 = vunpack.c.l.b16 %v8615
      %v8689 = vunpack.c.l.b16 %v8616
      %v8690 = vunpack.c.l.b16 %v8617
      %v8691 = vpack.c.b16 %v8660, %v8659
      %v8692 = vpack.c.b16 %v8662, %v8661
      %v8693 = vpack.c.b16 %v8664, %v8663
      %v8694 = vpack.c.b16 %v8666, %v8665
      %v8695 = vpack.c.b16 %v8668, %v8667
      %v8696 = vpack.c.b16 %v8670, %v8669
      %v8697 = vpack.c.b16 %v8672, %v8671
      %v8698 = vpack.c.b16 %v8674, %v8673
      %v8699 = vpack.c.b16 %v8676, %v8675
      %v8700 = vpack.c.b16 %v8678, %v8677
      %v8701 = vpack.c.b16 %v8680, %v8679
      %v8702 = vpack.c.b16 %v8682, %v8681
      %v8703 = vpack.c.b16 %v8684, %v8683
      %v8704 = vpack.c.b16 %v8686, %v8685
      %v8705 = vpack.c.b16 %v8688, %v8687
      %v8706 = vpack.c.b16 %v8690, %v8689
      %v8715 = vunpack.c.l.b16 %v8619
      %v8716 = vunpack.c.l.b16 %v8620
      %v8717 = vunpack.c.l.b16 %v8621
      %v8718 = vunpack.c.l.b16 %v8622
      %v8719 = vunpack.c.l.b16 %v8623
      %v8720 = vunpack.c.l.b16 %v8624
      %v8721 = vunpack.c.l.b16 %v8625
      %v8722 = vunpack.c.l.b16 %v8626
      %v8723 = vpack.c.b16 %v8716, %v8715
      %v8724 = vpack.c.b16 %v8718, %v8717
      %v8725 = vpack.c.b16 %v8720, %v8719
      %v8726 = vpack.c.b16 %v8722, %v8721
      %v8732 = vsel %vm491, %v8691, 0
      %v8735 = vsel %vm491, %v8692, 0
      %v8738 = vsel %vm491, %v8693, 0
      %v8741 = vsel %vm491, %v8694, 0
      %v8744 = vsel %vm491, %v8695, 0
      %v8747 = vsel %vm491, %v8696, 0
      %v8750 = vsel %vm491, %v8697, 0
      %v8753 = vsel %vm491, %v8698, 0
      %v8756 = vsel %vm491, %v8699, 0
      %v8759 = vsel %vm491, %v8700, 0
      %v8762 = vsel %vm491, %v8701, 0
      %v8765 = vsel %vm491, %v8702, 0
      %v8768 = vsel %vm491, %v8703, 0
      %v8771 = vsel %vm491, %v8704, 0
      %v8774 = vsel %vm491, %v8705, 0
      %v8777 = vsel %vm491, %v8706, 0
      %8779 = vmatpush.bf16.msra.mxu0 0
      %8780 = vmatpush.bf16.msra.mxu0 0
      %8781 = vmatpush.bf16.msra.mxu0 0
      %8782 = vmatpush.bf16.msra.mxu0 0
      %8783 = vmatpush.bf16.msra.mxu0 %v8726
      %8784 = vmatpush.bf16.msra.mxu0 %v8725
      %8785 = vmatpush.bf16.msra.mxu0 %v8724
      %8786 = vmatpush.bf16.msra.mxu0 %v8723
      %8787 = vmatmul.bf16.gmra.mxu0 %v8732
      %v8788 = vpop.f32.mrf.mxu0
      %v8789 = vadd.f32 0.0, %v8788
      %v8790 = vpop.f32.mrf.mxu0
      %v8791 = vadd.f32 0.0, %v8790
      %8792 = vmatmul.bf16.gmra.mxu0 %v8735
      %v8793 = vpop.f32.mrf.mxu0
      %v8794 = vadd.f32 0.0, %v8793
      %v8795 = vpop.f32.mrf.mxu0
      %v8796 = vadd.f32 0.0, %v8795
      %8797 = vmatmul.bf16.gmra.mxu0 %v8738
      %v8798 = vpop.f32.mrf.mxu0
      %v8799 = vadd.f32 0.0, %v8798
      %v8800 = vpop.f32.mrf.mxu0
      %v8801 = vadd.f32 0.0, %v8800
      %8802 = vmatmul.bf16.gmra.mxu0 %v8741
      %v8803 = vpop.f32.mrf.mxu0
      %v8804 = vadd.f32 0.0, %v8803
      %v8805 = vpop.f32.mrf.mxu0
      %v8806 = vadd.f32 0.0, %v8805
      %8807 = vmatmul.bf16.gmra.mxu0 %v8744
      %v8808 = vpop.f32.mrf.mxu0
      %v8809 = vadd.f32 0.0, %v8808
      %v8810 = vpop.f32.mrf.mxu0
      %v8811 = vadd.f32 0.0, %v8810
      %8812 = vmatmul.bf16.gmra.mxu0 %v8747
      %v8813 = vpop.f32.mrf.mxu0
      %v8814 = vadd.f32 0.0, %v8813
      %v8815 = vpop.f32.mrf.mxu0
      %v8816 = vadd.f32 0.0, %v8815
      %8817 = vmatmul.bf16.gmra.mxu0 %v8750
      %v8818 = vpop.f32.mrf.mxu0
      %v8819 = vadd.f32 0.0, %v8818
      %v8820 = vpop.f32.mrf.mxu0
      %v8821 = vadd.f32 0.0, %v8820
      %8822 = vmatmul.bf16.gmra.mxu0 %v8753
      %v8823 = vpop.f32.mrf.mxu0
      %v8824 = vadd.f32 0.0, %v8823
      %v8825 = vpop.f32.mrf.mxu0
      %v8826 = vadd.f32 0.0, %v8825
      %8827 = vmatmul.bf16.gmra.mxu0 %v8756
      %v8828 = vpop.f32.mrf.mxu0
      %v8829 = vadd.f32 0.0, %v8828
      %v8830 = vpop.f32.mrf.mxu0
      %v8831 = vadd.f32 0.0, %v8830
      %8832 = vmatmul.bf16.gmra.mxu0 %v8759
      %v8833 = vpop.f32.mrf.mxu0
      %v8834 = vadd.f32 0.0, %v8833
      %v8835 = vpop.f32.mrf.mxu0
      %v8836 = vadd.f32 0.0, %v8835
      %8837 = vmatmul.bf16.gmra.mxu0 %v8762
      %v8838 = vpop.f32.mrf.mxu0
      %v8839 = vadd.f32 0.0, %v8838
      %v8840 = vpop.f32.mrf.mxu0
      %v8841 = vadd.f32 0.0, %v8840
      %8842 = vmatmul.bf16.gmra.mxu0 %v8765
      %v8843 = vpop.f32.mrf.mxu0
      %v8844 = vadd.f32 0.0, %v8843
      %v8845 = vpop.f32.mrf.mxu0
      %v8846 = vadd.f32 0.0, %v8845
      %8847 = vmatmul.bf16.gmra.mxu0 %v8768
      %v8848 = vpop.f32.mrf.mxu0
      %v8849 = vadd.f32 0.0, %v8848
      %v8850 = vpop.f32.mrf.mxu0
      %v8851 = vadd.f32 0.0, %v8850
      %8852 = vmatmul.bf16.gmra.mxu0 %v8771
      %v8853 = vpop.f32.mrf.mxu0
      %v8854 = vadd.f32 0.0, %v8853
      %v8855 = vpop.f32.mrf.mxu0
      %v8856 = vadd.f32 0.0, %v8855
      %8857 = vmatmul.bf16.gmra.mxu0 %v8774
      %v8858 = vpop.f32.mrf.mxu0
      %v8859 = vadd.f32 0.0, %v8858
      %v8860 = vpop.f32.mrf.mxu0
      %v8861 = vadd.f32 0.0, %v8860
      %8862 = vmatmul.bf16.gmra.mxu0 %v8777
      %v8863 = vpop.f32.mrf.mxu0
      %v8864 = vadd.f32 0.0, %v8863
      %v8865 = vpop.f32.mrf.mxu0
      %v8866 = vadd.f32 0.0, %v8865
      %8867 = vdwg.mxu0
      %v8868 = vadd.f32 %v8554, %v8789
      %v8869 = vadd.f32 %v8555, %v8791
      %v8870 = vadd.f32 %v8556, %v8794
      %v8871 = vadd.f32 %v8557, %v8796
      %v8872 = vadd.f32 %v8558, %v8799
      %v8873 = vadd.f32 %v8559, %v8801
      %v8874 = vadd.f32 %v8560, %v8804
      %v8875 = vadd.f32 %v8561, %v8806
      %v8876 = vadd.f32 %v8562, %v8809
      %v8877 = vadd.f32 %v8563, %v8811
      %v8878 = vadd.f32 %v8564, %v8814
      %v8879 = vadd.f32 %v8565, %v8816
      %v8880 = vadd.f32 %v8566, %v8819
      %v8881 = vadd.f32 %v8567, %v8821
      %v8882 = vadd.f32 %v8568, %v8824
      %v8883 = vadd.f32 %v8569, %v8826
      %v8884 = vadd.f32 %v8570, %v8829
      %v8885 = vadd.f32 %v8571, %v8831
      %v8886 = vadd.f32 %v8572, %v8834
      %v8887 = vadd.f32 %v8573, %v8836
      %v8888 = vadd.f32 %v8574, %v8839
      %v8889 = vadd.f32 %v8575, %v8841
      %v8890 = vadd.f32 %v8576, %v8844
      %v8891 = vadd.f32 %v8577, %v8846
      %v8892 = vadd.f32 %v8578, %v8849
      %v8893 = vadd.f32 %v8579, %v8851
      %v8894 = vadd.f32 %v8580, %v8854
      %v8895 = vadd.f32 %v8581, %v8856
      %v8896 = vadd.f32 %v8582, %v8859
      %v8897 = vadd.f32 %v8583, %v8861
      %v8898 = vadd.f32 %v8584, %v8864
      %v8899 = vadd.f32 %v8585, %v8866
      %v8900 = vld [vmem:[#allocation3 + $0x28] sm:$0xe]
      %v8901 = vld [vmem:[#allocation3 + $0xa4] sm:$0xf]
      %s8902 = scalar_lea.vmem %s5, 224
      %v8903 = vld [vmem:[%s8902] sm:$0xf]
      %v8904 = vld [vmem:[%s8902 + $0x4] sm:$0xf]
      %v8905 = vld [vmem:[%s8902 + $0x8] sm:$0xf]
      %v8906 = vld [vmem:[%s8902 + $0xc] sm:$0xf]
      %v8907 = vld [vmem:[%s8902 + $0x10] sm:$0xf]
      %v8908 = vld [vmem:[%s8902 + $0x14] sm:$0xf]
      %v8909 = vld [vmem:[%s8902 + $0x18] sm:$0xf]
      %v8910 = vld [vmem:[%s8902 + $0x1c] sm:$0xf]
      %v8913 = vunpack.c.l.b16 %v8900
      %v8914 = vunpack.c.l.b16 %v8901
      %v8915 = vpack.c.b16 %v8660, %v8913
      %v8916 = vpack.c.b16 %v8914, %v8689
      %v8917 = vrot.slane %v8915, 1
      %v8918 = vrot.slane %v8692, 1
      %v8919 = vsel %vm1571, %v8917, %v8918
      %v8920 = vrot.slane %v8693, 1
      %v8921 = vsel %vm1571, %v8918, %v8920
      %v8922 = vrot.slane %v8694, 1
      %v8923 = vsel %vm1571, %v8920, %v8922
      %v8924 = vrot.slane %v8695, 1
      %v8925 = vsel %vm1571, %v8922, %v8924
      %v8926 = vrot.slane %v8696, 1
      %v8927 = vsel %vm1571, %v8924, %v8926
      %v8928 = vrot.slane %v8697, 1
      %v8929 = vsel %vm1571, %v8926, %v8928
      %v8930 = vrot.slane %v8698, 1
      %v8931 = vsel %vm1571, %v8928, %v8930
      %v8932 = vrot.slane %v8699, 1
      %v8933 = vsel %vm1571, %v8930, %v8932
      %v8934 = vrot.slane %v8700, 1
      %v8935 = vsel %vm1571, %v8932, %v8934
      %v8936 = vrot.slane %v8701, 1
      %v8937 = vsel %vm1571, %v8934, %v8936
      %v8938 = vrot.slane %v8702, 1
      %v8939 = vsel %vm1571, %v8936, %v8938
      %v8940 = vrot.slane %v8703, 1
      %v8941 = vsel %vm1571, %v8938, %v8940
      %v8942 = vrot.slane %v8704, 1
      %v8943 = vsel %vm1571, %v8940, %v8942
      %v8944 = vrot.slane %v8705, 1
      %v8945 = vsel %vm1571, %v8942, %v8944
      %v8946 = vrot.slane %v8916, 1
      %v8947 = vsel %vm1571, %v8944, %v8946
      %v8956 = vunpack.c.l.b16 %v8903
      %v8957 = vunpack.c.l.b16 %v8904
      %v8958 = vunpack.c.l.b16 %v8905
      %v8959 = vunpack.c.l.b16 %v8906
      %v8960 = vunpack.c.l.b16 %v8907
      %v8961 = vunpack.c.l.b16 %v8908
      %v8962 = vunpack.c.l.b16 %v8909
      %v8963 = vunpack.c.l.b16 %v8910
      %v8964 = vpack.c.b16 %v8957, %v8956
      %v8965 = vpack.c.b16 %v8959, %v8958
      %v8966 = vpack.c.b16 %v8961, %v8960
      %v8967 = vpack.c.b16 %v8963, %v8962
      %v8973 = vsel %vm491, %v8919, 0
      %v8976 = vsel %vm491, %v8921, 0
      %v8979 = vsel %vm491, %v8923, 0
      %v8982 = vsel %vm491, %v8925, 0
      %v8985 = vsel %vm491, %v8927, 0
      %v8988 = vsel %vm491, %v8929, 0
      %v8991 = vsel %vm491, %v8931, 0
      %v8994 = vsel %vm491, %v8933, 0
      %v8997 = vsel %vm491, %v8935, 0
      %v9000 = vsel %vm491, %v8937, 0
      %v9003 = vsel %vm491, %v8939, 0
      %v9006 = vsel %vm491, %v8941, 0
      %v9009 = vsel %vm491, %v8943, 0
      %v9012 = vsel %vm491, %v8945, 0
      %v9015 = vsel %vm491, %v8947, 0
      %v9018 = vsel %vm491, %v8946, 0
      %9020 = vmatpush.bf16.msra.mxu0 0
      %9021 = vmatpush.bf16.msra.mxu0 0
      %9022 = vmatpush.bf16.msra.mxu0 0
      %9023 = vmatpush.bf16.msra.mxu0 0
      %9024 = vmatpush.bf16.msra.mxu0 %v8967
      %9025 = vmatpush.bf16.msra.mxu0 %v8966
      %9026 = vmatpush.bf16.msra.mxu0 %v8965
      %9027 = vmatpush.bf16.msra.mxu0 %v8964
      %9028 = vmatmul.bf16.gmra.mxu0 %v8973
      %v9029 = vpop.f32.mrf.mxu0
      %v9030 = vadd.f32 0.0, %v9029
      %v9031 = vpop.f32.mrf.mxu0
      %v9032 = vadd.f32 0.0, %v9031
      %9033 = vmatmul.bf16.gmra.mxu0 %v8976
      %v9034 = vpop.f32.mrf.mxu0
      %v9035 = vadd.f32 0.0, %v9034
      %v9036 = vpop.f32.mrf.mxu0
      %v9037 = vadd.f32 0.0, %v9036
      %9038 = vmatmul.bf16.gmra.mxu0 %v8979
      %v9039 = vpop.f32.mrf.mxu0
      %v9040 = vadd.f32 0.0, %v9039
      %v9041 = vpop.f32.mrf.mxu0
      %v9042 = vadd.f32 0.0, %v9041
      %9043 = vmatmul.bf16.gmra.mxu0 %v8982
      %v9044 = vpop.f32.mrf.mxu0
      %v9045 = vadd.f32 0.0, %v9044
      %v9046 = vpop.f32.mrf.mxu0
      %v9047 = vadd.f32 0.0, %v9046
      %9048 = vmatmul.bf16.gmra.mxu0 %v8985
      %v9049 = vpop.f32.mrf.mxu0
      %v9050 = vadd.f32 0.0, %v9049
      %v9051 = vpop.f32.mrf.mxu0
      %v9052 = vadd.f32 0.0, %v9051
      %9053 = vmatmul.bf16.gmra.mxu0 %v8988
      %v9054 = vpop.f32.mrf.mxu0
      %v9055 = vadd.f32 0.0, %v9054
      %v9056 = vpop.f32.mrf.mxu0
      %v9057 = vadd.f32 0.0, %v9056
      %9058 = vmatmul.bf16.gmra.mxu0 %v8991
      %v9059 = vpop.f32.mrf.mxu0
      %v9060 = vadd.f32 0.0, %v9059
      %v9061 = vpop.f32.mrf.mxu0
      %v9062 = vadd.f32 0.0, %v9061
      %9063 = vmatmul.bf16.gmra.mxu0 %v8994
      %v9064 = vpop.f32.mrf.mxu0
      %v9065 = vadd.f32 0.0, %v9064
      %v9066 = vpop.f32.mrf.mxu0
      %v9067 = vadd.f32 0.0, %v9066
      %9068 = vmatmul.bf16.gmra.mxu0 %v8997
      %v9069 = vpop.f32.mrf.mxu0
      %v9070 = vadd.f32 0.0, %v9069
      %v9071 = vpop.f32.mrf.mxu0
      %v9072 = vadd.f32 0.0, %v9071
      %9073 = vmatmul.bf16.gmra.mxu0 %v9000
      %v9074 = vpop.f32.mrf.mxu0
      %v9075 = vadd.f32 0.0, %v9074
      %v9076 = vpop.f32.mrf.mxu0
      %v9077 = vadd.f32 0.0, %v9076
      %9078 = vmatmul.bf16.gmra.mxu0 %v9003
      %v9079 = vpop.f32.mrf.mxu0
      %v9080 = vadd.f32 0.0, %v9079
      %v9081 = vpop.f32.mrf.mxu0
      %v9082 = vadd.f32 0.0, %v9081
      %9083 = vmatmul.bf16.gmra.mxu0 %v9006
      %v9084 = vpop.f32.mrf.mxu0
      %v9085 = vadd.f32 0.0, %v9084
      %v9086 = vpop.f32.mrf.mxu0
      %v9087 = vadd.f32 0.0, %v9086
      %9088 = vmatmul.bf16.gmra.mxu0 %v9009
      %v9089 = vpop.f32.mrf.mxu0
      %v9090 = vadd.f32 0.0, %v9089
      %v9091 = vpop.f32.mrf.mxu0
      %v9092 = vadd.f32 0.0, %v9091
      %9093 = vmatmul.bf16.gmra.mxu0 %v9012
      %v9094 = vpop.f32.mrf.mxu0
      %v9095 = vadd.f32 0.0, %v9094
      %v9096 = vpop.f32.mrf.mxu0
      %v9097 = vadd.f32 0.0, %v9096
      %9098 = vmatmul.bf16.gmra.mxu0 %v9015
      %v9099 = vpop.f32.mrf.mxu0
      %v9100 = vadd.f32 0.0, %v9099
      %v9101 = vpop.f32.mrf.mxu0
      %v9102 = vadd.f32 0.0, %v9101
      %9103 = vmatmul.bf16.gmra.mxu0 %v9018
      %v9104 = vpop.f32.mrf.mxu0
      %v9105 = vadd.f32 0.0, %v9104
      %v9106 = vpop.f32.mrf.mxu0
      %v9107 = vadd.f32 0.0, %v9106
      %9108 = vdwg.mxu0
      %v9109 = vadd.f32 %v8868, %v9030
      %v9110 = vadd.f32 %v8869, %v9032
      %v9111 = vadd.f32 %v8870, %v9035
      %v9112 = vadd.f32 %v8871, %v9037
      %v9113 = vadd.f32 %v8872, %v9040
      %v9114 = vadd.f32 %v8873, %v9042
      %v9115 = vadd.f32 %v8874, %v9045
      %v9116 = vadd.f32 %v8875, %v9047
      %v9117 = vadd.f32 %v8876, %v9050
      %v9118 = vadd.f32 %v8877, %v9052
      %v9119 = vadd.f32 %v8878, %v9055
      %v9120 = vadd.f32 %v8879, %v9057
      %v9121 = vadd.f32 %v8880, %v9060
      %v9122 = vadd.f32 %v8881, %v9062
      %v9123 = vadd.f32 %v8882, %v9065
      %v9124 = vadd.f32 %v8883, %v9067
      %v9125 = vadd.f32 %v8884, %v9070
      %v9126 = vadd.f32 %v8885, %v9072
      %v9127 = vadd.f32 %v8886, %v9075
      %v9128 = vadd.f32 %v8887, %v9077
      %v9129 = vadd.f32 %v8888, %v9080
      %v9130 = vadd.f32 %v8889, %v9082
      %v9131 = vadd.f32 %v8890, %v9085
      %v9132 = vadd.f32 %v8891, %v9087
      %v9133 = vadd.f32 %v8892, %v9090
      %v9134 = vadd.f32 %v8893, %v9092
      %v9135 = vadd.f32 %v8894, %v9095
      %v9136 = vadd.f32 %v8895, %v9097
      %v9137 = vadd.f32 %v8896, %v9100
      %v9138 = vadd.f32 %v8897, %v9102
      %v9139 = vadd.f32 %v8898, %v9105
      %v9140 = vadd.f32 %v8899, %v9107
      %v9141 = vld [vmem:[#allocation3 + $0x28] sm:$0xc]
      %v9142 = vld [vmem:[#allocation3 + $0x2c] sm:$0xf]
      %v9143 = vld [vmem:[#allocation3 + $0x30] sm:$0xf]
      %v9144 = vld [vmem:[#allocation3 + $0x34] sm:$0xf]
      %v9145 = vld [vmem:[#allocation3 + $0x38] sm:$0xf]
      %v9146 = vld [vmem:[#allocation3 + $0x3c] sm:$0xf]
      %v9147 = vld [vmem:[#allocation3 + $0x40] sm:$0xf]
      %v9148 = vld [vmem:[#allocation3 + $0x44] sm:$0xf]
      %v9149 = vld [vmem:[#allocation3 + $0x48] sm:$0xf]
      %v9150 = vld [vmem:[#allocation3 + $0x4c] sm:$0xf]
      %v9151 = vld [vmem:[#allocation3 + $0x50] sm:$0xf]
      %v9152 = vld [vmem:[#allocation3 + $0x54] sm:$0xf]
      %v9153 = vld [vmem:[#allocation3 + $0x58] sm:$0xf]
      %v9154 = vld [vmem:[#allocation3 + $0x5c] sm:$0xf]
      %v9155 = vld [vmem:[#allocation3 + $0x60] sm:$0xf]
      %v9156 = vld [vmem:[#allocation3 + $0x64] sm:$0xf]
      %v9157 = vld [vmem:[#allocation3 + $0x68] sm:$0xf]
      %v9158 = vld [vmem:[#allocation3 + $0x6c] sm:$0xf]
      %v9159 = vld [vmem:[#allocation3 + $0x70] sm:$0xf]
      %v9160 = vld [vmem:[#allocation3 + $0x74] sm:$0xf]
      %v9161 = vld [vmem:[#allocation3 + $0x78] sm:$0xf]
      %v9162 = vld [vmem:[#allocation3 + $0x7c] sm:$0xf]
      %v9163 = vld [vmem:[#allocation3 + $0x80] sm:$0xf]
      %v9164 = vld [vmem:[#allocation3 + $0x84] sm:$0xf]
      %v9165 = vld [vmem:[#allocation3 + $0x88] sm:$0xf]
      %v9166 = vld [vmem:[#allocation3 + $0x8c] sm:$0xf]
      %v9167 = vld [vmem:[#allocation3 + $0x90] sm:$0xf]
      %v9168 = vld [vmem:[#allocation3 + $0x94] sm:$0xf]
      %v9169 = vld [vmem:[#allocation3 + $0x98] sm:$0xf]
      %v9170 = vld [vmem:[#allocation3 + $0x9c] sm:$0xf]
      %v9171 = vld [vmem:[#allocation3 + $0xa0] sm:$0xf]
      %v9172 = vld [vmem:[#allocation3 + $0xa4] sm:$0xf]
      %v9173 = vld [vmem:[#allocation3 + $0xa8] sm:$0x1]
      %s9174 = scalar_lea.vmem %s5, 256
      %v9175 = vld [vmem:[%s9174] sm:$0xf]
      %v9176 = vld [vmem:[%s9174 + $0x4] sm:$0xf]
      %v9177 = vld [vmem:[%s9174 + $0x8] sm:$0xf]
      %v9178 = vld [vmem:[%s9174 + $0xc] sm:$0xf]
      %v9179 = vld [vmem:[%s9174 + $0x10] sm:$0xf]
      %v9180 = vld [vmem:[%s9174 + $0x14] sm:$0xf]
      %v9181 = vld [vmem:[%s9174 + $0x18] sm:$0xf]
      %v9182 = vld [vmem:[%s9174 + $0x1c] sm:$0xf]
      %v9216 = vunpack.c.l.b16 %v9141
      %v9217 = vunpack.c.l.b16 %v9142
      %v9218 = vunpack.c.l.b16 %v9143
      %v9219 = vunpack.c.l.b16 %v9144
      %v9220 = vunpack.c.l.b16 %v9145
      %v9221 = vunpack.c.l.b16 %v9146
      %v9222 = vunpack.c.l.b16 %v9147
      %v9223 = vunpack.c.l.b16 %v9148
      %v9224 = vunpack.c.l.b16 %v9149
      %v9225 = vunpack.c.l.b16 %v9150
      %v9226 = vunpack.c.l.b16 %v9151
      %v9227 = vunpack.c.l.b16 %v9152
      %v9228 = vunpack.c.l.b16 %v9153
      %v9229 = vunpack.c.l.b16 %v9154
      %v9230 = vunpack.c.l.b16 %v9155
      %v9231 = vunpack.c.l.b16 %v9156
      %v9232 = vunpack.c.l.b16 %v9157
      %v9233 = vunpack.c.l.b16 %v9158
      %v9234 = vunpack.c.l.b16 %v9159
      %v9235 = vunpack.c.l.b16 %v9160
      %v9236 = vunpack.c.l.b16 %v9161
      %v9237 = vunpack.c.l.b16 %v9162
      %v9238 = vunpack.c.l.b16 %v9163
      %v9239 = vunpack.c.l.b16 %v9164
      %v9240 = vunpack.c.l.b16 %v9165
      %v9241 = vunpack.c.l.b16 %v9166
      %v9242 = vunpack.c.l.b16 %v9167
      %v9243 = vunpack.c.l.b16 %v9168
      %v9244 = vunpack.c.l.b16 %v9169
      %v9245 = vunpack.c.l.b16 %v9170
      %v9246 = vunpack.c.l.b16 %v9171
      %v9247 = vunpack.c.l.b16 %v9172
      %v9248 = vunpack.c.l.b16 %v9173
      %v9249 = vpack.c.b16 %v9217, %v9216
      %v9250 = vpack.c.b16 %v9219, %v9218
      %v9251 = vpack.c.b16 %v9221, %v9220
      %v9252 = vpack.c.b16 %v9223, %v9222
      %v9253 = vpack.c.b16 %v9225, %v9224
      %v9254 = vpack.c.b16 %v9227, %v9226
      %v9255 = vpack.c.b16 %v9229, %v9228
      %v9256 = vpack.c.b16 %v9231, %v9230
      %v9257 = vpack.c.b16 %v9233, %v9232
      %v9258 = vpack.c.b16 %v9235, %v9234
      %v9259 = vpack.c.b16 %v9237, %v9236
      %v9260 = vpack.c.b16 %v9239, %v9238
      %v9261 = vpack.c.b16 %v9241, %v9240
      %v9262 = vpack.c.b16 %v9243, %v9242
      %v9263 = vpack.c.b16 %v9245, %v9244
      %v9264 = vpack.c.b16 %v9247, %v9246
      %v9265 = vpack.c.b16 %v9248, %v9248
      %v9266 = vrot.slane %v9249, 2
      %v9267 = vrot.slane %v9250, 2
      %v9268 = vsel %vm2352, %v9266, %v9267
      %v9269 = vrot.slane %v9251, 2
      %v9270 = vsel %vm2352, %v9267, %v9269
      %v9271 = vrot.slane %v9252, 2
      %v9272 = vsel %vm2352, %v9269, %v9271
      %v9273 = vrot.slane %v9253, 2
      %v9274 = vsel %vm2352, %v9271, %v9273
      %v9275 = vrot.slane %v9254, 2
      %v9276 = vsel %vm2352, %v9273, %v9275
      %v9277 = vrot.slane %v9255, 2
      %v9278 = vsel %vm2352, %v9275, %v9277
      %v9279 = vrot.slane %v9256, 2
      %v9280 = vsel %vm2352, %v9277, %v9279
      %v9281 = vrot.slane %v9257, 2
      %v9282 = vsel %vm2352, %v9279, %v9281
      %v9283 = vrot.slane %v9258, 2
      %v9284 = vsel %vm2352, %v9281, %v9283
      %v9285 = vrot.slane %v9259, 2
      %v9286 = vsel %vm2352, %v9283, %v9285
      %v9287 = vrot.slane %v9260, 2
      %v9288 = vsel %vm2352, %v9285, %v9287
      %v9289 = vrot.slane %v9261, 2
      %v9290 = vsel %vm2352, %v9287, %v9289
      %v9291 = vrot.slane %v9262, 2
      %v9292 = vsel %vm2352, %v9289, %v9291
      %v9293 = vrot.slane %v9263, 2
      %v9294 = vsel %vm2352, %v9291, %v9293
      %v9295 = vrot.slane %v9264, 2
      %v9296 = vsel %vm2352, %v9293, %v9295
      %v9297 = vrot.slane %v9265, 2
      %v9298 = vsel %vm2352, %v9295, %v9297
      %v9307 = vunpack.c.l.b16 %v9175
      %v9308 = vunpack.c.l.b16 %v9176
      %v9309 = vunpack.c.l.b16 %v9177
      %v9310 = vunpack.c.l.b16 %v9178
      %v9311 = vunpack.c.l.b16 %v9179
      %v9312 = vunpack.c.l.b16 %v9180
      %v9313 = vunpack.c.l.b16 %v9181
      %v9314 = vunpack.c.l.b16 %v9182
      %v9315 = vpack.c.b16 %v9308, %v9307
      %v9316 = vpack.c.b16 %v9310, %v9309
      %v9317 = vpack.c.b16 %v9312, %v9311
      %v9318 = vpack.c.b16 %v9314, %v9313
      %v9324 = vsel %vm491, %v9268, 0
      %v9327 = vsel %vm491, %v9270, 0
      %v9330 = vsel %vm491, %v9272, 0
      %v9333 = vsel %vm491, %v9274, 0
      %v9336 = vsel %vm491, %v9276, 0
      %v9339 = vsel %vm491, %v9278, 0
      %v9342 = vsel %vm491, %v9280, 0
      %v9345 = vsel %vm491, %v9282, 0
      %v9348 = vsel %vm491, %v9284, 0
      %v9351 = vsel %vm491, %v9286, 0
      %v9354 = vsel %vm491, %v9288, 0
      %v9357 = vsel %vm491, %v9290, 0
      %v9360 = vsel %vm491, %v9292, 0
      %v9363 = vsel %vm491, %v9294, 0
      %v9366 = vsel %vm491, %v9296, 0
      %v9369 = vsel %vm491, %v9298, 0
      %9371 = vmatpush.bf16.msra.mxu0 0
      %9372 = vmatpush.bf16.msra.mxu0 0
      %9373 = vmatpush.bf16.msra.mxu0 0
      %9374 = vmatpush.bf16.msra.mxu0 0
      %9375 = vmatpush.bf16.msra.mxu0 %v9318
      %9376 = vmatpush.bf16.msra.mxu0 %v9317
      %9377 = vmatpush.bf16.msra.mxu0 %v9316
      %9378 = vmatpush.bf16.msra.mxu0 %v9315
      %9379 = vmatmul.bf16.gmra.mxu0 %v9324
      %v9380 = vpop.f32.mrf.mxu0
      %v9381 = vadd.f32 0.0, %v9380
      %v9382 = vpop.f32.mrf.mxu0
      %v9383 = vadd.f32 0.0, %v9382
      %9384 = vmatmul.bf16.gmra.mxu0 %v9327
      %v9385 = vpop.f32.mrf.mxu0
      %v9386 = vadd.f32 0.0, %v9385
      %v9387 = vpop.f32.mrf.mxu0
      %v9388 = vadd.f32 0.0, %v9387
      %9389 = vmatmul.bf16.gmra.mxu0 %v9330
      %v9390 = vpop.f32.mrf.mxu0
      %v9391 = vadd.f32 0.0, %v9390
      %v9392 = vpop.f32.mrf.mxu0
      %v9393 = vadd.f32 0.0, %v9392
      %9394 = vmatmul.bf16.gmra.mxu0 %v9333
      %v9395 = vpop.f32.mrf.mxu0
      %v9396 = vadd.f32 0.0, %v9395
      %v9397 = vpop.f32.mrf.mxu0
      %v9398 = vadd.f32 0.0, %v9397
      %9399 = vmatmul.bf16.gmra.mxu0 %v9336
      %v9400 = vpop.f32.mrf.mxu0
      %v9401 = vadd.f32 0.0, %v9400
      %v9402 = vpop.f32.mrf.mxu0
      %v9403 = vadd.f32 0.0, %v9402
      %9404 = vmatmul.bf16.gmra.mxu0 %v9339
      %v9405 = vpop.f32.mrf.mxu0
      %v9406 = vadd.f32 0.0, %v9405
      %v9407 = vpop.f32.mrf.mxu0
      %v9408 = vadd.f32 0.0, %v9407
      %9409 = vmatmul.bf16.gmra.mxu0 %v9342
      %v9410 = vpop.f32.mrf.mxu0
      %v9411 = vadd.f32 0.0, %v9410
      %v9412 = vpop.f32.mrf.mxu0
      %v9413 = vadd.f32 0.0, %v9412
      %9414 = vmatmul.bf16.gmra.mxu0 %v9345
      %v9415 = vpop.f32.mrf.mxu0
      %v9416 = vadd.f32 0.0, %v9415
      %v9417 = vpop.f32.mrf.mxu0
      %v9418 = vadd.f32 0.0, %v9417
      %9419 = vmatmul.bf16.gmra.mxu0 %v9348
      %v9420 = vpop.f32.mrf.mxu0
      %v9421 = vadd.f32 0.0, %v9420
      %v9422 = vpop.f32.mrf.mxu0
      %v9423 = vadd.f32 0.0, %v9422
      %9424 = vmatmul.bf16.gmra.mxu0 %v9351
      %v9425 = vpop.f32.mrf.mxu0
      %v9426 = vadd.f32 0.0, %v9425
      %v9427 = vpop.f32.mrf.mxu0
      %v9428 = vadd.f32 0.0, %v9427
      %9429 = vmatmul.bf16.gmra.mxu0 %v9354
      %v9430 = vpop.f32.mrf.mxu0
      %v9431 = vadd.f32 0.0, %v9430
      %v9432 = vpop.f32.mrf.mxu0
      %v9433 = vadd.f32 0.0, %v9432
      %9434 = vmatmul.bf16.gmra.mxu0 %v9357
      %v9435 = vpop.f32.mrf.mxu0
      %v9436 = vadd.f32 0.0, %v9435
      %v9437 = vpop.f32.mrf.mxu0
      %v9438 = vadd.f32 0.0, %v9437
      %9439 = vmatmul.bf16.gmra.mxu0 %v9360
      %v9440 = vpop.f32.mrf.mxu0
      %v9441 = vadd.f32 0.0, %v9440
      %v9442 = vpop.f32.mrf.mxu0
      %v9443 = vadd.f32 0.0, %v9442
      %9444 = vmatmul.bf16.gmra.mxu0 %v9363
      %v9445 = vpop.f32.mrf.mxu0
      %v9446 = vadd.f32 0.0, %v9445
      %v9447 = vpop.f32.mrf.mxu0
      %v9448 = vadd.f32 0.0, %v9447
      %9449 = vmatmul.bf16.gmra.mxu0 %v9366
      %v9450 = vpop.f32.mrf.mxu0
      %v9451 = vadd.f32 0.0, %v9450
      %v9452 = vpop.f32.mrf.mxu0
      %v9453 = vadd.f32 0.0, %v9452
      %9454 = vmatmul.bf16.gmra.mxu0 %v9369
      %v9455 = vpop.f32.mrf.mxu0
      %v9456 = vadd.f32 0.0, %v9455
      %v9457 = vpop.f32.mrf.mxu0
      %v9458 = vadd.f32 0.0, %v9457
      %9459 = vdwg.mxu0
      %v9460 = vadd.f32 %v9109, %v9381
      %v9461 = vadd.f32 %v9110, %v9383
      %v9462 = vadd.f32 %v9111, %v9386
      %v9463 = vadd.f32 %v9112, %v9388
      %v9464 = vadd.f32 %v9113, %v9391
      %v9465 = vadd.f32 %v9114, %v9393
      %v9466 = vadd.f32 %v9115, %v9396
      %v9467 = vadd.f32 %v9116, %v9398
      %v9468 = vadd.f32 %v9117, %v9401
      %v9469 = vadd.f32 %v9118, %v9403
      %v9470 = vadd.f32 %v9119, %v9406
      %v9471 = vadd.f32 %v9120, %v9408
      %v9472 = vadd.f32 %v9121, %v9411
      %v9473 = vadd.f32 %v9122, %v9413
      %v9474 = vadd.f32 %v9123, %v9416
      %v9475 = vadd.f32 %v9124, %v9418
      %v9476 = vadd.f32 %v9125, %v9421
      %v9477 = vadd.f32 %v9126, %v9423
      %v9478 = vadd.f32 %v9127, %v9426
      %v9479 = vadd.f32 %v9128, %v9428
      %v9480 = vadd.f32 %v9129, %v9431
      %v9481 = vadd.f32 %v9130, %v9433
      %v9482 = vadd.f32 %v9131, %v9436
      %v9483 = vadd.f32 %v9132, %v9438
      %v9484 = vadd.f32 %v9133, %v9441
      %v9485 = vadd.f32 %v9134, %v9443
      %v9486 = vadd.f32 %v9135, %v9446
      %v9487 = vadd.f32 %v9136, %v9448
      %v9488 = vadd.f32 %v9137, %v9451
      %v9489 = vadd.f32 %v9138, %v9453
      %v9490 = vadd.f32 %v9139, %v9456
      %v9491 = vadd.f32 %v9140, %v9458
      %v9492 = vld [vmem:[%s6] sm:$0x1]
      %v9494 = vperm.slane %v9492, 0
      %v9496 = vadd.f32 %v9460, %v9494
      %v9497 = vadd.f32 %v9461, %v9494
      %v9498 = vadd.f32 %v9462, %v9494
      %v9499 = vadd.f32 %v9463, %v9494
      %v9500 = vadd.f32 %v9464, %v9494
      %v9501 = vadd.f32 %v9465, %v9494
      %v9502 = vadd.f32 %v9466, %v9494
      %v9503 = vadd.f32 %v9467, %v9494
      %v9504 = vadd.f32 %v9468, %v9494
      %v9505 = vadd.f32 %v9469, %v9494
      %v9506 = vadd.f32 %v9470, %v9494
      %v9507 = vadd.f32 %v9471, %v9494
      %v9508 = vadd.f32 %v9472, %v9494
      %v9509 = vadd.f32 %v9473, %v9494
      %v9510 = vadd.f32 %v9474, %v9494
      %v9511 = vadd.f32 %v9475, %v9494
      %v9512 = vadd.f32 %v9476, %v9494
      %v9513 = vadd.f32 %v9477, %v9494
      %v9514 = vadd.f32 %v9478, %v9494
      %v9515 = vadd.f32 %v9479, %v9494
      %v9516 = vadd.f32 %v9480, %v9494
      %v9517 = vadd.f32 %v9481, %v9494
      %v9518 = vadd.f32 %v9482, %v9494
      %v9519 = vadd.f32 %v9483, %v9494
      %v9520 = vadd.f32 %v9484, %v9494
      %v9521 = vadd.f32 %v9485, %v9494
      %v9522 = vadd.f32 %v9486, %v9494
      %v9523 = vadd.f32 %v9487, %v9494
      %v9524 = vadd.f32 %v9488, %v9494
      %v9525 = vadd.f32 %v9489, %v9494
      %v9526 = vadd.f32 %v9490, %v9494
      %v9527 = vadd.f32 %v9491, %v9494
      %v9528 = vmax.f32 %v9496, 0.0
      %v9529 = vmax.f32 %v9497, 0.0
      %v9530 = vmax.f32 %v9498, 0.0
      %v9531 = vmax.f32 %v9499, 0.0
      %v9532 = vmax.f32 %v9500, 0.0
      %v9533 = vmax.f32 %v9501, 0.0
      %v9534 = vmax.f32 %v9502, 0.0
      %v9535 = vmax.f32 %v9503, 0.0
      %v9536 = vmax.f32 %v9504, 0.0
      %v9537 = vmax.f32 %v9505, 0.0
      %v9538 = vmax.f32 %v9506, 0.0
      %v9539 = vmax.f32 %v9507, 0.0
      %v9540 = vmax.f32 %v9508, 0.0
      %v9541 = vmax.f32 %v9509, 0.0
      %v9542 = vmax.f32 %v9510, 0.0
      %v9543 = vmax.f32 %v9511, 0.0
      %v9544 = vmax.f32 %v9512, 0.0
      %v9545 = vmax.f32 %v9513, 0.0
      %v9546 = vmax.f32 %v9514, 0.0
      %v9547 = vmax.f32 %v9515, 0.0
      %v9548 = vmax.f32 %v9516, 0.0
      %v9549 = vmax.f32 %v9517, 0.0
      %v9550 = vmax.f32 %v9518, 0.0
      %v9551 = vmax.f32 %v9519, 0.0
      %v9552 = vmax.f32 %v9520, 0.0
      %v9553 = vmax.f32 %v9521, 0.0
      %v9554 = vmax.f32 %v9522, 0.0
      %v9555 = vmax.f32 %v9523, 0.0
      %v9556 = vmax.f32 %v9524, 0.0
      %v9557 = vmax.f32 %v9525, 0.0
      %v9558 = vmax.f32 %v9526, 0.0
      %v9559 = vmax.f32 %v9527, 0.0
      %v9560 = vpack.c.bf16 %v9528, %v9528
      %v9561 = vpack.c.bf16 %v9529, %v9529
      %v9562 = vpack.c.bf16 %v9530, %v9530
      %v9563 = vpack.c.bf16 %v9531, %v9531
      %v9564 = vpack.c.bf16 %v9532, %v9532
      %v9565 = vpack.c.bf16 %v9533, %v9533
      %v9566 = vpack.c.bf16 %v9534, %v9534
      %v9567 = vpack.c.bf16 %v9535, %v9535
      %v9568 = vpack.c.bf16 %v9536, %v9536
      %v9569 = vpack.c.bf16 %v9537, %v9537
      %v9570 = vpack.c.bf16 %v9538, %v9538
      %v9571 = vpack.c.bf16 %v9539, %v9539
      %v9572 = vpack.c.bf16 %v9540, %v9540
      %v9573 = vpack.c.bf16 %v9541, %v9541
      %v9574 = vpack.c.bf16 %v9542, %v9542
      %v9575 = vpack.c.bf16 %v9543, %v9543
      %v9576 = vpack.c.bf16 %v9544, %v9544
      %v9577 = vpack.c.bf16 %v9545, %v9545
      %v9578 = vpack.c.bf16 %v9546, %v9546
      %v9579 = vpack.c.bf16 %v9547, %v9547
      %v9580 = vpack.c.bf16 %v9548, %v9548
      %v9581 = vpack.c.bf16 %v9549, %v9549
      %v9582 = vpack.c.bf16 %v9550, %v9550
      %v9583 = vpack.c.bf16 %v9551, %v9551
      %v9584 = vpack.c.bf16 %v9552, %v9552
      %v9585 = vpack.c.bf16 %v9553, %v9553
      %v9586 = vpack.c.bf16 %v9554, %v9554
      %v9587 = vpack.c.bf16 %v9555, %v9555
      %v9588 = vpack.c.bf16 %v9556, %v9556
      %v9589 = vpack.c.bf16 %v9557, %v9557
      %v9590 = vpack.c.bf16 %v9558, %v9558
      %v9591 = vpack.c.bf16 %v9559, %v9559
      %9592 = vst.msk [vmem:[%s278] sm:$0xf] %vm6790, %v9560
      %9593 = vst.msk [vmem:[%s278 + $0x4] sm:$0xf] %vm6790, %v9561
      %9594 = vst.msk [vmem:[%s278 + $0x8] sm:$0xf] %vm6790, %v9562
      %9595 = vst.msk [vmem:[%s278 + $0xc] sm:$0xf] %vm6790, %v9563
      %9596 = vst.msk [vmem:[%s278 + $0x10] sm:$0xf] %vm6790, %v9564
      %9597 = vst.msk [vmem:[%s278 + $0x14] sm:$0xf] %vm6790, %v9565
      %9598 = vst.msk [vmem:[%s278 + $0x18] sm:$0xf] %vm6790, %v9566
      %9599 = vst.msk [vmem:[%s278 + $0x1c] sm:$0xf] %vm6790, %v9567
      %9600 = vst.msk [vmem:[%s278 + $0x20] sm:$0xf] %vm6790, %v9568
      %9601 = vst.msk [vmem:[%s278 + $0x24] sm:$0xf] %vm6790, %v9569
      %9602 = vst.msk [vmem:[%s278 + $0x28] sm:$0xf] %vm6790, %v9570
      %9603 = vst.msk [vmem:[%s278 + $0x2c] sm:$0xf] %vm6790, %v9571
      %9604 = vst.msk [vmem:[%s278 + $0x30] sm:$0xf] %vm6790, %v9572
      %9605 = vst.msk [vmem:[%s278 + $0x34] sm:$0xf] %vm6790, %v9573
      %9606 = vst.msk [vmem:[%s278 + $0x38] sm:$0xf] %vm6790, %v9574
      %9607 = vst.msk [vmem:[%s278 + $0x3c] sm:$0xf] %vm6790, %v9575
      %9608 = vst.msk [vmem:[%s278 + $0x40] sm:$0xf] %vm6790, %v9576
      %9609 = vst.msk [vmem:[%s278 + $0x44] sm:$0xf] %vm6790, %v9577
      %9610 = vst.msk [vmem:[%s278 + $0x48] sm:$0xf] %vm6790, %v9578
      %9611 = vst.msk [vmem:[%s278 + $0x4c] sm:$0xf] %vm6790, %v9579
      %9612 = vst.msk [vmem:[%s278 + $0x50] sm:$0xf] %vm6790, %v9580
      %9613 = vst.msk [vmem:[%s278 + $0x54] sm:$0xf] %vm6790, %v9581
      %9614 = vst.msk [vmem:[%s278 + $0x58] sm:$0xf] %vm6790, %v9582
      %9615 = vst.msk [vmem:[%s278 + $0x5c] sm:$0xf] %vm6790, %v9583
      %9616 = vst.msk [vmem:[%s278 + $0x60] sm:$0xf] %vm6790, %v9584
      %9617 = vst.msk [vmem:[%s278 + $0x64] sm:$0xf] %vm6790, %v9585
      %9618 = vst.msk [vmem:[%s278 + $0x68] sm:$0xf] %vm6790, %v9586
      %9619 = vst.msk [vmem:[%s278 + $0x6c] sm:$0xf] %vm6790, %v9587
      %9620 = vst.msk [vmem:[%s278 + $0x70] sm:$0xf] %vm6790, %v9588
      %9621 = vst.msk [vmem:[%s278 + $0x74] sm:$0xf] %vm6790, %v9589
      %9622 = vst.msk [vmem:[%s278 + $0x78] sm:$0xf] %vm6790, %v9590
      %vm9623 = vcmask 518144
      %vm9624 = vsmask.f32 2304
      %vm9625 = vmand %vm9623, %vm9624
      %v9626 = vld [vmem:[%s278 + $0x7c] sm:$0x7]
      %v9627 = vsel %vm9625, %v9591, %v9626
      %9628 = vst [vmem:[%s278 + $0x7c] sm:$0x7] %v9627
      %p9629 = scmp.lt.s32.totalorder %s18, 1
      %s9630 = scalar_select %p9629, %s18, 1
      %s9631 = smul.addr %s9630, 32
      %s9632 = smul.addr %s9631, 4
      %s9633 = scalar_lea.vmem %s7, %s9632
      // Predicated region
      $region49: #{cnn_forward.2} parent=47 // pred_check
        %p9634 = pneg %p188
      $region50: #{cnn_forward.2} parent=47 // pred_check_branch
        %9636 = sbr.rel (%p9634) target = $region52
      $region51: #{cnn_forward.2} parent=47 // pred_region
        _
      $region52: #{cnn_forward.2} parent=47 // pred_fallthru
        _
    $region48: #{cnn_forward.2} parent=5 // pred_fallthru
      _
    %p9637 = scmp.le.s32.totalorder 2, %s13
    // Predicated region
    $region53: #{cnn_forward.2} parent=5 // pred_check
      %p9638 = pneg %p9637
    $region54: #{cnn_forward.2} parent=5 // pred_check_branch
      %9640 = sbr.rel (%p9638) target = $region56
    $region55: #{cnn_forward.2} parent=5 // pred_region
      %s9641 = ssub.s32 %s13, 2
      // Predicated region
      $region57: #{cnn_forward.2} parent=55 // pred_check
        %p9642 = pneg %p194
      $region58: #{cnn_forward.2} parent=55 // pred_check_branch
        %9644 = sbr.rel (%p9642) target = $region60
      $region59: #{cnn_forward.2} parent=55 // pred_region
        %p9645 = scmp.lt.s32.totalorder %s19, 1
        %s9646 = scalar_select %p9645, %s19, 1
        %s9647 = smul.addr %s9646, 32
        %s9648 = smul.addr %s9647, 4
        %s9649 = scalar_lea.vmem %s7, %s9648
      $region60: #{cnn_forward.2} parent=55 // pred_fallthru
        _
    $region56: #{cnn_forward.2} parent=5 // pred_fallthru
      _
  $region6: #{cnn_forward.2} parent=0 // loop_footer
    %s17 = sadd.s32 1, %s13
  $region7: #{cnn_forward.2} parent=0 // loop_footer_branch
    %12 = sbr.rel target = $region3
  $region8: #{cnn_forward.2} parent=0 // loop_exit
    _

</llo_original>
